<compile_context>
chip_gen: v7x
topology: tpu7x:2x2x1
jax: 0.10.0
libtpu: 0.0.40
codegen_flags: <defaults>
</compile_context>

<pallas_src>
import math

import jax
import jax.numpy as jnp
from jax.experimental import pallas as pl
from jax.experimental.pallas import tpu as pltpu

BN_EPS = 1e-3
LANES = 128                      # lane-dense channel padding
ACT_DTYPE = jnp.bfloat16         # storage / MXU-input dtype


def _round_up(x, m):
    return ((x + m - 1) // m) * m


def _pick_rows(m, cap=512):
    """Largest row tile <= cap that exactly divides m (falls back to a single block)."""
    if m <= cap:
        return m
    for t in (cap, 256, 128, 64, 32, 16, 8):
        if m % t == 0:
            return t
    return m


# ---------------------------- Pallas kernels ----------------------------

def _mm_kernel(act, has_res):
    def kernel(*refs):
        if has_res:
            a_ref, b_ref, bias_ref, res_ref, o_ref = refs
        else:
            a_ref, b_ref, bias_ref, o_ref = refs
            res_ref = None
        acc = jnp.dot(a_ref[...], b_ref[...], preferred_element_type=jnp.float32)
        acc = acc + bias_ref[...].astype(jnp.float32)
        if act == "silu":
            acc = acc * jax.nn.sigmoid(acc)
        if has_res:
            acc = acc + res_ref[...].astype(jnp.float32)
        o_ref[...] = acc.astype(o_ref.dtype)
    return kernel


def matmul_bias_act(a, b, bias, act="none", residual=None, out_dtype=ACT_DTYPE):
    """(M, K) @ (K, N) + bias, optional fused activation and fused residual add."""
    M, K = a.shape
    K2, N = b.shape
    assert K == K2
    tm = _pick_rows(M)
    grid_m = M // tm
    bias2 = bias.reshape(1, N).astype(jnp.float32)
    in_specs = [
        pl.BlockSpec((tm, K), lambda i: (i, 0)),
        pl.BlockSpec((K, N), lambda i: (0, 0)),
        pl.BlockSpec((1, N), lambda i: (0, 0)),
    ]
    args = [a.astype(ACT_DTYPE), b.astype(ACT_DTYPE), bias2]
    if residual is not None:
        in_specs.append(pl.BlockSpec((tm, N), lambda i: (i, 0)))
        args.append(residual.reshape(M, N).astype(ACT_DTYPE))
    return pl.pallas_call(
        _mm_kernel(act, residual is not None),
        out_shape=jax.ShapeDtypeStruct((M, N), out_dtype),
        grid=(grid_m,),
        in_specs=in_specs,
        out_specs=pl.BlockSpec((tm, N), lambda i: (i, 0)),
        compiler_params=pltpu.CompilerParams(dimension_semantics=("parallel",)),
    )(*args)


def _dw_kernel(kk, act):
    def kernel(p_ref, w_ref, b_ref, o_ref):
        acc = jnp.zeros(o_ref.shape, jnp.float32)
        for t in range(kk):                       # static, fully unrolled tap loop
            acc = acc + p_ref[t].astype(jnp.float32) * w_ref[t:t + 1, :]
        acc = acc + b_ref[...]
        if act == "silu":
            acc = acc * jax.nn.sigmoid(acc)
        o_ref[...] = acc.astype(o_ref.dtype)
    return kernel


def depthwise_conv(p, w, bias, act):
    """p: (kk, M, C) taps, w: (kk, C), bias: (C,) -> (M, C)."""
    kk, M, C = p.shape
    tm = _pick_rows(M)
    return pl.pallas_call(
        _dw_kernel(kk, act),
        out_shape=jax.ShapeDtypeStruct((M, C), ACT_DTYPE),
        grid=(M // tm,),
        in_specs=[
            pl.BlockSpec((kk, tm, C), lambda i: (0, i, 0)),
            pl.BlockSpec((kk, C), lambda i: (0, 0)),
            pl.BlockSpec((1, C), lambda i: (0, 0)),
        ],
        out_specs=pl.BlockSpec((tm, C), lambda i: (i, 0)),
        compiler_params=pltpu.CompilerParams(dimension_semantics=("parallel",)),
    )(p.astype(ACT_DTYPE), w.astype(jnp.float32),
      bias.reshape(1, C).astype(jnp.float32))


def se_gate(x3, w1, b1, w2, b2):
    """Fused SE squeeze + gate: GAP over HW, Linear->SiLU, Linear->Sigmoid.

    x3: (N, HW, C) bf16, w1/w2: (C, C) lane-padded, b1/b2: (C,) -> gate (N, C).
    Single kernel: the pooled (N, C) vector never round-trips through HBM.
    """
    N, HW, C = x3.shape
    inv_hw = 1.0 / HW

    def kernel(x_ref, w1_ref, b1_ref, w2_ref, b2_ref, o_ref):
        pooled = jnp.sum(x_ref[...].astype(jnp.float32), axis=1) * inv_hw   # (N, C)
        h = jnp.dot(pooled.astype(ACT_DTYPE), w1_ref[...],
                    preferred_element_type=jnp.float32) + b1_ref[...]
        h = h * jax.nn.sigmoid(h)                                           # SiLU
        g = jnp.dot(h.astype(ACT_DTYPE), w2_ref[...],
                    preferred_element_type=jnp.float32) + b2_ref[...]
        o_ref[...] = jax.nn.sigmoid(g).astype(o_ref.dtype)

    return pl.pallas_call(
        kernel,
        out_shape=jax.ShapeDtypeStruct((N, C), ACT_DTYPE),
    )(x3.astype(ACT_DTYPE), w1.astype(ACT_DTYPE),
      b1.reshape(1, C).astype(jnp.float32),
      w2.astype(ACT_DTYPE), b2.reshape(1, C).astype(jnp.float32))


def pool_classifier(x3, w_cls, b_cls):
    """Fused global-average-pool + Linear classifier.

    x3: (N, HW, C) bf16, w_cls: (C, Np) lane-padded, b_cls: (Np,) -> (N, Np) f32.
    """
    N, HW, C = x3.shape
    Np = w_cls.shape[1]
    inv_hw = 1.0 / HW

    def kernel(x_ref, w_ref, b_ref, o_ref):
        pooled = jnp.sum(x_ref[...].astype(jnp.float32), axis=1) * inv_hw   # (N, C)
        o_ref[...] = (jnp.dot(pooled.astype(ACT_DTYPE), w_ref[...],
                              preferred_element_type=jnp.float32) + b_ref[...])

    return pl.pallas_call(
        kernel,
        out_shape=jax.ShapeDtypeStruct((N, Np), jnp.float32),
    )(x3.astype(ACT_DTYPE), w_cls.astype(ACT_DTYPE),
      b_cls.reshape(1, Np).astype(jnp.float32))


def conv1x1_scaled(x3, s, w, bias):
    """SE scale fused into the 1x1 projection: out[n] = (x3[n] * s[n]) @ w + bias."""
    N, HW, C = x3.shape
    Cout = w.shape[1]
    thw = _pick_rows(HW)
    s3 = s.reshape(N, 1, C)

    def kernel(x_ref, s_ref, w_ref, b_ref, o_ref):
        xb = x_ref[0].astype(jnp.float32)          # (thw, C)
        sb = s_ref[0].astype(jnp.float32)          # (1, C)
        a = (xb * sb).astype(ACT_DTYPE)
        acc = jnp.dot(a, w_ref[...], preferred_element_type=jnp.float32)
        acc = acc + b_ref[...]
        o_ref[0] = acc.astype(o_ref.dtype)

    return pl.pallas_call(
        kernel,
        out_shape=jax.ShapeDtypeStruct((N, HW, Cout), ACT_DTYPE),
        grid=(N, HW // thw),
        in_specs=[
            pl.BlockSpec((1, thw, C), lambda n, h: (n, h, 0)),
            pl.BlockSpec((1, 1, C), lambda n, h: (n, 0, 0)),
            pl.BlockSpec((C, Cout), lambda n, h: (0, 0)),
            pl.BlockSpec((1, Cout), lambda n, h: (0, 0)),
        ],
        out_specs=pl.BlockSpec((1, thw, Cout), lambda n, h: (n, h, 0)),
        compiler_params=pltpu.CompilerParams(
            dimension_semantics=("parallel", "parallel")),
    )(x3.astype(ACT_DTYPE), s3.astype(ACT_DTYPE), w.astype(ACT_DTYPE),
      bias.reshape(1, Cout).astype(jnp.float32))


# ---------------------------- glue (im2col, BN fold, padding) ----------------------------

def im2col(x, k, stride):
    # TODO(synk): still materializes k*k shifted copies of the activation in HBM.
    N, H, W, C = x.shape
    pad = k // 2
    xp = jnp.pad(x, ((0, 0), (pad, pad), (pad, pad), (0, 0)))
    Ho = (H + 2 * pad - k) // stride + 1
    Wo = (W + 2 * pad - k) // stride + 1
    cols = []
    for i in range(k):
        for j in range(k):
            cols.append(xp[:, i:i + stride * Ho:stride, j:j + stride * Wo:stride, :])
    patches = jnp.stack(cols, axis=3)                 # (N, Ho, Wo, k*k, C)
    return patches.reshape(N * Ho * Wo, k * k * C), Ho, Wo


def dw_taps(x, k, stride):
    N, H, W, C = x.shape
    pad = k // 2
    xp = jnp.pad(x, ((0, 0), (pad, pad), (pad, pad), (0, 0)))
    Ho = (H + 2 * pad - k) // stride + 1
    Wo = (W + 2 * pad - k) // stride + 1
    taps = []
    for i in range(k):
        for j in range(k):
            taps.append(
                xp[:, i:i + stride * Ho:stride, j:j + stride * Wo:stride, :]
                .reshape(N * Ho * Wo, C))
    return jnp.stack(taps, axis=0), Ho, Wo            # (k*k, M, C)


def fold_bn(w_kkcc, bn):
    gamma, beta, mean, var = bn
    scale = gamma / jnp.sqrt(var + BN_EPS)
    return w_kkcc * scale, beta - mean * scale


def pad_conv_weight(w_kkcc, bias, cin_pad, cout_pad):
    kk, cin, cout = w_kkcc.shape
    w = jnp.pad(w_kkcc, ((0, 0), (0, cin_pad - cin), (0, cout_pad - cout)))
    b = jnp.pad(bias, (0, cout_pad - cout))
    return w.reshape(kk * cin_pad, cout_pad), b


def _pad_channels(x, mult=8):
    C = x.shape[-1]
    Cp = _round_up(C, mult)
    if Cp != C:
        x = jnp.pad(x, ((0, 0), (0, 0), (0, 0), (0, Cp - C)))
    return x


def conv_bn_act(x, w_kkcc, bn, k, stride, act, residual=None):
    N, H, W, Cin = x.shape
    w_f, b_f = fold_bn(w_kkcc, bn)
    w2, b2 = pad_conv_weight(w_f, b_f, Cin, LANES)
    if k == 1 and stride == 1:
        a = x.reshape(N * H * W, Cin)
        Ho, Wo = H, W
    else:
        a, Ho, Wo = im2col(x, k, stride)
    out = matmul_bias_act(a, w2, b2, act=act, residual=residual)
    return out.reshape(N, Ho, Wo, LANES)


def dwconv_bn_act(x, w_dw, bn, k, stride, act):
    N, H, W, C = x.shape
    gamma, beta, mean, var = bn
    scale = gamma / jnp.sqrt(var + BN_EPS)
    kk, c_log = w_dw.shape
    w_f = jnp.pad(w_dw * scale, ((0, 0), (0, C - c_log)))
    b_f = jnp.pad(beta - mean * scale, (0, C - c_log))
    p, Ho, Wo = dw_taps(x, k, stride)
    out = depthwise_conv(p, w_f, b_f, act)
    return out.reshape(N, Ho, Wo, C)


def squeeze_excite_project(x, w1, b1, w2, b2, prj_w, prj_bn):
    N, H, W, C = x.shape
    x3 = x.reshape(N, H * W, C)
    w1p = jnp.pad(w1, ((0, C - w1.shape[0]), (0, C - w1.shape[1])))
    b1p = jnp.pad(b1, (0, C - b1.shape[0]))
    w2p = jnp.pad(w2, ((0, C - w2.shape[0]), (0, C - w2.shape[1])))
    b2p = jnp.pad(b2, (0, C - b2.shape[0]))
    s = se_gate(x3, w1p, b1p, w2p, b2p)                            # (N, C) gate, single kernel
    w_f, b_f = fold_bn(prj_w, prj_bn)
    wp, bp = pad_conv_weight(w_f, b_f, C, LANES)
    out3 = conv1x1_scaled(x3, s, wp, bp)                           # scale + 1x1 proj fused
    return out3.reshape(N, H, W, LANES)


# ---------------------------- parameters ----------------------------

class KeyGen:
    def __init__(self, seed=0):
        self.key = jax.random.PRNGKey(seed)

    def __call__(self):
        self.key, sub = jax.random.split(self.key)
        return sub


def init_conv(kg, cin, cout, k):
    # PyTorch OIHW weight -> (k*k, cin, cout), rows ordered (kh, kw) to match im2col.
    w = jax.random.normal(kg(), (cout, cin, k, k), jnp.float32) * (1.0 / math.sqrt(cin * k * k))
    return jnp.transpose(w, (2, 3, 1, 0)).reshape(k * k, cin, cout)


def init_dwconv(kg, c, k):
    # PyTorch depthwise weight (C, 1, k, k) -> (k*k, C)
    w = jax.random.normal(kg(), (c, 1, k, k), jnp.float32) * (1.0 / math.sqrt(k * k))
    return jnp.transpose(w[:, 0], (1, 2, 0)).reshape(k * k, c)


def init_bn(kg, c):
    gamma = 1.0 + 0.1 * jax.random.normal(kg(), (c,), jnp.float32)
    beta = 0.1 * jax.random.normal(kg(), (c,), jnp.float32)
    mean = 0.05 * jax.random.normal(kg(), (c,), jnp.float32)
    var = 1.0 + 0.1 * jnp.abs(jax.random.normal(kg(), (c,), jnp.float32))
    return (gamma, beta, mean, var)


def init_linear(kg, cin, cout):
    w = jax.random.normal(kg(), (cout, cin), jnp.float32) * (1.0 / math.sqrt(cin))
    b = 0.01 * jax.random.normal(kg(), (cout,), jnp.float32)
    return jnp.transpose(w), b   # (cin, cout), (cout,)


def init_params(seed=0, out_size=1):
    kg = KeyGen(seed)
    p = {}
    # stem: 3 -> 8, 3x3 s2
    p["stem_w"] = init_conv(kg, 3, 8, 3); p["stem_bn"] = init_bn(kg, 8)
    # stage1: Fused-MBConv e=1, 3x3 s1, 8 -> 8 (residual)
    p["s1_w"] = init_conv(kg, 8, 8, 3); p["s1_bn"] = init_bn(kg, 8)
    # stage2: Fused-MBConv e=4, 3x3 s2, 8 -> 16
    p["s2_exp_w"] = init_conv(kg, 8, 32, 3); p["s2_exp_bn"] = init_bn(kg, 32)
    p["s2_prj_w"] = init_conv(kg, 32, 16, 1); p["s2_prj_bn"] = init_bn(kg, 16)
    # stage3: MBConv e=4, dw 3x3 s2, SE 0.25, 16 -> 32
    p["s3_exp_w"] = init_conv(kg, 16, 64, 1); p["s3_exp_bn"] = init_bn(kg, 64)
    p["s3_dw_w"] = init_dwconv(kg, 64, 3); p["s3_dw_bn"] = init_bn(kg, 64)
    p["s3_se_w1"], p["s3_se_b1"] = init_linear(kg, 64, 4)
    p["s3_se_w2"], p["s3_se_b2"] = init_linear(kg, 4, 64)
    p["s3_prj_w"] = init_conv(kg, 64, 32, 1); p["s3_prj_bn"] = init_bn(kg, 32)
    # head: 1x1 conv 32 -> 64
    p["head_w"] = init_conv(kg, 32, 64, 1); p["head_bn"] = init_bn(kg, 64)
    # classifier: Linear(feature_dim=64, out_size)
    p["cls_w"], p["cls_b"] = init_linear(kg, 64, out_size)
    return p


# ---------------------------- forward ----------------------------

def efficientnetv2l_forward(params, x_nchw):
    x = jnp.transpose(x_nchw, (0, 2, 3, 1)).astype(ACT_DTYPE)   # NCHW -> NHWC (bf16 storage)
    x = _pad_channels(x, 8)                                     # stem cin 3 -> 8 (sublane pad)
    # stem
    x = conv_bn_act(x, params["stem_w"], params["stem_bn"], 3, 2, "silu")
    # stage1: Fused-MBConv e=1 (conv-bn-silu, residual add fused into the matmul epilogue)
    x = conv_bn_act(x, params["s1_w"], params["s1_bn"], 3, 1, "silu", residual=x)
    # stage2: Fused-MBConv e=4 s=2
    x = conv_bn_act(x, params["s2_exp_w"], params["s2_exp_bn"], 3, 2, "silu")
    x = conv_bn_act(x, params["s2_prj_w"], params["s2_prj_bn"], 1, 1, "none")
    # stage3: MBConv e=4 s=2 with SE (scale fused into the projection conv)
    x = conv_bn_act(x, params["s3_exp_w"], params["s3_exp_bn"], 1, 1, "silu")
    x = dwconv_bn_act(x, params["s3_dw_w"], params["s3_dw_bn"], 3, 2, "silu")
    x = squeeze_excite_project(x, params["s3_se_w1"], params["s3_se_b1"],
                               params["s3_se_w2"], params["s3_se_b2"],
                               params["s3_prj_w"], params["s3_prj_bn"])
    # head conv
    x = conv_bn_act(x, params["head_w"], params["head_bn"], 1, 1, "silu")
    # global average pool + classifier fused in one kernel (matches nn.Linear(feature_dim, out))
    N, H, W, C = x.shape
    out_size = params["cls_b"].shape[0]
    w_cls = jnp.pad(params["cls_w"],
                    ((0, C - params["cls_w"].shape[0]), (0, LANES - out_size)))
    b_cls = jnp.pad(params["cls_b"], (0, LANES - out_size))
    logits_pad = pool_classifier(x.reshape(N, H * W, C), w_cls, b_cls)   # (N, 128) f32
    return logits_pad[:, :out_size]                                      # (N, out_size)


if __name__ == "__main__":
    key = jax.random.PRNGKey(0)
    x = jax.random.normal(key, (2, 3, 32, 32), jnp.float32)  # NCHW, as in PyTorch
    params = init_params(seed=0, out_size=1)
    fwd = jax.jit(efficientnetv2l_forward)
    out = fwd(params, x)
    out = jax.block_until_ready(out)
    assert out.shape == (2, 1) and out.dtype == jnp.float32
    print("KERNEL_OK")
</pallas_src>

<mosaic_0001>
module attributes {stable_mosaic.version = 11 : i64} {
  func.func @kernel(%arg0: i32, %arg1: memref<512x72xbf16, #tpu.memory_space<vmem>>, %arg2: memref<72x128xbf16, #tpu.memory_space<vmem>>, %arg3: memref<1x128xf32, #tpu.memory_space<vmem>>, %arg4: memref<512x128xbf16, #tpu.memory_space<vmem>>) attributes {dimension_semantics = [#tpu.dimension_semantics<parallel>], iteration_bounds = array<i64: 1>, scalar_prefetch = 0 : i64, scratch_operands = 0 : i64, tpu.core_type = #tpu.core_type<tc>, window_params = [{transform_indices = @transform_0, window_bounds = array<i64: 512, 72>}, {pipeline_mode = #tpu.pipeline_mode<synchronous>, transform_indices = @transform_1, window_bounds = array<i64: 72, 128>}, {pipeline_mode = #tpu.pipeline_mode<synchronous>, transform_indices = @transform_2, window_bounds = array<i64: 1, 128>}, {transform_indices = @transform_3, window_bounds = array<i64: 512, 128>}]} {
    %c0 = arith.constant 0 : index
    %c0_0 = arith.constant 0 : index
    %0 = vector.load %arg1[%c0, %c0_0] : memref<512x72xbf16, #tpu.memory_space<vmem>>, vector<512x72xbf16>
    %c0_1 = arith.constant 0 : index
    %c0_2 = arith.constant 0 : index
    %1 = vector.load %arg2[%c0_1, %c0_2] : memref<72x128xbf16, #tpu.memory_space<vmem>>, vector<72x128xbf16>
    %cst = arith.constant dense<0.000000e+00> : vector<512x128xf32>
    %2 = tpu.matmul %0, %1, %cst {dimension_numbers = #tpu.dot_dimension_numbers<[1], [0], [0], [1], [0, 0, 1, 1], [], []>} : vector<512x72xbf16>, vector<72x128xbf16>, vector<512x128xf32> -> vector<512x128xf32>
    %c0_3 = arith.constant 0 : index
    %c0_4 = arith.constant 0 : index
    %3 = vector.load %arg3[%c0_3, %c0_4] : memref<1x128xf32, #tpu.memory_space<vmem>>, vector<1x128xf32>
    %4 = vector.broadcast %3 : vector<1x128xf32> to vector<512x128xf32>
    %5 = arith.addf %2, %4 : vector<512x128xf32>
    %6 = arith.negf %5 : vector<512x128xf32>
    %7 = math.exp %6 : vector<512x128xf32>
    %cst_5 = arith.constant 1.000000e+00 : f32
    %8 = vector.broadcast %cst_5 : f32 to vector<512x128xf32>
    %9 = arith.addf %8, %7 : vector<512x128xf32>
    %10 = arith.divf %8, %9 : vector<512x128xf32>
    %11 = arith.mulf %5, %10 : vector<512x128xf32>
    %12 = arith.truncf %11 : vector<512x128xf32> to vector<512x128xbf16>
    %c0_6 = arith.constant 0 : index
    %c0_7 = arith.constant 0 : index
    %13 = vector.load %arg4[%c0_6, %c0_7] : memref<512x128xbf16, #tpu.memory_space<vmem>>, vector<512x128xbf16>
    tpu.vector_store %arg4[%c0_6, %c0_7], %12 {strides = array<i32>} : memref<512x128xbf16, #tpu.memory_space<vmem>>, vector<512x128xbf16>,
    return
  }
  func.func @transform_0(%arg0: i32) -> (i32, i32) {
    %c0_i32 = arith.constant 0 : i32
    %c0_i32_0 = arith.constant 0 : i32
    return %arg0, %c0_i32 : i32, i32
  }
  func.func @transform_1(%arg0: i32) -> (i32, i32) {
    %c0_i32 = arith.constant 0 : i32
    %c0_i32_0 = arith.constant 0 : i32
    %c0_i32_1 = arith.constant 0 : i32
    return %c0_i32, %c0_i32_0 : i32, i32
  }
  func.func @transform_2(%arg0: i32) -> (i32, i32) {
    %c0_i32 = arith.constant 0 : i32
    %c0_i32_0 = arith.constant 0 : i32
    %c0_i32_1 = arith.constant 0 : i32
    return %c0_i32, %c0_i32_0 : i32, i32
  }
  func.func @transform_3(%arg0: i32) -> (i32, i32) {
    %c0_i32 = arith.constant 0 : i32
    %c0_i32_0 = arith.constant 0 : i32
    return %arg0, %c0_i32 : i32, i32
  }
}

module attributes {stable_mosaic.version = 11 : i64} {
  func.func @kernel(%arg0: i32, %arg1: memref<512x1152xbf16, #tpu.memory_space<vmem>>, %arg2: memref<1152x128xbf16, #tpu.memory_space<vmem>>, %arg3: memref<1x128xf32, #tpu.memory_space<vmem>>, %arg4: memref<512x128xbf16, #tpu.memory_space<vmem>>, %arg5: memref<512x128xbf16, #tpu.memory_space<vmem>>) attributes {dimension_semantics = [#tpu.dimension_semantics<parallel>], iteration_bounds = array<i64: 1>, scalar_prefetch = 0 : i64, scratch_operands = 0 : i64, tpu.core_type = #tpu.core_type<tc>, window_params = [{transform_indices = @transform_0, window_bounds = array<i64: 512, 1152>}, {pipeline_mode = #tpu.pipeline_mode<synchronous>, transform_indices = @transform_1, window_bounds = array<i64: 1152, 128>}, {pipeline_mode = #tpu.pipeline_mode<synchronous>, transform_indices = @transform_2, window_bounds = array<i64: 1, 128>}, {transform_indices = @transform_3, window_bounds = array<i64: 512, 128>}, {transform_indices = @transform_4, window_bounds = array<i64: 512, 128>}]} {
    %c0 = arith.constant 0 : index
    %c0_0 = arith.constant 0 : index
    %0 = vector.load %arg1[%c0, %c0_0] : memref<512x1152xbf16, #tpu.memory_space<vmem>>, vector<512x1152xbf16>
    %c0_1 = arith.constant 0 : index
    %c0_2 = arith.constant 0 : index
    %1 = vector.load %arg2[%c0_1, %c0_2] : memref<1152x128xbf16, #tpu.memory_space<vmem>>, vector<1152x128xbf16>
    %cst = arith.constant dense<0.000000e+00> : vector<512x128xf32>
    %2 = tpu.matmul %0, %1, %cst {dimension_numbers = #tpu.dot_dimension_numbers<[1], [0], [0], [1], [0, 0, 1, 1], [], []>} : vector<512x1152xbf16>, vector<1152x128xbf16>, vector<512x128xf32> -> vector<512x128xf32>
    %c0_3 = arith.constant 0 : index
    %c0_4 = arith.constant 0 : index
    %3 = vector.load %arg3[%c0_3, %c0_4] : memref<1x128xf32, #tpu.memory_space<vmem>>, vector<1x128xf32>
    %4 = vector.broadcast %3 : vector<1x128xf32> to vector<512x128xf32>
    %5 = arith.addf %2, %4 : vector<512x128xf32>
    %6 = arith.negf %5 : vector<512x128xf32>
    %7 = math.exp %6 : vector<512x128xf32>
    %cst_5 = arith.constant 1.000000e+00 : f32
    %8 = vector.broadcast %cst_5 : f32 to vector<512x128xf32>
    %9 = arith.addf %8, %7 : vector<512x128xf32>
    %10 = arith.divf %8, %9 : vector<512x128xf32>
    %11 = arith.mulf %5, %10 : vector<512x128xf32>
    %c0_6 = arith.constant 0 : index
    %c0_7 = arith.constant 0 : index
    %12 = vector.load %arg4[%c0_6, %c0_7] : memref<512x128xbf16, #tpu.memory_space<vmem>>, vector<512x128xbf16>
    %13 = arith.extf %12 : vector<512x128xbf16> to vector<512x128xf32>
    %14 = arith.addf %11, %13 : vector<512x128xf32>
    %15 = arith.truncf %14 : vector<512x128xf32> to vector<512x128xbf16>
    %c0_8 = arith.constant 0 : index
    %c0_9 = arith.constant 0 : index
    %16 = vector.load %arg5[%c0_8, %c0_9] : memref<512x128xbf16, #tpu.memory_space<vmem>>, vector<512x128xbf16>
    tpu.vector_store %arg5[%c0_8, %c0_9], %15 {strides = array<i32>} : memref<512x128xbf16, #tpu.memory_space<vmem>>, vector<512x128xbf16>,
    return
  }
  func.func @transform_0(%arg0: i32) -> (i32, i32) {
    %c0_i32 = arith.constant 0 : i32
    %c0_i32_0 = arith.constant 0 : i32
    return %arg0, %c0_i32 : i32, i32
  }
  func.func @transform_1(%arg0: i32) -> (i32, i32) {
    %c0_i32 = arith.constant 0 : i32
    %c0_i32_0 = arith.constant 0 : i32
    %c0_i32_1 = arith.constant 0 : i32
    return %c0_i32, %c0_i32_0 : i32, i32
  }
  func.func @transform_2(%arg0: i32) -> (i32, i32) {
    %c0_i32 = arith.constant 0 : i32
    %c0_i32_0 = arith.constant 0 : i32
    %c0_i32_1 = arith.constant 0 : i32
    return %c0_i32, %c0_i32_0 : i32, i32
  }
  func.func @transform_3(%arg0: i32) -> (i32, i32) {
    %c0_i32 = arith.constant 0 : i32
    %c0_i32_0 = arith.constant 0 : i32
    return %arg0, %c0_i32 : i32, i32
  }
  func.func @transform_4(%arg0: i32) -> (i32, i32) {
    %c0_i32 = arith.constant 0 : i32
    %c0_i32_0 = arith.constant 0 : i32
    return %arg0, %c0_i32 : i32, i32
  }
}

module attributes {stable_mosaic.version = 11 : i64} {
  func.func @kernel(%arg0: i32, %arg1: memref<128x1152xbf16, #tpu.memory_space<vmem>>, %arg2: memref<1152x128xbf16, #tpu.memory_space<vmem>>, %arg3: memref<1x128xf32, #tpu.memory_space<vmem>>, %arg4: memref<128x128xbf16, #tpu.memory_space<vmem>>) attributes {dimension_semantics = [#tpu.dimension_semantics<parallel>], iteration_bounds = array<i64: 1>, scalar_prefetch = 0 : i64, scratch_operands = 0 : i64, tpu.core_type = #tpu.core_type<tc>, window_params = [{transform_indices = @transform_0, window_bounds = array<i64: 128, 1152>}, {pipeline_mode = #tpu.pipeline_mode<synchronous>, transform_indices = @transform_1, window_bounds = array<i64: 1152, 128>}, {pipeline_mode = #tpu.pipeline_mode<synchronous>, transform_indices = @transform_2, window_bounds = array<i64: 1, 128>}, {transform_indices = @transform_3, window_bounds = array<i64: 128, 128>}]} {
    %c0 = arith.constant 0 : index
    %c0_0 = arith.constant 0 : index
    %0 = vector.load %arg1[%c0, %c0_0] : memref<128x1152xbf16, #tpu.memory_space<vmem>>, vector<128x1152xbf16>
    %c0_1 = arith.constant 0 : index
    %c0_2 = arith.constant 0 : index
    %1 = vector.load %arg2[%c0_1, %c0_2] : memref<1152x128xbf16, #tpu.memory_space<vmem>>, vector<1152x128xbf16>
    %cst = arith.constant dense<0.000000e+00> : vector<128x128xf32>
    %2 = tpu.matmul %0, %1, %cst {dimension_numbers = #tpu.dot_dimension_numbers<[1], [0], [0], [1], [0, 0, 1, 1], [], []>} : vector<128x1152xbf16>, vector<1152x128xbf16>, vector<128x128xf32> -> vector<128x128xf32>
    %c0_3 = arith.constant 0 : index
    %c0_4 = arith.constant 0 : index
    %3 = vector.load %arg3[%c0_3, %c0_4] : memref<1x128xf32, #tpu.memory_space<vmem>>, vector<1x128xf32>
    %4 = vector.broadcast %3 : vector<1x128xf32> to vector<128x128xf32>
    %5 = arith.addf %2, %4 : vector<128x128xf32>
    %6 = arith.negf %5 : vector<128x128xf32>
    %7 = math.exp %6 : vector<128x128xf32>
    %cst_5 = arith.constant 1.000000e+00 : f32
    %8 = vector.broadcast %cst_5 : f32 to vector<128x128xf32>
    %9 = arith.addf %8, %7 : vector<128x128xf32>
    %10 = arith.divf %8, %9 : vector<128x128xf32>
    %11 = arith.mulf %5, %10 : vector<128x128xf32>
    %12 = arith.truncf %11 : vector<128x128xf32> to vector<128x128xbf16>
    %c0_6 = arith.constant 0 : index
    %c0_7 = arith.constant 0 : index
    %13 = vector.load %arg4[%c0_6, %c0_7] : memref<128x128xbf16, #tpu.memory_space<vmem>>, vector<128x128xbf16>
    tpu.vector_store %arg4[%c0_6, %c0_7], %12 {strides = array<i32>} : memref<128x128xbf16, #tpu.memory_space<vmem>>, vector<128x128xbf16>,
    return
  }
  func.func @transform_0(%arg0: i32) -> (i32, i32) {
    %c0_i32 = arith.constant 0 : i32
    %c0_i32_0 = arith.constant 0 : i32
    return %arg0, %c0_i32 : i32, i32
  }
  func.func @transform_1(%arg0: i32) -> (i32, i32) {
    %c0_i32 = arith.constant 0 : i32
    %c0_i32_0 = arith.constant 0 : i32
    %c0_i32_1 = arith.constant 0 : i32
    return %c0_i32, %c0_i32_0 : i32, i32
  }
  func.func @transform_2(%arg0: i32) -> (i32, i32) {
    %c0_i32 = arith.constant 0 : i32
    %c0_i32_0 = arith.constant 0 : i32
    %c0_i32_1 = arith.constant 0 : i32
    return %c0_i32, %c0_i32_0 : i32, i32
  }
  func.func @transform_3(%arg0: i32) -> (i32, i32) {
    %c0_i32 = arith.constant 0 : i32
    %c0_i32_0 = arith.constant 0 : i32
    return %arg0, %c0_i32 : i32, i32
  }
}

module attributes {stable_mosaic.version = 11 : i64} {
  func.func @kernel(%arg0: i32, %arg1: memref<128x128xbf16, #tpu.memory_space<vmem>>, %arg2: memref<128x128xbf16, #tpu.memory_space<vmem>>, %arg3: memref<1x128xf32, #tpu.memory_space<vmem>>, %arg4: memref<128x128xbf16, #tpu.memory_space<vmem>>) attributes {dimension_semantics = [#tpu.dimension_semantics<parallel>], iteration_bounds = array<i64: 1>, scalar_prefetch = 0 : i64, scratch_operands = 0 : i64, tpu.core_type = #tpu.core_type<tc>, window_params = [{transform_indices = @transform_0, window_bounds = array<i64: 128, 128>}, {pipeline_mode = #tpu.pipeline_mode<synchronous>, transform_indices = @transform_1, window_bounds = array<i64: 128, 128>}, {pipeline_mode = #tpu.pipeline_mode<synchronous>, transform_indices = @transform_2, window_bounds = array<i64: 1, 128>}, {transform_indices = @transform_3, window_bounds = array<i64: 128, 128>}]} {
    %c0 = arith.constant 0 : index
    %c0_0 = arith.constant 0 : index
    %0 = vector.load %arg1[%c0, %c0_0] : memref<128x128xbf16, #tpu.memory_space<vmem>>, vector<128x128xbf16>
    %c0_1 = arith.constant 0 : index
    %c0_2 = arith.constant 0 : index
    %1 = vector.load %arg2[%c0_1, %c0_2] : memref<128x128xbf16, #tpu.memory_space<vmem>>, vector<128x128xbf16>
    %cst = arith.constant dense<0.000000e+00> : vector<128x128xf32>
    %2 = tpu.matmul %0, %1, %cst {dimension_numbers = #tpu.dot_dimension_numbers<[1], [0], [0], [1], [0, 0, 1, 1], [], []>} : vector<128x128xbf16>, vector<128x128xbf16>, vector<128x128xf32> -> vector<128x128xf32>
    %c0_3 = arith.constant 0 : index
    %c0_4 = arith.constant 0 : index
    %3 = vector.load %arg3[%c0_3, %c0_4] : memref<1x128xf32, #tpu.memory_space<vmem>>, vector<1x128xf32>
    %4 = vector.broadcast %3 : vector<1x128xf32> to vector<128x128xf32>
    %5 = arith.addf %2, %4 : vector<128x128xf32>
    %6 = arith.truncf %5 : vector<128x128xf32> to vector<128x128xbf16>
    %c0_5 = arith.constant 0 : index
    %c0_6 = arith.constant 0 : index
    %7 = vector.load %arg4[%c0_5, %c0_6] : memref<128x128xbf16, #tpu.memory_space<vmem>>, vector<128x128xbf16>
    tpu.vector_store %arg4[%c0_5, %c0_6], %6 {strides = array<i32>} : memref<128x128xbf16, #tpu.memory_space<vmem>>, vector<128x128xbf16>,
    return
  }
  func.func @transform_0(%arg0: i32) -> (i32, i32) {
    %c0_i32 = arith.constant 0 : i32
    %c0_i32_0 = arith.constant 0 : i32
    return %arg0, %c0_i32 : i32, i32
  }
  func.func @transform_1(%arg0: i32) -> (i32, i32) {
    %c0_i32 = arith.constant 0 : i32
    %c0_i32_0 = arith.constant 0 : i32
    %c0_i32_1 = arith.constant 0 : i32
    return %c0_i32, %c0_i32_0 : i32, i32
  }
  func.func @transform_2(%arg0: i32) -> (i32, i32) {
    %c0_i32 = arith.constant 0 : i32
    %c0_i32_0 = arith.constant 0 : i32
    %c0_i32_1 = arith.constant 0 : i32
    return %c0_i32, %c0_i32_0 : i32, i32
  }
  func.func @transform_3(%arg0: i32) -> (i32, i32) {
    %c0_i32 = arith.constant 0 : i32
    %c0_i32_0 = arith.constant 0 : i32
    return %arg0, %c0_i32 : i32, i32
  }
}

module attributes {stable_mosaic.version = 11 : i64} {
  func.func @kernel(%arg0: i32, %arg1: memref<128x128xbf16, #tpu.memory_space<vmem>>, %arg2: memref<128x128xbf16, #tpu.memory_space<vmem>>, %arg3: memref<1x128xf32, #tpu.memory_space<vmem>>, %arg4: memref<128x128xbf16, #tpu.memory_space<vmem>>) attributes {dimension_semantics = [#tpu.dimension_semantics<parallel>], iteration_bounds = array<i64: 1>, scalar_prefetch = 0 : i64, scratch_operands = 0 : i64, tpu.core_type = #tpu.core_type<tc>, window_params = [{transform_indices = @transform_0, window_bounds = array<i64: 128, 128>}, {pipeline_mode = #tpu.pipeline_mode<synchronous>, transform_indices = @transform_1, window_bounds = array<i64: 128, 128>}, {pipeline_mode = #tpu.pipeline_mode<synchronous>, transform_indices = @transform_2, window_bounds = array<i64: 1, 128>}, {transform_indices = @transform_3, window_bounds = array<i64: 128, 128>}]} {
    %c0 = arith.constant 0 : index
    %c0_0 = arith.constant 0 : index
    %0 = vector.load %arg1[%c0, %c0_0] : memref<128x128xbf16, #tpu.memory_space<vmem>>, vector<128x128xbf16>
    %c0_1 = arith.constant 0 : index
    %c0_2 = arith.constant 0 : index
    %1 = vector.load %arg2[%c0_1, %c0_2] : memref<128x128xbf16, #tpu.memory_space<vmem>>, vector<128x128xbf16>
    %cst = arith.constant dense<0.000000e+00> : vector<128x128xf32>
    %2 = tpu.matmul %0, %1, %cst {dimension_numbers = #tpu.dot_dimension_numbers<[1], [0], [0], [1], [0, 0, 1, 1], [], []>} : vector<128x128xbf16>, vector<128x128xbf16>, vector<128x128xf32> -> vector<128x128xf32>
    %c0_3 = arith.constant 0 : index
    %c0_4 = arith.constant 0 : index
    %3 = vector.load %arg3[%c0_3, %c0_4] : memref<1x128xf32, #tpu.memory_space<vmem>>, vector<1x128xf32>
    %4 = vector.broadcast %3 : vector<1x128xf32> to vector<128x128xf32>
    %5 = arith.addf %2, %4 : vector<128x128xf32>
    %6 = arith.negf %5 : vector<128x128xf32>
    %7 = math.exp %6 : vector<128x128xf32>
    %cst_5 = arith.constant 1.000000e+00 : f32
    %8 = vector.broadcast %cst_5 : f32 to vector<128x128xf32>
    %9 = arith.addf %8, %7 : vector<128x128xf32>
    %10 = arith.divf %8, %9 : vector<128x128xf32>
    %11 = arith.mulf %5, %10 : vector<128x128xf32>
    %12 = arith.truncf %11 : vector<128x128xf32> to vector<128x128xbf16>
    %c0_6 = arith.constant 0 : index
    %c0_7 = arith.constant 0 : index
    %13 = vector.load %arg4[%c0_6, %c0_7] : memref<128x128xbf16, #tpu.memory_space<vmem>>, vector<128x128xbf16>
    tpu.vector_store %arg4[%c0_6, %c0_7], %12 {strides = array<i32>} : memref<128x128xbf16, #tpu.memory_space<vmem>>, vector<128x128xbf16>,
    return
  }
  func.func @transform_0(%arg0: i32) -> (i32, i32) {
    %c0_i32 = arith.constant 0 : i32
    %c0_i32_0 = arith.constant 0 : i32
    return %arg0, %c0_i32 : i32, i32
  }
  func.func @transform_1(%arg0: i32) -> (i32, i32) {
    %c0_i32 = arith.constant 0 : i32
    %c0_i32_0 = arith.constant 0 : i32
    %c0_i32_1 = arith.constant 0 : i32
    return %c0_i32, %c0_i32_0 : i32, i32
  }
  func.func @transform_2(%arg0: i32) -> (i32, i32) {
    %c0_i32 = arith.constant 0 : i32
    %c0_i32_0 = arith.constant 0 : i32
    %c0_i32_1 = arith.constant 0 : i32
    return %c0_i32, %c0_i32_0 : i32, i32
  }
  func.func @transform_3(%arg0: i32) -> (i32, i32) {
    %c0_i32 = arith.constant 0 : i32
    %c0_i32_0 = arith.constant 0 : i32
    return %arg0, %c0_i32 : i32, i32
  }
}

module attributes {stable_mosaic.version = 11 : i64} {
  func.func @kernel(%arg0: i32, %arg1: memref<9x32x128xbf16, #tpu.memory_space<vmem>>, %arg2: memref<9x128xf32, #tpu.memory_space<vmem>>, %arg3: memref<1x128xf32, #tpu.memory_space<vmem>>, %arg4: memref<32x128xbf16, #tpu.memory_space<vmem>>) attributes {dimension_semantics = [#tpu.dimension_semantics<parallel>], iteration_bounds = array<i64: 1>, scalar_prefetch = 0 : i64, scratch_operands = 0 : i64, tpu.core_type = #tpu.core_type<tc>, window_params = [{transform_indices = @transform_0, window_bounds = array<i64: 9, 32, 128>}, {pipeline_mode = #tpu.pipeline_mode<synchronous>, transform_indices = @transform_1, window_bounds = array<i64: 9, 128>}, {pipeline_mode = #tpu.pipeline_mode<synchronous>, transform_indices = @transform_2, window_bounds = array<i64: 1, 128>}, {transform_indices = @transform_3, window_bounds = array<i64: 32, 128>}]} {
    %cst = arith.constant 0.000000e+00 : f32
    %0 = vector.broadcast %cst : f32 to vector<32x128xf32>
    %c0 = arith.constant 0 : index
    %c0_0 = arith.constant 0 : index
    %c0_1 = arith.constant 0 : index
    %1 = vector.load %arg1[%c0, %c0_0, %c0_1] : memref<9x32x128xbf16, #tpu.memory_space<vmem>>, vector<1x32x128xbf16>
    %2 = vector.shape_cast %1 : vector<1x32x128xbf16> to vector<32x128xbf16>
    %3 = arith.extf %2 : vector<32x128xbf16> to vector<32x128xf32>
    %c0_2 = arith.constant 0 : index
    %c0_3 = arith.constant 0 : index
    %4 = vector.load %arg2[%c0_2, %c0_3] : memref<9x128xf32, #tpu.memory_space<vmem>>, vector<1x128xf32>
    %5 = vector.broadcast %4 : vector<1x128xf32> to vector<32x128xf32>
    %6 = arith.mulf %3, %5 : vector<32x128xf32>
    %7 = arith.addf %0, %6 : vector<32x128xf32>
    %c1 = arith.constant 1 : index
    %c0_4 = arith.constant 0 : index
    %c0_5 = arith.constant 0 : index
    %8 = vector.load %arg1[%c1, %c0_4, %c0_5] : memref<9x32x128xbf16, #tpu.memory_space<vmem>>, vector<1x32x128xbf16>
    %9 = vector.shape_cast %8 : vector<1x32x128xbf16> to vector<32x128xbf16>
    %10 = arith.extf %9 : vector<32x128xbf16> to vector<32x128xf32>
    %c1_6 = arith.constant 1 : index
    %c0_7 = arith.constant 0 : index
    %11 = vector.load %arg2[%c1_6, %c0_7] : memref<9x128xf32, #tpu.memory_space<vmem>>, vector<1x128xf32>
    %12 = vector.broadcast %11 : vector<1x128xf32> to vector<32x128xf32>
    %13 = arith.mulf %10, %12 : vector<32x128xf32>
    %14 = arith.addf %7, %13 : vector<32x128xf32>
    %c2 = arith.constant 2 : index
    %c0_8 = arith.constant 0 : index
    %c0_9 = arith.constant 0 : index
    %15 = vector.load %arg1[%c2, %c0_8, %c0_9] : memref<9x32x128xbf16, #tpu.memory_space<vmem>>, vector<1x32x128xbf16>
    %16 = vector.shape_cast %15 : vector<1x32x128xbf16> to vector<32x128xbf16>
    %17 = arith.extf %16 : vector<32x128xbf16> to vector<32x128xf32>
    %c2_10 = arith.constant 2 : index
    %c0_11 = arith.constant 0 : index
    %18 = vector.load %arg2[%c2_10, %c0_11] : memref<9x128xf32, #tpu.memory_space<vmem>>, vector<1x128xf32>
    %19 = vector.broadcast %18 : vector<1x128xf32> to vector<32x128xf32>
    %20 = arith.mulf %17, %19 : vector<32x128xf32>
    %21 = arith.addf %14, %20 : vector<32x128xf32>
    %c3 = arith.constant 3 : index
    %c0_12 = arith.constant 0 : index
    %c0_13 = arith.constant 0 : index
    %22 = vector.load %arg1[%c3, %c0_12, %c0_13] : memref<9x32x128xbf16, #tpu.memory_space<vmem>>, vector<1x32x128xbf16>
    %23 = vector.shape_cast %22 : vector<1x32x128xbf16> to vector<32x128xbf16>
    %24 = arith.extf %23 : vector<32x128xbf16> to vector<32x128xf32>
    %c3_14 = arith.constant 3 : index
    %c0_15 = arith.constant 0 : index
    %25 = vector.load %arg2[%c3_14, %c0_15] : memref<9x128xf32, #tpu.memory_space<vmem>>, vector<1x128xf32>
    %26 = vector.broadcast %25 : vector<1x128xf32> to vector<32x128xf32>
    %27 = arith.mulf %24, %26 : vector<32x128xf32>
    %28 = arith.addf %21, %27 : vector<32x128xf32>
    %c4 = arith.constant 4 : index
    %c0_16 = arith.constant 0 : index
    %c0_17 = arith.constant 0 : index
    %29 = vector.load %arg1[%c4, %c0_16, %c0_17] : memref<9x32x128xbf16, #tpu.memory_space<vmem>>, vector<1x32x128xbf16>
    %30 = vector.shape_cast %29 : vector<1x32x128xbf16> to vector<32x128xbf16>
    %31 = arith.extf %30 : vector<32x128xbf16> to vector<32x128xf32>
    %c4_18 = arith.constant 4 : index
    %c0_19 = arith.constant 0 : index
    %32 = vector.load %arg2[%c4_18, %c0_19] : memref<9x128xf32, #tpu.memory_space<vmem>>, vector<1x128xf32>
    %33 = vector.broadcast %32 : vector<1x128xf32> to vector<32x128xf32>
    %34 = arith.mulf %31, %33 : vector<32x128xf32>
    %35 = arith.addf %28, %34 : vector<32x128xf32>
    %c5 = arith.constant 5 : index
    %c0_20 = arith.constant 0 : index
    %c0_21 = arith.constant 0 : index
    %36 = vector.load %arg1[%c5, %c0_20, %c0_21] : memref<9x32x128xbf16, #tpu.memory_space<vmem>>, vector<1x32x128xbf16>
    %37 = vector.shape_cast %36 : vector<1x32x128xbf16> to vector<32x128xbf16>
    %38 = arith.extf %37 : vector<32x128xbf16> to vector<32x128xf32>
    %c5_22 = arith.constant 5 : index
    %c0_23 = arith.constant 0 : index
    %39 = vector.load %arg2[%c5_22, %c0_23] : memref<9x128xf32, #tpu.memory_space<vmem>>, vector<1x128xf32>
    %40 = vector.broadcast %39 : vector<1x128xf32> to vector<32x128xf32>
    %41 = arith.mulf %38, %40 : vector<32x128xf32>
    %42 = arith.addf %35, %41 : vector<32x128xf32>
    %c6 = arith.constant 6 : index
    %c0_24 = arith.constant 0 : index
    %c0_25 = arith.constant 0 : index
    %43 = vector.load %arg1[%c6, %c0_24, %c0_25] : memref<9x32x128xbf16, #tpu.memory_space<vmem>>, vector<1x32x128xbf16>
    %44 = vector.shape_cast %43 : vector<1x32x128xbf16> to vector<32x128xbf16>
    %45 = arith.extf %44 : vector<32x128xbf16> to vector<32x128xf32>
    %c6_26 = arith.constant 6 : index
    %c0_27 = arith.constant 0 : index
    %46 = vector.load %arg2[%c6_26, %c0_27] : memref<9x128xf32, #tpu.memory_space<vmem>>, vector<1x128xf32>
    %47 = vector.broadcast %46 : vector<1x128xf32> to vector<32x128xf32>
    %48 = arith.mulf %45, %47 : vector<32x128xf32>
    %49 = arith.addf %42, %48 : vector<32x128xf32>
    %c7 = arith.constant 7 : index
    %c0_28 = arith.constant 0 : index
    %c0_29 = arith.constant 0 : index
    %50 = vector.load %arg1[%c7, %c0_28, %c0_29] : memref<9x32x128xbf16, #tpu.memory_space<vmem>>, vector<1x32x128xbf16>
    %51 = vector.shape_cast %50 : vector<1x32x128xbf16> to vector<32x128xbf16>
    %52 = arith.extf %51 : vector<32x128xbf16> to vector<32x128xf32>
    %c7_30 = arith.constant 7 : index
    %c0_31 = arith.constant 0 : index
    %53 = vector.load %arg2[%c7_30, %c0_31] : memref<9x128xf32, #tpu.memory_space<vmem>>, vector<1x128xf32>
    %54 = vector.broadcast %53 : vector<1x128xf32> to vector<32x128xf32>
    %55 = arith.mulf %52, %54 : vector<32x128xf32>
    %56 = arith.addf %49, %55 : vector<32x128xf32>
    %c8 = arith.constant 8 : index
    %c0_32 = arith.constant 0 : index
    %c0_33 = arith.constant 0 : index
    %57 = vector.load %arg1[%c8, %c0_32, %c0_33] : memref<9x32x128xbf16, #tpu.memory_space<vmem>>, vector<1x32x128xbf16>
    %58 = vector.shape_cast %57 : vector<1x32x128xbf16> to vector<32x128xbf16>
    %59 = arith.extf %58 : vector<32x128xbf16> to vector<32x128xf32>
    %c8_34 = arith.constant 8 : index
    %c0_35 = arith.constant 0 : index
    %60 = vector.load %arg2[%c8_34, %c0_35] : memref<9x128xf32, #tpu.memory_space<vmem>>, vector<1x128xf32>
    %61 = vector.broadcast %60 : vector<1x128xf32> to vector<32x128xf32>
    %62 = arith.mulf %59, %61 : vector<32x128xf32>
    %63 = arith.addf %56, %62 : vector<32x128xf32>
    %c0_36 = arith.constant 0 : index
    %c0_37 = arith.constant 0 : index
    %64 = vector.load %arg3[%c0_36, %c0_37] : memref<1x128xf32, #tpu.memory_space<vmem>>, vector<1x128xf32>
    %65 = vector.broadcast %64 : vector<1x128xf32> to vector<32x128xf32>
    %66 = arith.addf %63, %65 : vector<32x128xf32>
    %67 = arith.negf %66 : vector<32x128xf32>
    %68 = math.exp %67 : vector<32x128xf32>
    %cst_38 = arith.constant 1.000000e+00 : f32
    %69 = vector.broadcast %cst_38 : f32 to vector<32x128xf32>
    %70 = arith.addf %69, %68 : vector<32x128xf32>
    %71 = arith.divf %69, %70 : vector<32x128xf32>
    %72 = arith.mulf %66, %71 : vector<32x128xf32>
    %73 = arith.truncf %72 : vector<32x128xf32> to vector<32x128xbf16>
    %c0_39 = arith.constant 0 : index
    %c0_40 = arith.constant 0 : index
    %74 = vector.load %arg4[%c0_39, %c0_40] : memref<32x128xbf16, #tpu.memory_space<vmem>>, vector<32x128xbf16>
    tpu.vector_store %arg4[%c0_39, %c0_40], %73 {strides = array<i32>} : memref<32x128xbf16, #tpu.memory_space<vmem>>, vector<32x128xbf16>,
    return
  }
  func.func @transform_0(%arg0: i32) -> (i32, i32, i32) {
    %c0_i32 = arith.constant 0 : i32
    %c0_i32_0 = arith.constant 0 : i32
    %c0_i32_1 = arith.constant 0 : i32
    return %c0_i32, %arg0, %c0_i32_0 : i32, i32, i32
  }
  func.func @transform_1(%arg0: i32) -> (i32, i32) {
    %c0_i32 = arith.constant 0 : i32
    %c0_i32_0 = arith.constant 0 : i32
    %c0_i32_1 = arith.constant 0 : i32
    return %c0_i32, %c0_i32_0 : i32, i32
  }
  func.func @transform_2(%arg0: i32) -> (i32, i32) {
    %c0_i32 = arith.constant 0 : i32
    %c0_i32_0 = arith.constant 0 : i32
    %c0_i32_1 = arith.constant 0 : i32
    return %c0_i32, %c0_i32_0 : i32, i32
  }
  func.func @transform_3(%arg0: i32) -> (i32, i32) {
    %c0_i32 = arith.constant 0 : i32
    %c0_i32_0 = arith.constant 0 : i32
    return %arg0, %c0_i32 : i32, i32
  }
}

module attributes {stable_mosaic.version = 11 : i64} {
  func.func @kernel(%arg0: memref<2x16x128xbf16, #tpu.memory_space<vmem>>, %arg1: memref<128x128xbf16, #tpu.memory_space<vmem>>, %arg2: memref<1x128xf32, #tpu.memory_space<vmem>>, %arg3: memref<128x128xbf16, #tpu.memory_space<vmem>>, %arg4: memref<1x128xf32, #tpu.memory_space<vmem>>, %arg5: memref<2x128xbf16, #tpu.memory_space<vmem>>) attributes {dimension_semantics = [], scalar_prefetch = 0 : i64, scratch_operands = 0 : i64, tpu.core_type = #tpu.core_type<tc>} {
    %c0 = arith.constant 0 : index
    %c0_0 = arith.constant 0 : index
    %c0_1 = arith.constant 0 : index
    %0 = vector.load %arg0[%c0, %c0_0, %c0_1] : memref<2x16x128xbf16, #tpu.memory_space<vmem>>, vector<2x16x128xbf16>
    %1 = arith.extf %0 : vector<2x16x128xbf16> to vector<2x16x128xf32>
    %cst = arith.constant dense<0.000000e+00> : vector<2x128xf32>
    %2 = vector.multi_reduction <add>, %1, %cst [1] : vector<2x16x128xf32> to vector<2x128xf32>
    %cst_2 = arith.constant 6.250000e-02 : f32
    %3 = vector.broadcast %cst_2 : f32 to vector<2x128xf32>
    %4 = arith.mulf %2, %3 : vector<2x128xf32>
    %5 = arith.truncf %4 : vector<2x128xf32> to vector<2x128xbf16>
    %c0_3 = arith.constant 0 : index
    %c0_4 = arith.constant 0 : index
    %6 = vector.load %arg1[%c0_3, %c0_4] : memref<128x128xbf16, #tpu.memory_space<vmem>>, vector<128x128xbf16>
    %cst_5 = arith.constant dense<0.000000e+00> : vector<2x128xf32>
    %7 = tpu.matmul %5, %6, %cst_5 {dimension_numbers = #tpu.dot_dimension_numbers<[1], [0], [0], [1], [0, 0, 1, 1], [], []>} : vector<2x128xbf16>, vector<128x128xbf16>, vector<2x128xf32> -> vector<2x128xf32>
    %c0_6 = arith.constant 0 : index
    %c0_7 = arith.constant 0 : index
    %8 = vector.load %arg2[%c0_6, %c0_7] : memref<1x128xf32, #tpu.memory_space<vmem>>, vector<1x128xf32>
    %9 = vector.broadcast %8 : vector<1x128xf32> to vector<2x128xf32>
    %10 = arith.addf %7, %9 : vector<2x128xf32>
    %11 = arith.negf %10 : vector<2x128xf32>
    %12 = math.exp %11 : vector<2x128xf32>
    %cst_8 = arith.constant 1.000000e+00 : f32
    %13 = vector.broadcast %cst_8 : f32 to vector<2x128xf32>
    %14 = arith.addf %13, %12 : vector<2x128xf32>
    %15 = arith.divf %13, %14 : vector<2x128xf32>
    %16 = arith.mulf %10, %15 : vector<2x128xf32>
    %17 = arith.truncf %16 : vector<2x128xf32> to vector<2x128xbf16>
    %c0_9 = arith.constant 0 : index
    %c0_10 = arith.constant 0 : index
    %18 = vector.load %arg3[%c0_9, %c0_10] : memref<128x128xbf16, #tpu.memory_space<vmem>>, vector<128x128xbf16>
    %cst_11 = arith.constant dense<0.000000e+00> : vector<2x128xf32>
    %19 = tpu.matmul %17, %18, %cst_11 {dimension_numbers = #tpu.dot_dimension_numbers<[1], [0], [0], [1], [0, 0, 1, 1], [], []>} : vector<2x128xbf16>, vector<128x128xbf16>, vector<2x128xf32> -> vector<2x128xf32>
    %c0_12 = arith.constant 0 : index
    %c0_13 = arith.constant 0 : index
    %20 = vector.load %arg4[%c0_12, %c0_13] : memref<1x128xf32, #tpu.memory_space<vmem>>, vector<1x128xf32>
    %21 = vector.broadcast %20 : vector<1x128xf32> to vector<2x128xf32>
    %22 = arith.addf %19, %21 : vector<2x128xf32>
    %23 = arith.negf %22 : vector<2x128xf32>
    %24 = math.exp %23 : vector<2x128xf32>
    %cst_14 = arith.constant 1.000000e+00 : f32
    %25 = vector.broadcast %cst_14 : f32 to vector<2x128xf32>
    %26 = arith.addf %25, %24 : vector<2x128xf32>
    %27 = arith.divf %25, %26 : vector<2x128xf32>
    %28 = arith.truncf %27 : vector<2x128xf32> to vector<2x128xbf16>
    %c0_15 = arith.constant 0 : index
    %c0_16 = arith.constant 0 : index
    %29 = vector.load %arg5[%c0_15, %c0_16] : memref<2x128xbf16, #tpu.memory_space<vmem>>, vector<2x128xbf16>
    tpu.vector_store %arg5[%c0_15, %c0_16], %28 {strides = array<i32>} : memref<2x128xbf16, #tpu.memory_space<vmem>>, vector<2x128xbf16>,
    return
  }
}

module attributes {stable_mosaic.version = 11 : i64} {
  func.func @kernel(%arg0: i32, %arg1: i32, %arg2: memref<1x16x128xbf16, #tpu.memory_space<vmem>>, %arg3: memref<1x1x128xbf16, #tpu.memory_space<vmem>>, %arg4: memref<128x128xbf16, #tpu.memory_space<vmem>>, %arg5: memref<1x128xf32, #tpu.memory_space<vmem>>, %arg6: memref<1x16x128xbf16, #tpu.memory_space<vmem>>) attributes {dimension_semantics = [#tpu.dimension_semantics<parallel>, #tpu.dimension_semantics<parallel>], iteration_bounds = array<i64: 2, 1>, scalar_prefetch = 0 : i64, scratch_operands = 0 : i64, tpu.core_type = #tpu.core_type<tc>, window_params = [{transform_indices = @transform_0, window_bounds = array<i64: 1, 16, 128>}, {transform_indices = @transform_1, window_bounds = array<i64: 1, 1, 128>}, {pipeline_mode = #tpu.pipeline_mode<synchronous>, transform_indices = @transform_2, window_bounds = array<i64: 128, 128>}, {pipeline_mode = #tpu.pipeline_mode<synchronous>, transform_indices = @transform_3, window_bounds = array<i64: 1, 128>}, {transform_indices = @transform_4, window_bounds = array<i64: 1, 16, 128>}]} {
    %c0 = arith.constant 0 : index
    %c0_0 = arith.constant 0 : index
    %c0_1 = arith.constant 0 : index
    %0 = vector.load %arg2[%c0, %c0_0, %c0_1] : memref<1x16x128xbf16, #tpu.memory_space<vmem>>, vector<1x16x128xbf16>
    %1 = vector.shape_cast %0 : vector<1x16x128xbf16> to vector<16x128xbf16>
    %2 = arith.extf %1 : vector<16x128xbf16> to vector<16x128xf32>
    %c0_2 = arith.constant 0 : index
    %c0_3 = arith.constant 0 : index
    %c0_4 = arith.constant 0 : index
    %3 = vector.load %arg3[%c0_2, %c0_3, %c0_4] : memref<1x1x128xbf16, #tpu.memory_space<vmem>>, vector<1x1x128xbf16>
    %4 = vector.shape_cast %3 : vector<1x1x128xbf16> to vector<1x128xbf16>
    %5 = arith.extf %4 : vector<1x128xbf16> to vector<1x128xf32>
    %6 = vector.broadcast %5 : vector<1x128xf32> to vector<16x128xf32>
    %7 = arith.mulf %2, %6 : vector<16x128xf32>
    %8 = arith.truncf %7 : vector<16x128xf32> to vector<16x128xbf16>
    %c0_5 = arith.constant 0 : index
    %c0_6 = arith.constant 0 : index
    %9 = vector.load %arg4[%c0_5, %c0_6] : memref<128x128xbf16, #tpu.memory_space<vmem>>, vector<128x128xbf16>
    %cst = arith.constant dense<0.000000e+00> : vector<16x128xf32>
    %10 = tpu.matmul %8, %9, %cst {dimension_numbers = #tpu.dot_dimension_numbers<[1], [0], [0], [1], [0, 0, 1, 1], [], []>} : vector<16x128xbf16>, vector<128x128xbf16>, vector<16x128xf32> -> vector<16x128xf32>
    %c0_7 = arith.constant 0 : index
    %c0_8 = arith.constant 0 : index
    %11 = vector.load %arg5[%c0_7, %c0_8] : memref<1x128xf32, #tpu.memory_space<vmem>>, vector<1x128xf32>
    %12 = vector.broadcast %11 : vector<1x128xf32> to vector<16x128xf32>
    %13 = arith.addf %10, %12 : vector<16x128xf32>
    %14 = arith.truncf %13 : vector<16x128xf32> to vector<16x128xbf16>
    %c0_9 = arith.constant 0 : index
    %c0_10 = arith.constant 0 : index
    %c0_11 = arith.constant 0 : index
    %15 = vector.load %arg6[%c0_9, %c0_10, %c0_11] : memref<1x16x128xbf16, #tpu.memory_space<vmem>>, vector<1x16x128xbf16>
    %16 = vector.shape_cast %15 : vector<1x16x128xbf16> to vector<16x128xbf16>
    %17 = vector.shape_cast %14 : vector<16x128xbf16> to vector<1x16x128xbf16>
    tpu.vector_store %arg6[%c0_9, %c0_10, %c0_11], %17 {strides = array<i32>} : memref<1x16x128xbf16, #tpu.memory_space<vmem>>, vector<1x16x128xbf16>,
    return
  }
  func.func @transform_0(%arg0: i32, %arg1: i32) -> (i32, i32, i32) {
    %c0_i32 = arith.constant 0 : i32
    %c0_i32_0 = arith.constant 0 : i32
    return %arg0, %arg1, %c0_i32 : i32, i32, i32
  }
  func.func @transform_1(%arg0: i32, %arg1: i32) -> (i32, i32, i32) {
    %c0_i32 = arith.constant 0 : i32
    %c0_i32_0 = arith.constant 0 : i32
    %c0_i32_1 = arith.constant 0 : i32
    return %arg0, %c0_i32, %c0_i32_0 : i32, i32, i32
  }
  func.func @transform_2(%arg0: i32, %arg1: i32) -> (i32, i32) {
    %c0_i32 = arith.constant 0 : i32
    %c0_i32_0 = arith.constant 0 : i32
    %c0_i32_1 = arith.constant 0 : i32
    return %c0_i32, %c0_i32_0 : i32, i32
  }
  func.func @transform_3(%arg0: i32, %arg1: i32) -> (i32, i32) {
    %c0_i32 = arith.constant 0 : i32
    %c0_i32_0 = arith.constant 0 : i32
    %c0_i32_1 = arith.constant 0 : i32
    return %c0_i32, %c0_i32_0 : i32, i32
  }
  func.func @transform_4(%arg0: i32, %arg1: i32) -> (i32, i32, i32) {
    %c0_i32 = arith.constant 0 : i32
    %c0_i32_0 = arith.constant 0 : i32
    return %arg0, %arg1, %c0_i32 : i32, i32, i32
  }
}

module attributes {stable_mosaic.version = 11 : i64} {
  func.func @kernel(%arg0: i32, %arg1: memref<32x128xbf16, #tpu.memory_space<vmem>>, %arg2: memref<128x128xbf16, #tpu.memory_space<vmem>>, %arg3: memref<1x128xf32, #tpu.memory_space<vmem>>, %arg4: memref<32x128xbf16, #tpu.memory_space<vmem>>) attributes {dimension_semantics = [#tpu.dimension_semantics<parallel>], iteration_bounds = array<i64: 1>, scalar_prefetch = 0 : i64, scratch_operands = 0 : i64, tpu.core_type = #tpu.core_type<tc>, window_params = [{transform_indices = @transform_0, window_bounds = array<i64: 32, 128>}, {pipeline_mode = #tpu.pipeline_mode<synchronous>, transform_indices = @transform_1, window_bounds = array<i64: 128, 128>}, {pipeline_mode = #tpu.pipeline_mode<synchronous>, transform_indices = @transform_2, window_bounds = array<i64: 1, 128>}, {transform_indices = @transform_3, window_bounds = array<i64: 32, 128>}]} {
    %c0 = arith.constant 0 : index
    %c0_0 = arith.constant 0 : index
    %0 = vector.load %arg1[%c0, %c0_0] : memref<32x128xbf16, #tpu.memory_space<vmem>>, vector<32x128xbf16>
    %c0_1 = arith.constant 0 : index
    %c0_2 = arith.constant 0 : index
    %1 = vector.load %arg2[%c0_1, %c0_2] : memref<128x128xbf16, #tpu.memory_space<vmem>>, vector<128x128xbf16>
    %cst = arith.constant dense<0.000000e+00> : vector<32x128xf32>
    %2 = tpu.matmul %0, %1, %cst {dimension_numbers = #tpu.dot_dimension_numbers<[1], [0], [0], [1], [0, 0, 1, 1], [], []>} : vector<32x128xbf16>, vector<128x128xbf16>, vector<32x128xf32> -> vector<32x128xf32>
    %c0_3 = arith.constant 0 : index
    %c0_4 = arith.constant 0 : index
    %3 = vector.load %arg3[%c0_3, %c0_4] : memref<1x128xf32, #tpu.memory_space<vmem>>, vector<1x128xf32>
    %4 = vector.broadcast %3 : vector<1x128xf32> to vector<32x128xf32>
    %5 = arith.addf %2, %4 : vector<32x128xf32>
    %6 = arith.negf %5 : vector<32x128xf32>
    %7 = math.exp %6 : vector<32x128xf32>
    %cst_5 = arith.constant 1.000000e+00 : f32
    %8 = vector.broadcast %cst_5 : f32 to vector<32x128xf32>
    %9 = arith.addf %8, %7 : vector<32x128xf32>
    %10 = arith.divf %8, %9 : vector<32x128xf32>
    %11 = arith.mulf %5, %10 : vector<32x128xf32>
    %12 = arith.truncf %11 : vector<32x128xf32> to vector<32x128xbf16>
    %c0_6 = arith.constant 0 : index
    %c0_7 = arith.constant 0 : index
    %13 = vector.load %arg4[%c0_6, %c0_7] : memref<32x128xbf16, #tpu.memory_space<vmem>>, vector<32x128xbf16>
    tpu.vector_store %arg4[%c0_6, %c0_7], %12 {strides = array<i32>} : memref<32x128xbf16, #tpu.memory_space<vmem>>, vector<32x128xbf16>,
    return
  }
  func.func @transform_0(%arg0: i32) -> (i32, i32) {
    %c0_i32 = arith.constant 0 : i32
    %c0_i32_0 = arith.constant 0 : i32
    return %arg0, %c0_i32 : i32, i32
  }
  func.func @transform_1(%arg0: i32) -> (i32, i32) {
    %c0_i32 = arith.constant 0 : i32
    %c0_i32_0 = arith.constant 0 : i32
    %c0_i32_1 = arith.constant 0 : i32
    return %c0_i32, %c0_i32_0 : i32, i32
  }
  func.func @transform_2(%arg0: i32) -> (i32, i32) {
    %c0_i32 = arith.constant 0 : i32
    %c0_i32_0 = arith.constant 0 : i32
    %c0_i32_1 = arith.constant 0 : i32
    return %c0_i32, %c0_i32_0 : i32, i32
  }
  func.func @transform_3(%arg0: i32) -> (i32, i32) {
    %c0_i32 = arith.constant 0 : i32
    %c0_i32_0 = arith.constant 0 : i32
    return %arg0, %c0_i32 : i32, i32
  }
}

module attributes {stable_mosaic.version = 11 : i64} {
  func.func @kernel(%arg0: memref<2x16x128xbf16, #tpu.memory_space<vmem>>, %arg1: memref<128x128xbf16, #tpu.memory_space<vmem>>, %arg2: memref<1x128xf32, #tpu.memory_space<vmem>>, %arg3: memref<2x128xf32, #tpu.memory_space<vmem>>) attributes {dimension_semantics = [], scalar_prefetch = 0 : i64, scratch_operands = 0 : i64, tpu.core_type = #tpu.core_type<tc>} {
    %c0 = arith.constant 0 : index
    %c0_0 = arith.constant 0 : index
    %c0_1 = arith.constant 0 : index
    %0 = vector.load %arg0[%c0, %c0_0, %c0_1] : memref<2x16x128xbf16, #tpu.memory_space<vmem>>, vector<2x16x128xbf16>
    %1 = arith.extf %0 : vector<2x16x128xbf16> to vector<2x16x128xf32>
    %cst = arith.constant dense<0.000000e+00> : vector<2x128xf32>
    %2 = vector.multi_reduction <add>, %1, %cst [1] : vector<2x16x128xf32> to vector<2x128xf32>
    %cst_2 = arith.constant 6.250000e-02 : f32
    %3 = vector.broadcast %cst_2 : f32 to vector<2x128xf32>
    %4 = arith.mulf %2, %3 : vector<2x128xf32>
    %5 = arith.truncf %4 : vector<2x128xf32> to vector<2x128xbf16>
    %c0_3 = arith.constant 0 : index
    %c0_4 = arith.constant 0 : index
    %6 = vector.load %arg1[%c0_3, %c0_4] : memref<128x128xbf16, #tpu.memory_space<vmem>>, vector<128x128xbf16>
    %cst_5 = arith.constant dense<0.000000e+00> : vector<2x128xf32>
    %7 = tpu.matmul %5, %6, %cst_5 {dimension_numbers = #tpu.dot_dimension_numbers<[1], [0], [0], [1], [0, 0, 1, 1], [], []>} : vector<2x128xbf16>, vector<128x128xbf16>, vector<2x128xf32> -> vector<2x128xf32>
    %c0_6 = arith.constant 0 : index
    %c0_7 = arith.constant 0 : index
    %8 = vector.load %arg2[%c0_6, %c0_7] : memref<1x128xf32, #tpu.memory_space<vmem>>, vector<1x128xf32>
    %9 = vector.broadcast %8 : vector<1x128xf32> to vector<2x128xf32>
    %10 = arith.addf %7, %9 : vector<2x128xf32>
    %c0_8 = arith.constant 0 : index
    %c0_9 = arith.constant 0 : index
    %11 = vector.load %arg3[%c0_8, %c0_9] : memref<2x128xf32, #tpu.memory_space<vmem>>, vector<2x128xf32>
    tpu.vector_store %arg3[%c0_8, %c0_9], %10 {strides = array<i32>} : memref<2x128xf32, #tpu.memory_space<vmem>>, vector<2x128xf32>,
    return
  }
}

</mosaic_0001>

<llo_original>
// kernel: efficientnetv2l_forward.10
$region0: #{efficientnetv2l_forward.10}
  #allocation0 [shape = 'u32[]', space=smem, size = 0x4, offset = 0x4, fixed_abs, tag = 'smem constant byte address 0x4 - core index']
  #allocation1 [shape = 'u32[144,128]{1,0:T(1,128)}', space=vmem, size = 0x12000, scoped, tag = 'internal scratch']
  %s0 = inlined_call_operand.vmem [shape: bf16[512,72], index: 0, kind: input, shape index: {}]
  %s1 = inlined_call_operand.vmem [shape: bf16[72,128], index: 1, kind: input, shape index: {}]
  %s2 = inlined_call_operand.vmem [shape: f32[1,128], index: 2, kind: input, shape index: {}]
  %s3 = inlined_call_operand.vmem [shape: bf16[512,128], index: 3, kind: output, shape index: {}]
  %s4 = sld [smem:[#allocation0]]
  $region22: #{efficientnetv2l_forward.10} parent=0
    _
  %s6 = ssub.s32 1, %s4
  %s7 = scalar_select 0, %s6, %s4
  // Predicated region
  $region2: #{efficientnetv2l_forward.10} parent=0 // pred_check
    _
  $region3: #{efficientnetv2l_forward.10} parent=0 // pred_check_branch
    %9 = sbr.rel (0) target = $region5
  $region4: #{efficientnetv2l_forward.10} parent=0 // pred_region
    _
  $region5: #{efficientnetv2l_forward.10} parent=0 // pred_fallthru
    _
  // Predicated region
  $region6: #{efficientnetv2l_forward.10} parent=0 // pred_check
    _
  $region7: #{efficientnetv2l_forward.10} parent=0 // pred_check_branch
    %11 = sbr.rel (0) target = $region9
  $region8: #{efficientnetv2l_forward.10} parent=0 // pred_region
    _
  $region9: #{efficientnetv2l_forward.10} parent=0 // pred_fallthru
    _
  // Predicated region
  $region10: #{efficientnetv2l_forward.10} parent=0 // pred_check
    _
  $region11: #{efficientnetv2l_forward.10} parent=0 // pred_check_branch
    %13 = sbr.rel (0) target = $region13
  $region12: #{efficientnetv2l_forward.10} parent=0 // pred_region
    _
  $region13: #{efficientnetv2l_forward.10} parent=0 // pred_fallthru
    _
  %v15 = vld [vmem:[%s0] sm:$0xf]
  %v16 = vld [vmem:[%s0 + $0x4] sm:$0xf]
  %v17 = vld [vmem:[%s0 + $0x8] sm:$0xf]
  %v18 = vld [vmem:[%s0 + $0xc] sm:$0xf]
  %v19 = vld [vmem:[%s0 + $0x10] sm:$0xf]
  %v20 = vld [vmem:[%s0 + $0x14] sm:$0xf]
  %v21 = vld [vmem:[%s0 + $0x18] sm:$0xf]
  %v22 = vld [vmem:[%s0 + $0x1c] sm:$0xf]
  %v23 = vld [vmem:[%s0 + $0x20] sm:$0xf]
  %v24 = vld [vmem:[%s0 + $0x24] sm:$0xf]
  %v25 = vld [vmem:[%s0 + $0x28] sm:$0xf]
  %v26 = vld [vmem:[%s0 + $0x2c] sm:$0xf]
  %v27 = vld [vmem:[%s0 + $0x30] sm:$0xf]
  %v28 = vld [vmem:[%s0 + $0x34] sm:$0xf]
  %v29 = vld [vmem:[%s0 + $0x38] sm:$0xf]
  %v30 = vld [vmem:[%s0 + $0x3c] sm:$0xf]
  %v31 = vld [vmem:[%s0 + $0x40] sm:$0xf]
  %v32 = vld [vmem:[%s0 + $0x44] sm:$0xf]
  %v33 = vld [vmem:[%s0 + $0x48] sm:$0xf]
  %v34 = vld [vmem:[%s0 + $0x4c] sm:$0xf]
  %v35 = vld [vmem:[%s0 + $0x50] sm:$0xf]
  %v36 = vld [vmem:[%s0 + $0x54] sm:$0xf]
  %v37 = vld [vmem:[%s0 + $0x58] sm:$0xf]
  %v38 = vld [vmem:[%s0 + $0x5c] sm:$0xf]
  %v39 = vld [vmem:[%s0 + $0x60] sm:$0xf]
  %v40 = vld [vmem:[%s0 + $0x64] sm:$0xf]
  %v41 = vld [vmem:[%s0 + $0x68] sm:$0xf]
  %v42 = vld [vmem:[%s0 + $0x6c] sm:$0xf]
  %v43 = vld [vmem:[%s0 + $0x70] sm:$0xf]
  %v44 = vld [vmem:[%s0 + $0x74] sm:$0xf]
  %v45 = vld [vmem:[%s0 + $0x78] sm:$0xf]
  %v46 = vld [vmem:[%s0 + $0x7c] sm:$0xf]
  %v47 = vld [vmem:[%s0 + $0x80] sm:$0xf]
  %v48 = vld [vmem:[%s0 + $0x84] sm:$0xf]
  %v49 = vld [vmem:[%s0 + $0x88] sm:$0xf]
  %v50 = vld [vmem:[%s0 + $0x8c] sm:$0xf]
  %v51 = vld [vmem:[%s0 + $0x90] sm:$0xf]
  %v52 = vld [vmem:[%s0 + $0x94] sm:$0xf]
  %v53 = vld [vmem:[%s0 + $0x98] sm:$0xf]
  %v54 = vld [vmem:[%s0 + $0x9c] sm:$0xf]
  %v55 = vld [vmem:[%s0 + $0xa0] sm:$0xf]
  %v56 = vld [vmem:[%s0 + $0xa4] sm:$0xf]
  %v57 = vld [vmem:[%s0 + $0xa8] sm:$0xf]
  %v58 = vld [vmem:[%s0 + $0xac] sm:$0xf]
  %v59 = vld [vmem:[%s0 + $0xb0] sm:$0xf]
  %v60 = vld [vmem:[%s0 + $0xb4] sm:$0xf]
  %v61 = vld [vmem:[%s0 + $0xb8] sm:$0xf]
  %v62 = vld [vmem:[%s0 + $0xbc] sm:$0xf]
  %v63 = vld [vmem:[%s0 + $0xc0] sm:$0xf]
  %v64 = vld [vmem:[%s0 + $0xc4] sm:$0xf]
  %v65 = vld [vmem:[%s0 + $0xc8] sm:$0xf]
  %v66 = vld [vmem:[%s0 + $0xcc] sm:$0xf]
  %v67 = vld [vmem:[%s0 + $0xd0] sm:$0xf]
  %v68 = vld [vmem:[%s0 + $0xd4] sm:$0xf]
  %v69 = vld [vmem:[%s0 + $0xd8] sm:$0xf]
  %v70 = vld [vmem:[%s0 + $0xdc] sm:$0xf]
  %v71 = vld [vmem:[%s0 + $0xe0] sm:$0xf]
  %v72 = vld [vmem:[%s0 + $0xe4] sm:$0xf]
  %v73 = vld [vmem:[%s0 + $0xe8] sm:$0xf]
  %v74 = vld [vmem:[%s0 + $0xec] sm:$0xf]
  %v75 = vld [vmem:[%s0 + $0xf0] sm:$0xf]
  %v76 = vld [vmem:[%s0 + $0xf4] sm:$0xf]
  %v77 = vld [vmem:[%s0 + $0xf8] sm:$0xf]
  %v78 = vld [vmem:[%s0 + $0xfc] sm:$0xf]
  %v79 = vld [vmem:[%s1] sm:$0xf]
  %v80 = vld [vmem:[%s1 + $0x4] sm:$0xf]
  %v81 = vld [vmem:[%s1 + $0x8] sm:$0xf]
  %v82 = vld [vmem:[%s1 + $0xc] sm:$0xf]
  %v83 = vld [vmem:[%s1 + $0x10] sm:$0xf]
  %v84 = vld [vmem:[%s1 + $0x14] sm:$0xf]
  %v85 = vld [vmem:[%s1 + $0x18] sm:$0xf]
  %v86 = vld [vmem:[%s1 + $0x1c] sm:$0xf]
  %v87 = vld [vmem:[%s1 + $0x20] sm:$0xf]
  %v88 = vld [vmem:[%s2] sm:$0x1]
  %v90 = vlaneseq
  %v91 = vshrl.u32 %v90, 7
  %v92 = vsub.s32 0, %v91
  %v93 = vrot.slane %v88, %v92
  %v159 = vunpack.c.l.b16 %v15
  %v160 = vunpack.c.l.b16 %v16
  %v161 = vunpack.c.l.b16 %v17
  %v162 = vunpack.c.l.b16 %v18
  %v163 = vunpack.c.l.b16 %v19
  %v164 = vunpack.c.l.b16 %v20
  %v165 = vunpack.c.l.b16 %v21
  %v166 = vunpack.c.l.b16 %v22
  %v167 = vunpack.c.l.b16 %v23
  %v168 = vunpack.c.l.b16 %v24
  %v169 = vunpack.c.l.b16 %v25
  %v170 = vunpack.c.l.b16 %v26
  %v171 = vunpack.c.l.b16 %v27
  %v172 = vunpack.c.l.b16 %v28
  %v173 = vunpack.c.l.b16 %v29
  %v174 = vunpack.c.l.b16 %v30
  %v175 = vunpack.c.l.b16 %v31
  %v176 = vunpack.c.l.b16 %v32
  %v177 = vunpack.c.l.b16 %v33
  %v178 = vunpack.c.l.b16 %v34
  %v179 = vunpack.c.l.b16 %v35
  %v180 = vunpack.c.l.b16 %v36
  %v181 = vunpack.c.l.b16 %v37
  %v182 = vunpack.c.l.b16 %v38
  %v183 = vunpack.c.l.b16 %v39
  %v184 = vunpack.c.l.b16 %v40
  %v185 = vunpack.c.l.b16 %v41
  %v186 = vunpack.c.l.b16 %v42
  %v187 = vunpack.c.l.b16 %v43
  %v188 = vunpack.c.l.b16 %v44
  %v189 = vunpack.c.l.b16 %v45
  %v190 = vunpack.c.l.b16 %v46
  %v191 = vunpack.c.l.b16 %v47
  %v192 = vunpack.c.l.b16 %v48
  %v193 = vunpack.c.l.b16 %v49
  %v194 = vunpack.c.l.b16 %v50
  %v195 = vunpack.c.l.b16 %v51
  %v196 = vunpack.c.l.b16 %v52
  %v197 = vunpack.c.l.b16 %v53
  %v198 = vunpack.c.l.b16 %v54
  %v199 = vunpack.c.l.b16 %v55
  %v200 = vunpack.c.l.b16 %v56
  %v201 = vunpack.c.l.b16 %v57
  %v202 = vunpack.c.l.b16 %v58
  %v203 = vunpack.c.l.b16 %v59
  %v204 = vunpack.c.l.b16 %v60
  %v205 = vunpack.c.l.b16 %v61
  %v206 = vunpack.c.l.b16 %v62
  %v207 = vunpack.c.l.b16 %v63
  %v208 = vunpack.c.l.b16 %v64
  %v209 = vunpack.c.l.b16 %v65
  %v210 = vunpack.c.l.b16 %v66
  %v211 = vunpack.c.l.b16 %v67
  %v212 = vunpack.c.l.b16 %v68
  %v213 = vunpack.c.l.b16 %v69
  %v214 = vunpack.c.l.b16 %v70
  %v215 = vunpack.c.l.b16 %v71
  %v216 = vunpack.c.l.b16 %v72
  %v217 = vunpack.c.l.b16 %v73
  %v218 = vunpack.c.l.b16 %v74
  %v219 = vunpack.c.l.b16 %v75
  %v220 = vunpack.c.l.b16 %v76
  %v221 = vunpack.c.l.b16 %v77
  %v222 = vunpack.c.l.b16 %v78
  %v223 = vpack.c.b16 %v160, %v159
  %v224 = vpack.c.b16 %v162, %v161
  %v225 = vpack.c.b16 %v164, %v163
  %v226 = vpack.c.b16 %v166, %v165
  %v227 = vpack.c.b16 %v168, %v167
  %v228 = vpack.c.b16 %v170, %v169
  %v229 = vpack.c.b16 %v172, %v171
  %v230 = vpack.c.b16 %v174, %v173
  %v231 = vpack.c.b16 %v176, %v175
  %v232 = vpack.c.b16 %v178, %v177
  %v233 = vpack.c.b16 %v180, %v179
  %v234 = vpack.c.b16 %v182, %v181
  %v235 = vpack.c.b16 %v184, %v183
  %v236 = vpack.c.b16 %v186, %v185
  %v237 = vpack.c.b16 %v188, %v187
  %v238 = vpack.c.b16 %v190, %v189
  %v239 = vpack.c.b16 %v192, %v191
  %v240 = vpack.c.b16 %v194, %v193
  %v241 = vpack.c.b16 %v196, %v195
  %v242 = vpack.c.b16 %v198, %v197
  %v243 = vpack.c.b16 %v200, %v199
  %v244 = vpack.c.b16 %v202, %v201
  %v245 = vpack.c.b16 %v204, %v203
  %v246 = vpack.c.b16 %v206, %v205
  %v247 = vpack.c.b16 %v208, %v207
  %v248 = vpack.c.b16 %v210, %v209
  %v249 = vpack.c.b16 %v212, %v211
  %v250 = vpack.c.b16 %v214, %v213
  %v251 = vpack.c.b16 %v216, %v215
  %v252 = vpack.c.b16 %v218, %v217
  %v253 = vpack.c.b16 %v220, %v219
  %v254 = vpack.c.b16 %v222, %v221
  %v264 = vunpack.c.l.b16 %v79
  %v265 = vunpack.c.l.b16 %v80
  %v266 = vunpack.c.l.b16 %v81
  %v267 = vunpack.c.l.b16 %v82
  %v268 = vunpack.c.l.b16 %v83
  %v269 = vunpack.c.l.b16 %v84
  %v270 = vunpack.c.l.b16 %v85
  %v271 = vunpack.c.l.b16 %v86
  %v272 = vunpack.c.l.b16 %v87
  %v273 = vpack.c.b16 %v265, %v264
  %v274 = vpack.c.b16 %v267, %v266
  %v275 = vpack.c.b16 %v269, %v268
  %v276 = vpack.c.b16 %v271, %v270
  %v277 = vpack.c.b16 %v272, %v272
  %vm282 = vcmask 588800
  %v284 = vsel %vm282, %v223, 0
  %v287 = vsel %vm282, %v224, 0
  %v290 = vsel %vm282, %v225, 0
  %v293 = vsel %vm282, %v226, 0
  %v296 = vsel %vm282, %v227, 0
  %v299 = vsel %vm282, %v228, 0
  %v302 = vsel %vm282, %v229, 0
  %v305 = vsel %vm282, %v230, 0
  %v308 = vsel %vm282, %v231, 0
  %v311 = vsel %vm282, %v232, 0
  %v314 = vsel %vm282, %v233, 0
  %v317 = vsel %vm282, %v234, 0
  %v320 = vsel %vm282, %v235, 0
  %v323 = vsel %vm282, %v236, 0
  %v326 = vsel %vm282, %v237, 0
  %v329 = vsel %vm282, %v238, 0
  %v332 = vsel %vm282, %v239, 0
  %v335 = vsel %vm282, %v240, 0
  %v338 = vsel %vm282, %v241, 0
  %v341 = vsel %vm282, %v242, 0
  %v344 = vsel %vm282, %v243, 0
  %v347 = vsel %vm282, %v244, 0
  %v350 = vsel %vm282, %v245, 0
  %v353 = vsel %vm282, %v246, 0
  %v356 = vsel %vm282, %v247, 0
  %v359 = vsel %vm282, %v248, 0
  %v362 = vsel %vm282, %v249, 0
  %v365 = vsel %vm282, %v250, 0
  %v368 = vsel %vm282, %v251, 0
  %v371 = vsel %vm282, %v252, 0
  %v374 = vsel %vm282, %v253, 0
  %v377 = vsel %vm282, %v254, 0
  %vm379 = vcmask 1043456
  %v381 = vsel %vm379, %v277, 0
  %383 = vmatprep.subr.bf16.mxu0 0
  %384 = vmatpush1.bf16.msra.mxu0 %v273
  %385 = vmatprep.subr.bf16.mxu0 0
  %386 = vmatpush1.bf16.msra.mxu0 %v274
  %387 = vmatprep.subr.bf16.mxu0 0
  %388 = vmatpush1.bf16.msra.mxu0 %v275
  %389 = vmatprep.subr.bf16.mxu0 0
  %390 = vmatpush1.bf16.msra.mxu0 %v276
  %391 = vmatprep.subr.bf16.mxu0 0
  %392 = vmatpush1.bf16.msra.mxu0 %v381
  %393 = vmatprep.subr.bf16.mxu0 0
  %394 = vmatpush1.bf16.msra.mxu0 0
  %395 = vmatprep.subr.bf16.mxu0 0
  %396 = vmatpush1.bf16.msra.mxu0 0
  %397 = vmatprep.subr.bf16.mxu0 0
  %398 = vmatpush1.bf16.msra.mxu0 0
  %399 = vmatprep.subr.bf16.mxu0 0
  %400 = vmatpush1.bf16.msra.mxu0 0
  %401 = vmatprep.subr.bf16.mxu0 0
  %402 = vmatpush1.bf16.msra.mxu0 0
  %403 = vmatprep.subr.bf16.mxu0 0
  %404 = vmatpush1.bf16.msra.mxu0 0
  %405 = vmatprep.subr.bf16.mxu0 0
  %406 = vmatpush1.bf16.msra.mxu0 0
  %407 = vmatprep.subr.bf16.mxu0 0
  %408 = vmatpush1.bf16.msra.mxu0 0
  %409 = vmatprep.subr.bf16.mxu0 0
  %410 = vmatpush1.bf16.msra.mxu0 0
  %411 = vmatprep.subr.bf16.mxu0 0
  %412 = vmatpush1.bf16.msra.mxu0 0
  %413 = vmatprep.subr.bf16.mxu0 0
  %414 = vmatpush1.bf16.msra.mxu0 0
  %415 = vmatprep.mubr.bf16.mxu0 0
  %416 = vmatmul.mubr.bf16.gmra.mrb[0].mxu0 %v284
  %v417 = vpop.f32.mrb[0].mxu0
  %v418 = vadd.f32 %v93, %v417
  %v419 = vpop.f32.mrb[0].mxu0
  %v420 = vpop.f32.mrb[0].mxu0
  %v421 = vadd.f32 %v93, %v420
  %v422 = vpop.f32.mrb[0].mxu0
  %423 = vmatprep.mubr.bf16.mxu0 0
  %424 = vmatmul.mubr.bf16.gmra.mrb[0].mxu0 %v287
  %v425 = vpop.f32.mrb[0].mxu0
  %v426 = vadd.f32 %v93, %v425
  %v427 = vpop.f32.mrb[0].mxu0
  %v428 = vpop.f32.mrb[0].mxu0
  %v429 = vadd.f32 %v93, %v428
  %v430 = vpop.f32.mrb[0].mxu0
  %431 = vmatprep.mubr.bf16.mxu0 0
  %432 = vmatmul.mubr.bf16.gmra.mrb[0].mxu0 %v290
  %v433 = vpop.f32.mrb[0].mxu0
  %v434 = vadd.f32 %v93, %v433
  %v435 = vpop.f32.mrb[0].mxu0
  %v436 = vpop.f32.mrb[0].mxu0
  %v437 = vadd.f32 %v93, %v436
  %v438 = vpop.f32.mrb[0].mxu0
  %439 = vmatprep.mubr.bf16.mxu0 0
  %440 = vmatmul.mubr.bf16.gmra.mrb[0].mxu0 %v293
  %v441 = vpop.f32.mrb[0].mxu0
  %v442 = vadd.f32 %v93, %v441
  %v443 = vpop.f32.mrb[0].mxu0
  %v444 = vpop.f32.mrb[0].mxu0
  %v445 = vadd.f32 %v93, %v444
  %v446 = vpop.f32.mrb[0].mxu0
  %447 = vmatprep.mubr.bf16.mxu0 0
  %448 = vmatmul.mubr.bf16.gmra.mrb[0].mxu0 %v296
  %v449 = vpop.f32.mrb[0].mxu0
  %v450 = vadd.f32 %v93, %v449
  %v451 = vpop.f32.mrb[0].mxu0
  %v452 = vpop.f32.mrb[0].mxu0
  %v453 = vadd.f32 %v93, %v452
  %v454 = vpop.f32.mrb[0].mxu0
  %455 = vmatprep.mubr.bf16.mxu0 0
  %456 = vmatmul.mubr.bf16.gmra.mrb[0].mxu0 %v299
  %v457 = vpop.f32.mrb[0].mxu0
  %v458 = vadd.f32 %v93, %v457
  %v459 = vpop.f32.mrb[0].mxu0
  %v460 = vpop.f32.mrb[0].mxu0
  %v461 = vadd.f32 %v93, %v460
  %v462 = vpop.f32.mrb[0].mxu0
  %463 = vmatprep.mubr.bf16.mxu0 0
  %464 = vmatmul.mubr.bf16.gmra.mrb[0].mxu0 %v302
  %v465 = vpop.f32.mrb[0].mxu0
  %v466 = vadd.f32 %v93, %v465
  %v467 = vpop.f32.mrb[0].mxu0
  %v468 = vpop.f32.mrb[0].mxu0
  %v469 = vadd.f32 %v93, %v468
  %v470 = vpop.f32.mrb[0].mxu0
  %471 = vmatprep.mubr.bf16.mxu0 0
  %472 = vmatmul.mubr.bf16.gmra.mrb[0].mxu0 %v305
  %v473 = vpop.f32.mrb[0].mxu0
  %v474 = vadd.f32 %v93, %v473
  %v475 = vpop.f32.mrb[0].mxu0
  %v476 = vpop.f32.mrb[0].mxu0
  %v477 = vadd.f32 %v93, %v476
  %v478 = vpop.f32.mrb[0].mxu0
  %479 = vmatprep.mubr.bf16.mxu0 0
  %480 = vmatmul.mubr.bf16.gmra.mrb[0].mxu0 %v308
  %v481 = vpop.f32.mrb[0].mxu0
  %v482 = vadd.f32 %v93, %v481
  %v483 = vpop.f32.mrb[0].mxu0
  %v484 = vpop.f32.mrb[0].mxu0
  %v485 = vadd.f32 %v93, %v484
  %v486 = vpop.f32.mrb[0].mxu0
  %487 = vmatprep.mubr.bf16.mxu0 0
  %488 = vmatmul.mubr.bf16.gmra.mrb[0].mxu0 %v311
  %v489 = vpop.f32.mrb[0].mxu0
  %v490 = vadd.f32 %v93, %v489
  %v491 = vpop.f32.mrb[0].mxu0
  %v492 = vpop.f32.mrb[0].mxu0
  %v493 = vadd.f32 %v93, %v492
  %v494 = vpop.f32.mrb[0].mxu0
  %495 = vmatprep.mubr.bf16.mxu0 0
  %496 = vmatmul.mubr.bf16.gmra.mrb[0].mxu0 %v314
  %v497 = vpop.f32.mrb[0].mxu0
  %v498 = vadd.f32 %v93, %v497
  %v499 = vpop.f32.mrb[0].mxu0
  %v500 = vpop.f32.mrb[0].mxu0
  %v501 = vadd.f32 %v93, %v500
  %v502 = vpop.f32.mrb[0].mxu0
  %503 = vmatprep.mubr.bf16.mxu0 0
  %504 = vmatmul.mubr.bf16.gmra.mrb[0].mxu0 %v317
  %v505 = vpop.f32.mrb[0].mxu0
  %v506 = vadd.f32 %v93, %v505
  %v507 = vpop.f32.mrb[0].mxu0
  %v508 = vpop.f32.mrb[0].mxu0
  %v509 = vadd.f32 %v93, %v508
  %v510 = vpop.f32.mrb[0].mxu0
  %511 = vmatprep.mubr.bf16.mxu0 0
  %512 = vmatmul.mubr.bf16.gmra.mrb[0].mxu0 %v320
  %v513 = vpop.f32.mrb[0].mxu0
  %v514 = vadd.f32 %v93, %v513
  %v515 = vpop.f32.mrb[0].mxu0
  %v516 = vpop.f32.mrb[0].mxu0
  %v517 = vadd.f32 %v93, %v516
  %v518 = vpop.f32.mrb[0].mxu0
  %519 = vmatprep.mubr.bf16.mxu0 0
  %520 = vmatmul.mubr.bf16.gmra.mrb[0].mxu0 %v323
  %v521 = vpop.f32.mrb[0].mxu0
  %v522 = vadd.f32 %v93, %v521
  %v523 = vpop.f32.mrb[0].mxu0
  %v524 = vpop.f32.mrb[0].mxu0
  %v525 = vadd.f32 %v93, %v524
  %v526 = vpop.f32.mrb[0].mxu0
  %527 = vmatprep.mubr.bf16.mxu0 0
  %528 = vmatmul.mubr.bf16.gmra.mrb[0].mxu0 %v326
  %v529 = vpop.f32.mrb[0].mxu0
  %v530 = vadd.f32 %v93, %v529
  %v531 = vpop.f32.mrb[0].mxu0
  %v532 = vpop.f32.mrb[0].mxu0
  %v533 = vadd.f32 %v93, %v532
  %v534 = vpop.f32.mrb[0].mxu0
  %535 = vmatprep.mubr.bf16.mxu0 0
  %536 = vmatmul.mubr.bf16.gmra.mrb[0].mxu0 %v329
  %v537 = vpop.f32.mrb[0].mxu0
  %v538 = vadd.f32 %v93, %v537
  %v539 = vpop.f32.mrb[0].mxu0
  %v540 = vpop.f32.mrb[0].mxu0
  %v541 = vadd.f32 %v93, %v540
  %v542 = vpop.f32.mrb[0].mxu0
  %543 = vmatprep.mubr.bf16.mxu0 0
  %544 = vmatmul.mubr.bf16.gmra.mrb[0].mxu0 %v332
  %v545 = vpop.f32.mrb[0].mxu0
  %v546 = vadd.f32 %v93, %v545
  %v547 = vpop.f32.mrb[0].mxu0
  %v548 = vpop.f32.mrb[0].mxu0
  %v549 = vadd.f32 %v93, %v548
  %v550 = vpop.f32.mrb[0].mxu0
  %551 = vmatprep.mubr.bf16.mxu0 0
  %552 = vmatmul.mubr.bf16.gmra.mrb[0].mxu0 %v335
  %v553 = vpop.f32.mrb[0].mxu0
  %v554 = vadd.f32 %v93, %v553
  %v555 = vpop.f32.mrb[0].mxu0
  %v556 = vpop.f32.mrb[0].mxu0
  %v557 = vadd.f32 %v93, %v556
  %v558 = vpop.f32.mrb[0].mxu0
  %559 = vmatprep.mubr.bf16.mxu0 0
  %560 = vmatmul.mubr.bf16.gmra.mrb[0].mxu0 %v338
  %v561 = vpop.f32.mrb[0].mxu0
  %v562 = vadd.f32 %v93, %v561
  %v563 = vpop.f32.mrb[0].mxu0
  %v564 = vpop.f32.mrb[0].mxu0
  %v565 = vadd.f32 %v93, %v564
  %v566 = vpop.f32.mrb[0].mxu0
  %567 = vmatprep.mubr.bf16.mxu0 0
  %568 = vmatmul.mubr.bf16.gmra.mrb[0].mxu0 %v341
  %v569 = vpop.f32.mrb[0].mxu0
  %v570 = vadd.f32 %v93, %v569
  %v571 = vpop.f32.mrb[0].mxu0
  %v572 = vpop.f32.mrb[0].mxu0
  %v573 = vadd.f32 %v93, %v572
  %v574 = vpop.f32.mrb[0].mxu0
  %575 = vmatprep.mubr.bf16.mxu0 0
  %576 = vmatmul.mubr.bf16.gmra.mrb[0].mxu0 %v344
  %v577 = vpop.f32.mrb[0].mxu0
  %v578 = vadd.f32 %v93, %v577
  %v579 = vpop.f32.mrb[0].mxu0
  %v580 = vpop.f32.mrb[0].mxu0
  %v581 = vadd.f32 %v93, %v580
  %v582 = vpop.f32.mrb[0].mxu0
  %583 = vmatprep.mubr.bf16.mxu0 0
  %584 = vmatmul.mubr.bf16.gmra.mrb[0].mxu0 %v347
  %v585 = vpop.f32.mrb[0].mxu0
  %v586 = vadd.f32 %v93, %v585
  %v587 = vpop.f32.mrb[0].mxu0
  %v588 = vpop.f32.mrb[0].mxu0
  %v589 = vadd.f32 %v93, %v588
  %v590 = vpop.f32.mrb[0].mxu0
  %591 = vmatprep.mubr.bf16.mxu0 0
  %592 = vmatmul.mubr.bf16.gmra.mrb[0].mxu0 %v350
  %v593 = vpop.f32.mrb[0].mxu0
  %v594 = vadd.f32 %v93, %v593
  %v595 = vpop.f32.mrb[0].mxu0
  %v596 = vpop.f32.mrb[0].mxu0
  %v597 = vadd.f32 %v93, %v596
  %v598 = vpop.f32.mrb[0].mxu0
  %599 = vmatprep.mubr.bf16.mxu0 0
  %600 = vmatmul.mubr.bf16.gmra.mrb[0].mxu0 %v353
  %v601 = vpop.f32.mrb[0].mxu0
  %v602 = vadd.f32 %v93, %v601
  %v603 = vpop.f32.mrb[0].mxu0
  %v604 = vpop.f32.mrb[0].mxu0
  %v605 = vadd.f32 %v93, %v604
  %v606 = vpop.f32.mrb[0].mxu0
  %607 = vmatprep.mubr.bf16.mxu0 0
  %608 = vmatmul.mubr.bf16.gmra.mrb[0].mxu0 %v356
  %v609 = vpop.f32.mrb[0].mxu0
  %v610 = vadd.f32 %v93, %v609
  %v611 = vpop.f32.mrb[0].mxu0
  %v612 = vpop.f32.mrb[0].mxu0
  %v613 = vadd.f32 %v93, %v612
  %v614 = vpop.f32.mrb[0].mxu0
  %615 = vmatprep.mubr.bf16.mxu0 0
  %616 = vmatmul.mubr.bf16.gmra.mrb[0].mxu0 %v359
  %v617 = vpop.f32.mrb[0].mxu0
  %v618 = vadd.f32 %v93, %v617
  %v619 = vpop.f32.mrb[0].mxu0
  %v620 = vpop.f32.mrb[0].mxu0
  %v621 = vadd.f32 %v93, %v620
  %v622 = vpop.f32.mrb[0].mxu0
  %623 = vmatprep.mubr.bf16.mxu0 0
  %624 = vmatmul.mubr.bf16.gmra.mrb[0].mxu0 %v362
  %v625 = vpop.f32.mrb[0].mxu0
  %v626 = vadd.f32 %v93, %v625
  %v627 = vpop.f32.mrb[0].mxu0
  %v628 = vpop.f32.mrb[0].mxu0
  %v629 = vadd.f32 %v93, %v628
  %v630 = vpop.f32.mrb[0].mxu0
  %631 = vmatprep.mubr.bf16.mxu0 0
  %632 = vmatmul.mubr.bf16.gmra.mrb[0].mxu0 %v365
  %v633 = vpop.f32.mrb[0].mxu0
  %v634 = vadd.f32 %v93, %v633
  %v635 = vpop.f32.mrb[0].mxu0
  %v636 = vpop.f32.mrb[0].mxu0
  %v637 = vadd.f32 %v93, %v636
  %v638 = vpop.f32.mrb[0].mxu0
  %639 = vmatprep.mubr.bf16.mxu0 0
  %640 = vmatmul.mubr.bf16.gmra.mrb[0].mxu0 %v368
  %v641 = vpop.f32.mrb[0].mxu0
  %v642 = vadd.f32 %v93, %v641
  %v643 = vpop.f32.mrb[0].mxu0
  %v644 = vpop.f32.mrb[0].mxu0
  %v645 = vadd.f32 %v93, %v644
  %v646 = vpop.f32.mrb[0].mxu0
  %647 = vmatprep.mubr.bf16.mxu0 0
  %648 = vmatmul.mubr.bf16.gmra.mrb[0].mxu0 %v371
  %v649 = vpop.f32.mrb[0].mxu0
  %v650 = vadd.f32 %v93, %v649
  %v651 = vpop.f32.mrb[0].mxu0
  %v652 = vpop.f32.mrb[0].mxu0
  %v653 = vadd.f32 %v93, %v652
  %v654 = vpop.f32.mrb[0].mxu0
  %655 = vmatprep.mubr.bf16.mxu0 0
  %656 = vmatmul.mubr.bf16.gmra.mrb[0].mxu0 %v374
  %v657 = vpop.f32.mrb[0].mxu0
  %v658 = vadd.f32 %v93, %v657
  %v659 = vpop.f32.mrb[0].mxu0
  %v660 = vpop.f32.mrb[0].mxu0
  %v661 = vadd.f32 %v93, %v660
  %v662 = vpop.f32.mrb[0].mxu0
  %663 = vmatprep.mubr.bf16.mxu0 0
  %664 = vmatmul.mubr.bf16.gmra.mrb[0].mxu0 %v377
  %v665 = vpop.f32.mrb[0].mxu0
  %v666 = vadd.f32 %v93, %v665
  %v667 = vpop.f32.mrb[0].mxu0
  %v668 = vpop.f32.mrb[0].mxu0
  %v669 = vadd.f32 %v93, %v668
  %v670 = vpop.f32.mrb[0].mxu0
  %671 = vdwg.mxu0
  %v672 = vxor.u32 %v418, 2147483648
  %v673 = vxor.u32 %v421, 2147483648
  %v674 = vxor.u32 %v426, 2147483648
  %v675 = vxor.u32 %v429, 2147483648
  %v676 = vxor.u32 %v434, 2147483648
  %v677 = vxor.u32 %v437, 2147483648
  %v678 = vxor.u32 %v442, 2147483648
  %v679 = vxor.u32 %v445, 2147483648
  %v680 = vxor.u32 %v450, 2147483648
  %v681 = vxor.u32 %v453, 2147483648
  %v682 = vxor.u32 %v458, 2147483648
  %v683 = vxor.u32 %v461, 2147483648
  %v684 = vxor.u32 %v466, 2147483648
  %v685 = vxor.u32 %v469, 2147483648
  %v686 = vxor.u32 %v474, 2147483648
  %v687 = vxor.u32 %v477, 2147483648
  %v688 = vxor.u32 %v482, 2147483648
  %v689 = vxor.u32 %v485, 2147483648
  %v690 = vxor.u32 %v490, 2147483648
  %v691 = vxor.u32 %v493, 2147483648
  %v692 = vxor.u32 %v498, 2147483648
  %v693 = vxor.u32 %v501, 2147483648
  %v694 = vxor.u32 %v506, 2147483648
  %v695 = vxor.u32 %v509, 2147483648
  %v696 = vxor.u32 %v514, 2147483648
  %v697 = vxor.u32 %v517, 2147483648
  %v698 = vxor.u32 %v522, 2147483648
  %v699 = vxor.u32 %v525, 2147483648
  %v700 = vxor.u32 %v530, 2147483648
  %v701 = vxor.u32 %v533, 2147483648
  %v702 = vxor.u32 %v538, 2147483648
  %v703 = vxor.u32 %v541, 2147483648
  %v704 = vxor.u32 %v546, 2147483648
  %v705 = vxor.u32 %v549, 2147483648
  %v706 = vxor.u32 %v554, 2147483648
  %v707 = vxor.u32 %v557, 2147483648
  %v708 = vxor.u32 %v562, 2147483648
  %v709 = vxor.u32 %v565, 2147483648
  %v710 = vxor.u32 %v570, 2147483648
  %v711 = vxor.u32 %v573, 2147483648
  %v712 = vxor.u32 %v578, 2147483648
  %v713 = vxor.u32 %v581, 2147483648
  %v714 = vxor.u32 %v586, 2147483648
  %v715 = vxor.u32 %v589, 2147483648
  %v716 = vxor.u32 %v594, 2147483648
  %v717 = vxor.u32 %v597, 2147483648
  %v718 = vxor.u32 %v602, 2147483648
  %v719 = vxor.u32 %v605, 2147483648
  %v720 = vxor.u32 %v610, 2147483648
  %v721 = vxor.u32 %v613, 2147483648
  %v722 = vxor.u32 %v618, 2147483648
  %v723 = vxor.u32 %v621, 2147483648
  %v724 = vxor.u32 %v626, 2147483648
  %v725 = vxor.u32 %v629, 2147483648
  %v726 = vxor.u32 %v634, 2147483648
  %v727 = vxor.u32 %v637, 2147483648
  %v728 = vxor.u32 %v642, 2147483648
  %v729 = vxor.u32 %v645, 2147483648
  %v730 = vxor.u32 %v650, 2147483648
  %v731 = vxor.u32 %v653, 2147483648
  %v732 = vxor.u32 %v658, 2147483648
  %v733 = vxor.u32 %v661, 2147483648
  %v734 = vxor.u32 %v666, 2147483648
  %v735 = vxor.u32 %v669, 2147483648
  %v736 = vmul.f32 %v672, 1.442695
  %v737 = vpow.pop %v736
  %v738 = vmul.f32 %v673, 1.442695
  %v739 = vpow.pop %v738
  %v740 = vmul.f32 %v674, 1.442695
  %v741 = vpow.pop %v740
  %v742 = vmul.f32 %v675, 1.442695
  %v743 = vpow.pop %v742
  %v744 = vmul.f32 %v676, 1.442695
  %v745 = vpow.pop %v744
  %v746 = vmul.f32 %v677, 1.442695
  %v747 = vpow.pop %v746
  %v748 = vmul.f32 %v678, 1.442695
  %v749 = vpow.pop %v748
  %v750 = vmul.f32 %v679, 1.442695
  %v751 = vpow.pop %v750
  %v752 = vmul.f32 %v680, 1.442695
  %v753 = vpow.pop %v752
  %v754 = vmul.f32 %v681, 1.442695
  %v755 = vpow.pop %v754
  %v756 = vmul.f32 %v682, 1.442695
  %v757 = vpow.pop %v756
  %v758 = vmul.f32 %v683, 1.442695
  %v759 = vpow.pop %v758
  %v760 = vmul.f32 %v684, 1.442695
  %v761 = vpow.pop %v760
  %v762 = vmul.f32 %v685, 1.442695
  %v763 = vpow.pop %v762
  %v764 = vmul.f32 %v686, 1.442695
  %v765 = vpow.pop %v764
  %v766 = vmul.f32 %v687, 1.442695
  %v767 = vpow.pop %v766
  %v768 = vmul.f32 %v688, 1.442695
  %v769 = vpow.pop %v768
  %v770 = vmul.f32 %v689, 1.442695
  %v771 = vpow.pop %v770
  %v772 = vmul.f32 %v690, 1.442695
  %v773 = vpow.pop %v772
  %v774 = vmul.f32 %v691, 1.442695
  %v775 = vpow.pop %v774
  %v776 = vmul.f32 %v692, 1.442695
  %v777 = vpow.pop %v776
  %v778 = vmul.f32 %v693, 1.442695
  %v779 = vpow.pop %v778
  %v780 = vmul.f32 %v694, 1.442695
  %v781 = vpow.pop %v780
  %v782 = vmul.f32 %v695, 1.442695
  %v783 = vpow.pop %v782
  %v784 = vmul.f32 %v696, 1.442695
  %v785 = vpow.pop %v784
  %v786 = vmul.f32 %v697, 1.442695
  %v787 = vpow.pop %v786
  %v788 = vmul.f32 %v698, 1.442695
  %v789 = vpow.pop %v788
  %v790 = vmul.f32 %v699, 1.442695
  %v791 = vpow.pop %v790
  %v792 = vmul.f32 %v700, 1.442695
  %v793 = vpow.pop %v792
  %v794 = vmul.f32 %v701, 1.442695
  %v795 = vpow.pop %v794
  %v796 = vmul.f32 %v702, 1.442695
  %v797 = vpow.pop %v796
  %v798 = vmul.f32 %v703, 1.442695
  %v799 = vpow.pop %v798
  %v800 = vmul.f32 %v704, 1.442695
  %v801 = vpow.pop %v800
  %v802 = vmul.f32 %v705, 1.442695
  %v803 = vpow.pop %v802
  %v804 = vmul.f32 %v706, 1.442695
  %v805 = vpow.pop %v804
  %v806 = vmul.f32 %v707, 1.442695
  %v807 = vpow.pop %v806
  %v808 = vmul.f32 %v708, 1.442695
  %v809 = vpow.pop %v808
  %v810 = vmul.f32 %v709, 1.442695
  %v811 = vpow.pop %v810
  %v812 = vmul.f32 %v710, 1.442695
  %v813 = vpow.pop %v812
  %v814 = vmul.f32 %v711, 1.442695
  %v815 = vpow.pop %v814
  %v816 = vmul.f32 %v712, 1.442695
  %v817 = vpow.pop %v816
  %v818 = vmul.f32 %v713, 1.442695
  %v819 = vpow.pop %v818
  %v820 = vmul.f32 %v714, 1.442695
  %v821 = vpow.pop %v820
  %v822 = vmul.f32 %v715, 1.442695
  %v823 = vpow.pop %v822
  %v824 = vmul.f32 %v716, 1.442695
  %v825 = vpow.pop %v824
  %v826 = vmul.f32 %v717, 1.442695
  %v827 = vpow.pop %v826
  %v828 = vmul.f32 %v718, 1.442695
  %v829 = vpow.pop %v828
  %v830 = vmul.f32 %v719, 1.442695
  %v831 = vpow.pop %v830
  %v832 = vmul.f32 %v720, 1.442695
  %v833 = vpow.pop %v832
  %v834 = vmul.f32 %v721, 1.442695
  %v835 = vpow.pop %v834
  %v836 = vmul.f32 %v722, 1.442695
  %v837 = vpow.pop %v836
  %v838 = vmul.f32 %v723, 1.442695
  %v839 = vpow.pop %v838
  %v840 = vmul.f32 %v724, 1.442695
  %v841 = vpow.pop %v840
  %v842 = vmul.f32 %v725, 1.442695
  %v843 = vpow.pop %v842
  %v844 = vmul.f32 %v726, 1.442695
  %v845 = vpow.pop %v844
  %v846 = vmul.f32 %v727, 1.442695
  %v847 = vpow.pop %v846
  %v848 = vmul.f32 %v728, 1.442695
  %v849 = vpow.pop %v848
  %v850 = vmul.f32 %v729, 1.442695
  %v851 = vpow.pop %v850
  %v852 = vmul.f32 %v730, 1.442695
  %v853 = vpow.pop %v852
  %v854 = vmul.f32 %v731, 1.442695
  %v855 = vpow.pop %v854
  %v856 = vmul.f32 %v732, 1.442695
  %v857 = vpow.pop %v856
  %v858 = vmul.f32 %v733, 1.442695
  %v859 = vpow.pop %v858
  %v860 = vmul.f32 %v734, 1.442695
  %v861 = vpow.pop %v860
  %v862 = vmul.f32 %v735, 1.442695
  %v863 = vpow.pop %v862
  %v864 = vadd.f32 %v737, 1.0
  %v865 = vadd.f32 %v739, 1.0
  %v866 = vadd.f32 %v741, 1.0
  %v867 = vadd.f32 %v743, 1.0
  %v868 = vadd.f32 %v745, 1.0
  %v869 = vadd.f32 %v747, 1.0
  %v870 = vadd.f32 %v749, 1.0
  %v871 = vadd.f32 %v751, 1.0
  %v872 = vadd.f32 %v753, 1.0
  %v873 = vadd.f32 %v755, 1.0
  %v874 = vadd.f32 %v757, 1.0
  %v875 = vadd.f32 %v759, 1.0
  %v876 = vadd.f32 %v761, 1.0
  %v877 = vadd.f32 %v763, 1.0
  %v878 = vadd.f32 %v765, 1.0
  %v879 = vadd.f32 %v767, 1.0
  %v880 = vadd.f32 %v769, 1.0
  %v881 = vadd.f32 %v771, 1.0
  %v882 = vadd.f32 %v773, 1.0
  %v883 = vadd.f32 %v775, 1.0
  %v884 = vadd.f32 %v777, 1.0
  %v885 = vadd.f32 %v779, 1.0
  %v886 = vadd.f32 %v781, 1.0
  %v887 = vadd.f32 %v783, 1.0
  %v888 = vadd.f32 %v785, 1.0
  %v889 = vadd.f32 %v787, 1.0
  %v890 = vadd.f32 %v789, 1.0
  %v891 = vadd.f32 %v791, 1.0
  %v892 = vadd.f32 %v793, 1.0
  %v893 = vadd.f32 %v795, 1.0
  %v894 = vadd.f32 %v797, 1.0
  %v895 = vadd.f32 %v799, 1.0
  %v896 = vadd.f32 %v801, 1.0
  %v897 = vadd.f32 %v803, 1.0
  %v898 = vadd.f32 %v805, 1.0
  %v899 = vadd.f32 %v807, 1.0
  %v900 = vadd.f32 %v809, 1.0
  %v901 = vadd.f32 %v811, 1.0
  %v902 = vadd.f32 %v813, 1.0
  %v903 = vadd.f32 %v815, 1.0
  %v904 = vadd.f32 %v817, 1.0
  %v905 = vadd.f32 %v819, 1.0
  %v906 = vadd.f32 %v821, 1.0
  %v907 = vadd.f32 %v823, 1.0
  %v908 = vadd.f32 %v825, 1.0
  %v909 = vadd.f32 %v827, 1.0
  %v910 = vadd.f32 %v829, 1.0
  %v911 = vadd.f32 %v831, 1.0
  %v912 = vadd.f32 %v833, 1.0
  %v913 = vadd.f32 %v835, 1.0
  %v914 = vadd.f32 %v837, 1.0
  %v915 = vadd.f32 %v839, 1.0
  %v916 = vadd.f32 %v841, 1.0
  %v917 = vadd.f32 %v843, 1.0
  %v918 = vadd.f32 %v845, 1.0
  %v919 = vadd.f32 %v847, 1.0
  %v920 = vadd.f32 %v849, 1.0
  %v921 = vadd.f32 %v851, 1.0
  %v922 = vadd.f32 %v853, 1.0
  %v923 = vadd.f32 %v855, 1.0
  %v924 = vadd.f32 %v857, 1.0
  %v925 = vadd.f32 %v859, 1.0
  %v926 = vadd.f32 %v861, 1.0
  %v927 = vadd.f32 %v863, 1.0
  %v928 = vrcp.pop %v864
  %v929 = vmul.f32 1.0, %v928
  %v930 = vrcp.pop %v865
  %v931 = vmul.f32 1.0, %v930
  %v932 = vrcp.pop %v866
  %v933 = vmul.f32 1.0, %v932
  %v934 = vrcp.pop %v867
  %v935 = vmul.f32 1.0, %v934
  %v936 = vrcp.pop %v868
  %v937 = vmul.f32 1.0, %v936
  %v938 = vrcp.pop %v869
  %v939 = vmul.f32 1.0, %v938
  %v940 = vrcp.pop %v870
  %v941 = vmul.f32 1.0, %v940
  %v942 = vrcp.pop %v871
  %v943 = vmul.f32 1.0, %v942
  %v944 = vrcp.pop %v872
  %v945 = vmul.f32 1.0, %v944
  %v946 = vrcp.pop %v873
  %v947 = vmul.f32 1.0, %v946
  %v948 = vrcp.pop %v874
  %v949 = vmul.f32 1.0, %v948
  %v950 = vrcp.pop %v875
  %v951 = vmul.f32 1.0, %v950
  %v952 = vrcp.pop %v876
  %v953 = vmul.f32 1.0, %v952
  %v954 = vrcp.pop %v877
  %v955 = vmul.f32 1.0, %v954
  %v956 = vrcp.pop %v878
  %v957 = vmul.f32 1.0, %v956
  %v958 = vrcp.pop %v879
  %v959 = vmul.f32 1.0, %v958
  %v960 = vrcp.pop %v880
  %v961 = vmul.f32 1.0, %v960
  %v962 = vrcp.pop %v881
  %v963 = vmul.f32 1.0, %v962
  %v964 = vrcp.pop %v882
  %v965 = vmul.f32 1.0, %v964
  %v966 = vrcp.pop %v883
  %v967 = vmul.f32 1.0, %v966
  %v968 = vrcp.pop %v884
  %v969 = vmul.f32 1.0, %v968
  %v970 = vrcp.pop %v885
  %v971 = vmul.f32 1.0, %v970
  %v972 = vrcp.pop %v886
  %v973 = vmul.f32 1.0, %v972
  %v974 = vrcp.pop %v887
  %v975 = vmul.f32 1.0, %v974
  %v976 = vrcp.pop %v888
  %v977 = vmul.f32 1.0, %v976
  %v978 = vrcp.pop %v889
  %v979 = vmul.f32 1.0, %v978
  %v980 = vrcp.pop %v890
  %v981 = vmul.f32 1.0, %v980
  %v982 = vrcp.pop %v891
  %v983 = vmul.f32 1.0, %v982
  %v984 = vrcp.pop %v892
  %v985 = vmul.f32 1.0, %v984
  %v986 = vrcp.pop %v893
  %v987 = vmul.f32 1.0, %v986
  %v988 = vrcp.pop %v894
  %v989 = vmul.f32 1.0, %v988
  %v990 = vrcp.pop %v895
  %v991 = vmul.f32 1.0, %v990
  %v992 = vrcp.pop %v896
  %v993 = vmul.f32 1.0, %v992
  %v994 = vrcp.pop %v897
  %v995 = vmul.f32 1.0, %v994
  %v996 = vrcp.pop %v898
  %v997 = vmul.f32 1.0, %v996
  %v998 = vrcp.pop %v899
  %v999 = vmul.f32 1.0, %v998
  %v1000 = vrcp.pop %v900
  %v1001 = vmul.f32 1.0, %v1000
  %v1002 = vrcp.pop %v901
  %v1003 = vmul.f32 1.0, %v1002
  %v1004 = vrcp.pop %v902
  %v1005 = vmul.f32 1.0, %v1004
  %v1006 = vrcp.pop %v903
  %v1007 = vmul.f32 1.0, %v1006
  %v1008 = vrcp.pop %v904
  %v1009 = vmul.f32 1.0, %v1008
  %v1010 = vrcp.pop %v905
  %v1011 = vmul.f32 1.0, %v1010
  %v1012 = vrcp.pop %v906
  %v1013 = vmul.f32 1.0, %v1012
  %v1014 = vrcp.pop %v907
  %v1015 = vmul.f32 1.0, %v1014
  %v1016 = vrcp.pop %v908
  %v1017 = vmul.f32 1.0, %v1016
  %v1018 = vrcp.pop %v909
  %v1019 = vmul.f32 1.0, %v1018
  %v1020 = vrcp.pop %v910
  %v1021 = vmul.f32 1.0, %v1020
  %v1022 = vrcp.pop %v911
  %v1023 = vmul.f32 1.0, %v1022
  %v1024 = vrcp.pop %v912
  %v1025 = vmul.f32 1.0, %v1024
  %v1026 = vrcp.pop %v913
  %v1027 = vmul.f32 1.0, %v1026
  %v1028 = vrcp.pop %v914
  %v1029 = vmul.f32 1.0, %v1028
  %v1030 = vrcp.pop %v915
  %v1031 = vmul.f32 1.0, %v1030
  %v1032 = vrcp.pop %v916
  %v1033 = vmul.f32 1.0, %v1032
  %v1034 = vrcp.pop %v917
  %v1035 = vmul.f32 1.0, %v1034
  %v1036 = vrcp.pop %v918
  %v1037 = vmul.f32 1.0, %v1036
  %v1038 = vrcp.pop %v919
  %v1039 = vmul.f32 1.0, %v1038
  %v1040 = vrcp.pop %v920
  %v1041 = vmul.f32 1.0, %v1040
  %v1042 = vrcp.pop %v921
  %v1043 = vmul.f32 1.0, %v1042
  %v1044 = vrcp.pop %v922
  %v1045 = vmul.f32 1.0, %v1044
  %v1046 = vrcp.pop %v923
  %v1047 = vmul.f32 1.0, %v1046
  %v1048 = vrcp.pop %v924
  %v1049 = vmul.f32 1.0, %v1048
  %v1050 = vrcp.pop %v925
  %v1051 = vmul.f32 1.0, %v1050
  %v1052 = vrcp.pop %v926
  %v1053 = vmul.f32 1.0, %v1052
  %v1054 = vrcp.pop %v927
  %v1055 = vmul.f32 1.0, %v1054
  %v1056 = vmul.f32 %v418, %v929
  %v1057 = vmul.f32 %v421, %v931
  %v1058 = vmul.f32 %v426, %v933
  %v1059 = vmul.f32 %v429, %v935
  %v1060 = vmul.f32 %v434, %v937
  %v1061 = vmul.f32 %v437, %v939
  %v1062 = vmul.f32 %v442, %v941
  %v1063 = vmul.f32 %v445, %v943
  %v1064 = vmul.f32 %v450, %v945
  %v1065 = vmul.f32 %v453, %v947
  %v1066 = vmul.f32 %v458, %v949
  %v1067 = vmul.f32 %v461, %v951
  %v1068 = vmul.f32 %v466, %v953
  %v1069 = vmul.f32 %v469, %v955
  %v1070 = vmul.f32 %v474, %v957
  %v1071 = vmul.f32 %v477, %v959
  %v1072 = vmul.f32 %v482, %v961
  %v1073 = vmul.f32 %v485, %v963
  %v1074 = vmul.f32 %v490, %v965
  %v1075 = vmul.f32 %v493, %v967
  %v1076 = vmul.f32 %v498, %v969
  %v1077 = vmul.f32 %v501, %v971
  %v1078 = vmul.f32 %v506, %v973
  %v1079 = vmul.f32 %v509, %v975
  %v1080 = vmul.f32 %v514, %v977
  %v1081 = vmul.f32 %v517, %v979
  %v1082 = vmul.f32 %v522, %v981
  %v1083 = vmul.f32 %v525, %v983
  %v1084 = vmul.f32 %v530, %v985
  %v1085 = vmul.f32 %v533, %v987
  %v1086 = vmul.f32 %v538, %v989
  %v1087 = vmul.f32 %v541, %v991
  %v1088 = vmul.f32 %v546, %v993
  %v1089 = vmul.f32 %v549, %v995
  %v1090 = vmul.f32 %v554, %v997
  %v1091 = vmul.f32 %v557, %v999
  %v1092 = vmul.f32 %v562, %v1001
  %v1093 = vmul.f32 %v565, %v1003
  %v1094 = vmul.f32 %v570, %v1005
  %v1095 = vmul.f32 %v573, %v1007
  %v1096 = vmul.f32 %v578, %v1009
  %v1097 = vmul.f32 %v581, %v1011
  %v1098 = vmul.f32 %v586, %v1013
  %v1099 = vmul.f32 %v589, %v1015
  %v1100 = vmul.f32 %v594, %v1017
  %v1101 = vmul.f32 %v597, %v1019
  %v1102 = vmul.f32 %v602, %v1021
  %v1103 = vmul.f32 %v605, %v1023
  %v1104 = vmul.f32 %v610, %v1025
  %v1105 = vmul.f32 %v613, %v1027
  %v1106 = vmul.f32 %v618, %v1029
  %v1107 = vmul.f32 %v621, %v1031
  %v1108 = vmul.f32 %v626, %v1033
  %v1109 = vmul.f32 %v629, %v1035
  %v1110 = vmul.f32 %v634, %v1037
  %v1111 = vmul.f32 %v637, %v1039
  %v1112 = vmul.f32 %v642, %v1041
  %v1113 = vmul.f32 %v645, %v1043
  %v1114 = vmul.f32 %v650, %v1045
  %v1115 = vmul.f32 %v653, %v1047
  %v1116 = vmul.f32 %v658, %v1049
  %v1117 = vmul.f32 %v661, %v1051
  %v1118 = vmul.f32 %v666, %v1053
  %v1119 = vmul.f32 %v669, %v1055
  %v1120 = vpack.c.bf16 %v1057, %v1056
  %v1121 = vpack.c.bf16 %v1059, %v1058
  %v1122 = vpack.c.bf16 %v1061, %v1060
  %v1123 = vpack.c.bf16 %v1063, %v1062
  %v1124 = vpack.c.bf16 %v1065, %v1064
  %v1125 = vpack.c.bf16 %v1067, %v1066
  %v1126 = vpack.c.bf16 %v1069, %v1068
  %v1127 = vpack.c.bf16 %v1071, %v1070
  %v1128 = vpack.c.bf16 %v1073, %v1072
  %v1129 = vpack.c.bf16 %v1075, %v1074
  %v1130 = vpack.c.bf16 %v1077, %v1076
  %v1131 = vpack.c.bf16 %v1079, %v1078
  %v1132 = vpack.c.bf16 %v1081, %v1080
  %v1133 = vpack.c.bf16 %v1083, %v1082
  %v1134 = vpack.c.bf16 %v1085, %v1084
  %v1135 = vpack.c.bf16 %v1087, %v1086
  %v1136 = vpack.c.bf16 %v1089, %v1088
  %v1137 = vpack.c.bf16 %v1091, %v1090
  %v1138 = vpack.c.bf16 %v1093, %v1092
  %v1139 = vpack.c.bf16 %v1095, %v1094
  %v1140 = vpack.c.bf16 %v1097, %v1096
  %v1141 = vpack.c.bf16 %v1099, %v1098
  %v1142 = vpack.c.bf16 %v1101, %v1100
  %v1143 = vpack.c.bf16 %v1103, %v1102
  %v1144 = vpack.c.bf16 %v1105, %v1104
  %v1145 = vpack.c.bf16 %v1107, %v1106
  %v1146 = vpack.c.bf16 %v1109, %v1108
  %v1147 = vpack.c.bf16 %v1111, %v1110
  %v1148 = vpack.c.bf16 %v1113, %v1112
  %v1149 = vpack.c.bf16 %v1115, %v1114
  %v1150 = vpack.c.bf16 %v1117, %v1116
  %v1151 = vpack.c.bf16 %v1119, %v1118
  %v1184 = vunpack.c.l.b16 %v1120
  %v1185 = vunpack.c.h.b16 %v1120
  %v1186 = vunpack.c.l.b16 %v1121
  %v1187 = vunpack.c.h.b16 %v1121
  %v1188 = vunpack.c.l.b16 %v1122
  %v1189 = vunpack.c.h.b16 %v1122
  %v1190 = vunpack.c.l.b16 %v1123
  %v1191 = vunpack.c.h.b16 %v1123
  %v1192 = vunpack.c.l.b16 %v1124
  %v1193 = vunpack.c.h.b16 %v1124
  %v1194 = vunpack.c.l.b16 %v1125
  %v1195 = vunpack.c.h.b16 %v1125
  %v1196 = vunpack.c.l.b16 %v1126
  %v1197 = vunpack.c.h.b16 %v1126
  %v1198 = vunpack.c.l.b16 %v1127
  %v1199 = vunpack.c.h.b16 %v1127
  %v1200 = vunpack.c.l.b16 %v1128
  %v1201 = vunpack.c.h.b16 %v1128
  %v1202 = vunpack.c.l.b16 %v1129
  %v1203 = vunpack.c.h.b16 %v1129
  %v1204 = vunpack.c.l.b16 %v1130
  %v1205 = vunpack.c.h.b16 %v1130
  %v1206 = vunpack.c.l.b16 %v1131
  %v1207 = vunpack.c.h.b16 %v1131
  %v1208 = vunpack.c.l.b16 %v1132
  %v1209 = vunpack.c.h.b16 %v1132
  %v1210 = vunpack.c.l.b16 %v1133
  %v1211 = vunpack.c.h.b16 %v1133
  %v1212 = vunpack.c.l.b16 %v1134
  %v1213 = vunpack.c.h.b16 %v1134
  %v1214 = vunpack.c.l.b16 %v1135
  %v1215 = vunpack.c.h.b16 %v1135
  %v1216 = vunpack.c.l.b16 %v1136
  %v1217 = vunpack.c.h.b16 %v1136
  %v1218 = vunpack.c.l.b16 %v1137
  %v1219 = vunpack.c.h.b16 %v1137
  %v1220 = vunpack.c.l.b16 %v1138
  %v1221 = vunpack.c.h.b16 %v1138
  %v1222 = vunpack.c.l.b16 %v1139
  %v1223 = vunpack.c.h.b16 %v1139
  %v1224 = vunpack.c.l.b16 %v1140
  %v1225 = vunpack.c.h.b16 %v1140
  %v1226 = vunpack.c.l.b16 %v1141
  %v1227 = vunpack.c.h.b16 %v1141
  %v1228 = vunpack.c.l.b16 %v1142
  %v1229 = vunpack.c.h.b16 %v1142
  %v1230 = vunpack.c.l.b16 %v1143
  %v1231 = vunpack.c.h.b16 %v1143
  %v1232 = vunpack.c.l.b16 %v1144
  %v1233 = vunpack.c.h.b16 %v1144
  %v1234 = vunpack.c.l.b16 %v1145
  %v1235 = vunpack.c.h.b16 %v1145
  %v1236 = vunpack.c.l.b16 %v1146
  %v1237 = vunpack.c.h.b16 %v1146
  %v1238 = vunpack.c.l.b16 %v1147
  %v1239 = vunpack.c.h.b16 %v1147
  %v1240 = vunpack.c.l.b16 %v1148
  %v1241 = vunpack.c.h.b16 %v1148
  %v1242 = vunpack.c.l.b16 %v1149
  %v1243 = vunpack.c.h.b16 %v1149
  %v1244 = vunpack.c.l.b16 %v1150
  %v1245 = vunpack.c.h.b16 %v1150
  %v1246 = vunpack.c.l.b16 %v1151
  %v1247 = vunpack.c.h.b16 %v1151
  %v1248 = vpack.c.b16 %v1184, %v1184
  %v1249 = vpack.c.b16 %v1185, %v1185
  %v1250 = vpack.c.b16 %v1186, %v1186
  %v1251 = vpack.c.b16 %v1187, %v1187
  %v1252 = vpack.c.b16 %v1188, %v1188
  %v1253 = vpack.c.b16 %v1189, %v1189
  %v1254 = vpack.c.b16 %v1190, %v1190
  %v1255 = vpack.c.b16 %v1191, %v1191
  %v1256 = vpack.c.b16 %v1192, %v1192
  %v1257 = vpack.c.b16 %v1193, %v1193
  %v1258 = vpack.c.b16 %v1194, %v1194
  %v1259 = vpack.c.b16 %v1195, %v1195
  %v1260 = vpack.c.b16 %v1196, %v1196
  %v1261 = vpack.c.b16 %v1197, %v1197
  %v1262 = vpack.c.b16 %v1198, %v1198
  %v1263 = vpack.c.b16 %v1199, %v1199
  %v1264 = vpack.c.b16 %v1200, %v1200
  %v1265 = vpack.c.b16 %v1201, %v1201
  %v1266 = vpack.c.b16 %v1202, %v1202
  %v1267 = vpack.c.b16 %v1203, %v1203
  %v1268 = vpack.c.b16 %v1204, %v1204
  %v1269 = vpack.c.b16 %v1205, %v1205
  %v1270 = vpack.c.b16 %v1206, %v1206
  %v1271 = vpack.c.b16 %v1207, %v1207
  %v1272 = vpack.c.b16 %v1208, %v1208
  %v1273 = vpack.c.b16 %v1209, %v1209
  %v1274 = vpack.c.b16 %v1210, %v1210
  %v1275 = vpack.c.b16 %v1211, %v1211
  %v1276 = vpack.c.b16 %v1212, %v1212
  %v1277 = vpack.c.b16 %v1213, %v1213
  %v1278 = vpack.c.b16 %v1214, %v1214
  %v1279 = vpack.c.b16 %v1215, %v1215
  %v1280 = vpack.c.b16 %v1216, %v1216
  %v1281 = vpack.c.b16 %v1217, %v1217
  %v1282 = vpack.c.b16 %v1218, %v1218
  %v1283 = vpack.c.b16 %v1219, %v1219
  %v1284 = vpack.c.b16 %v1220, %v1220
  %v1285 = vpack.c.b16 %v1221, %v1221
  %v1286 = vpack.c.b16 %v1222, %v1222
  %v1287 = vpack.c.b16 %v1223, %v1223
  %v1288 = vpack.c.b16 %v1224, %v1224
  %v1289 = vpack.c.b16 %v1225, %v1225
  %v1290 = vpack.c.b16 %v1226, %v1226
  %v1291 = vpack.c.b16 %v1227, %v1227
  %v1292 = vpack.c.b16 %v1228, %v1228
  %v1293 = vpack.c.b16 %v1229, %v1229
  %v1294 = vpack.c.b16 %v1230, %v1230
  %v1295 = vpack.c.b16 %v1231, %v1231
  %v1296 = vpack.c.b16 %v1232, %v1232
  %v1297 = vpack.c.b16 %v1233, %v1233
  %v1298 = vpack.c.b16 %v1234, %v1234
  %v1299 = vpack.c.b16 %v1235, %v1235
  %v1300 = vpack.c.b16 %v1236, %v1236
  %v1301 = vpack.c.b16 %v1237, %v1237
  %v1302 = vpack.c.b16 %v1238, %v1238
  %v1303 = vpack.c.b16 %v1239, %v1239
  %v1304 = vpack.c.b16 %v1240, %v1240
  %v1305 = vpack.c.b16 %v1241, %v1241
  %v1306 = vpack.c.b16 %v1242, %v1242
  %v1307 = vpack.c.b16 %v1243, %v1243
  %v1308 = vpack.c.b16 %v1244, %v1244
  %v1309 = vpack.c.b16 %v1245, %v1245
  %v1310 = vpack.c.b16 %v1246, %v1246
  %v1311 = vpack.c.b16 %v1247, %v1247
  %1376 = vst [vmem:[%s3] sm:$0xf] %v1248
  %1377 = vst [vmem:[%s3 + $0x4] sm:$0xf] %v1249
  %1378 = vst [vmem:[%s3 + $0x8] sm:$0xf] %v1250
  %1379 = vst [vmem:[%s3 + $0xc] sm:$0xf] %v1251
  %1380 = vst [vmem:[%s3 + $0x10] sm:$0xf] %v1252
  %1381 = vst [vmem:[%s3 + $0x14] sm:$0xf] %v1253
  %1382 = vst [vmem:[%s3 + $0x18] sm:$0xf] %v1254
  %1383 = vst [vmem:[%s3 + $0x1c] sm:$0xf] %v1255
  %1384 = vst [vmem:[%s3 + $0x20] sm:$0xf] %v1256
  %1385 = vst [vmem:[%s3 + $0x24] sm:$0xf] %v1257
  %1386 = vst [vmem:[%s3 + $0x28] sm:$0xf] %v1258
  %1387 = vst [vmem:[%s3 + $0x2c] sm:$0xf] %v1259
  %1388 = vst [vmem:[%s3 + $0x30] sm:$0xf] %v1260
  %1389 = vst [vmem:[%s3 + $0x34] sm:$0xf] %v1261
  %1390 = vst [vmem:[%s3 + $0x38] sm:$0xf] %v1262
  %1391 = vst [vmem:[%s3 + $0x3c] sm:$0xf] %v1263
  %1392 = vst [vmem:[%s3 + $0x40] sm:$0xf] %v1264
  %1393 = vst [vmem:[%s3 + $0x44] sm:$0xf] %v1265
  %1394 = vst [vmem:[%s3 + $0x48] sm:$0xf] %v1266
  %1395 = vst [vmem:[%s3 + $0x4c] sm:$0xf] %v1267
  %1396 = vst [vmem:[%s3 + $0x50] sm:$0xf] %v1268
  %1397 = vst [vmem:[%s3 + $0x54] sm:$0xf] %v1269
  %1398 = vst [vmem:[%s3 + $0x58] sm:$0xf] %v1270
  %1399 = vst [vmem:[%s3 + $0x5c] sm:$0xf] %v1271
  %1400 = vst [vmem:[%s3 + $0x60] sm:$0xf] %v1272
  %1401 = vst [vmem:[%s3 + $0x64] sm:$0xf] %v1273
  %1402 = vst [vmem:[%s3 + $0x68] sm:$0xf] %v1274
  %1403 = vst [vmem:[%s3 + $0x6c] sm:$0xf] %v1275
  %1404 = vst [vmem:[%s3 + $0x70] sm:$0xf] %v1276
  %1405 = vst [vmem:[%s3 + $0x74] sm:$0xf] %v1277
  %1406 = vst [vmem:[%s3 + $0x78] sm:$0xf] %v1278
  %1407 = vst [vmem:[%s3 + $0x7c] sm:$0xf] %v1279
  %1408 = vst [vmem:[%s3 + $0x80] sm:$0xf] %v1280
  %1409 = vst [vmem:[%s3 + $0x84] sm:$0xf] %v1281
  %1410 = vst [vmem:[%s3 + $0x88] sm:$0xf] %v1282
  %1411 = vst [vmem:[%s3 + $0x8c] sm:$0xf] %v1283
  %1412 = vst [vmem:[%s3 + $0x90] sm:$0xf] %v1284
  %1413 = vst [vmem:[%s3 + $0x94] sm:$0xf] %v1285
  %1414 = vst [vmem:[%s3 + $0x98] sm:$0xf] %v1286
  %1415 = vst [vmem:[%s3 + $0x9c] sm:$0xf] %v1287
  %1416 = vst [vmem:[%s3 + $0xa0] sm:$0xf] %v1288
  %1417 = vst [vmem:[%s3 + $0xa4] sm:$0xf] %v1289
  %1418 = vst [vmem:[%s3 + $0xa8] sm:$0xf] %v1290
  %1419 = vst [vmem:[%s3 + $0xac] sm:$0xf] %v1291
  %1420 = vst [vmem:[%s3 + $0xb0] sm:$0xf] %v1292
  %1421 = vst [vmem:[%s3 + $0xb4] sm:$0xf] %v1293
  %1422 = vst [vmem:[%s3 + $0xb8] sm:$0xf] %v1294
  %1423 = vst [vmem:[%s3 + $0xbc] sm:$0xf] %v1295
  %1424 = vst [vmem:[%s3 + $0xc0] sm:$0xf] %v1296
  %1425 = vst [vmem:[%s3 + $0xc4] sm:$0xf] %v1297
  %1426 = vst [vmem:[%s3 + $0xc8] sm:$0xf] %v1298
  %1427 = vst [vmem:[%s3 + $0xcc] sm:$0xf] %v1299
  %1428 = vst [vmem:[%s3 + $0xd0] sm:$0xf] %v1300
  %1429 = vst [vmem:[%s3 + $0xd4] sm:$0xf] %v1301
  %1430 = vst [vmem:[%s3 + $0xd8] sm:$0xf] %v1302
  %1431 = vst [vmem:[%s3 + $0xdc] sm:$0xf] %v1303
  %1432 = vst [vmem:[%s3 + $0xe0] sm:$0xf] %v1304
  %1433 = vst [vmem:[%s3 + $0xe4] sm:$0xf] %v1305
  %1434 = vst [vmem:[%s3 + $0xe8] sm:$0xf] %v1306
  %1435 = vst [vmem:[%s3 + $0xec] sm:$0xf] %v1307
  %1436 = vst [vmem:[%s3 + $0xf0] sm:$0xf] %v1308
  %1437 = vst [vmem:[%s3 + $0xf4] sm:$0xf] %v1309
  %1438 = vst [vmem:[%s3 + $0xf8] sm:$0xf] %v1310
  %1439 = vst [vmem:[%s3 + $0xfc] sm:$0xf] %v1311
  // Predicated region
  $region14: #{efficientnetv2l_forward.10} parent=0 // pred_check
    _
  $region15: #{efficientnetv2l_forward.10} parent=0 // pred_check_branch
    %1441 = sbr.rel (0) target = $region17
  $region16: #{efficientnetv2l_forward.10} parent=0 // pred_region
    _
  $region17: #{efficientnetv2l_forward.10} parent=0 // pred_fallthru
    _
  // Predicated region
  $region18: #{efficientnetv2l_forward.10} parent=0 // pred_check
    _
  $region19: #{efficientnetv2l_forward.10} parent=0 // pred_check_branch
    %1443 = sbr.rel (0) target = $region21
  $region20: #{efficientnetv2l_forward.10} parent=0 // pred_region
    _
  $region21: #{efficientnetv2l_forward.10} parent=0 // pred_fallthru
    _

// kernel: efficientnetv2l_forward.11
$region0: #{efficientnetv2l_forward.11}
  #allocation0 [shape = 'u32[]', space=smem, size = 0x4, offset = 0x4, fixed_abs, tag = 'smem constant byte address 0x4 - core index']
  #allocation1 [shape = 'u32[144,128]{1,0:T(1,128)}', space=vmem, size = 0x12000, scoped, tag = 'internal scratch']
  %s0 = inlined_call_operand.vmem [shape: bf16[512,1152], index: 0, kind: input, shape index: {}]
  %s1 = inlined_call_operand.vmem [shape: bf16[1152,128], index: 1, kind: input, shape index: {}]
  %s2 = inlined_call_operand.vmem [shape: f32[1,128], index: 2, kind: input, shape index: {}]
  %s3 = inlined_call_operand.vmem [shape: bf16[512,128], index: 3, kind: input, shape index: {}]
  %s4 = inlined_call_operand.vmem [shape: bf16[512,128], index: 4, kind: output, shape index: {}]
  %s5 = sld [smem:[#allocation0]]
  $region26: #{efficientnetv2l_forward.11} parent=0
    _
  %s7 = ssub.s32 1, %s5
  %s8 = scalar_select 0, %s7, %s5
  // Predicated region
  $region2: #{efficientnetv2l_forward.11} parent=0 // pred_check
    _
  $region3: #{efficientnetv2l_forward.11} parent=0 // pred_check_branch
    %10 = sbr.rel (0) target = $region5
  $region4: #{efficientnetv2l_forward.11} parent=0 // pred_region
    _
  $region5: #{efficientnetv2l_forward.11} parent=0 // pred_fallthru
    _
  // Predicated region
  $region6: #{efficientnetv2l_forward.11} parent=0 // pred_check
    _
  $region7: #{efficientnetv2l_forward.11} parent=0 // pred_check_branch
    %12 = sbr.rel (0) target = $region9
  $region8: #{efficientnetv2l_forward.11} parent=0 // pred_region
    _
  $region9: #{efficientnetv2l_forward.11} parent=0 // pred_fallthru
    _
  // Predicated region
  $region10: #{efficientnetv2l_forward.11} parent=0 // pred_check
    _
  $region11: #{efficientnetv2l_forward.11} parent=0 // pred_check_branch
    %14 = sbr.rel (0) target = $region13
  $region12: #{efficientnetv2l_forward.11} parent=0 // pred_region
    _
  $region13: #{efficientnetv2l_forward.11} parent=0 // pred_fallthru
    _
  // Predicated region
  $region14: #{efficientnetv2l_forward.11} parent=0 // pred_check
    _
  $region15: #{efficientnetv2l_forward.11} parent=0 // pred_check_branch
    %16 = sbr.rel (0) target = $region17
  $region16: #{efficientnetv2l_forward.11} parent=0 // pred_region
    _
  $region17: #{efficientnetv2l_forward.11} parent=0 // pred_fallthru
    _
  %v18 = vld [vmem:[%s0] sm:$0xff]
  %v19 = vld [vmem:[%s0 + $0x8] sm:$0xff]
  %v20 = vld [vmem:[%s0 + $0x10] sm:$0xff]
  %v21 = vld [vmem:[%s0 + $0x18] sm:$0xff]
  %v22 = vld [vmem:[%s0 + $0x20] sm:$0xf]
  %v23 = vld [vmem:[%s0 + $0x24] sm:$0xff]
  %v24 = vld [vmem:[%s0 + $0x2c] sm:$0xff]
  %v25 = vld [vmem:[%s0 + $0x34] sm:$0xff]
  %v26 = vld [vmem:[%s0 + $0x3c] sm:$0xff]
  %v27 = vld [vmem:[%s0 + $0x44] sm:$0xf]
  %v28 = vld [vmem:[%s0 + $0x48] sm:$0xff]
  %v29 = vld [vmem:[%s0 + $0x50] sm:$0xff]
  %v30 = vld [vmem:[%s0 + $0x58] sm:$0xff]
  %v31 = vld [vmem:[%s0 + $0x60] sm:$0xff]
  %v32 = vld [vmem:[%s0 + $0x68] sm:$0xf]
  %v33 = vld [vmem:[%s0 + $0x6c] sm:$0xff]
  %v34 = vld [vmem:[%s0 + $0x74] sm:$0xff]
  %v35 = vld [vmem:[%s0 + $0x7c] sm:$0xff]
  %v36 = vld [vmem:[%s0 + $0x84] sm:$0xff]
  %v37 = vld [vmem:[%s0 + $0x8c] sm:$0xf]
  %v38 = vld [vmem:[%s0 + $0x90] sm:$0xff]
  %v39 = vld [vmem:[%s0 + $0x98] sm:$0xff]
  %v40 = vld [vmem:[%s0 + $0xa0] sm:$0xff]
  %v41 = vld [vmem:[%s0 + $0xa8] sm:$0xff]
  %v42 = vld [vmem:[%s0 + $0xb0] sm:$0xf]
  %v43 = vld [vmem:[%s0 + $0xb4] sm:$0xff]
  %v44 = vld [vmem:[%s0 + $0xbc] sm:$0xff]
  %v45 = vld [vmem:[%s0 + $0xc4] sm:$0xff]
  %v46 = vld [vmem:[%s0 + $0xcc] sm:$0xff]
  %v47 = vld [vmem:[%s0 + $0xd4] sm:$0xf]
  %v48 = vld [vmem:[%s0 + $0xd8] sm:$0xff]
  %v49 = vld [vmem:[%s0 + $0xe0] sm:$0xff]
  %v50 = vld [vmem:[%s0 + $0xe8] sm:$0xff]
  %v51 = vld [vmem:[%s0 + $0xf0] sm:$0xff]
  %v52 = vld [vmem:[%s0 + $0xf8] sm:$0xf]
  %v53 = vld [vmem:[%s0 + $0xfc] sm:$0xff]
  %v54 = vld [vmem:[%s0 + $0x104] sm:$0xff]
  %v55 = vld [vmem:[%s0 + $0x10c] sm:$0xff]
  %v56 = vld [vmem:[%s0 + $0x114] sm:$0xff]
  %v57 = vld [vmem:[%s0 + $0x11c] sm:$0xf]
  %v58 = vld [vmem:[%s0 + $0x120] sm:$0xff]
  %v59 = vld [vmem:[%s0 + $0x128] sm:$0xff]
  %v60 = vld [vmem:[%s0 + $0x130] sm:$0xff]
  %v61 = vld [vmem:[%s0 + $0x138] sm:$0xff]
  %v62 = vld [vmem:[%s0 + $0x140] sm:$0xf]
  %v63 = vld [vmem:[%s0 + $0x144] sm:$0xff]
  %v64 = vld [vmem:[%s0 + $0x14c] sm:$0xff]
  %v65 = vld [vmem:[%s0 + $0x154] sm:$0xff]
  %v66 = vld [vmem:[%s0 + $0x15c] sm:$0xff]
  %v67 = vld [vmem:[%s0 + $0x164] sm:$0xf]
  %v68 = vld [vmem:[%s0 + $0x168] sm:$0xff]
  %v69 = vld [vmem:[%s0 + $0x170] sm:$0xff]
  %v70 = vld [vmem:[%s0 + $0x178] sm:$0xff]
  %v71 = vld [vmem:[%s0 + $0x180] sm:$0xff]
  %v72 = vld [vmem:[%s0 + $0x188] sm:$0xf]
  %v73 = vld [vmem:[%s0 + $0x18c] sm:$0xff]
  %v74 = vld [vmem:[%s0 + $0x194] sm:$0xff]
  %v75 = vld [vmem:[%s0 + $0x19c] sm:$0xff]
  %v76 = vld [vmem:[%s0 + $0x1a4] sm:$0xff]
  %v77 = vld [vmem:[%s0 + $0x1ac] sm:$0xf]
  %v78 = vld [vmem:[%s0 + $0x1b0] sm:$0xff]
  %v79 = vld [vmem:[%s0 + $0x1b8] sm:$0xff]
  %v80 = vld [vmem:[%s0 + $0x1c0] sm:$0xff]
  %v81 = vld [vmem:[%s0 + $0x1c8] sm:$0xff]
  %v82 = vld [vmem:[%s0 + $0x1d0] sm:$0xf]
  %v83 = vld [vmem:[%s0 + $0x1d4] sm:$0xff]
  %v84 = vld [vmem:[%s0 + $0x1dc] sm:$0xff]
  %v85 = vld [vmem:[%s0 + $0x1e4] sm:$0xff]
  %v86 = vld [vmem:[%s0 + $0x1ec] sm:$0xff]
  %v87 = vld [vmem:[%s0 + $0x1f4] sm:$0xf]
  %v88 = vld [vmem:[%s0 + $0x1f8] sm:$0xff]
  %v89 = vld [vmem:[%s0 + $0x200] sm:$0xff]
  %v90 = vld [vmem:[%s0 + $0x208] sm:$0xff]
  %v91 = vld [vmem:[%s0 + $0x210] sm:$0xff]
  %v92 = vld [vmem:[%s0 + $0x218] sm:$0xf]
  %v93 = vld [vmem:[%s0 + $0x21c] sm:$0xff]
  %v94 = vld [vmem:[%s0 + $0x224] sm:$0xff]
  %v95 = vld [vmem:[%s0 + $0x22c] sm:$0xff]
  %v96 = vld [vmem:[%s0 + $0x234] sm:$0xff]
  %v97 = vld [vmem:[%s0 + $0x23c] sm:$0xf]
  %v98 = vld [vmem:[%s0 + $0x240] sm:$0xff]
  %v99 = vld [vmem:[%s0 + $0x248] sm:$0xff]
  %v100 = vld [vmem:[%s0 + $0x250] sm:$0xff]
  %v101 = vld [vmem:[%s0 + $0x258] sm:$0xff]
  %v102 = vld [vmem:[%s0 + $0x260] sm:$0xf]
  %v103 = vld [vmem:[%s0 + $0x264] sm:$0xff]
  %v104 = vld [vmem:[%s0 + $0x26c] sm:$0xff]
  %v105 = vld [vmem:[%s0 + $0x274] sm:$0xff]
  %v106 = vld [vmem:[%s0 + $0x27c] sm:$0xff]
  %v107 = vld [vmem:[%s0 + $0x284] sm:$0xf]
  %v108 = vld [vmem:[%s0 + $0x288] sm:$0xff]
  %v109 = vld [vmem:[%s0 + $0x290] sm:$0xff]
  %v110 = vld [vmem:[%s0 + $0x298] sm:$0xff]
  %v111 = vld [vmem:[%s0 + $0x2a0] sm:$0xff]
  %v112 = vld [vmem:[%s0 + $0x2a8] sm:$0xf]
  %v113 = vld [vmem:[%s0 + $0x2ac] sm:$0xff]
  %v114 = vld [vmem:[%s0 + $0x2b4] sm:$0xff]
  %v115 = vld [vmem:[%s0 + $0x2bc] sm:$0xff]
  %v116 = vld [vmem:[%s0 + $0x2c4] sm:$0xff]
  %v117 = vld [vmem:[%s0 + $0x2cc] sm:$0xf]
  %v118 = vld [vmem:[%s0 + $0x2d0] sm:$0xff]
  %v119 = vld [vmem:[%s0 + $0x2d8] sm:$0xff]
  %v120 = vld [vmem:[%s0 + $0x2e0] sm:$0xff]
  %v121 = vld [vmem:[%s0 + $0x2e8] sm:$0xff]
  %v122 = vld [vmem:[%s0 + $0x2f0] sm:$0xf]
  %v123 = vld [vmem:[%s0 + $0x2f4] sm:$0xff]
  %v124 = vld [vmem:[%s0 + $0x2fc] sm:$0xff]
  %v125 = vld [vmem:[%s0 + $0x304] sm:$0xff]
  %v126 = vld [vmem:[%s0 + $0x30c] sm:$0xff]
  %v127 = vld [vmem:[%s0 + $0x314] sm:$0xf]
  %v128 = vld [vmem:[%s0 + $0x318] sm:$0xff]
  %v129 = vld [vmem:[%s0 + $0x320] sm:$0xff]
  %v130 = vld [vmem:[%s0 + $0x328] sm:$0xff]
  %v131 = vld [vmem:[%s0 + $0x330] sm:$0xff]
  %v132 = vld [vmem:[%s0 + $0x338] sm:$0xf]
  %v133 = vld [vmem:[%s0 + $0x33c] sm:$0xff]
  %v134 = vld [vmem:[%s0 + $0x344] sm:$0xff]
  %v135 = vld [vmem:[%s0 + $0x34c] sm:$0xff]
  %v136 = vld [vmem:[%s0 + $0x354] sm:$0xff]
  %v137 = vld [vmem:[%s0 + $0x35c] sm:$0xf]
  %v138 = vld [vmem:[%s0 + $0x360] sm:$0xff]
  %v139 = vld [vmem:[%s0 + $0x368] sm:$0xff]
  %v140 = vld [vmem:[%s0 + $0x370] sm:$0xff]
  %v141 = vld [vmem:[%s0 + $0x378] sm:$0xff]
  %v142 = vld [vmem:[%s0 + $0x380] sm:$0xf]
  %v143 = vld [vmem:[%s0 + $0x384] sm:$0xff]
  %v144 = vld [vmem:[%s0 + $0x38c] sm:$0xff]
  %v145 = vld [vmem:[%s0 + $0x394] sm:$0xff]
  %v146 = vld [vmem:[%s0 + $0x39c] sm:$0xff]
  %v147 = vld [vmem:[%s0 + $0x3a4] sm:$0xf]
  %v148 = vld [vmem:[%s0 + $0x3a8] sm:$0xff]
  %v149 = vld [vmem:[%s0 + $0x3b0] sm:$0xff]
  %v150 = vld [vmem:[%s0 + $0x3b8] sm:$0xff]
  %v151 = vld [vmem:[%s0 + $0x3c0] sm:$0xff]
  %v152 = vld [vmem:[%s0 + $0x3c8] sm:$0xf]
  %v153 = vld [vmem:[%s0 + $0x3cc] sm:$0xff]
  %v154 = vld [vmem:[%s0 + $0x3d4] sm:$0xff]
  %v155 = vld [vmem:[%s0 + $0x3dc] sm:$0xff]
  %v156 = vld [vmem:[%s0 + $0x3e4] sm:$0xff]
  %v157 = vld [vmem:[%s0 + $0x3ec] sm:$0xf]
  %v158 = vld [vmem:[%s0 + $0x3f0] sm:$0xff]
  %v159 = vld [vmem:[%s0 + $0x3f8] sm:$0xff]
  %v160 = vld [vmem:[%s0 + $0x400] sm:$0xff]
  %v161 = vld [vmem:[%s0 + $0x408] sm:$0xff]
  %v162 = vld [vmem:[%s0 + $0x410] sm:$0xf]
  %v163 = vld [vmem:[%s0 + $0x414] sm:$0xff]
  %v164 = vld [vmem:[%s0 + $0x41c] sm:$0xff]
  %v165 = vld [vmem:[%s0 + $0x424] sm:$0xff]
  %v166 = vld [vmem:[%s0 + $0x42c] sm:$0xff]
  %v167 = vld [vmem:[%s0 + $0x434] sm:$0xf]
  %v168 = vld [vmem:[%s0 + $0x438] sm:$0xff]
  %v169 = vld [vmem:[%s0 + $0x440] sm:$0xff]
  %v170 = vld [vmem:[%s0 + $0x448] sm:$0xff]
  %v171 = vld [vmem:[%s0 + $0x450] sm:$0xff]
  %v172 = vld [vmem:[%s0 + $0x458] sm:$0xf]
  %v173 = vld [vmem:[%s0 + $0x45c] sm:$0xff]
  %v174 = vld [vmem:[%s0 + $0x464] sm:$0xff]
  %v175 = vld [vmem:[%s0 + $0x46c] sm:$0xff]
  %v176 = vld [vmem:[%s0 + $0x474] sm:$0xff]
  %v177 = vld [vmem:[%s0 + $0x47c] sm:$0xf]
  %v178 = vld [vmem:[%s0 + $0x480] sm:$0xff]
  %v179 = vld [vmem:[%s0 + $0x488] sm:$0xff]
  %v180 = vld [vmem:[%s0 + $0x490] sm:$0xff]
  %v181 = vld [vmem:[%s0 + $0x498] sm:$0xff]
  %v182 = vld [vmem:[%s0 + $0x4a0] sm:$0xf]
  %v183 = vld [vmem:[%s0 + $0x4a4] sm:$0xff]
  %v184 = vld [vmem:[%s0 + $0x4ac] sm:$0xff]
  %v185 = vld [vmem:[%s0 + $0x4b4] sm:$0xff]
  %v186 = vld [vmem:[%s0 + $0x4bc] sm:$0xff]
  %v187 = vld [vmem:[%s0 + $0x4c4] sm:$0xf]
  %v188 = vld [vmem:[%s0 + $0x4c8] sm:$0xff]
  %v189 = vld [vmem:[%s0 + $0x4d0] sm:$0xff]
  %v190 = vld [vmem:[%s0 + $0x4d8] sm:$0xff]
  %v191 = vld [vmem:[%s0 + $0x4e0] sm:$0xff]
  %v192 = vld [vmem:[%s0 + $0x4e8] sm:$0xf]
  %v193 = vld [vmem:[%s0 + $0x4ec] sm:$0xff]
  %v194 = vld [vmem:[%s0 + $0x4f4] sm:$0xff]
  %v195 = vld [vmem:[%s0 + $0x4fc] sm:$0xff]
  %v196 = vld [vmem:[%s0 + $0x504] sm:$0xff]
  %v197 = vld [vmem:[%s0 + $0x50c] sm:$0xf]
  %v198 = vld [vmem:[%s0 + $0x510] sm:$0xff]
  %v199 = vld [vmem:[%s0 + $0x518] sm:$0xff]
  %v200 = vld [vmem:[%s0 + $0x520] sm:$0xff]
  %v201 = vld [vmem:[%s0 + $0x528] sm:$0xff]
  %v202 = vld [vmem:[%s0 + $0x530] sm:$0xf]
  %v203 = vld [vmem:[%s0 + $0x534] sm:$0xff]
  %v204 = vld [vmem:[%s0 + $0x53c] sm:$0xff]
  %v205 = vld [vmem:[%s0 + $0x544] sm:$0xff]
  %v206 = vld [vmem:[%s0 + $0x54c] sm:$0xff]
  %v207 = vld [vmem:[%s0 + $0x554] sm:$0xf]
  %v208 = vld [vmem:[%s0 + $0x558] sm:$0xff]
  %v209 = vld [vmem:[%s0 + $0x560] sm:$0xff]
  %v210 = vld [vmem:[%s0 + $0x568] sm:$0xff]
  %v211 = vld [vmem:[%s0 + $0x570] sm:$0xff]
  %v212 = vld [vmem:[%s0 + $0x578] sm:$0xf]
  %v213 = vld [vmem:[%s0 + $0x57c] sm:$0xff]
  %v214 = vld [vmem:[%s0 + $0x584] sm:$0xff]
  %v215 = vld [vmem:[%s0 + $0x58c] sm:$0xff]
  %v216 = vld [vmem:[%s0 + $0x594] sm:$0xff]
  %v217 = vld [vmem:[%s0 + $0x59c] sm:$0xf]
  %v218 = vld [vmem:[%s0 + $0x5a0] sm:$0xff]
  %v219 = vld [vmem:[%s0 + $0x5a8] sm:$0xff]
  %v220 = vld [vmem:[%s0 + $0x5b0] sm:$0xff]
  %v221 = vld [vmem:[%s0 + $0x5b8] sm:$0xff]
  %v222 = vld [vmem:[%s0 + $0x5c0] sm:$0xf]
  %v223 = vld [vmem:[%s0 + $0x5c4] sm:$0xff]
  %v224 = vld [vmem:[%s0 + $0x5cc] sm:$0xff]
  %v225 = vld [vmem:[%s0 + $0x5d4] sm:$0xff]
  %v226 = vld [vmem:[%s0 + $0x5dc] sm:$0xff]
  %v227 = vld [vmem:[%s0 + $0x5e4] sm:$0xf]
  %v228 = vld [vmem:[%s0 + $0x5e8] sm:$0xff]
  %v229 = vld [vmem:[%s0 + $0x5f0] sm:$0xff]
  %v230 = vld [vmem:[%s0 + $0x5f8] sm:$0xff]
  %v231 = vld [vmem:[%s0 + $0x600] sm:$0xff]
  %v232 = vld [vmem:[%s0 + $0x608] sm:$0xf]
  %v233 = vld [vmem:[%s0 + $0x60c] sm:$0xff]
  %v234 = vld [vmem:[%s0 + $0x614] sm:$0xff]
  %v235 = vld [vmem:[%s0 + $0x61c] sm:$0xff]
  %v236 = vld [vmem:[%s0 + $0x624] sm:$0xff]
  %v237 = vld [vmem:[%s0 + $0x62c] sm:$0xf]
  %v238 = vld [vmem:[%s0 + $0x630] sm:$0xff]
  %v239 = vld [vmem:[%s0 + $0x638] sm:$0xff]
  %v240 = vld [vmem:[%s0 + $0x640] sm:$0xff]
  %v241 = vld [vmem:[%s0 + $0x648] sm:$0xff]
  %v242 = vld [vmem:[%s0 + $0x650] sm:$0xf]
  %v243 = vld [vmem:[%s0 + $0x654] sm:$0xff]
  %v244 = vld [vmem:[%s0 + $0x65c] sm:$0xff]
  %v245 = vld [vmem:[%s0 + $0x664] sm:$0xff]
  %v246 = vld [vmem:[%s0 + $0x66c] sm:$0xff]
  %v247 = vld [vmem:[%s0 + $0x674] sm:$0xf]
  %v248 = vld [vmem:[%s0 + $0x678] sm:$0xff]
  %v249 = vld [vmem:[%s0 + $0x680] sm:$0xff]
  %v250 = vld [vmem:[%s0 + $0x688] sm:$0xff]
  %v251 = vld [vmem:[%s0 + $0x690] sm:$0xff]
  %v252 = vld [vmem:[%s0 + $0x698] sm:$0xf]
  %v253 = vld [vmem:[%s0 + $0x69c] sm:$0xff]
  %v254 = vld [vmem:[%s0 + $0x6a4] sm:$0xff]
  %v255 = vld [vmem:[%s0 + $0x6ac] sm:$0xff]
  %v256 = vld [vmem:[%s0 + $0x6b4] sm:$0xff]
  %v257 = vld [vmem:[%s0 + $0x6bc] sm:$0xf]
  %v258 = vld [vmem:[%s0 + $0x6c0] sm:$0xff]
  %v259 = vld [vmem:[%s0 + $0x6c8] sm:$0xff]
  %v260 = vld [vmem:[%s0 + $0x6d0] sm:$0xff]
  %v261 = vld [vmem:[%s0 + $0x6d8] sm:$0xff]
  %v262 = vld [vmem:[%s0 + $0x6e0] sm:$0xf]
  %v263 = vld [vmem:[%s0 + $0x6e4] sm:$0xff]
  %v264 = vld [vmem:[%s0 + $0x6ec] sm:$0xff]
  %v265 = vld [vmem:[%s0 + $0x6f4] sm:$0xff]
  %v266 = vld [vmem:[%s0 + $0x6fc] sm:$0xff]
  %v267 = vld [vmem:[%s0 + $0x704] sm:$0xf]
  %v268 = vld [vmem:[%s0 + $0x708] sm:$0xff]
  %v269 = vld [vmem:[%s0 + $0x710] sm:$0xff]
  %v270 = vld [vmem:[%s0 + $0x718] sm:$0xff]
  %v271 = vld [vmem:[%s0 + $0x720] sm:$0xff]
  %v272 = vld [vmem:[%s0 + $0x728] sm:$0xf]
  %v273 = vld [vmem:[%s0 + $0x72c] sm:$0xff]
  %v274 = vld [vmem:[%s0 + $0x734] sm:$0xff]
  %v275 = vld [vmem:[%s0 + $0x73c] sm:$0xff]
  %v276 = vld [vmem:[%s0 + $0x744] sm:$0xff]
  %v277 = vld [vmem:[%s0 + $0x74c] sm:$0xf]
  %v278 = vld [vmem:[%s0 + $0x750] sm:$0xff]
  %v279 = vld [vmem:[%s0 + $0x758] sm:$0xff]
  %v280 = vld [vmem:[%s0 + $0x760] sm:$0xff]
  %v281 = vld [vmem:[%s0 + $0x768] sm:$0xff]
  %v282 = vld [vmem:[%s0 + $0x770] sm:$0xf]
  %v283 = vld [vmem:[%s0 + $0x774] sm:$0xff]
  %v284 = vld [vmem:[%s0 + $0x77c] sm:$0xff]
  %v285 = vld [vmem:[%s0 + $0x784] sm:$0xff]
  %v286 = vld [vmem:[%s0 + $0x78c] sm:$0xff]
  %v287 = vld [vmem:[%s0 + $0x794] sm:$0xf]
  %v288 = vld [vmem:[%s0 + $0x798] sm:$0xff]
  %v289 = vld [vmem:[%s0 + $0x7a0] sm:$0xff]
  %v290 = vld [vmem:[%s0 + $0x7a8] sm:$0xff]
  %v291 = vld [vmem:[%s0 + $0x7b0] sm:$0xff]
  %v292 = vld [vmem:[%s0 + $0x7b8] sm:$0xf]
  %v293 = vld [vmem:[%s0 + $0x7bc] sm:$0xff]
  %v294 = vld [vmem:[%s0 + $0x7c4] sm:$0xff]
  %v295 = vld [vmem:[%s0 + $0x7cc] sm:$0xff]
  %v296 = vld [vmem:[%s0 + $0x7d4] sm:$0xff]
  %v297 = vld [vmem:[%s0 + $0x7dc] sm:$0xf]
  %v298 = vld [vmem:[%s0 + $0x7e0] sm:$0xff]
  %v299 = vld [vmem:[%s0 + $0x7e8] sm:$0xff]
  %v300 = vld [vmem:[%s0 + $0x7f0] sm:$0xff]
  %v301 = vld [vmem:[%s0 + $0x7f8] sm:$0xff]
  %v302 = vld [vmem:[%s0 + $0x800] sm:$0xf]
  %v303 = vld [vmem:[%s0 + $0x804] sm:$0xff]
  %v304 = vld [vmem:[%s0 + $0x80c] sm:$0xff]
  %v305 = vld [vmem:[%s0 + $0x814] sm:$0xff]
  %v306 = vld [vmem:[%s0 + $0x81c] sm:$0xff]
  %v307 = vld [vmem:[%s0 + $0x824] sm:$0xf]
  %v308 = vld [vmem:[%s0 + $0x828] sm:$0xff]
  %v309 = vld [vmem:[%s0 + $0x830] sm:$0xff]
  %v310 = vld [vmem:[%s0 + $0x838] sm:$0xff]
  %v311 = vld [vmem:[%s0 + $0x840] sm:$0xff]
  %v312 = vld [vmem:[%s0 + $0x848] sm:$0xf]
  %v313 = vld [vmem:[%s0 + $0x84c] sm:$0xff]
  %v314 = vld [vmem:[%s0 + $0x854] sm:$0xff]
  %v315 = vld [vmem:[%s0 + $0x85c] sm:$0xff]
  %v316 = vld [vmem:[%s0 + $0x864] sm:$0xff]
  %v317 = vld [vmem:[%s0 + $0x86c] sm:$0xf]
  %v318 = vld [vmem:[%s0 + $0x870] sm:$0xff]
  %v319 = vld [vmem:[%s0 + $0x878] sm:$0xff]
  %v320 = vld [vmem:[%s0 + $0x880] sm:$0xff]
  %v321 = vld [vmem:[%s0 + $0x888] sm:$0xff]
  %v322 = vld [vmem:[%s0 + $0x890] sm:$0xf]
  %v323 = vld [vmem:[%s0 + $0x894] sm:$0xff]
  %v324 = vld [vmem:[%s0 + $0x89c] sm:$0xff]
  %v325 = vld [vmem:[%s0 + $0x8a4] sm:$0xff]
  %v326 = vld [vmem:[%s0 + $0x8ac] sm:$0xff]
  %v327 = vld [vmem:[%s0 + $0x8b4] sm:$0xf]
  %v328 = vld [vmem:[%s0 + $0x8b8] sm:$0xff]
  %v329 = vld [vmem:[%s0 + $0x8c0] sm:$0xff]
  %v330 = vld [vmem:[%s0 + $0x8c8] sm:$0xff]
  %v331 = vld [vmem:[%s0 + $0x8d0] sm:$0xff]
  %v332 = vld [vmem:[%s0 + $0x8d8] sm:$0xf]
  %v333 = vld [vmem:[%s0 + $0x8dc] sm:$0xff]
  %v334 = vld [vmem:[%s0 + $0x8e4] sm:$0xff]
  %v335 = vld [vmem:[%s0 + $0x8ec] sm:$0xff]
  %v336 = vld [vmem:[%s0 + $0x8f4] sm:$0xff]
  %v337 = vld [vmem:[%s0 + $0x8fc] sm:$0xf]
  %v338 = vld [vmem:[%s1] sm:$0xf]
  %v339 = vld [vmem:[%s1 + $0x4] sm:$0xf]
  %v340 = vld [vmem:[%s1 + $0x8] sm:$0xf]
  %v341 = vld [vmem:[%s1 + $0xc] sm:$0xf]
  %v342 = vld [vmem:[%s1 + $0x10] sm:$0xf]
  %v343 = vld [vmem:[%s1 + $0x14] sm:$0xf]
  %v344 = vld [vmem:[%s1 + $0x18] sm:$0xf]
  %v345 = vld [vmem:[%s1 + $0x1c] sm:$0xf]
  %v346 = vld [vmem:[%s1 + $0x20] sm:$0xf]
  %v347 = vld [vmem:[%s1 + $0x24] sm:$0xf]
  %v348 = vld [vmem:[%s1 + $0x28] sm:$0xf]
  %v349 = vld [vmem:[%s1 + $0x2c] sm:$0xf]
  %v350 = vld [vmem:[%s1 + $0x30] sm:$0xf]
  %v351 = vld [vmem:[%s1 + $0x34] sm:$0xf]
  %v352 = vld [vmem:[%s1 + $0x38] sm:$0xf]
  %v353 = vld [vmem:[%s1 + $0x3c] sm:$0xf]
  %v354 = vld [vmem:[%s1 + $0x40] sm:$0xf]
  %v355 = vld [vmem:[%s1 + $0x44] sm:$0xf]
  %v356 = vld [vmem:[%s1 + $0x48] sm:$0xf]
  %v357 = vld [vmem:[%s1 + $0x4c] sm:$0xf]
  %v358 = vld [vmem:[%s1 + $0x50] sm:$0xf]
  %v359 = vld [vmem:[%s1 + $0x54] sm:$0xf]
  %v360 = vld [vmem:[%s1 + $0x58] sm:$0xf]
  %v361 = vld [vmem:[%s1 + $0x5c] sm:$0xf]
  %v362 = vld [vmem:[%s1 + $0x60] sm:$0xf]
  %v363 = vld [vmem:[%s1 + $0x64] sm:$0xf]
  %v364 = vld [vmem:[%s1 + $0x68] sm:$0xf]
  %v365 = vld [vmem:[%s1 + $0x6c] sm:$0xf]
  %v366 = vld [vmem:[%s1 + $0x70] sm:$0xf]
  %v367 = vld [vmem:[%s1 + $0x74] sm:$0xf]
  %v368 = vld [vmem:[%s1 + $0x78] sm:$0xf]
  %v369 = vld [vmem:[%s1 + $0x7c] sm:$0xf]
  %v370 = vld [vmem:[%s1 + $0x80] sm:$0xf]
  %v371 = vld [vmem:[%s1 + $0x84] sm:$0xf]
  %v372 = vld [vmem:[%s1 + $0x88] sm:$0xf]
  %v373 = vld [vmem:[%s1 + $0x8c] sm:$0xf]
  %v374 = vld [vmem:[%s1 + $0x90] sm:$0xf]
  %v375 = vld [vmem:[%s1 + $0x94] sm:$0xf]
  %v376 = vld [vmem:[%s1 + $0x98] sm:$0xf]
  %v377 = vld [vmem:[%s1 + $0x9c] sm:$0xf]
  %v378 = vld [vmem:[%s1 + $0xa0] sm:$0xf]
  %v379 = vld [vmem:[%s1 + $0xa4] sm:$0xf]
  %v380 = vld [vmem:[%s1 + $0xa8] sm:$0xf]
  %v381 = vld [vmem:[%s1 + $0xac] sm:$0xf]
  %v382 = vld [vmem:[%s1 + $0xb0] sm:$0xf]
  %v383 = vld [vmem:[%s1 + $0xb4] sm:$0xf]
  %v384 = vld [vmem:[%s1 + $0xb8] sm:$0xf]
  %v385 = vld [vmem:[%s1 + $0xbc] sm:$0xf]
  %v386 = vld [vmem:[%s1 + $0xc0] sm:$0xf]
  %v387 = vld [vmem:[%s1 + $0xc4] sm:$0xf]
  %v388 = vld [vmem:[%s1 + $0xc8] sm:$0xf]
  %v389 = vld [vmem:[%s1 + $0xcc] sm:$0xf]
  %v390 = vld [vmem:[%s1 + $0xd0] sm:$0xf]
  %v391 = vld [vmem:[%s1 + $0xd4] sm:$0xf]
  %v392 = vld [vmem:[%s1 + $0xd8] sm:$0xf]
  %v393 = vld [vmem:[%s1 + $0xdc] sm:$0xf]
  %v394 = vld [vmem:[%s1 + $0xe0] sm:$0xf]
  %v395 = vld [vmem:[%s1 + $0xe4] sm:$0xf]
  %v396 = vld [vmem:[%s1 + $0xe8] sm:$0xf]
  %v397 = vld [vmem:[%s1 + $0xec] sm:$0xf]
  %v398 = vld [vmem:[%s1 + $0xf0] sm:$0xf]
  %v399 = vld [vmem:[%s1 + $0xf4] sm:$0xf]
  %v400 = vld [vmem:[%s1 + $0xf8] sm:$0xf]
  %v401 = vld [vmem:[%s1 + $0xfc] sm:$0xf]
  %v402 = vld [vmem:[%s1 + $0x100] sm:$0xf]
  %v403 = vld [vmem:[%s1 + $0x104] sm:$0xf]
  %v404 = vld [vmem:[%s1 + $0x108] sm:$0xf]
  %v405 = vld [vmem:[%s1 + $0x10c] sm:$0xf]
  %v406 = vld [vmem:[%s1 + $0x110] sm:$0xf]
  %v407 = vld [vmem:[%s1 + $0x114] sm:$0xf]
  %v408 = vld [vmem:[%s1 + $0x118] sm:$0xf]
  %v409 = vld [vmem:[%s1 + $0x11c] sm:$0xf]
  %v410 = vld [vmem:[%s1 + $0x120] sm:$0xf]
  %v411 = vld [vmem:[%s1 + $0x124] sm:$0xf]
  %v412 = vld [vmem:[%s1 + $0x128] sm:$0xf]
  %v413 = vld [vmem:[%s1 + $0x12c] sm:$0xf]
  %v414 = vld [vmem:[%s1 + $0x130] sm:$0xf]
  %v415 = vld [vmem:[%s1 + $0x134] sm:$0xf]
  %v416 = vld [vmem:[%s1 + $0x138] sm:$0xf]
  %v417 = vld [vmem:[%s1 + $0x13c] sm:$0xf]
  %v418 = vld [vmem:[%s1 + $0x140] sm:$0xf]
  %v419 = vld [vmem:[%s1 + $0x144] sm:$0xf]
  %v420 = vld [vmem:[%s1 + $0x148] sm:$0xf]
  %v421 = vld [vmem:[%s1 + $0x14c] sm:$0xf]
  %v422 = vld [vmem:[%s1 + $0x150] sm:$0xf]
  %v423 = vld [vmem:[%s1 + $0x154] sm:$0xf]
  %v424 = vld [vmem:[%s1 + $0x158] sm:$0xf]
  %v425 = vld [vmem:[%s1 + $0x15c] sm:$0xf]
  %v426 = vld [vmem:[%s1 + $0x160] sm:$0xf]
  %v427 = vld [vmem:[%s1 + $0x164] sm:$0xf]
  %v428 = vld [vmem:[%s1 + $0x168] sm:$0xf]
  %v429 = vld [vmem:[%s1 + $0x16c] sm:$0xf]
  %v430 = vld [vmem:[%s1 + $0x170] sm:$0xf]
  %v431 = vld [vmem:[%s1 + $0x174] sm:$0xf]
  %v432 = vld [vmem:[%s1 + $0x178] sm:$0xf]
  %v433 = vld [vmem:[%s1 + $0x17c] sm:$0xf]
  %v434 = vld [vmem:[%s1 + $0x180] sm:$0xf]
  %v435 = vld [vmem:[%s1 + $0x184] sm:$0xf]
  %v436 = vld [vmem:[%s1 + $0x188] sm:$0xf]
  %v437 = vld [vmem:[%s1 + $0x18c] sm:$0xf]
  %v438 = vld [vmem:[%s1 + $0x190] sm:$0xf]
  %v439 = vld [vmem:[%s1 + $0x194] sm:$0xf]
  %v440 = vld [vmem:[%s1 + $0x198] sm:$0xf]
  %v441 = vld [vmem:[%s1 + $0x19c] sm:$0xf]
  %v442 = vld [vmem:[%s1 + $0x1a0] sm:$0xf]
  %v443 = vld [vmem:[%s1 + $0x1a4] sm:$0xf]
  %v444 = vld [vmem:[%s1 + $0x1a8] sm:$0xf]
  %v445 = vld [vmem:[%s1 + $0x1ac] sm:$0xf]
  %v446 = vld [vmem:[%s1 + $0x1b0] sm:$0xf]
  %v447 = vld [vmem:[%s1 + $0x1b4] sm:$0xf]
  %v448 = vld [vmem:[%s1 + $0x1b8] sm:$0xf]
  %v449 = vld [vmem:[%s1 + $0x1bc] sm:$0xf]
  %v450 = vld [vmem:[%s1 + $0x1c0] sm:$0xf]
  %v451 = vld [vmem:[%s1 + $0x1c4] sm:$0xf]
  %v452 = vld [vmem:[%s1 + $0x1c8] sm:$0xf]
  %v453 = vld [vmem:[%s1 + $0x1cc] sm:$0xf]
  %v454 = vld [vmem:[%s1 + $0x1d0] sm:$0xf]
  %v455 = vld [vmem:[%s1 + $0x1d4] sm:$0xf]
  %v456 = vld [vmem:[%s1 + $0x1d8] sm:$0xf]
  %v457 = vld [vmem:[%s1 + $0x1dc] sm:$0xf]
  %v458 = vld [vmem:[%s1 + $0x1e0] sm:$0xf]
  %v459 = vld [vmem:[%s1 + $0x1e4] sm:$0xf]
  %v460 = vld [vmem:[%s1 + $0x1e8] sm:$0xf]
  %v461 = vld [vmem:[%s1 + $0x1ec] sm:$0xf]
  %v462 = vld [vmem:[%s1 + $0x1f0] sm:$0xf]
  %v463 = vld [vmem:[%s1 + $0x1f4] sm:$0xf]
  %v464 = vld [vmem:[%s1 + $0x1f8] sm:$0xf]
  %v465 = vld [vmem:[%s1 + $0x1fc] sm:$0xf]
  %v466 = vld [vmem:[%s1 + $0x200] sm:$0xf]
  %v467 = vld [vmem:[%s1 + $0x204] sm:$0xf]
  %v468 = vld [vmem:[%s1 + $0x208] sm:$0xf]
  %v469 = vld [vmem:[%s1 + $0x20c] sm:$0xf]
  %v470 = vld [vmem:[%s1 + $0x210] sm:$0xf]
  %v471 = vld [vmem:[%s1 + $0x214] sm:$0xf]
  %v472 = vld [vmem:[%s1 + $0x218] sm:$0xf]
  %v473 = vld [vmem:[%s1 + $0x21c] sm:$0xf]
  %v474 = vld [vmem:[%s1 + $0x220] sm:$0xf]
  %v475 = vld [vmem:[%s1 + $0x224] sm:$0xf]
  %v476 = vld [vmem:[%s1 + $0x228] sm:$0xf]
  %v477 = vld [vmem:[%s1 + $0x22c] sm:$0xf]
  %v478 = vld [vmem:[%s1 + $0x230] sm:$0xf]
  %v479 = vld [vmem:[%s1 + $0x234] sm:$0xf]
  %v480 = vld [vmem:[%s1 + $0x238] sm:$0xf]
  %v481 = vld [vmem:[%s1 + $0x23c] sm:$0xf]
  %v482 = vld [vmem:[%s2] sm:$0x1]
  %v484 = vlaneseq
  %v485 = vshrl.u32 %v484, 7
  %v486 = vsub.s32 0, %v485
  %v487 = vrot.slane %v482, %v486
  %v809 = vunpack.c.l.b16 %v18
  %v810 = vunpack.c.h.b16 %v18
  %v811 = vunpack.c.l.b16 %v19
  %v812 = vunpack.c.h.b16 %v19
  %v813 = vunpack.c.l.b16 %v20
  %v814 = vunpack.c.h.b16 %v20
  %v815 = vunpack.c.l.b16 %v21
  %v816 = vunpack.c.h.b16 %v21
  %v817 = vunpack.c.l.b16 %v22
  %v818 = vunpack.c.l.b16 %v23
  %v819 = vunpack.c.h.b16 %v23
  %v820 = vunpack.c.l.b16 %v24
  %v821 = vunpack.c.h.b16 %v24
  %v822 = vunpack.c.l.b16 %v25
  %v823 = vunpack.c.h.b16 %v25
  %v824 = vunpack.c.l.b16 %v26
  %v825 = vunpack.c.h.b16 %v26
  %v826 = vunpack.c.l.b16 %v27
  %v827 = vunpack.c.l.b16 %v28
  %v828 = vunpack.c.h.b16 %v28
  %v829 = vunpack.c.l.b16 %v29
  %v830 = vunpack.c.h.b16 %v29
  %v831 = vunpack.c.l.b16 %v30
  %v832 = vunpack.c.h.b16 %v30
  %v833 = vunpack.c.l.b16 %v31
  %v834 = vunpack.c.h.b16 %v31
  %v835 = vunpack.c.l.b16 %v32
  %v836 = vunpack.c.l.b16 %v33
  %v837 = vunpack.c.h.b16 %v33
  %v838 = vunpack.c.l.b16 %v34
  %v839 = vunpack.c.h.b16 %v34
  %v840 = vunpack.c.l.b16 %v35
  %v841 = vunpack.c.h.b16 %v35
  %v842 = vunpack.c.l.b16 %v36
  %v843 = vunpack.c.h.b16 %v36
  %v844 = vunpack.c.l.b16 %v37
  %v845 = vunpack.c.l.b16 %v38
  %v846 = vunpack.c.h.b16 %v38
  %v847 = vunpack.c.l.b16 %v39
  %v848 = vunpack.c.h.b16 %v39
  %v849 = vunpack.c.l.b16 %v40
  %v850 = vunpack.c.h.b16 %v40
  %v851 = vunpack.c.l.b16 %v41
  %v852 = vunpack.c.h.b16 %v41
  %v853 = vunpack.c.l.b16 %v42
  %v854 = vunpack.c.l.b16 %v43
  %v855 = vunpack.c.h.b16 %v43
  %v856 = vunpack.c.l.b16 %v44
  %v857 = vunpack.c.h.b16 %v44
  %v858 = vunpack.c.l.b16 %v45
  %v859 = vunpack.c.h.b16 %v45
  %v860 = vunpack.c.l.b16 %v46
  %v861 = vunpack.c.h.b16 %v46
  %v862 = vunpack.c.l.b16 %v47
  %v863 = vunpack.c.l.b16 %v48
  %v864 = vunpack.c.h.b16 %v48
  %v865 = vunpack.c.l.b16 %v49
  %v866 = vunpack.c.h.b16 %v49
  %v867 = vunpack.c.l.b16 %v50
  %v868 = vunpack.c.h.b16 %v50
  %v869 = vunpack.c.l.b16 %v51
  %v870 = vunpack.c.h.b16 %v51
  %v871 = vunpack.c.l.b16 %v52
  %v872 = vunpack.c.l.b16 %v53
  %v873 = vunpack.c.h.b16 %v53
  %v874 = vunpack.c.l.b16 %v54
  %v875 = vunpack.c.h.b16 %v54
  %v876 = vunpack.c.l.b16 %v55
  %v877 = vunpack.c.h.b16 %v55
  %v878 = vunpack.c.l.b16 %v56
  %v879 = vunpack.c.h.b16 %v56
  %v880 = vunpack.c.l.b16 %v57
  %v881 = vunpack.c.l.b16 %v58
  %v882 = vunpack.c.h.b16 %v58
  %v883 = vunpack.c.l.b16 %v59
  %v884 = vunpack.c.h.b16 %v59
  %v885 = vunpack.c.l.b16 %v60
  %v886 = vunpack.c.h.b16 %v60
  %v887 = vunpack.c.l.b16 %v61
  %v888 = vunpack.c.h.b16 %v61
  %v889 = vunpack.c.l.b16 %v62
  %v890 = vunpack.c.l.b16 %v63
  %v891 = vunpack.c.h.b16 %v63
  %v892 = vunpack.c.l.b16 %v64
  %v893 = vunpack.c.h.b16 %v64
  %v894 = vunpack.c.l.b16 %v65
  %v895 = vunpack.c.h.b16 %v65
  %v896 = vunpack.c.l.b16 %v66
  %v897 = vunpack.c.h.b16 %v66
  %v898 = vunpack.c.l.b16 %v67
  %v899 = vunpack.c.l.b16 %v68
  %v900 = vunpack.c.h.b16 %v68
  %v901 = vunpack.c.l.b16 %v69
  %v902 = vunpack.c.h.b16 %v69
  %v903 = vunpack.c.l.b16 %v70
  %v904 = vunpack.c.h.b16 %v70
  %v905 = vunpack.c.l.b16 %v71
  %v906 = vunpack.c.h.b16 %v71
  %v907 = vunpack.c.l.b16 %v72
  %v908 = vunpack.c.l.b16 %v73
  %v909 = vunpack.c.h.b16 %v73
  %v910 = vunpack.c.l.b16 %v74
  %v911 = vunpack.c.h.b16 %v74
  %v912 = vunpack.c.l.b16 %v75
  %v913 = vunpack.c.h.b16 %v75
  %v914 = vunpack.c.l.b16 %v76
  %v915 = vunpack.c.h.b16 %v76
  %v916 = vunpack.c.l.b16 %v77
  %v917 = vunpack.c.l.b16 %v78
  %v918 = vunpack.c.h.b16 %v78
  %v919 = vunpack.c.l.b16 %v79
  %v920 = vunpack.c.h.b16 %v79
  %v921 = vunpack.c.l.b16 %v80
  %v922 = vunpack.c.h.b16 %v80
  %v923 = vunpack.c.l.b16 %v81
  %v924 = vunpack.c.h.b16 %v81
  %v925 = vunpack.c.l.b16 %v82
  %v926 = vunpack.c.l.b16 %v83
  %v927 = vunpack.c.h.b16 %v83
  %v928 = vunpack.c.l.b16 %v84
  %v929 = vunpack.c.h.b16 %v84
  %v930 = vunpack.c.l.b16 %v85
  %v931 = vunpack.c.h.b16 %v85
  %v932 = vunpack.c.l.b16 %v86
  %v933 = vunpack.c.h.b16 %v86
  %v934 = vunpack.c.l.b16 %v87
  %v935 = vunpack.c.l.b16 %v88
  %v936 = vunpack.c.h.b16 %v88
  %v937 = vunpack.c.l.b16 %v89
  %v938 = vunpack.c.h.b16 %v89
  %v939 = vunpack.c.l.b16 %v90
  %v940 = vunpack.c.h.b16 %v90
  %v941 = vunpack.c.l.b16 %v91
  %v942 = vunpack.c.h.b16 %v91
  %v943 = vunpack.c.l.b16 %v92
  %v944 = vunpack.c.l.b16 %v93
  %v945 = vunpack.c.h.b16 %v93
  %v946 = vunpack.c.l.b16 %v94
  %v947 = vunpack.c.h.b16 %v94
  %v948 = vunpack.c.l.b16 %v95
  %v949 = vunpack.c.h.b16 %v95
  %v950 = vunpack.c.l.b16 %v96
  %v951 = vunpack.c.h.b16 %v96
  %v952 = vunpack.c.l.b16 %v97
  %v953 = vunpack.c.l.b16 %v98
  %v954 = vunpack.c.h.b16 %v98
  %v955 = vunpack.c.l.b16 %v99
  %v956 = vunpack.c.h.b16 %v99
  %v957 = vunpack.c.l.b16 %v100
  %v958 = vunpack.c.h.b16 %v100
  %v959 = vunpack.c.l.b16 %v101
  %v960 = vunpack.c.h.b16 %v101
  %v961 = vunpack.c.l.b16 %v102
  %v962 = vunpack.c.l.b16 %v103
  %v963 = vunpack.c.h.b16 %v103
  %v964 = vunpack.c.l.b16 %v104
  %v965 = vunpack.c.h.b16 %v104
  %v966 = vunpack.c.l.b16 %v105
  %v967 = vunpack.c.h.b16 %v105
  %v968 = vunpack.c.l.b16 %v106
  %v969 = vunpack.c.h.b16 %v106
  %v970 = vunpack.c.l.b16 %v107
  %v971 = vunpack.c.l.b16 %v108
  %v972 = vunpack.c.h.b16 %v108
  %v973 = vunpack.c.l.b16 %v109
  %v974 = vunpack.c.h.b16 %v109
  %v975 = vunpack.c.l.b16 %v110
  %v976 = vunpack.c.h.b16 %v110
  %v977 = vunpack.c.l.b16 %v111
  %v978 = vunpack.c.h.b16 %v111
  %v979 = vunpack.c.l.b16 %v112
  %v980 = vunpack.c.l.b16 %v113
  %v981 = vunpack.c.h.b16 %v113
  %v982 = vunpack.c.l.b16 %v114
  %v983 = vunpack.c.h.b16 %v114
  %v984 = vunpack.c.l.b16 %v115
  %v985 = vunpack.c.h.b16 %v115
  %v986 = vunpack.c.l.b16 %v116
  %v987 = vunpack.c.h.b16 %v116
  %v988 = vunpack.c.l.b16 %v117
  %v989 = vunpack.c.l.b16 %v118
  %v990 = vunpack.c.h.b16 %v118
  %v991 = vunpack.c.l.b16 %v119
  %v992 = vunpack.c.h.b16 %v119
  %v993 = vunpack.c.l.b16 %v120
  %v994 = vunpack.c.h.b16 %v120
  %v995 = vunpack.c.l.b16 %v121
  %v996 = vunpack.c.h.b16 %v121
  %v997 = vunpack.c.l.b16 %v122
  %v998 = vunpack.c.l.b16 %v123
  %v999 = vunpack.c.h.b16 %v123
  %v1000 = vunpack.c.l.b16 %v124
  %v1001 = vunpack.c.h.b16 %v124
  %v1002 = vunpack.c.l.b16 %v125
  %v1003 = vunpack.c.h.b16 %v125
  %v1004 = vunpack.c.l.b16 %v126
  %v1005 = vunpack.c.h.b16 %v126
  %v1006 = vunpack.c.l.b16 %v127
  %v1007 = vunpack.c.l.b16 %v128
  %v1008 = vunpack.c.h.b16 %v128
  %v1009 = vunpack.c.l.b16 %v129
  %v1010 = vunpack.c.h.b16 %v129
  %v1011 = vunpack.c.l.b16 %v130
  %v1012 = vunpack.c.h.b16 %v130
  %v1013 = vunpack.c.l.b16 %v131
  %v1014 = vunpack.c.h.b16 %v131
  %v1015 = vunpack.c.l.b16 %v132
  %v1016 = vunpack.c.l.b16 %v133
  %v1017 = vunpack.c.h.b16 %v133
  %v1018 = vunpack.c.l.b16 %v134
  %v1019 = vunpack.c.h.b16 %v134
  %v1020 = vunpack.c.l.b16 %v135
  %v1021 = vunpack.c.h.b16 %v135
  %v1022 = vunpack.c.l.b16 %v136
  %v1023 = vunpack.c.h.b16 %v136
  %v1024 = vunpack.c.l.b16 %v137
  %v1025 = vunpack.c.l.b16 %v138
  %v1026 = vunpack.c.h.b16 %v138
  %v1027 = vunpack.c.l.b16 %v139
  %v1028 = vunpack.c.h.b16 %v139
  %v1029 = vunpack.c.l.b16 %v140
  %v1030 = vunpack.c.h.b16 %v140
  %v1031 = vunpack.c.l.b16 %v141
  %v1032 = vunpack.c.h.b16 %v141
  %v1033 = vunpack.c.l.b16 %v142
  %v1034 = vunpack.c.l.b16 %v143
  %v1035 = vunpack.c.h.b16 %v143
  %v1036 = vunpack.c.l.b16 %v144
  %v1037 = vunpack.c.h.b16 %v144
  %v1038 = vunpack.c.l.b16 %v145
  %v1039 = vunpack.c.h.b16 %v145
  %v1040 = vunpack.c.l.b16 %v146
  %v1041 = vunpack.c.h.b16 %v146
  %v1042 = vunpack.c.l.b16 %v147
  %v1043 = vunpack.c.l.b16 %v148
  %v1044 = vunpack.c.h.b16 %v148
  %v1045 = vunpack.c.l.b16 %v149
  %v1046 = vunpack.c.h.b16 %v149
  %v1047 = vunpack.c.l.b16 %v150
  %v1048 = vunpack.c.h.b16 %v150
  %v1049 = vunpack.c.l.b16 %v151
  %v1050 = vunpack.c.h.b16 %v151
  %v1051 = vunpack.c.l.b16 %v152
  %v1052 = vunpack.c.l.b16 %v153
  %v1053 = vunpack.c.h.b16 %v153
  %v1054 = vunpack.c.l.b16 %v154
  %v1055 = vunpack.c.h.b16 %v154
  %v1056 = vunpack.c.l.b16 %v155
  %v1057 = vunpack.c.h.b16 %v155
  %v1058 = vunpack.c.l.b16 %v156
  %v1059 = vunpack.c.h.b16 %v156
  %v1060 = vunpack.c.l.b16 %v157
  %v1061 = vunpack.c.l.b16 %v158
  %v1062 = vunpack.c.h.b16 %v158
  %v1063 = vunpack.c.l.b16 %v159
  %v1064 = vunpack.c.h.b16 %v159
  %v1065 = vunpack.c.l.b16 %v160
  %v1066 = vunpack.c.h.b16 %v160
  %v1067 = vunpack.c.l.b16 %v161
  %v1068 = vunpack.c.h.b16 %v161
  %v1069 = vunpack.c.l.b16 %v162
  %v1070 = vunpack.c.l.b16 %v163
  %v1071 = vunpack.c.h.b16 %v163
  %v1072 = vunpack.c.l.b16 %v164
  %v1073 = vunpack.c.h.b16 %v164
  %v1074 = vunpack.c.l.b16 %v165
  %v1075 = vunpack.c.h.b16 %v165
  %v1076 = vunpack.c.l.b16 %v166
  %v1077 = vunpack.c.h.b16 %v166
  %v1078 = vunpack.c.l.b16 %v167
  %v1079 = vunpack.c.l.b16 %v168
  %v1080 = vunpack.c.h.b16 %v168
  %v1081 = vunpack.c.l.b16 %v169
  %v1082 = vunpack.c.h.b16 %v169
  %v1083 = vunpack.c.l.b16 %v170
  %v1084 = vunpack.c.h.b16 %v170
  %v1085 = vunpack.c.l.b16 %v171
  %v1086 = vunpack.c.h.b16 %v171
  %v1087 = vunpack.c.l.b16 %v172
  %v1088 = vunpack.c.l.b16 %v173
  %v1089 = vunpack.c.h.b16 %v173
  %v1090 = vunpack.c.l.b16 %v174
  %v1091 = vunpack.c.h.b16 %v174
  %v1092 = vunpack.c.l.b16 %v175
  %v1093 = vunpack.c.h.b16 %v175
  %v1094 = vunpack.c.l.b16 %v176
  %v1095 = vunpack.c.h.b16 %v176
  %v1096 = vunpack.c.l.b16 %v177
  %v1097 = vunpack.c.l.b16 %v178
  %v1098 = vunpack.c.h.b16 %v178
  %v1099 = vunpack.c.l.b16 %v179
  %v1100 = vunpack.c.h.b16 %v179
  %v1101 = vunpack.c.l.b16 %v180
  %v1102 = vunpack.c.h.b16 %v180
  %v1103 = vunpack.c.l.b16 %v181
  %v1104 = vunpack.c.h.b16 %v181
  %v1105 = vunpack.c.l.b16 %v182
  %v1106 = vunpack.c.l.b16 %v183
  %v1107 = vunpack.c.h.b16 %v183
  %v1108 = vunpack.c.l.b16 %v184
  %v1109 = vunpack.c.h.b16 %v184
  %v1110 = vunpack.c.l.b16 %v185
  %v1111 = vunpack.c.h.b16 %v185
  %v1112 = vunpack.c.l.b16 %v186
  %v1113 = vunpack.c.h.b16 %v186
  %v1114 = vunpack.c.l.b16 %v187
  %v1115 = vunpack.c.l.b16 %v188
  %v1116 = vunpack.c.h.b16 %v188
  %v1117 = vunpack.c.l.b16 %v189
  %v1118 = vunpack.c.h.b16 %v189
  %v1119 = vunpack.c.l.b16 %v190
  %v1120 = vunpack.c.h.b16 %v190
  %v1121 = vunpack.c.l.b16 %v191
  %v1122 = vunpack.c.h.b16 %v191
  %v1123 = vunpack.c.l.b16 %v192
  %v1124 = vunpack.c.l.b16 %v193
  %v1125 = vunpack.c.h.b16 %v193
  %v1126 = vunpack.c.l.b16 %v194
  %v1127 = vunpack.c.h.b16 %v194
  %v1128 = vunpack.c.l.b16 %v195
  %v1129 = vunpack.c.h.b16 %v195
  %v1130 = vunpack.c.l.b16 %v196
  %v1131 = vunpack.c.h.b16 %v196
  %v1132 = vunpack.c.l.b16 %v197
  %v1133 = vunpack.c.l.b16 %v198
  %v1134 = vunpack.c.h.b16 %v198
  %v1135 = vunpack.c.l.b16 %v199
  %v1136 = vunpack.c.h.b16 %v199
  %v1137 = vunpack.c.l.b16 %v200
  %v1138 = vunpack.c.h.b16 %v200
  %v1139 = vunpack.c.l.b16 %v201
  %v1140 = vunpack.c.h.b16 %v201
  %v1141 = vunpack.c.l.b16 %v202
  %v1142 = vunpack.c.l.b16 %v203
  %v1143 = vunpack.c.h.b16 %v203
  %v1144 = vunpack.c.l.b16 %v204
  %v1145 = vunpack.c.h.b16 %v204
  %v1146 = vunpack.c.l.b16 %v205
  %v1147 = vunpack.c.h.b16 %v205
  %v1148 = vunpack.c.l.b16 %v206
  %v1149 = vunpack.c.h.b16 %v206
  %v1150 = vunpack.c.l.b16 %v207
  %v1151 = vunpack.c.l.b16 %v208
  %v1152 = vunpack.c.h.b16 %v208
  %v1153 = vunpack.c.l.b16 %v209
  %v1154 = vunpack.c.h.b16 %v209
  %v1155 = vunpack.c.l.b16 %v210
  %v1156 = vunpack.c.h.b16 %v210
  %v1157 = vunpack.c.l.b16 %v211
  %v1158 = vunpack.c.h.b16 %v211
  %v1159 = vunpack.c.l.b16 %v212
  %v1160 = vunpack.c.l.b16 %v213
  %v1161 = vunpack.c.h.b16 %v213
  %v1162 = vunpack.c.l.b16 %v214
  %v1163 = vunpack.c.h.b16 %v214
  %v1164 = vunpack.c.l.b16 %v215
  %v1165 = vunpack.c.h.b16 %v215
  %v1166 = vunpack.c.l.b16 %v216
  %v1167 = vunpack.c.h.b16 %v216
  %v1168 = vunpack.c.l.b16 %v217
  %v1169 = vunpack.c.l.b16 %v218
  %v1170 = vunpack.c.h.b16 %v218
  %v1171 = vunpack.c.l.b16 %v219
  %v1172 = vunpack.c.h.b16 %v219
  %v1173 = vunpack.c.l.b16 %v220
  %v1174 = vunpack.c.h.b16 %v220
  %v1175 = vunpack.c.l.b16 %v221
  %v1176 = vunpack.c.h.b16 %v221
  %v1177 = vunpack.c.l.b16 %v222
  %v1178 = vunpack.c.l.b16 %v223
  %v1179 = vunpack.c.h.b16 %v223
  %v1180 = vunpack.c.l.b16 %v224
  %v1181 = vunpack.c.h.b16 %v224
  %v1182 = vunpack.c.l.b16 %v225
  %v1183 = vunpack.c.h.b16 %v225
  %v1184 = vunpack.c.l.b16 %v226
  %v1185 = vunpack.c.h.b16 %v226
  %v1186 = vunpack.c.l.b16 %v227
  %v1187 = vunpack.c.l.b16 %v228
  %v1188 = vunpack.c.h.b16 %v228
  %v1189 = vunpack.c.l.b16 %v229
  %v1190 = vunpack.c.h.b16 %v229
  %v1191 = vunpack.c.l.b16 %v230
  %v1192 = vunpack.c.h.b16 %v230
  %v1193 = vunpack.c.l.b16 %v231
  %v1194 = vunpack.c.h.b16 %v231
  %v1195 = vunpack.c.l.b16 %v232
  %v1196 = vunpack.c.l.b16 %v233
  %v1197 = vunpack.c.h.b16 %v233
  %v1198 = vunpack.c.l.b16 %v234
  %v1199 = vunpack.c.h.b16 %v234
  %v1200 = vunpack.c.l.b16 %v235
  %v1201 = vunpack.c.h.b16 %v235
  %v1202 = vunpack.c.l.b16 %v236
  %v1203 = vunpack.c.h.b16 %v236
  %v1204 = vunpack.c.l.b16 %v237
  %v1205 = vunpack.c.l.b16 %v238
  %v1206 = vunpack.c.h.b16 %v238
  %v1207 = vunpack.c.l.b16 %v239
  %v1208 = vunpack.c.h.b16 %v239
  %v1209 = vunpack.c.l.b16 %v240
  %v1210 = vunpack.c.h.b16 %v240
  %v1211 = vunpack.c.l.b16 %v241
  %v1212 = vunpack.c.h.b16 %v241
  %v1213 = vunpack.c.l.b16 %v242
  %v1214 = vunpack.c.l.b16 %v243
  %v1215 = vunpack.c.h.b16 %v243
  %v1216 = vunpack.c.l.b16 %v244
  %v1217 = vunpack.c.h.b16 %v244
  %v1218 = vunpack.c.l.b16 %v245
  %v1219 = vunpack.c.h.b16 %v245
  %v1220 = vunpack.c.l.b16 %v246
  %v1221 = vunpack.c.h.b16 %v246
  %v1222 = vunpack.c.l.b16 %v247
  %v1223 = vunpack.c.l.b16 %v248
  %v1224 = vunpack.c.h.b16 %v248
  %v1225 = vunpack.c.l.b16 %v249
  %v1226 = vunpack.c.h.b16 %v249
  %v1227 = vunpack.c.l.b16 %v250
  %v1228 = vunpack.c.h.b16 %v250
  %v1229 = vunpack.c.l.b16 %v251
  %v1230 = vunpack.c.h.b16 %v251
  %v1231 = vunpack.c.l.b16 %v252
  %v1232 = vunpack.c.l.b16 %v253
  %v1233 = vunpack.c.h.b16 %v253
  %v1234 = vunpack.c.l.b16 %v254
  %v1235 = vunpack.c.h.b16 %v254
  %v1236 = vunpack.c.l.b16 %v255
  %v1237 = vunpack.c.h.b16 %v255
  %v1238 = vunpack.c.l.b16 %v256
  %v1239 = vunpack.c.h.b16 %v256
  %v1240 = vunpack.c.l.b16 %v257
  %v1241 = vunpack.c.l.b16 %v258
  %v1242 = vunpack.c.h.b16 %v258
  %v1243 = vunpack.c.l.b16 %v259
  %v1244 = vunpack.c.h.b16 %v259
  %v1245 = vunpack.c.l.b16 %v260
  %v1246 = vunpack.c.h.b16 %v260
  %v1247 = vunpack.c.l.b16 %v261
  %v1248 = vunpack.c.h.b16 %v261
  %v1249 = vunpack.c.l.b16 %v262
  %v1250 = vunpack.c.l.b16 %v263
  %v1251 = vunpack.c.h.b16 %v263
  %v1252 = vunpack.c.l.b16 %v264
  %v1253 = vunpack.c.h.b16 %v264
  %v1254 = vunpack.c.l.b16 %v265
  %v1255 = vunpack.c.h.b16 %v265
  %v1256 = vunpack.c.l.b16 %v266
  %v1257 = vunpack.c.h.b16 %v266
  %v1258 = vunpack.c.l.b16 %v267
  %v1259 = vunpack.c.l.b16 %v268
  %v1260 = vunpack.c.h.b16 %v268
  %v1261 = vunpack.c.l.b16 %v269
  %v1262 = vunpack.c.h.b16 %v269
  %v1263 = vunpack.c.l.b16 %v270
  %v1264 = vunpack.c.h.b16 %v270
  %v1265 = vunpack.c.l.b16 %v271
  %v1266 = vunpack.c.h.b16 %v271
  %v1267 = vunpack.c.l.b16 %v272
  %v1268 = vunpack.c.l.b16 %v273
  %v1269 = vunpack.c.h.b16 %v273
  %v1270 = vunpack.c.l.b16 %v274
  %v1271 = vunpack.c.h.b16 %v274
  %v1272 = vunpack.c.l.b16 %v275
  %v1273 = vunpack.c.h.b16 %v275
  %v1274 = vunpack.c.l.b16 %v276
  %v1275 = vunpack.c.h.b16 %v276
  %v1276 = vunpack.c.l.b16 %v277
  %v1277 = vunpack.c.l.b16 %v278
  %v1278 = vunpack.c.h.b16 %v278
  %v1279 = vunpack.c.l.b16 %v279
  %v1280 = vunpack.c.h.b16 %v279
  %v1281 = vunpack.c.l.b16 %v280
  %v1282 = vunpack.c.h.b16 %v280
  %v1283 = vunpack.c.l.b16 %v281
  %v1284 = vunpack.c.h.b16 %v281
  %v1285 = vunpack.c.l.b16 %v282
  %v1286 = vunpack.c.l.b16 %v283
  %v1287 = vunpack.c.h.b16 %v283
  %v1288 = vunpack.c.l.b16 %v284
  %v1289 = vunpack.c.h.b16 %v284
  %v1290 = vunpack.c.l.b16 %v285
  %v1291 = vunpack.c.h.b16 %v285
  %v1292 = vunpack.c.l.b16 %v286
  %v1293 = vunpack.c.h.b16 %v286
  %v1294 = vunpack.c.l.b16 %v287
  %v1295 = vunpack.c.l.b16 %v288
  %v1296 = vunpack.c.h.b16 %v288
  %v1297 = vunpack.c.l.b16 %v289
  %v1298 = vunpack.c.h.b16 %v289
  %v1299 = vunpack.c.l.b16 %v290
  %v1300 = vunpack.c.h.b16 %v290
  %v1301 = vunpack.c.l.b16 %v291
  %v1302 = vunpack.c.h.b16 %v291
  %v1303 = vunpack.c.l.b16 %v292
  %v1304 = vunpack.c.l.b16 %v293
  %v1305 = vunpack.c.h.b16 %v293
  %v1306 = vunpack.c.l.b16 %v294
  %v1307 = vunpack.c.h.b16 %v294
  %v1308 = vunpack.c.l.b16 %v295
  %v1309 = vunpack.c.h.b16 %v295
  %v1310 = vunpack.c.l.b16 %v296
  %v1311 = vunpack.c.h.b16 %v296
  %v1312 = vunpack.c.l.b16 %v297
  %v1313 = vunpack.c.l.b16 %v298
  %v1314 = vunpack.c.h.b16 %v298
  %v1315 = vunpack.c.l.b16 %v299
  %v1316 = vunpack.c.h.b16 %v299
  %v1317 = vunpack.c.l.b16 %v300
  %v1318 = vunpack.c.h.b16 %v300
  %v1319 = vunpack.c.l.b16 %v301
  %v1320 = vunpack.c.h.b16 %v301
  %v1321 = vunpack.c.l.b16 %v302
  %v1322 = vunpack.c.l.b16 %v303
  %v1323 = vunpack.c.h.b16 %v303
  %v1324 = vunpack.c.l.b16 %v304
  %v1325 = vunpack.c.h.b16 %v304
  %v1326 = vunpack.c.l.b16 %v305
  %v1327 = vunpack.c.h.b16 %v305
  %v1328 = vunpack.c.l.b16 %v306
  %v1329 = vunpack.c.h.b16 %v306
  %v1330 = vunpack.c.l.b16 %v307
  %v1331 = vunpack.c.l.b16 %v308
  %v1332 = vunpack.c.h.b16 %v308
  %v1333 = vunpack.c.l.b16 %v309
  %v1334 = vunpack.c.h.b16 %v309
  %v1335 = vunpack.c.l.b16 %v310
  %v1336 = vunpack.c.h.b16 %v310
  %v1337 = vunpack.c.l.b16 %v311
  %v1338 = vunpack.c.h.b16 %v311
  %v1339 = vunpack.c.l.b16 %v312
  %v1340 = vunpack.c.l.b16 %v313
  %v1341 = vunpack.c.h.b16 %v313
  %v1342 = vunpack.c.l.b16 %v314
  %v1343 = vunpack.c.h.b16 %v314
  %v1344 = vunpack.c.l.b16 %v315
  %v1345 = vunpack.c.h.b16 %v315
  %v1346 = vunpack.c.l.b16 %v316
  %v1347 = vunpack.c.h.b16 %v316
  %v1348 = vunpack.c.l.b16 %v317
  %v1349 = vunpack.c.l.b16 %v318
  %v1350 = vunpack.c.h.b16 %v318
  %v1351 = vunpack.c.l.b16 %v319
  %v1352 = vunpack.c.h.b16 %v319
  %v1353 = vunpack.c.l.b16 %v320
  %v1354 = vunpack.c.h.b16 %v320
  %v1355 = vunpack.c.l.b16 %v321
  %v1356 = vunpack.c.h.b16 %v321
  %v1357 = vunpack.c.l.b16 %v322
  %v1358 = vunpack.c.l.b16 %v323
  %v1359 = vunpack.c.h.b16 %v323
  %v1360 = vunpack.c.l.b16 %v324
  %v1361 = vunpack.c.h.b16 %v324
  %v1362 = vunpack.c.l.b16 %v325
  %v1363 = vunpack.c.h.b16 %v325
  %v1364 = vunpack.c.l.b16 %v326
  %v1365 = vunpack.c.h.b16 %v326
  %v1366 = vunpack.c.l.b16 %v327
  %v1367 = vunpack.c.l.b16 %v328
  %v1368 = vunpack.c.h.b16 %v328
  %v1369 = vunpack.c.l.b16 %v329
  %v1370 = vunpack.c.h.b16 %v329
  %v1371 = vunpack.c.l.b16 %v330
  %v1372 = vunpack.c.h.b16 %v330
  %v1373 = vunpack.c.l.b16 %v331
  %v1374 = vunpack.c.h.b16 %v331
  %v1375 = vunpack.c.l.b16 %v332
  %v1376 = vunpack.c.l.b16 %v333
  %v1377 = vunpack.c.h.b16 %v333
  %v1378 = vunpack.c.l.b16 %v334
  %v1379 = vunpack.c.h.b16 %v334
  %v1380 = vunpack.c.l.b16 %v335
  %v1381 = vunpack.c.h.b16 %v335
  %v1382 = vunpack.c.l.b16 %v336
  %v1383 = vunpack.c.h.b16 %v336
  %v1384 = vunpack.c.l.b16 %v337
  %v1385 = vpack.c.b16 %v818, %v809
  %v1386 = vpack.c.b16 %v819, %v810
  %v1387 = vpack.c.b16 %v820, %v811
  %v1388 = vpack.c.b16 %v821, %v812
  %v1389 = vpack.c.b16 %v822, %v813
  %v1390 = vpack.c.b16 %v823, %v814
  %v1391 = vpack.c.b16 %v824, %v815
  %v1392 = vpack.c.b16 %v825, %v816
  %v1393 = vpack.c.b16 %v826, %v817
  %v1394 = vpack.c.b16 %v836, %v827
  %v1395 = vpack.c.b16 %v837, %v828
  %v1396 = vpack.c.b16 %v838, %v829
  %v1397 = vpack.c.b16 %v839, %v830
  %v1398 = vpack.c.b16 %v840, %v831
  %v1399 = vpack.c.b16 %v841, %v832
  %v1400 = vpack.c.b16 %v842, %v833
  %v1401 = vpack.c.b16 %v843, %v834
  %v1402 = vpack.c.b16 %v844, %v835
  %v1403 = vpack.c.b16 %v854, %v845
  %v1404 = vpack.c.b16 %v855, %v846
  %v1405 = vpack.c.b16 %v856, %v847
  %v1406 = vpack.c.b16 %v857, %v848
  %v1407 = vpack.c.b16 %v858, %v849
  %v1408 = vpack.c.b16 %v859, %v850
  %v1409 = vpack.c.b16 %v860, %v851
  %v1410 = vpack.c.b16 %v861, %v852
  %v1411 = vpack.c.b16 %v862, %v853
  %v1412 = vpack.c.b16 %v872, %v863
  %v1413 = vpack.c.b16 %v873, %v864
  %v1414 = vpack.c.b16 %v874, %v865
  %v1415 = vpack.c.b16 %v875, %v866
  %v1416 = vpack.c.b16 %v876, %v867
  %v1417 = vpack.c.b16 %v877, %v868
  %v1418 = vpack.c.b16 %v878, %v869
  %v1419 = vpack.c.b16 %v879, %v870
  %v1420 = vpack.c.b16 %v880, %v871
  %v1421 = vpack.c.b16 %v890, %v881
  %v1422 = vpack.c.b16 %v891, %v882
  %v1423 = vpack.c.b16 %v892, %v883
  %v1424 = vpack.c.b16 %v893, %v884
  %v1425 = vpack.c.b16 %v894, %v885
  %v1426 = vpack.c.b16 %v895, %v886
  %v1427 = vpack.c.b16 %v896, %v887
  %v1428 = vpack.c.b16 %v897, %v888
  %v1429 = vpack.c.b16 %v898, %v889
  %v1430 = vpack.c.b16 %v908, %v899
  %v1431 = vpack.c.b16 %v909, %v900
  %v1432 = vpack.c.b16 %v910, %v901
  %v1433 = vpack.c.b16 %v911, %v902
  %v1434 = vpack.c.b16 %v912, %v903
  %v1435 = vpack.c.b16 %v913, %v904
  %v1436 = vpack.c.b16 %v914, %v905
  %v1437 = vpack.c.b16 %v915, %v906
  %v1438 = vpack.c.b16 %v916, %v907
  %v1439 = vpack.c.b16 %v926, %v917
  %v1440 = vpack.c.b16 %v927, %v918
  %v1441 = vpack.c.b16 %v928, %v919
  %v1442 = vpack.c.b16 %v929, %v920
  %v1443 = vpack.c.b16 %v930, %v921
  %v1444 = vpack.c.b16 %v931, %v922
  %v1445 = vpack.c.b16 %v932, %v923
  %v1446 = vpack.c.b16 %v933, %v924
  %v1447 = vpack.c.b16 %v934, %v925
  %v1448 = vpack.c.b16 %v944, %v935
  %v1449 = vpack.c.b16 %v945, %v936
  %v1450 = vpack.c.b16 %v946, %v937
  %v1451 = vpack.c.b16 %v947, %v938
  %v1452 = vpack.c.b16 %v948, %v939
  %v1453 = vpack.c.b16 %v949, %v940
  %v1454 = vpack.c.b16 %v950, %v941
  %v1455 = vpack.c.b16 %v951, %v942
  %v1456 = vpack.c.b16 %v952, %v943
  %v1457 = vpack.c.b16 %v962, %v953
  %v1458 = vpack.c.b16 %v963, %v954
  %v1459 = vpack.c.b16 %v964, %v955
  %v1460 = vpack.c.b16 %v965, %v956
  %v1461 = vpack.c.b16 %v966, %v957
  %v1462 = vpack.c.b16 %v967, %v958
  %v1463 = vpack.c.b16 %v968, %v959
  %v1464 = vpack.c.b16 %v969, %v960
  %v1465 = vpack.c.b16 %v970, %v961
  %v1466 = vpack.c.b16 %v980, %v971
  %v1467 = vpack.c.b16 %v981, %v972
  %v1468 = vpack.c.b16 %v982, %v973
  %v1469 = vpack.c.b16 %v983, %v974
  %v1470 = vpack.c.b16 %v984, %v975
  %v1471 = vpack.c.b16 %v985, %v976
  %v1472 = vpack.c.b16 %v986, %v977
  %v1473 = vpack.c.b16 %v987, %v978
  %v1474 = vpack.c.b16 %v988, %v979
  %v1475 = vpack.c.b16 %v998, %v989
  %v1476 = vpack.c.b16 %v999, %v990
  %v1477 = vpack.c.b16 %v1000, %v991
  %v1478 = vpack.c.b16 %v1001, %v992
  %v1479 = vpack.c.b16 %v1002, %v993
  %v1480 = vpack.c.b16 %v1003, %v994
  %v1481 = vpack.c.b16 %v1004, %v995
  %v1482 = vpack.c.b16 %v1005, %v996
  %v1483 = vpack.c.b16 %v1006, %v997
  %v1484 = vpack.c.b16 %v1016, %v1007
  %v1485 = vpack.c.b16 %v1017, %v1008
  %v1486 = vpack.c.b16 %v1018, %v1009
  %v1487 = vpack.c.b16 %v1019, %v1010
  %v1488 = vpack.c.b16 %v1020, %v1011
  %v1489 = vpack.c.b16 %v1021, %v1012
  %v1490 = vpack.c.b16 %v1022, %v1013
  %v1491 = vpack.c.b16 %v1023, %v1014
  %v1492 = vpack.c.b16 %v1024, %v1015
  %v1493 = vpack.c.b16 %v1034, %v1025
  %v1494 = vpack.c.b16 %v1035, %v1026
  %v1495 = vpack.c.b16 %v1036, %v1027
  %v1496 = vpack.c.b16 %v1037, %v1028
  %v1497 = vpack.c.b16 %v1038, %v1029
  %v1498 = vpack.c.b16 %v1039, %v1030
  %v1499 = vpack.c.b16 %v1040, %v1031
  %v1500 = vpack.c.b16 %v1041, %v1032
  %v1501 = vpack.c.b16 %v1042, %v1033
  %v1502 = vpack.c.b16 %v1052, %v1043
  %v1503 = vpack.c.b16 %v1053, %v1044
  %v1504 = vpack.c.b16 %v1054, %v1045
  %v1505 = vpack.c.b16 %v1055, %v1046
  %v1506 = vpack.c.b16 %v1056, %v1047
  %v1507 = vpack.c.b16 %v1057, %v1048
  %v1508 = vpack.c.b16 %v1058, %v1049
  %v1509 = vpack.c.b16 %v1059, %v1050
  %v1510 = vpack.c.b16 %v1060, %v1051
  %v1511 = vpack.c.b16 %v1070, %v1061
  %v1512 = vpack.c.b16 %v1071, %v1062
  %v1513 = vpack.c.b16 %v1072, %v1063
  %v1514 = vpack.c.b16 %v1073, %v1064
  %v1515 = vpack.c.b16 %v1074, %v1065
  %v1516 = vpack.c.b16 %v1075, %v1066
  %v1517 = vpack.c.b16 %v1076, %v1067
  %v1518 = vpack.c.b16 %v1077, %v1068
  %v1519 = vpack.c.b16 %v1078, %v1069
  %v1520 = vpack.c.b16 %v1088, %v1079
  %v1521 = vpack.c.b16 %v1089, %v1080
  %v1522 = vpack.c.b16 %v1090, %v1081
  %v1523 = vpack.c.b16 %v1091, %v1082
  %v1524 = vpack.c.b16 %v1092, %v1083
  %v1525 = vpack.c.b16 %v1093, %v1084
  %v1526 = vpack.c.b16 %v1094, %v1085
  %v1527 = vpack.c.b16 %v1095, %v1086
  %v1528 = vpack.c.b16 %v1096, %v1087
  %v1529 = vpack.c.b16 %v1106, %v1097
  %v1530 = vpack.c.b16 %v1107, %v1098
  %v1531 = vpack.c.b16 %v1108, %v1099
  %v1532 = vpack.c.b16 %v1109, %v1100
  %v1533 = vpack.c.b16 %v1110, %v1101
  %v1534 = vpack.c.b16 %v1111, %v1102
  %v1535 = vpack.c.b16 %v1112, %v1103
  %v1536 = vpack.c.b16 %v1113, %v1104
  %v1537 = vpack.c.b16 %v1114, %v1105
  %v1538 = vpack.c.b16 %v1124, %v1115
  %v1539 = vpack.c.b16 %v1125, %v1116
  %v1540 = vpack.c.b16 %v1126, %v1117
  %v1541 = vpack.c.b16 %v1127, %v1118
  %v1542 = vpack.c.b16 %v1128, %v1119
  %v1543 = vpack.c.b16 %v1129, %v1120
  %v1544 = vpack.c.b16 %v1130, %v1121
  %v1545 = vpack.c.b16 %v1131, %v1122
  %v1546 = vpack.c.b16 %v1132, %v1123
  %v1547 = vpack.c.b16 %v1142, %v1133
  %v1548 = vpack.c.b16 %v1143, %v1134
  %v1549 = vpack.c.b16 %v1144, %v1135
  %v1550 = vpack.c.b16 %v1145, %v1136
  %v1551 = vpack.c.b16 %v1146, %v1137
  %v1552 = vpack.c.b16 %v1147, %v1138
  %v1553 = vpack.c.b16 %v1148, %v1139
  %v1554 = vpack.c.b16 %v1149, %v1140
  %v1555 = vpack.c.b16 %v1150, %v1141
  %v1556 = vpack.c.b16 %v1160, %v1151
  %v1557 = vpack.c.b16 %v1161, %v1152
  %v1558 = vpack.c.b16 %v1162, %v1153
  %v1559 = vpack.c.b16 %v1163, %v1154
  %v1560 = vpack.c.b16 %v1164, %v1155
  %v1561 = vpack.c.b16 %v1165, %v1156
  %v1562 = vpack.c.b16 %v1166, %v1157
  %v1563 = vpack.c.b16 %v1167, %v1158
  %v1564 = vpack.c.b16 %v1168, %v1159
  %v1565 = vpack.c.b16 %v1178, %v1169
  %v1566 = vpack.c.b16 %v1179, %v1170
  %v1567 = vpack.c.b16 %v1180, %v1171
  %v1568 = vpack.c.b16 %v1181, %v1172
  %v1569 = vpack.c.b16 %v1182, %v1173
  %v1570 = vpack.c.b16 %v1183, %v1174
  %v1571 = vpack.c.b16 %v1184, %v1175
  %v1572 = vpack.c.b16 %v1185, %v1176
  %v1573 = vpack.c.b16 %v1186, %v1177
  %v1574 = vpack.c.b16 %v1196, %v1187
  %v1575 = vpack.c.b16 %v1197, %v1188
  %v1576 = vpack.c.b16 %v1198, %v1189
  %v1577 = vpack.c.b16 %v1199, %v1190
  %v1578 = vpack.c.b16 %v1200, %v1191
  %v1579 = vpack.c.b16 %v1201, %v1192
  %v1580 = vpack.c.b16 %v1202, %v1193
  %v1581 = vpack.c.b16 %v1203, %v1194
  %v1582 = vpack.c.b16 %v1204, %v1195
  %v1583 = vpack.c.b16 %v1214, %v1205
  %v1584 = vpack.c.b16 %v1215, %v1206
  %v1585 = vpack.c.b16 %v1216, %v1207
  %v1586 = vpack.c.b16 %v1217, %v1208
  %v1587 = vpack.c.b16 %v1218, %v1209
  %v1588 = vpack.c.b16 %v1219, %v1210
  %v1589 = vpack.c.b16 %v1220, %v1211
  %v1590 = vpack.c.b16 %v1221, %v1212
  %v1591 = vpack.c.b16 %v1222, %v1213
  %v1592 = vpack.c.b16 %v1232, %v1223
  %v1593 = vpack.c.b16 %v1233, %v1224
  %v1594 = vpack.c.b16 %v1234, %v1225
  %v1595 = vpack.c.b16 %v1235, %v1226
  %v1596 = vpack.c.b16 %v1236, %v1227
  %v1597 = vpack.c.b16 %v1237, %v1228
  %v1598 = vpack.c.b16 %v1238, %v1229
  %v1599 = vpack.c.b16 %v1239, %v1230
  %v1600 = vpack.c.b16 %v1240, %v1231
  %v1601 = vpack.c.b16 %v1250, %v1241
  %v1602 = vpack.c.b16 %v1251, %v1242
  %v1603 = vpack.c.b16 %v1252, %v1243
  %v1604 = vpack.c.b16 %v1253, %v1244
  %v1605 = vpack.c.b16 %v1254, %v1245
  %v1606 = vpack.c.b16 %v1255, %v1246
  %v1607 = vpack.c.b16 %v1256, %v1247
  %v1608 = vpack.c.b16 %v1257, %v1248
  %v1609 = vpack.c.b16 %v1258, %v1249
  %v1610 = vpack.c.b16 %v1268, %v1259
  %v1611 = vpack.c.b16 %v1269, %v1260
  %v1612 = vpack.c.b16 %v1270, %v1261
  %v1613 = vpack.c.b16 %v1271, %v1262
  %v1614 = vpack.c.b16 %v1272, %v1263
  %v1615 = vpack.c.b16 %v1273, %v1264
  %v1616 = vpack.c.b16 %v1274, %v1265
  %v1617 = vpack.c.b16 %v1275, %v1266
  %v1618 = vpack.c.b16 %v1276, %v1267
  %v1619 = vpack.c.b16 %v1286, %v1277
  %v1620 = vpack.c.b16 %v1287, %v1278
  %v1621 = vpack.c.b16 %v1288, %v1279
  %v1622 = vpack.c.b16 %v1289, %v1280
  %v1623 = vpack.c.b16 %v1290, %v1281
  %v1624 = vpack.c.b16 %v1291, %v1282
  %v1625 = vpack.c.b16 %v1292, %v1283
  %v1626 = vpack.c.b16 %v1293, %v1284
  %v1627 = vpack.c.b16 %v1294, %v1285
  %v1628 = vpack.c.b16 %v1304, %v1295
  %v1629 = vpack.c.b16 %v1305, %v1296
  %v1630 = vpack.c.b16 %v1306, %v1297
  %v1631 = vpack.c.b16 %v1307, %v1298
  %v1632 = vpack.c.b16 %v1308, %v1299
  %v1633 = vpack.c.b16 %v1309, %v1300
  %v1634 = vpack.c.b16 %v1310, %v1301
  %v1635 = vpack.c.b16 %v1311, %v1302
  %v1636 = vpack.c.b16 %v1312, %v1303
  %v1637 = vpack.c.b16 %v1322, %v1313
  %v1638 = vpack.c.b16 %v1323, %v1314
  %v1639 = vpack.c.b16 %v1324, %v1315
  %v1640 = vpack.c.b16 %v1325, %v1316
  %v1641 = vpack.c.b16 %v1326, %v1317
  %v1642 = vpack.c.b16 %v1327, %v1318
  %v1643 = vpack.c.b16 %v1328, %v1319
  %v1644 = vpack.c.b16 %v1329, %v1320
  %v1645 = vpack.c.b16 %v1330, %v1321
  %v1646 = vpack.c.b16 %v1340, %v1331
  %v1647 = vpack.c.b16 %v1341, %v1332
  %v1648 = vpack.c.b16 %v1342, %v1333
  %v1649 = vpack.c.b16 %v1343, %v1334
  %v1650 = vpack.c.b16 %v1344, %v1335
  %v1651 = vpack.c.b16 %v1345, %v1336
  %v1652 = vpack.c.b16 %v1346, %v1337
  %v1653 = vpack.c.b16 %v1347, %v1338
  %v1654 = vpack.c.b16 %v1348, %v1339
  %v1655 = vpack.c.b16 %v1358, %v1349
  %v1656 = vpack.c.b16 %v1359, %v1350
  %v1657 = vpack.c.b16 %v1360, %v1351
  %v1658 = vpack.c.b16 %v1361, %v1352
  %v1659 = vpack.c.b16 %v1362, %v1353
  %v1660 = vpack.c.b16 %v1363, %v1354
  %v1661 = vpack.c.b16 %v1364, %v1355
  %v1662 = vpack.c.b16 %v1365, %v1356
  %v1663 = vpack.c.b16 %v1366, %v1357
  %v1664 = vpack.c.b16 %v1376, %v1367
  %v1665 = vpack.c.b16 %v1377, %v1368
  %v1666 = vpack.c.b16 %v1378, %v1369
  %v1667 = vpack.c.b16 %v1379, %v1370
  %v1668 = vpack.c.b16 %v1380, %v1371
  %v1669 = vpack.c.b16 %v1381, %v1372
  %v1670 = vpack.c.b16 %v1382, %v1373
  %v1671 = vpack.c.b16 %v1383, %v1374
  %v1672 = vpack.c.b16 %v1384, %v1375
  %v2105 = vunpack.c.l.b16 %v338
  %v2106 = vunpack.c.l.b16 %v339
  %v2107 = vunpack.c.l.b16 %v340
  %v2108 = vunpack.c.l.b16 %v341
  %v2109 = vunpack.c.l.b16 %v342
  %v2110 = vunpack.c.l.b16 %v343
  %v2111 = vunpack.c.l.b16 %v344
  %v2112 = vunpack.c.l.b16 %v345
  %v2113 = vunpack.c.l.b16 %v346
  %v2114 = vunpack.c.l.b16 %v347
  %v2115 = vunpack.c.l.b16 %v348
  %v2116 = vunpack.c.l.b16 %v349
  %v2117 = vunpack.c.l.b16 %v350
  %v2118 = vunpack.c.l.b16 %v351
  %v2119 = vunpack.c.l.b16 %v352
  %v2120 = vunpack.c.l.b16 %v353
  %v2121 = vunpack.c.l.b16 %v354
  %v2122 = vunpack.c.l.b16 %v355
  %v2123 = vunpack.c.l.b16 %v356
  %v2124 = vunpack.c.l.b16 %v357
  %v2125 = vunpack.c.l.b16 %v358
  %v2126 = vunpack.c.l.b16 %v359
  %v2127 = vunpack.c.l.b16 %v360
  %v2128 = vunpack.c.l.b16 %v361
  %v2129 = vunpack.c.l.b16 %v362
  %v2130 = vunpack.c.l.b16 %v363
  %v2131 = vunpack.c.l.b16 %v364
  %v2132 = vunpack.c.l.b16 %v365
  %v2133 = vunpack.c.l.b16 %v366
  %v2134 = vunpack.c.l.b16 %v367
  %v2135 = vunpack.c.l.b16 %v368
  %v2136 = vunpack.c.l.b16 %v369
  %v2137 = vunpack.c.l.b16 %v370
  %v2138 = vunpack.c.l.b16 %v371
  %v2139 = vunpack.c.l.b16 %v372
  %v2140 = vunpack.c.l.b16 %v373
  %v2141 = vunpack.c.l.b16 %v374
  %v2142 = vunpack.c.l.b16 %v375
  %v2143 = vunpack.c.l.b16 %v376
  %v2144 = vunpack.c.l.b16 %v377
  %v2145 = vunpack.c.l.b16 %v378
  %v2146 = vunpack.c.l.b16 %v379
  %v2147 = vunpack.c.l.b16 %v380
  %v2148 = vunpack.c.l.b16 %v381
  %v2149 = vunpack.c.l.b16 %v382
  %v2150 = vunpack.c.l.b16 %v383
  %v2151 = vunpack.c.l.b16 %v384
  %v2152 = vunpack.c.l.b16 %v385
  %v2153 = vunpack.c.l.b16 %v386
  %v2154 = vunpack.c.l.b16 %v387
  %v2155 = vunpack.c.l.b16 %v388
  %v2156 = vunpack.c.l.b16 %v389
  %v2157 = vunpack.c.l.b16 %v390
  %v2158 = vunpack.c.l.b16 %v391
  %v2159 = vunpack.c.l.b16 %v392
  %v2160 = vunpack.c.l.b16 %v393
  %v2161 = vunpack.c.l.b16 %v394
  %v2162 = vunpack.c.l.b16 %v395
  %v2163 = vunpack.c.l.b16 %v396
  %v2164 = vunpack.c.l.b16 %v397
  %v2165 = vunpack.c.l.b16 %v398
  %v2166 = vunpack.c.l.b16 %v399
  %v2167 = vunpack.c.l.b16 %v400
  %v2168 = vunpack.c.l.b16 %v401
  %v2169 = vunpack.c.l.b16 %v402
  %v2170 = vunpack.c.l.b16 %v403
  %v2171 = vunpack.c.l.b16 %v404
  %v2172 = vunpack.c.l.b16 %v405
  %v2173 = vunpack.c.l.b16 %v406
  %v2174 = vunpack.c.l.b16 %v407
  %v2175 = vunpack.c.l.b16 %v408
  %v2176 = vunpack.c.l.b16 %v409
  %v2177 = vunpack.c.l.b16 %v410
  %v2178 = vunpack.c.l.b16 %v411
  %v2179 = vunpack.c.l.b16 %v412
  %v2180 = vunpack.c.l.b16 %v413
  %v2181 = vunpack.c.l.b16 %v414
  %v2182 = vunpack.c.l.b16 %v415
  %v2183 = vunpack.c.l.b16 %v416
  %v2184 = vunpack.c.l.b16 %v417
  %v2185 = vunpack.c.l.b16 %v418
  %v2186 = vunpack.c.l.b16 %v419
  %v2187 = vunpack.c.l.b16 %v420
  %v2188 = vunpack.c.l.b16 %v421
  %v2189 = vunpack.c.l.b16 %v422
  %v2190 = vunpack.c.l.b16 %v423
  %v2191 = vunpack.c.l.b16 %v424
  %v2192 = vunpack.c.l.b16 %v425
  %v2193 = vunpack.c.l.b16 %v426
  %v2194 = vunpack.c.l.b16 %v427
  %v2195 = vunpack.c.l.b16 %v428
  %v2196 = vunpack.c.l.b16 %v429
  %v2197 = vunpack.c.l.b16 %v430
  %v2198 = vunpack.c.l.b16 %v431
  %v2199 = vunpack.c.l.b16 %v432
  %v2200 = vunpack.c.l.b16 %v433
  %v2201 = vunpack.c.l.b16 %v434
  %v2202 = vunpack.c.l.b16 %v435
  %v2203 = vunpack.c.l.b16 %v436
  %v2204 = vunpack.c.l.b16 %v437
  %v2205 = vunpack.c.l.b16 %v438
  %v2206 = vunpack.c.l.b16 %v439
  %v2207 = vunpack.c.l.b16 %v440
  %v2208 = vunpack.c.l.b16 %v441
  %v2209 = vunpack.c.l.b16 %v442
  %v2210 = vunpack.c.l.b16 %v443
  %v2211 = vunpack.c.l.b16 %v444
  %v2212 = vunpack.c.l.b16 %v445
  %v2213 = vunpack.c.l.b16 %v446
  %v2214 = vunpack.c.l.b16 %v447
  %v2215 = vunpack.c.l.b16 %v448
  %v2216 = vunpack.c.l.b16 %v449
  %v2217 = vunpack.c.l.b16 %v450
  %v2218 = vunpack.c.l.b16 %v451
  %v2219 = vunpack.c.l.b16 %v452
  %v2220 = vunpack.c.l.b16 %v453
  %v2221 = vunpack.c.l.b16 %v454
  %v2222 = vunpack.c.l.b16 %v455
  %v2223 = vunpack.c.l.b16 %v456
  %v2224 = vunpack.c.l.b16 %v457
  %v2225 = vunpack.c.l.b16 %v458
  %v2226 = vunpack.c.l.b16 %v459
  %v2227 = vunpack.c.l.b16 %v460
  %v2228 = vunpack.c.l.b16 %v461
  %v2229 = vunpack.c.l.b16 %v462
  %v2230 = vunpack.c.l.b16 %v463
  %v2231 = vunpack.c.l.b16 %v464
  %v2232 = vunpack.c.l.b16 %v465
  %v2233 = vunpack.c.l.b16 %v466
  %v2234 = vunpack.c.l.b16 %v467
  %v2235 = vunpack.c.l.b16 %v468
  %v2236 = vunpack.c.l.b16 %v469
  %v2237 = vunpack.c.l.b16 %v470
  %v2238 = vunpack.c.l.b16 %v471
  %v2239 = vunpack.c.l.b16 %v472
  %v2240 = vunpack.c.l.b16 %v473
  %v2241 = vunpack.c.l.b16 %v474
  %v2242 = vunpack.c.l.b16 %v475
  %v2243 = vunpack.c.l.b16 %v476
  %v2244 = vunpack.c.l.b16 %v477
  %v2245 = vunpack.c.l.b16 %v478
  %v2246 = vunpack.c.l.b16 %v479
  %v2247 = vunpack.c.l.b16 %v480
  %v2248 = vunpack.c.l.b16 %v481
  %v2249 = vpack.c.b16 %v2106, %v2105
  %v2250 = vpack.c.b16 %v2108, %v2107
  %v2251 = vpack.c.b16 %v2110, %v2109
  %v2252 = vpack.c.b16 %v2112, %v2111
  %v2253 = vpack.c.b16 %v2114, %v2113
  %v2254 = vpack.c.b16 %v2116, %v2115
  %v2255 = vpack.c.b16 %v2118, %v2117
  %v2256 = vpack.c.b16 %v2120, %v2119
  %v2257 = vpack.c.b16 %v2122, %v2121
  %v2258 = vpack.c.b16 %v2124, %v2123
  %v2259 = vpack.c.b16 %v2126, %v2125
  %v2260 = vpack.c.b16 %v2128, %v2127
  %v2261 = vpack.c.b16 %v2130, %v2129
  %v2262 = vpack.c.b16 %v2132, %v2131
  %v2263 = vpack.c.b16 %v2134, %v2133
  %v2264 = vpack.c.b16 %v2136, %v2135
  %v2265 = vpack.c.b16 %v2138, %v2137
  %v2266 = vpack.c.b16 %v2140, %v2139
  %v2267 = vpack.c.b16 %v2142, %v2141
  %v2268 = vpack.c.b16 %v2144, %v2143
  %v2269 = vpack.c.b16 %v2146, %v2145
  %v2270 = vpack.c.b16 %v2148, %v2147
  %v2271 = vpack.c.b16 %v2150, %v2149
  %v2272 = vpack.c.b16 %v2152, %v2151
  %v2273 = vpack.c.b16 %v2154, %v2153
  %v2274 = vpack.c.b16 %v2156, %v2155
  %v2275 = vpack.c.b16 %v2158, %v2157
  %v2276 = vpack.c.b16 %v2160, %v2159
  %v2277 = vpack.c.b16 %v2162, %v2161
  %v2278 = vpack.c.b16 %v2164, %v2163
  %v2279 = vpack.c.b16 %v2166, %v2165
  %v2280 = vpack.c.b16 %v2168, %v2167
  %v2281 = vpack.c.b16 %v2170, %v2169
  %v2282 = vpack.c.b16 %v2172, %v2171
  %v2283 = vpack.c.b16 %v2174, %v2173
  %v2284 = vpack.c.b16 %v2176, %v2175
  %v2285 = vpack.c.b16 %v2178, %v2177
  %v2286 = vpack.c.b16 %v2180, %v2179
  %v2287 = vpack.c.b16 %v2182, %v2181
  %v2288 = vpack.c.b16 %v2184, %v2183
  %v2289 = vpack.c.b16 %v2186, %v2185
  %v2290 = vpack.c.b16 %v2188, %v2187
  %v2291 = vpack.c.b16 %v2190, %v2189
  %v2292 = vpack.c.b16 %v2192, %v2191
  %v2293 = vpack.c.b16 %v2194, %v2193
  %v2294 = vpack.c.b16 %v2196, %v2195
  %v2295 = vpack.c.b16 %v2198, %v2197
  %v2296 = vpack.c.b16 %v2200, %v2199
  %v2297 = vpack.c.b16 %v2202, %v2201
  %v2298 = vpack.c.b16 %v2204, %v2203
  %v2299 = vpack.c.b16 %v2206, %v2205
  %v2300 = vpack.c.b16 %v2208, %v2207
  %v2301 = vpack.c.b16 %v2210, %v2209
  %v2302 = vpack.c.b16 %v2212, %v2211
  %v2303 = vpack.c.b16 %v2214, %v2213
  %v2304 = vpack.c.b16 %v2216, %v2215
  %v2305 = vpack.c.b16 %v2218, %v2217
  %v2306 = vpack.c.b16 %v2220, %v2219
  %v2307 = vpack.c.b16 %v2222, %v2221
  %v2308 = vpack.c.b16 %v2224, %v2223
  %v2309 = vpack.c.b16 %v2226, %v2225
  %v2310 = vpack.c.b16 %v2228, %v2227
  %v2311 = vpack.c.b16 %v2230, %v2229
  %v2312 = vpack.c.b16 %v2232, %v2231
  %v2313 = vpack.c.b16 %v2234, %v2233
  %v2314 = vpack.c.b16 %v2236, %v2235
  %v2315 = vpack.c.b16 %v2238, %v2237
  %v2316 = vpack.c.b16 %v2240, %v2239
  %v2317 = vpack.c.b16 %v2242, %v2241
  %v2318 = vpack.c.b16 %v2244, %v2243
  %v2319 = vpack.c.b16 %v2246, %v2245
  %v2320 = vpack.c.b16 %v2248, %v2247
  %2393 = vmatprep.subr.bf16.mxu0 0
  %2394 = vmatpush1.bf16.msra.mxu0 %v2249
  %2395 = vmatprep.subr.bf16.mxu0 0
  %2396 = vmatpush1.bf16.msra.mxu0 %v2250
  %2397 = vmatprep.subr.bf16.mxu0 0
  %2398 = vmatpush1.bf16.msra.mxu0 %v2251
  %2399 = vmatprep.subr.bf16.mxu0 0
  %2400 = vmatpush1.bf16.msra.mxu0 %v2252
  %2401 = vmatprep.subr.bf16.mxu0 0
  %2402 = vmatpush1.bf16.msra.mxu0 %v2253
  %2403 = vmatprep.subr.bf16.mxu0 0
  %2404 = vmatpush1.bf16.msra.mxu0 %v2254
  %2405 = vmatprep.subr.bf16.mxu0 0
  %2406 = vmatpush1.bf16.msra.mxu0 %v2255
  %2407 = vmatprep.subr.bf16.mxu0 0
  %2408 = vmatpush1.bf16.msra.mxu0 %v2256
  %2409 = vmatprep.subr.bf16.mxu0 0
  %2410 = vmatpush1.bf16.msra.mxu0 %v2257
  %2411 = vmatprep.subr.bf16.mxu0 0
  %2412 = vmatpush1.bf16.msra.mxu0 %v2258
  %2413 = vmatprep.subr.bf16.mxu0 0
  %2414 = vmatpush1.bf16.msra.mxu0 %v2259
  %2415 = vmatprep.subr.bf16.mxu0 0
  %2416 = vmatpush1.bf16.msra.mxu0 %v2260
  %2417 = vmatprep.subr.bf16.mxu0 0
  %2418 = vmatpush1.bf16.msra.mxu0 %v2261
  %2419 = vmatprep.subr.bf16.mxu0 0
  %2420 = vmatpush1.bf16.msra.mxu0 %v2262
  %2421 = vmatprep.subr.bf16.mxu0 0
  %2422 = vmatpush1.bf16.msra.mxu0 %v2263
  %2423 = vmatprep.subr.bf16.mxu0 0
  %2424 = vmatpush1.bf16.msra.mxu0 %v2264
  %2425 = vmatprep.mubr.bf16.mxu0 %v1386
  %2426 = vmatmul.mubr.bf16.gmra.mrb[0].mxu0 %v1385
  %v2427 = vpop.f32.mrb[0].mxu0
  %v2428 = vadd.f32 %v487, %v2427
  %v2429 = vpop.f32.mrb[0].mxu0
  %v2430 = vpop.f32.mrb[0].mxu0
  %v2431 = vadd.f32 %v487, %v2430
  %v2432 = vpop.f32.mrb[0].mxu0
  %2433 = vmatprep.mubr.bf16.mxu0 %v1395
  %2434 = vmatmul.mubr.bf16.gmra.mrb[0].mxu0 %v1394
  %v2435 = vpop.f32.mrb[0].mxu0
  %v2436 = vadd.f32 %v487, %v2435
  %v2437 = vpop.f32.mrb[0].mxu0
  %v2438 = vpop.f32.mrb[0].mxu0
  %v2439 = vadd.f32 %v487, %v2438
  %v2440 = vpop.f32.mrb[0].mxu0
  %2441 = vmatprep.mubr.bf16.mxu0 %v1404
  %2442 = vmatmul.mubr.bf16.gmra.mrb[0].mxu0 %v1403
  %v2443 = vpop.f32.mrb[0].mxu0
  %v2444 = vadd.f32 %v487, %v2443
  %v2445 = vpop.f32.mrb[0].mxu0
  %v2446 = vpop.f32.mrb[0].mxu0
  %v2447 = vadd.f32 %v487, %v2446
  %v2448 = vpop.f32.mrb[0].mxu0
  %2449 = vmatprep.mubr.bf16.mxu0 %v1413
  %2450 = vmatmul.mubr.bf16.gmra.mrb[0].mxu0 %v1412
  %v2451 = vpop.f32.mrb[0].mxu0
  %v2452 = vadd.f32 %v487, %v2451
  %v2453 = vpop.f32.mrb[0].mxu0
  %v2454 = vpop.f32.mrb[0].mxu0
  %v2455 = vadd.f32 %v487, %v2454
  %v2456 = vpop.f32.mrb[0].mxu0
  %2457 = vmatprep.mubr.bf16.mxu0 %v1422
  %2458 = vmatmul.mubr.bf16.gmra.mrb[0].mxu0 %v1421
  %v2459 = vpop.f32.mrb[0].mxu0
  %v2460 = vadd.f32 %v487, %v2459
  %v2461 = vpop.f32.mrb[0].mxu0
  %v2462 = vpop.f32.mrb[0].mxu0
  %v2463 = vadd.f32 %v487, %v2462
  %v2464 = vpop.f32.mrb[0].mxu0
  %2465 = vmatprep.mubr.bf16.mxu0 %v1431
  %2466 = vmatmul.mubr.bf16.gmra.mrb[0].mxu0 %v1430
  %v2467 = vpop.f32.mrb[0].mxu0
  %v2468 = vadd.f32 %v487, %v2467
  %v2469 = vpop.f32.mrb[0].mxu0
  %v2470 = vpop.f32.mrb[0].mxu0
  %v2471 = vadd.f32 %v487, %v2470
  %v2472 = vpop.f32.mrb[0].mxu0
  %2473 = vmatprep.mubr.bf16.mxu0 %v1440
  %2474 = vmatmul.mubr.bf16.gmra.mrb[0].mxu0 %v1439
  %v2475 = vpop.f32.mrb[0].mxu0
  %v2476 = vadd.f32 %v487, %v2475
  %v2477 = vpop.f32.mrb[0].mxu0
  %v2478 = vpop.f32.mrb[0].mxu0
  %v2479 = vadd.f32 %v487, %v2478
  %v2480 = vpop.f32.mrb[0].mxu0
  %2481 = vmatprep.mubr.bf16.mxu0 %v1449
  %2482 = vmatmul.mubr.bf16.gmra.mrb[0].mxu0 %v1448
  %v2483 = vpop.f32.mrb[0].mxu0
  %v2484 = vadd.f32 %v487, %v2483
  %v2485 = vpop.f32.mrb[0].mxu0
  %v2486 = vpop.f32.mrb[0].mxu0
  %v2487 = vadd.f32 %v487, %v2486
  %v2488 = vpop.f32.mrb[0].mxu0
  %2489 = vmatprep.mubr.bf16.mxu0 %v1458
  %2490 = vmatmul.mubr.bf16.gmra.mrb[0].mxu0 %v1457
  %v2491 = vpop.f32.mrb[0].mxu0
  %v2492 = vadd.f32 %v487, %v2491
  %v2493 = vpop.f32.mrb[0].mxu0
  %v2494 = vpop.f32.mrb[0].mxu0
  %v2495 = vadd.f32 %v487, %v2494
  %v2496 = vpop.f32.mrb[0].mxu0
  %2497 = vmatprep.mubr.bf16.mxu0 %v1467
  %2498 = vmatmul.mubr.bf16.gmra.mrb[0].mxu0 %v1466
  %v2499 = vpop.f32.mrb[0].mxu0
  %v2500 = vadd.f32 %v487, %v2499
  %v2501 = vpop.f32.mrb[0].mxu0
  %v2502 = vpop.f32.mrb[0].mxu0
  %v2503 = vadd.f32 %v487, %v2502
  %v2504 = vpop.f32.mrb[0].mxu0
  %2505 = vmatprep.mubr.bf16.mxu0 %v1476
  %2506 = vmatmul.mubr.bf16.gmra.mrb[0].mxu0 %v1475
  %v2507 = vpop.f32.mrb[0].mxu0
  %v2508 = vadd.f32 %v487, %v2507
  %v2509 = vpop.f32.mrb[0].mxu0
  %v2510 = vpop.f32.mrb[0].mxu0
  %v2511 = vadd.f32 %v487, %v2510
  %v2512 = vpop.f32.mrb[0].mxu0
  %2513 = vmatprep.mubr.bf16.mxu0 %v1485
  %2514 = vmatmul.mubr.bf16.gmra.mrb[0].mxu0 %v1484
  %v2515 = vpop.f32.mrb[0].mxu0
  %v2516 = vadd.f32 %v487, %v2515
  %v2517 = vpop.f32.mrb[0].mxu0
  %v2518 = vpop.f32.mrb[0].mxu0
  %v2519 = vadd.f32 %v487, %v2518
  %v2520 = vpop.f32.mrb[0].mxu0
  %2521 = vmatprep.mubr.bf16.mxu0 %v1494
  %2522 = vmatmul.mubr.bf16.gmra.mrb[0].mxu0 %v1493
  %v2523 = vpop.f32.mrb[0].mxu0
  %v2524 = vadd.f32 %v487, %v2523
  %v2525 = vpop.f32.mrb[0].mxu0
  %v2526 = vpop.f32.mrb[0].mxu0
  %v2527 = vadd.f32 %v487, %v2526
  %v2528 = vpop.f32.mrb[0].mxu0
  %2529 = vmatprep.mubr.bf16.mxu0 %v1503
  %2530 = vmatmul.mubr.bf16.gmra.mrb[0].mxu0 %v1502
  %v2531 = vpop.f32.mrb[0].mxu0
  %v2532 = vadd.f32 %v487, %v2531
  %v2533 = vpop.f32.mrb[0].mxu0
  %v2534 = vpop.f32.mrb[0].mxu0
  %v2535 = vadd.f32 %v487, %v2534
  %v2536 = vpop.f32.mrb[0].mxu0
  %2537 = vmatprep.mubr.bf16.mxu0 %v1512
  %2538 = vmatmul.mubr.bf16.gmra.mrb[0].mxu0 %v1511
  %v2539 = vpop.f32.mrb[0].mxu0
  %v2540 = vadd.f32 %v487, %v2539
  %v2541 = vpop.f32.mrb[0].mxu0
  %v2542 = vpop.f32.mrb[0].mxu0
  %v2543 = vadd.f32 %v487, %v2542
  %v2544 = vpop.f32.mrb[0].mxu0
  %2545 = vmatprep.mubr.bf16.mxu0 %v1521
  %2546 = vmatmul.mubr.bf16.gmra.mrb[0].mxu0 %v1520
  %v2547 = vpop.f32.mrb[0].mxu0
  %v2548 = vadd.f32 %v487, %v2547
  %v2549 = vpop.f32.mrb[0].mxu0
  %v2550 = vpop.f32.mrb[0].mxu0
  %v2551 = vadd.f32 %v487, %v2550
  %v2552 = vpop.f32.mrb[0].mxu0
  %2553 = vmatprep.mubr.bf16.mxu0 %v1530
  %2554 = vmatmul.mubr.bf16.gmra.mrb[0].mxu0 %v1529
  %v2555 = vpop.f32.mrb[0].mxu0
  %v2556 = vadd.f32 %v487, %v2555
  %v2557 = vpop.f32.mrb[0].mxu0
  %v2558 = vpop.f32.mrb[0].mxu0
  %v2559 = vadd.f32 %v487, %v2558
  %v2560 = vpop.f32.mrb[0].mxu0
  %2561 = vmatprep.mubr.bf16.mxu0 %v1539
  %2562 = vmatmul.mubr.bf16.gmra.mrb[0].mxu0 %v1538
  %v2563 = vpop.f32.mrb[0].mxu0
  %v2564 = vadd.f32 %v487, %v2563
  %v2565 = vpop.f32.mrb[0].mxu0
  %v2566 = vpop.f32.mrb[0].mxu0
  %v2567 = vadd.f32 %v487, %v2566
  %v2568 = vpop.f32.mrb[0].mxu0
  %2569 = vmatprep.mubr.bf16.mxu0 %v1548
  %2570 = vmatmul.mubr.bf16.gmra.mrb[0].mxu0 %v1547
  %v2571 = vpop.f32.mrb[0].mxu0
  %v2572 = vadd.f32 %v487, %v2571
  %v2573 = vpop.f32.mrb[0].mxu0
  %v2574 = vpop.f32.mrb[0].mxu0
  %v2575 = vadd.f32 %v487, %v2574
  %v2576 = vpop.f32.mrb[0].mxu0
  %2577 = vmatprep.mubr.bf16.mxu0 %v1557
  %2578 = vmatmul.mubr.bf16.gmra.mrb[0].mxu0 %v1556
  %v2579 = vpop.f32.mrb[0].mxu0
  %v2580 = vadd.f32 %v487, %v2579
  %v2581 = vpop.f32.mrb[0].mxu0
  %v2582 = vpop.f32.mrb[0].mxu0
  %v2583 = vadd.f32 %v487, %v2582
  %v2584 = vpop.f32.mrb[0].mxu0
  %2585 = vmatprep.mubr.bf16.mxu0 %v1566
  %2586 = vmatmul.mubr.bf16.gmra.mrb[0].mxu0 %v1565
  %v2587 = vpop.f32.mrb[0].mxu0
  %v2588 = vadd.f32 %v487, %v2587
  %v2589 = vpop.f32.mrb[0].mxu0
  %v2590 = vpop.f32.mrb[0].mxu0
  %v2591 = vadd.f32 %v487, %v2590
  %v2592 = vpop.f32.mrb[0].mxu0
  %2593 = vmatprep.mubr.bf16.mxu0 %v1575
  %2594 = vmatmul.mubr.bf16.gmra.mrb[0].mxu0 %v1574
  %v2595 = vpop.f32.mrb[0].mxu0
  %v2596 = vadd.f32 %v487, %v2595
  %v2597 = vpop.f32.mrb[0].mxu0
  %v2598 = vpop.f32.mrb[0].mxu0
  %v2599 = vadd.f32 %v487, %v2598
  %v2600 = vpop.f32.mrb[0].mxu0
  %2601 = vmatprep.mubr.bf16.mxu0 %v1584
  %2602 = vmatmul.mubr.bf16.gmra.mrb[0].mxu0 %v1583
  %v2603 = vpop.f32.mrb[0].mxu0
  %v2604 = vadd.f32 %v487, %v2603
  %v2605 = vpop.f32.mrb[0].mxu0
  %v2606 = vpop.f32.mrb[0].mxu0
  %v2607 = vadd.f32 %v487, %v2606
  %v2608 = vpop.f32.mrb[0].mxu0
  %2609 = vmatprep.mubr.bf16.mxu0 %v1593
  %2610 = vmatmul.mubr.bf16.gmra.mrb[0].mxu0 %v1592
  %v2611 = vpop.f32.mrb[0].mxu0
  %v2612 = vadd.f32 %v487, %v2611
  %v2613 = vpop.f32.mrb[0].mxu0
  %v2614 = vpop.f32.mrb[0].mxu0
  %v2615 = vadd.f32 %v487, %v2614
  %v2616 = vpop.f32.mrb[0].mxu0
  %2617 = vmatprep.mubr.bf16.mxu0 %v1602
  %2618 = vmatmul.mubr.bf16.gmra.mrb[0].mxu0 %v1601
  %v2619 = vpop.f32.mrb[0].mxu0
  %v2620 = vadd.f32 %v487, %v2619
  %v2621 = vpop.f32.mrb[0].mxu0
  %v2622 = vpop.f32.mrb[0].mxu0
  %v2623 = vadd.f32 %v487, %v2622
  %v2624 = vpop.f32.mrb[0].mxu0
  %2625 = vmatprep.mubr.bf16.mxu0 %v1611
  %2626 = vmatmul.mubr.bf16.gmra.mrb[0].mxu0 %v1610
  %v2627 = vpop.f32.mrb[0].mxu0
  %v2628 = vadd.f32 %v487, %v2627
  %v2629 = vpop.f32.mrb[0].mxu0
  %v2630 = vpop.f32.mrb[0].mxu0
  %v2631 = vadd.f32 %v487, %v2630
  %v2632 = vpop.f32.mrb[0].mxu0
  %2633 = vmatprep.mubr.bf16.mxu0 %v1620
  %2634 = vmatmul.mubr.bf16.gmra.mrb[0].mxu0 %v1619
  %v2635 = vpop.f32.mrb[0].mxu0
  %v2636 = vadd.f32 %v487, %v2635
  %v2637 = vpop.f32.mrb[0].mxu0
  %v2638 = vpop.f32.mrb[0].mxu0
  %v2639 = vadd.f32 %v487, %v2638
  %v2640 = vpop.f32.mrb[0].mxu0
  %2641 = vmatprep.mubr.bf16.mxu0 %v1629
  %2642 = vmatmul.mubr.bf16.gmra.mrb[0].mxu0 %v1628
  %v2643 = vpop.f32.mrb[0].mxu0
  %v2644 = vadd.f32 %v487, %v2643
  %v2645 = vpop.f32.mrb[0].mxu0
  %v2646 = vpop.f32.mrb[0].mxu0
  %v2647 = vadd.f32 %v487, %v2646
  %v2648 = vpop.f32.mrb[0].mxu0
  %2649 = vmatprep.mubr.bf16.mxu0 %v1638
  %2650 = vmatmul.mubr.bf16.gmra.mrb[0].mxu0 %v1637
  %v2651 = vpop.f32.mrb[0].mxu0
  %v2652 = vadd.f32 %v487, %v2651
  %v2653 = vpop.f32.mrb[0].mxu0
  %v2654 = vpop.f32.mrb[0].mxu0
  %v2655 = vadd.f32 %v487, %v2654
  %v2656 = vpop.f32.mrb[0].mxu0
  %2657 = vmatprep.mubr.bf16.mxu0 %v1647
  %2658 = vmatmul.mubr.bf16.gmra.mrb[0].mxu0 %v1646
  %v2659 = vpop.f32.mrb[0].mxu0
  %v2660 = vadd.f32 %v487, %v2659
  %v2661 = vpop.f32.mrb[0].mxu0
  %v2662 = vpop.f32.mrb[0].mxu0
  %v2663 = vadd.f32 %v487, %v2662
  %v2664 = vpop.f32.mrb[0].mxu0
  %2665 = vmatprep.mubr.bf16.mxu0 %v1656
  %2666 = vmatmul.mubr.bf16.gmra.mrb[0].mxu0 %v1655
  %v2667 = vpop.f32.mrb[0].mxu0
  %v2668 = vadd.f32 %v487, %v2667
  %v2669 = vpop.f32.mrb[0].mxu0
  %v2670 = vpop.f32.mrb[0].mxu0
  %v2671 = vadd.f32 %v487, %v2670
  %v2672 = vpop.f32.mrb[0].mxu0
  %2673 = vmatprep.mubr.bf16.mxu0 %v1665
  %2674 = vmatmul.mubr.bf16.gmra.mrb[0].mxu0 %v1664
  %v2675 = vpop.f32.mrb[0].mxu0
  %v2676 = vadd.f32 %v487, %v2675
  %v2677 = vpop.f32.mrb[0].mxu0
  %v2678 = vpop.f32.mrb[0].mxu0
  %v2679 = vadd.f32 %v487, %v2678
  %v2680 = vpop.f32.mrb[0].mxu0
  %2681 = vdwg.mxu0
  %2682 = vmatprep.subr.bf16.mxu0 0
  %2683 = vmatpush1.bf16.msra.mxu0 %v2265
  %2684 = vmatprep.subr.bf16.mxu0 0
  %2685 = vmatpush1.bf16.msra.mxu0 %v2266
  %2686 = vmatprep.subr.bf16.mxu0 0
  %2687 = vmatpush1.bf16.msra.mxu0 %v2267
  %2688 = vmatprep.subr.bf16.mxu0 0
  %2689 = vmatpush1.bf16.msra.mxu0 %v2268
  %2690 = vmatprep.subr.bf16.mxu0 0
  %2691 = vmatpush1.bf16.msra.mxu0 %v2269
  %2692 = vmatprep.subr.bf16.mxu0 0
  %2693 = vmatpush1.bf16.msra.mxu0 %v2270
  %2694 = vmatprep.subr.bf16.mxu0 0
  %2695 = vmatpush1.bf16.msra.mxu0 %v2271
  %2696 = vmatprep.subr.bf16.mxu0 0
  %2697 = vmatpush1.bf16.msra.mxu0 %v2272
  %2698 = vmatprep.subr.bf16.mxu0 0
  %2699 = vmatpush1.bf16.msra.mxu0 %v2273
  %2700 = vmatprep.subr.bf16.mxu0 0
  %2701 = vmatpush1.bf16.msra.mxu0 %v2274
  %2702 = vmatprep.subr.bf16.mxu0 0
  %2703 = vmatpush1.bf16.msra.mxu0 %v2275
  %2704 = vmatprep.subr.bf16.mxu0 0
  %2705 = vmatpush1.bf16.msra.mxu0 %v2276
  %2706 = vmatprep.subr.bf16.mxu0 0
  %2707 = vmatpush1.bf16.msra.mxu0 %v2277
  %2708 = vmatprep.subr.bf16.mxu0 0
  %2709 = vmatpush1.bf16.msra.mxu0 %v2278
  %2710 = vmatprep.subr.bf16.mxu0 0
  %2711 = vmatpush1.bf16.msra.mxu0 %v2279
  %2712 = vmatprep.subr.bf16.mxu0 0
  %2713 = vmatpush1.bf16.msra.mxu0 %v2280
  %2714 = vmatprep.mubr.bf16.mxu0 %v1388
  %2715 = vmatmul.mubr.bf16.gmra.mrb[0].mxu0 %v1387
  %v2716 = vpop.f32.mrb[0].mxu0
  %v2717 = vadd.f32 %v2428, %v2716
  %v2718 = vpop.f32.mrb[0].mxu0
  %v2719 = vpop.f32.mrb[0].mxu0
  %v2720 = vadd.f32 %v2431, %v2719
  %v2721 = vpop.f32.mrb[0].mxu0
  %2722 = vmatprep.mubr.bf16.mxu0 %v1397
  %2723 = vmatmul.mubr.bf16.gmra.mrb[0].mxu0 %v1396
  %v2724 = vpop.f32.mrb[0].mxu0
  %v2725 = vadd.f32 %v2436, %v2724
  %v2726 = vpop.f32.mrb[0].mxu0
  %v2727 = vpop.f32.mrb[0].mxu0
  %v2728 = vadd.f32 %v2439, %v2727
  %v2729 = vpop.f32.mrb[0].mxu0
  %2730 = vmatprep.mubr.bf16.mxu0 %v1406
  %2731 = vmatmul.mubr.bf16.gmra.mrb[0].mxu0 %v1405
  %v2732 = vpop.f32.mrb[0].mxu0
  %v2733 = vadd.f32 %v2444, %v2732
  %v2734 = vpop.f32.mrb[0].mxu0
  %v2735 = vpop.f32.mrb[0].mxu0
  %v2736 = vadd.f32 %v2447, %v2735
  %v2737 = vpop.f32.mrb[0].mxu0
  %2738 = vmatprep.mubr.bf16.mxu0 %v1415
  %2739 = vmatmul.mubr.bf16.gmra.mrb[0].mxu0 %v1414
  %v2740 = vpop.f32.mrb[0].mxu0
  %v2741 = vadd.f32 %v2452, %v2740
  %v2742 = vpop.f32.mrb[0].mxu0
  %v2743 = vpop.f32.mrb[0].mxu0
  %v2744 = vadd.f32 %v2455, %v2743
  %v2745 = vpop.f32.mrb[0].mxu0
  %2746 = vmatprep.mubr.bf16.mxu0 %v1424
  %2747 = vmatmul.mubr.bf16.gmra.mrb[0].mxu0 %v1423
  %v2748 = vpop.f32.mrb[0].mxu0
  %v2749 = vadd.f32 %v2460, %v2748
  %v2750 = vpop.f32.mrb[0].mxu0
  %v2751 = vpop.f32.mrb[0].mxu0
  %v2752 = vadd.f32 %v2463, %v2751
  %v2753 = vpop.f32.mrb[0].mxu0
  %2754 = vmatprep.mubr.bf16.mxu0 %v1433
  %2755 = vmatmul.mubr.bf16.gmra.mrb[0].mxu0 %v1432
  %v2756 = vpop.f32.mrb[0].mxu0
  %v2757 = vadd.f32 %v2468, %v2756
  %v2758 = vpop.f32.mrb[0].mxu0
  %v2759 = vpop.f32.mrb[0].mxu0
  %v2760 = vadd.f32 %v2471, %v2759
  %v2761 = vpop.f32.mrb[0].mxu0
  %2762 = vmatprep.mubr.bf16.mxu0 %v1442
  %2763 = vmatmul.mubr.bf16.gmra.mrb[0].mxu0 %v1441
  %v2764 = vpop.f32.mrb[0].mxu0
  %v2765 = vadd.f32 %v2476, %v2764
  %v2766 = vpop.f32.mrb[0].mxu0
  %v2767 = vpop.f32.mrb[0].mxu0
  %v2768 = vadd.f32 %v2479, %v2767
  %v2769 = vpop.f32.mrb[0].mxu0
  %2770 = vmatprep.mubr.bf16.mxu0 %v1451
  %2771 = vmatmul.mubr.bf16.gmra.mrb[0].mxu0 %v1450
  %v2772 = vpop.f32.mrb[0].mxu0
  %v2773 = vadd.f32 %v2484, %v2772
  %v2774 = vpop.f32.mrb[0].mxu0
  %v2775 = vpop.f32.mrb[0].mxu0
  %v2776 = vadd.f32 %v2487, %v2775
  %v2777 = vpop.f32.mrb[0].mxu0
  %2778 = vmatprep.mubr.bf16.mxu0 %v1460
  %2779 = vmatmul.mubr.bf16.gmra.mrb[0].mxu0 %v1459
  %v2780 = vpop.f32.mrb[0].mxu0
  %v2781 = vadd.f32 %v2492, %v2780
  %v2782 = vpop.f32.mrb[0].mxu0
  %v2783 = vpop.f32.mrb[0].mxu0
  %v2784 = vadd.f32 %v2495, %v2783
  %v2785 = vpop.f32.mrb[0].mxu0
  %2786 = vmatprep.mubr.bf16.mxu0 %v1469
  %2787 = vmatmul.mubr.bf16.gmra.mrb[0].mxu0 %v1468
  %v2788 = vpop.f32.mrb[0].mxu0
  %v2789 = vadd.f32 %v2500, %v2788
  %v2790 = vpop.f32.mrb[0].mxu0
  %v2791 = vpop.f32.mrb[0].mxu0
  %v2792 = vadd.f32 %v2503, %v2791
  %v2793 = vpop.f32.mrb[0].mxu0
  %2794 = vmatprep.mubr.bf16.mxu0 %v1478
  %2795 = vmatmul.mubr.bf16.gmra.mrb[0].mxu0 %v1477
  %v2796 = vpop.f32.mrb[0].mxu0
  %v2797 = vadd.f32 %v2508, %v2796
  %v2798 = vpop.f32.mrb[0].mxu0
  %v2799 = vpop.f32.mrb[0].mxu0
  %v2800 = vadd.f32 %v2511, %v2799
  %v2801 = vpop.f32.mrb[0].mxu0
  %2802 = vmatprep.mubr.bf16.mxu0 %v1487
  %2803 = vmatmul.mubr.bf16.gmra.mrb[0].mxu0 %v1486
  %v2804 = vpop.f32.mrb[0].mxu0
  %v2805 = vadd.f32 %v2516, %v2804
  %v2806 = vpop.f32.mrb[0].mxu0
  %v2807 = vpop.f32.mrb[0].mxu0
  %v2808 = vadd.f32 %v2519, %v2807
  %v2809 = vpop.f32.mrb[0].mxu0
  %2810 = vmatprep.mubr.bf16.mxu0 %v1496
  %2811 = vmatmul.mubr.bf16.gmra.mrb[0].mxu0 %v1495
  %v2812 = vpop.f32.mrb[0].mxu0
  %v2813 = vadd.f32 %v2524, %v2812
  %v2814 = vpop.f32.mrb[0].mxu0
  %v2815 = vpop.f32.mrb[0].mxu0
  %v2816 = vadd.f32 %v2527, %v2815
  %v2817 = vpop.f32.mrb[0].mxu0
  %2818 = vmatprep.mubr.bf16.mxu0 %v1505
  %2819 = vmatmul.mubr.bf16.gmra.mrb[0].mxu0 %v1504
  %v2820 = vpop.f32.mrb[0].mxu0
  %v2821 = vadd.f32 %v2532, %v2820
  %v2822 = vpop.f32.mrb[0].mxu0
  %v2823 = vpop.f32.mrb[0].mxu0
  %v2824 = vadd.f32 %v2535, %v2823
  %v2825 = vpop.f32.mrb[0].mxu0
  %2826 = vmatprep.mubr.bf16.mxu0 %v1514
  %2827 = vmatmul.mubr.bf16.gmra.mrb[0].mxu0 %v1513
  %v2828 = vpop.f32.mrb[0].mxu0
  %v2829 = vadd.f32 %v2540, %v2828
  %v2830 = vpop.f32.mrb[0].mxu0
  %v2831 = vpop.f32.mrb[0].mxu0
  %v2832 = vadd.f32 %v2543, %v2831
  %v2833 = vpop.f32.mrb[0].mxu0
  %2834 = vmatprep.mubr.bf16.mxu0 %v1523
  %2835 = vmatmul.mubr.bf16.gmra.mrb[0].mxu0 %v1522
  %v2836 = vpop.f32.mrb[0].mxu0
  %v2837 = vadd.f32 %v2548, %v2836
  %v2838 = vpop.f32.mrb[0].mxu0
  %v2839 = vpop.f32.mrb[0].mxu0
  %v2840 = vadd.f32 %v2551, %v2839
  %v2841 = vpop.f32.mrb[0].mxu0
  %2842 = vmatprep.mubr.bf16.mxu0 %v1532
  %2843 = vmatmul.mubr.bf16.gmra.mrb[0].mxu0 %v1531
  %v2844 = vpop.f32.mrb[0].mxu0
  %v2845 = vadd.f32 %v2556, %v2844
  %v2846 = vpop.f32.mrb[0].mxu0
  %v2847 = vpop.f32.mrb[0].mxu0
  %v2848 = vadd.f32 %v2559, %v2847
  %v2849 = vpop.f32.mrb[0].mxu0
  %2850 = vmatprep.mubr.bf16.mxu0 %v1541
  %2851 = vmatmul.mubr.bf16.gmra.mrb[0].mxu0 %v1540
  %v2852 = vpop.f32.mrb[0].mxu0
  %v2853 = vadd.f32 %v2564, %v2852
  %v2854 = vpop.f32.mrb[0].mxu0
  %v2855 = vpop.f32.mrb[0].mxu0
  %v2856 = vadd.f32 %v2567, %v2855
  %v2857 = vpop.f32.mrb[0].mxu0
  %2858 = vmatprep.mubr.bf16.mxu0 %v1550
  %2859 = vmatmul.mubr.bf16.gmra.mrb[0].mxu0 %v1549
  %v2860 = vpop.f32.mrb[0].mxu0
  %v2861 = vadd.f32 %v2572, %v2860
  %v2862 = vpop.f32.mrb[0].mxu0
  %v2863 = vpop.f32.mrb[0].mxu0
  %v2864 = vadd.f32 %v2575, %v2863
  %v2865 = vpop.f32.mrb[0].mxu0
  %2866 = vmatprep.mubr.bf16.mxu0 %v1559
  %2867 = vmatmul.mubr.bf16.gmra.mrb[0].mxu0 %v1558
  %v2868 = vpop.f32.mrb[0].mxu0
  %v2869 = vadd.f32 %v2580, %v2868
  %v2870 = vpop.f32.mrb[0].mxu0
  %v2871 = vpop.f32.mrb[0].mxu0
  %v2872 = vadd.f32 %v2583, %v2871
  %v2873 = vpop.f32.mrb[0].mxu0
  %2874 = vmatprep.mubr.bf16.mxu0 %v1568
  %2875 = vmatmul.mubr.bf16.gmra.mrb[0].mxu0 %v1567
  %v2876 = vpop.f32.mrb[0].mxu0
  %v2877 = vadd.f32 %v2588, %v2876
  %v2878 = vpop.f32.mrb[0].mxu0
  %v2879 = vpop.f32.mrb[0].mxu0
  %v2880 = vadd.f32 %v2591, %v2879
  %v2881 = vpop.f32.mrb[0].mxu0
  %2882 = vmatprep.mubr.bf16.mxu0 %v1577
  %2883 = vmatmul.mubr.bf16.gmra.mrb[0].mxu0 %v1576
  %v2884 = vpop.f32.mrb[0].mxu0
  %v2885 = vadd.f32 %v2596, %v2884
  %v2886 = vpop.f32.mrb[0].mxu0
  %v2887 = vpop.f32.mrb[0].mxu0
  %v2888 = vadd.f32 %v2599, %v2887
  %v2889 = vpop.f32.mrb[0].mxu0
  %2890 = vmatprep.mubr.bf16.mxu0 %v1586
  %2891 = vmatmul.mubr.bf16.gmra.mrb[0].mxu0 %v1585
  %v2892 = vpop.f32.mrb[0].mxu0
  %v2893 = vadd.f32 %v2604, %v2892
  %v2894 = vpop.f32.mrb[0].mxu0
  %v2895 = vpop.f32.mrb[0].mxu0
  %v2896 = vadd.f32 %v2607, %v2895
  %v2897 = vpop.f32.mrb[0].mxu0
  %2898 = vmatprep.mubr.bf16.mxu0 %v1595
  %2899 = vmatmul.mubr.bf16.gmra.mrb[0].mxu0 %v1594
  %v2900 = vpop.f32.mrb[0].mxu0
  %v2901 = vadd.f32 %v2612, %v2900
  %v2902 = vpop.f32.mrb[0].mxu0
  %v2903 = vpop.f32.mrb[0].mxu0
  %v2904 = vadd.f32 %v2615, %v2903
  %v2905 = vpop.f32.mrb[0].mxu0
  %2906 = vmatprep.mubr.bf16.mxu0 %v1604
  %2907 = vmatmul.mubr.bf16.gmra.mrb[0].mxu0 %v1603
  %v2908 = vpop.f32.mrb[0].mxu0
  %v2909 = vadd.f32 %v2620, %v2908
  %v2910 = vpop.f32.mrb[0].mxu0
  %v2911 = vpop.f32.mrb[0].mxu0
  %v2912 = vadd.f32 %v2623, %v2911
  %v2913 = vpop.f32.mrb[0].mxu0
  %2914 = vmatprep.mubr.bf16.mxu0 %v1613
  %2915 = vmatmul.mubr.bf16.gmra.mrb[0].mxu0 %v1612
  %v2916 = vpop.f32.mrb[0].mxu0
  %v2917 = vadd.f32 %v2628, %v2916
  %v2918 = vpop.f32.mrb[0].mxu0
  %v2919 = vpop.f32.mrb[0].mxu0
  %v2920 = vadd.f32 %v2631, %v2919
  %v2921 = vpop.f32.mrb[0].mxu0
  %2922 = vmatprep.mubr.bf16.mxu0 %v1622
  %2923 = vmatmul.mubr.bf16.gmra.mrb[0].mxu0 %v1621
  %v2924 = vpop.f32.mrb[0].mxu0
  %v2925 = vadd.f32 %v2636, %v2924
  %v2926 = vpop.f32.mrb[0].mxu0
  %v2927 = vpop.f32.mrb[0].mxu0
  %v2928 = vadd.f32 %v2639, %v2927
  %v2929 = vpop.f32.mrb[0].mxu0
  %2930 = vmatprep.mubr.bf16.mxu0 %v1631
  %2931 = vmatmul.mubr.bf16.gmra.mrb[0].mxu0 %v1630
  %v2932 = vpop.f32.mrb[0].mxu0
  %v2933 = vadd.f32 %v2644, %v2932
  %v2934 = vpop.f32.mrb[0].mxu0
  %v2935 = vpop.f32.mrb[0].mxu0
  %v2936 = vadd.f32 %v2647, %v2935
  %v2937 = vpop.f32.mrb[0].mxu0
  %2938 = vmatprep.mubr.bf16.mxu0 %v1640
  %2939 = vmatmul.mubr.bf16.gmra.mrb[0].mxu0 %v1639
  %v2940 = vpop.f32.mrb[0].mxu0
  %v2941 = vadd.f32 %v2652, %v2940
  %v2942 = vpop.f32.mrb[0].mxu0
  %v2943 = vpop.f32.mrb[0].mxu0
  %v2944 = vadd.f32 %v2655, %v2943
  %v2945 = vpop.f32.mrb[0].mxu0
  %2946 = vmatprep.mubr.bf16.mxu0 %v1649
  %2947 = vmatmul.mubr.bf16.gmra.mrb[0].mxu0 %v1648
  %v2948 = vpop.f32.mrb[0].mxu0
  %v2949 = vadd.f32 %v2660, %v2948
  %v2950 = vpop.f32.mrb[0].mxu0
  %v2951 = vpop.f32.mrb[0].mxu0
  %v2952 = vadd.f32 %v2663, %v2951
  %v2953 = vpop.f32.mrb[0].mxu0
  %2954 = vmatprep.mubr.bf16.mxu0 %v1658
  %2955 = vmatmul.mubr.bf16.gmra.mrb[0].mxu0 %v1657
  %v2956 = vpop.f32.mrb[0].mxu0
  %v2957 = vadd.f32 %v2668, %v2956
  %v2958 = vpop.f32.mrb[0].mxu0
  %v2959 = vpop.f32.mrb[0].mxu0
  %v2960 = vadd.f32 %v2671, %v2959
  %v2961 = vpop.f32.mrb[0].mxu0
  %2962 = vmatprep.mubr.bf16.mxu0 %v1667
  %2963 = vmatmul.mubr.bf16.gmra.mrb[0].mxu0 %v1666
  %v2964 = vpop.f32.mrb[0].mxu0
  %v2965 = vadd.f32 %v2676, %v2964
  %v2966 = vpop.f32.mrb[0].mxu0
  %v2967 = vpop.f32.mrb[0].mxu0
  %v2968 = vadd.f32 %v2679, %v2967
  %v2969 = vpop.f32.mrb[0].mxu0
  %2970 = vdwg.mxu0
  %2971 = vmatprep.subr.bf16.mxu0 0
  %2972 = vmatpush1.bf16.msra.mxu0 %v2281
  %2973 = vmatprep.subr.bf16.mxu0 0
  %2974 = vmatpush1.bf16.msra.mxu0 %v2282
  %2975 = vmatprep.subr.bf16.mxu0 0
  %2976 = vmatpush1.bf16.msra.mxu0 %v2283
  %2977 = vmatprep.subr.bf16.mxu0 0
  %2978 = vmatpush1.bf16.msra.mxu0 %v2284
  %2979 = vmatprep.subr.bf16.mxu0 0
  %2980 = vmatpush1.bf16.msra.mxu0 %v2285
  %2981 = vmatprep.subr.bf16.mxu0 0
  %2982 = vmatpush1.bf16.msra.mxu0 %v2286
  %2983 = vmatprep.subr.bf16.mxu0 0
  %2984 = vmatpush1.bf16.msra.mxu0 %v2287
  %2985 = vmatprep.subr.bf16.mxu0 0
  %2986 = vmatpush1.bf16.msra.mxu0 %v2288
  %2987 = vmatprep.subr.bf16.mxu0 0
  %2988 = vmatpush1.bf16.msra.mxu0 %v2289
  %2989 = vmatprep.subr.bf16.mxu0 0
  %2990 = vmatpush1.bf16.msra.mxu0 %v2290
  %2991 = vmatprep.subr.bf16.mxu0 0
  %2992 = vmatpush1.bf16.msra.mxu0 %v2291
  %2993 = vmatprep.subr.bf16.mxu0 0
  %2994 = vmatpush1.bf16.msra.mxu0 %v2292
  %2995 = vmatprep.subr.bf16.mxu0 0
  %2996 = vmatpush1.bf16.msra.mxu0 %v2293
  %2997 = vmatprep.subr.bf16.mxu0 0
  %2998 = vmatpush1.bf16.msra.mxu0 %v2294
  %2999 = vmatprep.subr.bf16.mxu0 0
  %3000 = vmatpush1.bf16.msra.mxu0 %v2295
  %3001 = vmatprep.subr.bf16.mxu0 0
  %3002 = vmatpush1.bf16.msra.mxu0 %v2296
  %3003 = vmatprep.mubr.bf16.mxu0 %v1390
  %3004 = vmatmul.mubr.bf16.gmra.mrb[0].mxu0 %v1389
  %v3005 = vpop.f32.mrb[0].mxu0
  %v3006 = vadd.f32 %v2717, %v3005
  %v3007 = vpop.f32.mrb[0].mxu0
  %v3008 = vpop.f32.mrb[0].mxu0
  %v3009 = vadd.f32 %v2720, %v3008
  %v3010 = vpop.f32.mrb[0].mxu0
  %3011 = vmatprep.mubr.bf16.mxu0 %v1399
  %3012 = vmatmul.mubr.bf16.gmra.mrb[0].mxu0 %v1398
  %v3013 = vpop.f32.mrb[0].mxu0
  %v3014 = vadd.f32 %v2725, %v3013
  %v3015 = vpop.f32.mrb[0].mxu0
  %v3016 = vpop.f32.mrb[0].mxu0
  %v3017 = vadd.f32 %v2728, %v3016
  %v3018 = vpop.f32.mrb[0].mxu0
  %3019 = vmatprep.mubr.bf16.mxu0 %v1408
  %3020 = vmatmul.mubr.bf16.gmra.mrb[0].mxu0 %v1407
  %v3021 = vpop.f32.mrb[0].mxu0
  %v3022 = vadd.f32 %v2733, %v3021
  %v3023 = vpop.f32.mrb[0].mxu0
  %v3024 = vpop.f32.mrb[0].mxu0
  %v3025 = vadd.f32 %v2736, %v3024
  %v3026 = vpop.f32.mrb[0].mxu0
  %3027 = vmatprep.mubr.bf16.mxu0 %v1417
  %3028 = vmatmul.mubr.bf16.gmra.mrb[0].mxu0 %v1416
  %v3029 = vpop.f32.mrb[0].mxu0
  %v3030 = vadd.f32 %v2741, %v3029
  %v3031 = vpop.f32.mrb[0].mxu0
  %v3032 = vpop.f32.mrb[0].mxu0
  %v3033 = vadd.f32 %v2744, %v3032
  %v3034 = vpop.f32.mrb[0].mxu0
  %3035 = vmatprep.mubr.bf16.mxu0 %v1426
  %3036 = vmatmul.mubr.bf16.gmra.mrb[0].mxu0 %v1425
  %v3037 = vpop.f32.mrb[0].mxu0
  %v3038 = vadd.f32 %v2749, %v3037
  %v3039 = vpop.f32.mrb[0].mxu0
  %v3040 = vpop.f32.mrb[0].mxu0
  %v3041 = vadd.f32 %v2752, %v3040
  %v3042 = vpop.f32.mrb[0].mxu0
  %3043 = vmatprep.mubr.bf16.mxu0 %v1435
  %3044 = vmatmul.mubr.bf16.gmra.mrb[0].mxu0 %v1434
  %v3045 = vpop.f32.mrb[0].mxu0
  %v3046 = vadd.f32 %v2757, %v3045
  %v3047 = vpop.f32.mrb[0].mxu0
  %v3048 = vpop.f32.mrb[0].mxu0
  %v3049 = vadd.f32 %v2760, %v3048
  %v3050 = vpop.f32.mrb[0].mxu0
  %3051 = vmatprep.mubr.bf16.mxu0 %v1444
  %3052 = vmatmul.mubr.bf16.gmra.mrb[0].mxu0 %v1443
  %v3053 = vpop.f32.mrb[0].mxu0
  %v3054 = vadd.f32 %v2765, %v3053
  %v3055 = vpop.f32.mrb[0].mxu0
  %v3056 = vpop.f32.mrb[0].mxu0
  %v3057 = vadd.f32 %v2768, %v3056
  %v3058 = vpop.f32.mrb[0].mxu0
  %3059 = vmatprep.mubr.bf16.mxu0 %v1453
  %3060 = vmatmul.mubr.bf16.gmra.mrb[0].mxu0 %v1452
  %v3061 = vpop.f32.mrb[0].mxu0
  %v3062 = vadd.f32 %v2773, %v3061
  %v3063 = vpop.f32.mrb[0].mxu0
  %v3064 = vpop.f32.mrb[0].mxu0
  %v3065 = vadd.f32 %v2776, %v3064
  %v3066 = vpop.f32.mrb[0].mxu0
  %3067 = vmatprep.mubr.bf16.mxu0 %v1462
  %3068 = vmatmul.mubr.bf16.gmra.mrb[0].mxu0 %v1461
  %v3069 = vpop.f32.mrb[0].mxu0
  %v3070 = vadd.f32 %v2781, %v3069
  %v3071 = vpop.f32.mrb[0].mxu0
  %v3072 = vpop.f32.mrb[0].mxu0
  %v3073 = vadd.f32 %v2784, %v3072
  %v3074 = vpop.f32.mrb[0].mxu0
  %3075 = vmatprep.mubr.bf16.mxu0 %v1471
  %3076 = vmatmul.mubr.bf16.gmra.mrb[0].mxu0 %v1470
  %v3077 = vpop.f32.mrb[0].mxu0
  %v3078 = vadd.f32 %v2789, %v3077
  %v3079 = vpop.f32.mrb[0].mxu0
  %v3080 = vpop.f32.mrb[0].mxu0
  %v3081 = vadd.f32 %v2792, %v3080
  %v3082 = vpop.f32.mrb[0].mxu0
  %3083 = vmatprep.mubr.bf16.mxu0 %v1480
  %3084 = vmatmul.mubr.bf16.gmra.mrb[0].mxu0 %v1479
  %v3085 = vpop.f32.mrb[0].mxu0
  %v3086 = vadd.f32 %v2797, %v3085
  %v3087 = vpop.f32.mrb[0].mxu0
  %v3088 = vpop.f32.mrb[0].mxu0
  %v3089 = vadd.f32 %v2800, %v3088
  %v3090 = vpop.f32.mrb[0].mxu0
  %3091 = vmatprep.mubr.bf16.mxu0 %v1489
  %3092 = vmatmul.mubr.bf16.gmra.mrb[0].mxu0 %v1488
  %v3093 = vpop.f32.mrb[0].mxu0
  %v3094 = vadd.f32 %v2805, %v3093
  %v3095 = vpop.f32.mrb[0].mxu0
  %v3096 = vpop.f32.mrb[0].mxu0
  %v3097 = vadd.f32 %v2808, %v3096
  %v3098 = vpop.f32.mrb[0].mxu0
  %3099 = vmatprep.mubr.bf16.mxu0 %v1498
  %3100 = vmatmul.mubr.bf16.gmra.mrb[0].mxu0 %v1497
  %v3101 = vpop.f32.mrb[0].mxu0
  %v3102 = vadd.f32 %v2813, %v3101
  %v3103 = vpop.f32.mrb[0].mxu0
  %v3104 = vpop.f32.mrb[0].mxu0
  %v3105 = vadd.f32 %v2816, %v3104
  %v3106 = vpop.f32.mrb[0].mxu0
  %3107 = vmatprep.mubr.bf16.mxu0 %v1507
  %3108 = vmatmul.mubr.bf16.gmra.mrb[0].mxu0 %v1506
  %v3109 = vpop.f32.mrb[0].mxu0
  %v3110 = vadd.f32 %v2821, %v3109
  %v3111 = vpop.f32.mrb[0].mxu0
  %v3112 = vpop.f32.mrb[0].mxu0
  %v3113 = vadd.f32 %v2824, %v3112
  %v3114 = vpop.f32.mrb[0].mxu0
  %3115 = vmatprep.mubr.bf16.mxu0 %v1516
  %3116 = vmatmul.mubr.bf16.gmra.mrb[0].mxu0 %v1515
  %v3117 = vpop.f32.mrb[0].mxu0
  %v3118 = vadd.f32 %v2829, %v3117
  %v3119 = vpop.f32.mrb[0].mxu0
  %v3120 = vpop.f32.mrb[0].mxu0
  %v3121 = vadd.f32 %v2832, %v3120
  %v3122 = vpop.f32.mrb[0].mxu0
  %3123 = vmatprep.mubr.bf16.mxu0 %v1525
  %3124 = vmatmul.mubr.bf16.gmra.mrb[0].mxu0 %v1524
  %v3125 = vpop.f32.mrb[0].mxu0
  %v3126 = vadd.f32 %v2837, %v3125
  %v3127 = vpop.f32.mrb[0].mxu0
  %v3128 = vpop.f32.mrb[0].mxu0
  %v3129 = vadd.f32 %v2840, %v3128
  %v3130 = vpop.f32.mrb[0].mxu0
  %3131 = vmatprep.mubr.bf16.mxu0 %v1534
  %3132 = vmatmul.mubr.bf16.gmra.mrb[0].mxu0 %v1533
  %v3133 = vpop.f32.mrb[0].mxu0
  %v3134 = vadd.f32 %v2845, %v3133
  %v3135 = vpop.f32.mrb[0].mxu0
  %v3136 = vpop.f32.mrb[0].mxu0
  %v3137 = vadd.f32 %v2848, %v3136
  %v3138 = vpop.f32.mrb[0].mxu0
  %3139 = vmatprep.mubr.bf16.mxu0 %v1543
  %3140 = vmatmul.mubr.bf16.gmra.mrb[0].mxu0 %v1542
  %v3141 = vpop.f32.mrb[0].mxu0
  %v3142 = vadd.f32 %v2853, %v3141
  %v3143 = vpop.f32.mrb[0].mxu0
  %v3144 = vpop.f32.mrb[0].mxu0
  %v3145 = vadd.f32 %v2856, %v3144
  %v3146 = vpop.f32.mrb[0].mxu0
  %3147 = vmatprep.mubr.bf16.mxu0 %v1552
  %3148 = vmatmul.mubr.bf16.gmra.mrb[0].mxu0 %v1551
  %v3149 = vpop.f32.mrb[0].mxu0
  %v3150 = vadd.f32 %v2861, %v3149
  %v3151 = vpop.f32.mrb[0].mxu0
  %v3152 = vpop.f32.mrb[0].mxu0
  %v3153 = vadd.f32 %v2864, %v3152
  %v3154 = vpop.f32.mrb[0].mxu0
  %3155 = vmatprep.mubr.bf16.mxu0 %v1561
  %3156 = vmatmul.mubr.bf16.gmra.mrb[0].mxu0 %v1560
  %v3157 = vpop.f32.mrb[0].mxu0
  %v3158 = vadd.f32 %v2869, %v3157
  %v3159 = vpop.f32.mrb[0].mxu0
  %v3160 = vpop.f32.mrb[0].mxu0
  %v3161 = vadd.f32 %v2872, %v3160
  %v3162 = vpop.f32.mrb[0].mxu0
  %3163 = vmatprep.mubr.bf16.mxu0 %v1570
  %3164 = vmatmul.mubr.bf16.gmra.mrb[0].mxu0 %v1569
  %v3165 = vpop.f32.mrb[0].mxu0
  %v3166 = vadd.f32 %v2877, %v3165
  %v3167 = vpop.f32.mrb[0].mxu0
  %v3168 = vpop.f32.mrb[0].mxu0
  %v3169 = vadd.f32 %v2880, %v3168
  %v3170 = vpop.f32.mrb[0].mxu0
  %3171 = vmatprep.mubr.bf16.mxu0 %v1579
  %3172 = vmatmul.mubr.bf16.gmra.mrb[0].mxu0 %v1578
  %v3173 = vpop.f32.mrb[0].mxu0
  %v3174 = vadd.f32 %v2885, %v3173
  %v3175 = vpop.f32.mrb[0].mxu0
  %v3176 = vpop.f32.mrb[0].mxu0
  %v3177 = vadd.f32 %v2888, %v3176
  %v3178 = vpop.f32.mrb[0].mxu0
  %3179 = vmatprep.mubr.bf16.mxu0 %v1588
  %3180 = vmatmul.mubr.bf16.gmra.mrb[0].mxu0 %v1587
  %v3181 = vpop.f32.mrb[0].mxu0
  %v3182 = vadd.f32 %v2893, %v3181
  %v3183 = vpop.f32.mrb[0].mxu0
  %v3184 = vpop.f32.mrb[0].mxu0
  %v3185 = vadd.f32 %v2896, %v3184
  %v3186 = vpop.f32.mrb[0].mxu0
  %3187 = vmatprep.mubr.bf16.mxu0 %v1597
  %3188 = vmatmul.mubr.bf16.gmra.mrb[0].mxu0 %v1596
  %v3189 = vpop.f32.mrb[0].mxu0
  %v3190 = vadd.f32 %v2901, %v3189
  %v3191 = vpop.f32.mrb[0].mxu0
  %v3192 = vpop.f32.mrb[0].mxu0
  %v3193 = vadd.f32 %v2904, %v3192
  %v3194 = vpop.f32.mrb[0].mxu0
  %3195 = vmatprep.mubr.bf16.mxu0 %v1606
  %3196 = vmatmul.mubr.bf16.gmra.mrb[0].mxu0 %v1605
  %v3197 = vpop.f32.mrb[0].mxu0
  %v3198 = vadd.f32 %v2909, %v3197
  %v3199 = vpop.f32.mrb[0].mxu0
  %v3200 = vpop.f32.mrb[0].mxu0
  %v3201 = vadd.f32 %v2912, %v3200
  %v3202 = vpop.f32.mrb[0].mxu0
  %3203 = vmatprep.mubr.bf16.mxu0 %v1615
  %3204 = vmatmul.mubr.bf16.gmra.mrb[0].mxu0 %v1614
  %v3205 = vpop.f32.mrb[0].mxu0
  %v3206 = vadd.f32 %v2917, %v3205
  %v3207 = vpop.f32.mrb[0].mxu0
  %v3208 = vpop.f32.mrb[0].mxu0
  %v3209 = vadd.f32 %v2920, %v3208
  %v3210 = vpop.f32.mrb[0].mxu0
  %3211 = vmatprep.mubr.bf16.mxu0 %v1624
  %3212 = vmatmul.mubr.bf16.gmra.mrb[0].mxu0 %v1623
  %v3213 = vpop.f32.mrb[0].mxu0
  %v3214 = vadd.f32 %v2925, %v3213
  %v3215 = vpop.f32.mrb[0].mxu0
  %v3216 = vpop.f32.mrb[0].mxu0
  %v3217 = vadd.f32 %v2928, %v3216
  %v3218 = vpop.f32.mrb[0].mxu0
  %3219 = vmatprep.mubr.bf16.mxu0 %v1633
  %3220 = vmatmul.mubr.bf16.gmra.mrb[0].mxu0 %v1632
  %v3221 = vpop.f32.mrb[0].mxu0
  %v3222 = vadd.f32 %v2933, %v3221
  %v3223 = vpop.f32.mrb[0].mxu0
  %v3224 = vpop.f32.mrb[0].mxu0
  %v3225 = vadd.f32 %v2936, %v3224
  %v3226 = vpop.f32.mrb[0].mxu0
  %3227 = vmatprep.mubr.bf16.mxu0 %v1642
  %3228 = vmatmul.mubr.bf16.gmra.mrb[0].mxu0 %v1641
  %v3229 = vpop.f32.mrb[0].mxu0
  %v3230 = vadd.f32 %v2941, %v3229
  %v3231 = vpop.f32.mrb[0].mxu0
  %v3232 = vpop.f32.mrb[0].mxu0
  %v3233 = vadd.f32 %v2944, %v3232
  %v3234 = vpop.f32.mrb[0].mxu0
  %3235 = vmatprep.mubr.bf16.mxu0 %v1651
  %3236 = vmatmul.mubr.bf16.gmra.mrb[0].mxu0 %v1650
  %v3237 = vpop.f32.mrb[0].mxu0
  %v3238 = vadd.f32 %v2949, %v3237
  %v3239 = vpop.f32.mrb[0].mxu0
  %v3240 = vpop.f32.mrb[0].mxu0
  %v3241 = vadd.f32 %v2952, %v3240
  %v3242 = vpop.f32.mrb[0].mxu0
  %3243 = vmatprep.mubr.bf16.mxu0 %v1660
  %3244 = vmatmul.mubr.bf16.gmra.mrb[0].mxu0 %v1659
  %v3245 = vpop.f32.mrb[0].mxu0
  %v3246 = vadd.f32 %v2957, %v3245
  %v3247 = vpop.f32.mrb[0].mxu0
  %v3248 = vpop.f32.mrb[0].mxu0
  %v3249 = vadd.f32 %v2960, %v3248
  %v3250 = vpop.f32.mrb[0].mxu0
  %3251 = vmatprep.mubr.bf16.mxu0 %v1669
  %3252 = vmatmul.mubr.bf16.gmra.mrb[0].mxu0 %v1668
  %v3253 = vpop.f32.mrb[0].mxu0
  %v3254 = vadd.f32 %v2965, %v3253
  %v3255 = vpop.f32.mrb[0].mxu0
  %v3256 = vpop.f32.mrb[0].mxu0
  %v3257 = vadd.f32 %v2968, %v3256
  %v3258 = vpop.f32.mrb[0].mxu0
  %3259 = vdwg.mxu0
  %3260 = vmatprep.subr.bf16.mxu0 0
  %3261 = vmatpush1.bf16.msra.mxu0 %v2297
  %3262 = vmatprep.subr.bf16.mxu0 0
  %3263 = vmatpush1.bf16.msra.mxu0 %v2298
  %3264 = vmatprep.subr.bf16.mxu0 0
  %3265 = vmatpush1.bf16.msra.mxu0 %v2299
  %3266 = vmatprep.subr.bf16.mxu0 0
  %3267 = vmatpush1.bf16.msra.mxu0 %v2300
  %3268 = vmatprep.subr.bf16.mxu0 0
  %3269 = vmatpush1.bf16.msra.mxu0 %v2301
  %3270 = vmatprep.subr.bf16.mxu0 0
  %3271 = vmatpush1.bf16.msra.mxu0 %v2302
  %3272 = vmatprep.subr.bf16.mxu0 0
  %3273 = vmatpush1.bf16.msra.mxu0 %v2303
  %3274 = vmatprep.subr.bf16.mxu0 0
  %3275 = vmatpush1.bf16.msra.mxu0 %v2304
  %3276 = vmatprep.subr.bf16.mxu0 0
  %3277 = vmatpush1.bf16.msra.mxu0 %v2305
  %3278 = vmatprep.subr.bf16.mxu0 0
  %3279 = vmatpush1.bf16.msra.mxu0 %v2306
  %3280 = vmatprep.subr.bf16.mxu0 0
  %3281 = vmatpush1.bf16.msra.mxu0 %v2307
  %3282 = vmatprep.subr.bf16.mxu0 0
  %3283 = vmatpush1.bf16.msra.mxu0 %v2308
  %3284 = vmatprep.subr.bf16.mxu0 0
  %3285 = vmatpush1.bf16.msra.mxu0 %v2309
  %3286 = vmatprep.subr.bf16.mxu0 0
  %3287 = vmatpush1.bf16.msra.mxu0 %v2310
  %3288 = vmatprep.subr.bf16.mxu0 0
  %3289 = vmatpush1.bf16.msra.mxu0 %v2311
  %3290 = vmatprep.subr.bf16.mxu0 0
  %3291 = vmatpush1.bf16.msra.mxu0 %v2312
  %3292 = vmatprep.mubr.bf16.mxu0 %v1392
  %3293 = vmatmul.mubr.bf16.gmra.mrb[0].mxu0 %v1391
  %v3294 = vpop.f32.mrb[0].mxu0
  %v3295 = vadd.f32 %v3006, %v3294
  %v3296 = vpop.f32.mrb[0].mxu0
  %v3297 = vpop.f32.mrb[0].mxu0
  %v3298 = vadd.f32 %v3009, %v3297
  %v3299 = vpop.f32.mrb[0].mxu0
  %3300 = vmatprep.mubr.bf16.mxu0 %v1401
  %3301 = vmatmul.mubr.bf16.gmra.mrb[0].mxu0 %v1400
  %v3302 = vpop.f32.mrb[0].mxu0
  %v3303 = vadd.f32 %v3014, %v3302
  %v3304 = vpop.f32.mrb[0].mxu0
  %v3305 = vpop.f32.mrb[0].mxu0
  %v3306 = vadd.f32 %v3017, %v3305
  %v3307 = vpop.f32.mrb[0].mxu0
  %3308 = vmatprep.mubr.bf16.mxu0 %v1410
  %3309 = vmatmul.mubr.bf16.gmra.mrb[0].mxu0 %v1409
  %v3310 = vpop.f32.mrb[0].mxu0
  %v3311 = vadd.f32 %v3022, %v3310
  %v3312 = vpop.f32.mrb[0].mxu0
  %v3313 = vpop.f32.mrb[0].mxu0
  %v3314 = vadd.f32 %v3025, %v3313
  %v3315 = vpop.f32.mrb[0].mxu0
  %3316 = vmatprep.mubr.bf16.mxu0 %v1419
  %3317 = vmatmul.mubr.bf16.gmra.mrb[0].mxu0 %v1418
  %v3318 = vpop.f32.mrb[0].mxu0
  %v3319 = vadd.f32 %v3030, %v3318
  %v3320 = vpop.f32.mrb[0].mxu0
  %v3321 = vpop.f32.mrb[0].mxu0
  %v3322 = vadd.f32 %v3033, %v3321
  %v3323 = vpop.f32.mrb[0].mxu0
  %3324 = vmatprep.mubr.bf16.mxu0 %v1428
  %3325 = vmatmul.mubr.bf16.gmra.mrb[0].mxu0 %v1427
  %v3326 = vpop.f32.mrb[0].mxu0
  %v3327 = vadd.f32 %v3038, %v3326
  %v3328 = vpop.f32.mrb[0].mxu0
  %v3329 = vpop.f32.mrb[0].mxu0
  %v3330 = vadd.f32 %v3041, %v3329
  %v3331 = vpop.f32.mrb[0].mxu0
  %3332 = vmatprep.mubr.bf16.mxu0 %v1437
  %3333 = vmatmul.mubr.bf16.gmra.mrb[0].mxu0 %v1436
  %v3334 = vpop.f32.mrb[0].mxu0
  %v3335 = vadd.f32 %v3046, %v3334
  %v3336 = vpop.f32.mrb[0].mxu0
  %v3337 = vpop.f32.mrb[0].mxu0
  %v3338 = vadd.f32 %v3049, %v3337
  %v3339 = vpop.f32.mrb[0].mxu0
  %3340 = vmatprep.mubr.bf16.mxu0 %v1446
  %3341 = vmatmul.mubr.bf16.gmra.mrb[0].mxu0 %v1445
  %v3342 = vpop.f32.mrb[0].mxu0
  %v3343 = vadd.f32 %v3054, %v3342
  %v3344 = vpop.f32.mrb[0].mxu0
  %v3345 = vpop.f32.mrb[0].mxu0
  %v3346 = vadd.f32 %v3057, %v3345
  %v3347 = vpop.f32.mrb[0].mxu0
  %3348 = vmatprep.mubr.bf16.mxu0 %v1455
  %3349 = vmatmul.mubr.bf16.gmra.mrb[0].mxu0 %v1454
  %v3350 = vpop.f32.mrb[0].mxu0
  %v3351 = vadd.f32 %v3062, %v3350
  %v3352 = vpop.f32.mrb[0].mxu0
  %v3353 = vpop.f32.mrb[0].mxu0
  %v3354 = vadd.f32 %v3065, %v3353
  %v3355 = vpop.f32.mrb[0].mxu0
  %3356 = vmatprep.mubr.bf16.mxu0 %v1464
  %3357 = vmatmul.mubr.bf16.gmra.mrb[0].mxu0 %v1463
  %v3358 = vpop.f32.mrb[0].mxu0
  %v3359 = vadd.f32 %v3070, %v3358
  %v3360 = vpop.f32.mrb[0].mxu0
  %v3361 = vpop.f32.mrb[0].mxu0
  %v3362 = vadd.f32 %v3073, %v3361
  %v3363 = vpop.f32.mrb[0].mxu0
  %3364 = vmatprep.mubr.bf16.mxu0 %v1473
  %3365 = vmatmul.mubr.bf16.gmra.mrb[0].mxu0 %v1472
  %v3366 = vpop.f32.mrb[0].mxu0
  %v3367 = vadd.f32 %v3078, %v3366
  %v3368 = vpop.f32.mrb[0].mxu0
  %v3369 = vpop.f32.mrb[0].mxu0
  %v3370 = vadd.f32 %v3081, %v3369
  %v3371 = vpop.f32.mrb[0].mxu0
  %3372 = vmatprep.mubr.bf16.mxu0 %v1482
  %3373 = vmatmul.mubr.bf16.gmra.mrb[0].mxu0 %v1481
  %v3374 = vpop.f32.mrb[0].mxu0
  %v3375 = vadd.f32 %v3086, %v3374
  %v3376 = vpop.f32.mrb[0].mxu0
  %v3377 = vpop.f32.mrb[0].mxu0
  %v3378 = vadd.f32 %v3089, %v3377
  %v3379 = vpop.f32.mrb[0].mxu0
  %3380 = vmatprep.mubr.bf16.mxu0 %v1491
  %3381 = vmatmul.mubr.bf16.gmra.mrb[0].mxu0 %v1490
  %v3382 = vpop.f32.mrb[0].mxu0
  %v3383 = vadd.f32 %v3094, %v3382
  %v3384 = vpop.f32.mrb[0].mxu0
  %v3385 = vpop.f32.mrb[0].mxu0
  %v3386 = vadd.f32 %v3097, %v3385
  %v3387 = vpop.f32.mrb[0].mxu0
  %3388 = vmatprep.mubr.bf16.mxu0 %v1500
  %3389 = vmatmul.mubr.bf16.gmra.mrb[0].mxu0 %v1499
  %v3390 = vpop.f32.mrb[0].mxu0
  %v3391 = vadd.f32 %v3102, %v3390
  %v3392 = vpop.f32.mrb[0].mxu0
  %v3393 = vpop.f32.mrb[0].mxu0
  %v3394 = vadd.f32 %v3105, %v3393
  %v3395 = vpop.f32.mrb[0].mxu0
  %3396 = vmatprep.mubr.bf16.mxu0 %v1509
  %3397 = vmatmul.mubr.bf16.gmra.mrb[0].mxu0 %v1508
  %v3398 = vpop.f32.mrb[0].mxu0
  %v3399 = vadd.f32 %v3110, %v3398
  %v3400 = vpop.f32.mrb[0].mxu0
  %v3401 = vpop.f32.mrb[0].mxu0
  %v3402 = vadd.f32 %v3113, %v3401
  %v3403 = vpop.f32.mrb[0].mxu0
  %3404 = vmatprep.mubr.bf16.mxu0 %v1518
  %3405 = vmatmul.mubr.bf16.gmra.mrb[0].mxu0 %v1517
  %v3406 = vpop.f32.mrb[0].mxu0
  %v3407 = vadd.f32 %v3118, %v3406
  %v3408 = vpop.f32.mrb[0].mxu0
  %v3409 = vpop.f32.mrb[0].mxu0
  %v3410 = vadd.f32 %v3121, %v3409
  %v3411 = vpop.f32.mrb[0].mxu0
  %3412 = vmatprep.mubr.bf16.mxu0 %v1527
  %3413 = vmatmul.mubr.bf16.gmra.mrb[0].mxu0 %v1526
  %v3414 = vpop.f32.mrb[0].mxu0
  %v3415 = vadd.f32 %v3126, %v3414
  %v3416 = vpop.f32.mrb[0].mxu0
  %v3417 = vpop.f32.mrb[0].mxu0
  %v3418 = vadd.f32 %v3129, %v3417
  %v3419 = vpop.f32.mrb[0].mxu0
  %3420 = vmatprep.mubr.bf16.mxu0 %v1536
  %3421 = vmatmul.mubr.bf16.gmra.mrb[0].mxu0 %v1535
  %v3422 = vpop.f32.mrb[0].mxu0
  %v3423 = vadd.f32 %v3134, %v3422
  %v3424 = vpop.f32.mrb[0].mxu0
  %v3425 = vpop.f32.mrb[0].mxu0
  %v3426 = vadd.f32 %v3137, %v3425
  %v3427 = vpop.f32.mrb[0].mxu0
  %3428 = vmatprep.mubr.bf16.mxu0 %v1545
  %3429 = vmatmul.mubr.bf16.gmra.mrb[0].mxu0 %v1544
  %v3430 = vpop.f32.mrb[0].mxu0
  %v3431 = vadd.f32 %v3142, %v3430
  %v3432 = vpop.f32.mrb[0].mxu0
  %v3433 = vpop.f32.mrb[0].mxu0
  %v3434 = vadd.f32 %v3145, %v3433
  %v3435 = vpop.f32.mrb[0].mxu0
  %3436 = vmatprep.mubr.bf16.mxu0 %v1554
  %3437 = vmatmul.mubr.bf16.gmra.mrb[0].mxu0 %v1553
  %v3438 = vpop.f32.mrb[0].mxu0
  %v3439 = vadd.f32 %v3150, %v3438
  %v3440 = vpop.f32.mrb[0].mxu0
  %v3441 = vpop.f32.mrb[0].mxu0
  %v3442 = vadd.f32 %v3153, %v3441
  %v3443 = vpop.f32.mrb[0].mxu0
  %3444 = vmatprep.mubr.bf16.mxu0 %v1563
  %3445 = vmatmul.mubr.bf16.gmra.mrb[0].mxu0 %v1562
  %v3446 = vpop.f32.mrb[0].mxu0
  %v3447 = vadd.f32 %v3158, %v3446
  %v3448 = vpop.f32.mrb[0].mxu0
  %v3449 = vpop.f32.mrb[0].mxu0
  %v3450 = vadd.f32 %v3161, %v3449
  %v3451 = vpop.f32.mrb[0].mxu0
  %3452 = vmatprep.mubr.bf16.mxu0 %v1572
  %3453 = vmatmul.mubr.bf16.gmra.mrb[0].mxu0 %v1571
  %v3454 = vpop.f32.mrb[0].mxu0
  %v3455 = vadd.f32 %v3166, %v3454
  %v3456 = vpop.f32.mrb[0].mxu0
  %v3457 = vpop.f32.mrb[0].mxu0
  %v3458 = vadd.f32 %v3169, %v3457
  %v3459 = vpop.f32.mrb[0].mxu0
  %3460 = vmatprep.mubr.bf16.mxu0 %v1581
  %3461 = vmatmul.mubr.bf16.gmra.mrb[0].mxu0 %v1580
  %v3462 = vpop.f32.mrb[0].mxu0
  %v3463 = vadd.f32 %v3174, %v3462
  %v3464 = vpop.f32.mrb[0].mxu0
  %v3465 = vpop.f32.mrb[0].mxu0
  %v3466 = vadd.f32 %v3177, %v3465
  %v3467 = vpop.f32.mrb[0].mxu0
  %3468 = vmatprep.mubr.bf16.mxu0 %v1590
  %3469 = vmatmul.mubr.bf16.gmra.mrb[0].mxu0 %v1589
  %v3470 = vpop.f32.mrb[0].mxu0
  %v3471 = vadd.f32 %v3182, %v3470
  %v3472 = vpop.f32.mrb[0].mxu0
  %v3473 = vpop.f32.mrb[0].mxu0
  %v3474 = vadd.f32 %v3185, %v3473
  %v3475 = vpop.f32.mrb[0].mxu0
  %3476 = vmatprep.mubr.bf16.mxu0 %v1599
  %3477 = vmatmul.mubr.bf16.gmra.mrb[0].mxu0 %v1598
  %v3478 = vpop.f32.mrb[0].mxu0
  %v3479 = vadd.f32 %v3190, %v3478
  %v3480 = vpop.f32.mrb[0].mxu0
  %v3481 = vpop.f32.mrb[0].mxu0
  %v3482 = vadd.f32 %v3193, %v3481
  %v3483 = vpop.f32.mrb[0].mxu0
  %3484 = vmatprep.mubr.bf16.mxu0 %v1608
  %3485 = vmatmul.mubr.bf16.gmra.mrb[0].mxu0 %v1607
  %v3486 = vpop.f32.mrb[0].mxu0
  %v3487 = vadd.f32 %v3198, %v3486
  %v3488 = vpop.f32.mrb[0].mxu0
  %v3489 = vpop.f32.mrb[0].mxu0
  %v3490 = vadd.f32 %v3201, %v3489
  %v3491 = vpop.f32.mrb[0].mxu0
  %3492 = vmatprep.mubr.bf16.mxu0 %v1617
  %3493 = vmatmul.mubr.bf16.gmra.mrb[0].mxu0 %v1616
  %v3494 = vpop.f32.mrb[0].mxu0
  %v3495 = vadd.f32 %v3206, %v3494
  %v3496 = vpop.f32.mrb[0].mxu0
  %v3497 = vpop.f32.mrb[0].mxu0
  %v3498 = vadd.f32 %v3209, %v3497
  %v3499 = vpop.f32.mrb[0].mxu0
  %3500 = vmatprep.mubr.bf16.mxu0 %v1626
  %3501 = vmatmul.mubr.bf16.gmra.mrb[0].mxu0 %v1625
  %v3502 = vpop.f32.mrb[0].mxu0
  %v3503 = vadd.f32 %v3214, %v3502
  %v3504 = vpop.f32.mrb[0].mxu0
  %v3505 = vpop.f32.mrb[0].mxu0
  %v3506 = vadd.f32 %v3217, %v3505
  %v3507 = vpop.f32.mrb[0].mxu0
  %3508 = vmatprep.mubr.bf16.mxu0 %v1635
  %3509 = vmatmul.mubr.bf16.gmra.mrb[0].mxu0 %v1634
  %v3510 = vpop.f32.mrb[0].mxu0
  %v3511 = vadd.f32 %v3222, %v3510
  %v3512 = vpop.f32.mrb[0].mxu0
  %v3513 = vpop.f32.mrb[0].mxu0
  %v3514 = vadd.f32 %v3225, %v3513
  %v3515 = vpop.f32.mrb[0].mxu0
  %3516 = vmatprep.mubr.bf16.mxu0 %v1644
  %3517 = vmatmul.mubr.bf16.gmra.mrb[0].mxu0 %v1643
  %v3518 = vpop.f32.mrb[0].mxu0
  %v3519 = vadd.f32 %v3230, %v3518
  %v3520 = vpop.f32.mrb[0].mxu0
  %v3521 = vpop.f32.mrb[0].mxu0
  %v3522 = vadd.f32 %v3233, %v3521
  %v3523 = vpop.f32.mrb[0].mxu0
  %3524 = vmatprep.mubr.bf16.mxu0 %v1653
  %3525 = vmatmul.mubr.bf16.gmra.mrb[0].mxu0 %v1652
  %v3526 = vpop.f32.mrb[0].mxu0
  %v3527 = vadd.f32 %v3238, %v3526
  %v3528 = vpop.f32.mrb[0].mxu0
  %v3529 = vpop.f32.mrb[0].mxu0
  %v3530 = vadd.f32 %v3241, %v3529
  %v3531 = vpop.f32.mrb[0].mxu0
  %3532 = vmatprep.mubr.bf16.mxu0 %v1662
  %3533 = vmatmul.mubr.bf16.gmra.mrb[0].mxu0 %v1661
  %v3534 = vpop.f32.mrb[0].mxu0
  %v3535 = vadd.f32 %v3246, %v3534
  %v3536 = vpop.f32.mrb[0].mxu0
  %v3537 = vpop.f32.mrb[0].mxu0
  %v3538 = vadd.f32 %v3249, %v3537
  %v3539 = vpop.f32.mrb[0].mxu0
  %3540 = vmatprep.mubr.bf16.mxu0 %v1671
  %3541 = vmatmul.mubr.bf16.gmra.mrb[0].mxu0 %v1670
  %v3542 = vpop.f32.mrb[0].mxu0
  %v3543 = vadd.f32 %v3254, %v3542
  %v3544 = vpop.f32.mrb[0].mxu0
  %v3545 = vpop.f32.mrb[0].mxu0
  %v3546 = vadd.f32 %v3257, %v3545
  %v3547 = vpop.f32.mrb[0].mxu0
  %3548 = vdwg.mxu0
  %3549 = vmatprep.subr.bf16.mxu0 0
  %3550 = vmatpush1.bf16.msra.mxu0 %v2313
  %3551 = vmatprep.subr.bf16.mxu0 0
  %3552 = vmatpush1.bf16.msra.mxu0 %v2314
  %3553 = vmatprep.subr.bf16.mxu0 0
  %3554 = vmatpush1.bf16.msra.mxu0 %v2315
  %3555 = vmatprep.subr.bf16.mxu0 0
  %3556 = vmatpush1.bf16.msra.mxu0 %v2316
  %3557 = vmatprep.subr.bf16.mxu0 0
  %3558 = vmatpush1.bf16.msra.mxu0 %v2317
  %3559 = vmatprep.subr.bf16.mxu0 0
  %3560 = vmatpush1.bf16.msra.mxu0 %v2318
  %3561 = vmatprep.subr.bf16.mxu0 0
  %3562 = vmatpush1.bf16.msra.mxu0 %v2319
  %3563 = vmatprep.subr.bf16.mxu0 0
  %3564 = vmatpush1.bf16.msra.mxu0 %v2320
  %3565 = vmatprep.subr.bf16.mxu0 0
  %3566 = vmatpush1.bf16.msra.mxu0 0
  %3567 = vmatprep.subr.bf16.mxu0 0
  %3568 = vmatpush1.bf16.msra.mxu0 0
  %3569 = vmatprep.subr.bf16.mxu0 0
  %3570 = vmatpush1.bf16.msra.mxu0 0
  %3571 = vmatprep.subr.bf16.mxu0 0
  %3572 = vmatpush1.bf16.msra.mxu0 0
  %3573 = vmatprep.subr.bf16.mxu0 0
  %3574 = vmatpush1.bf16.msra.mxu0 0
  %3575 = vmatprep.subr.bf16.mxu0 0
  %3576 = vmatpush1.bf16.msra.mxu0 0
  %3577 = vmatprep.subr.bf16.mxu0 0
  %3578 = vmatpush1.bf16.msra.mxu0 0
  %3579 = vmatprep.subr.bf16.mxu0 0
  %3580 = vmatpush1.bf16.msra.mxu0 0
  %3581 = vmatprep.mubr.bf16.mxu0 0
  %3582 = vmatmul.mubr.bf16.gmra.mrb[0].mxu0 %v1393
  %v3583 = vpop.f32.mrb[0].mxu0
  %v3584 = vadd.f32 %v3295, %v3583
  %v3585 = vpop.f32.mrb[0].mxu0
  %v3586 = vpop.f32.mrb[0].mxu0
  %v3587 = vadd.f32 %v3298, %v3586
  %v3588 = vpop.f32.mrb[0].mxu0
  %3589 = vmatprep.mubr.bf16.mxu0 0
  %3590 = vmatmul.mubr.bf16.gmra.mrb[0].mxu0 %v1402
  %v3591 = vpop.f32.mrb[0].mxu0
  %v3592 = vadd.f32 %v3303, %v3591
  %v3593 = vpop.f32.mrb[0].mxu0
  %v3594 = vpop.f32.mrb[0].mxu0
  %v3595 = vadd.f32 %v3306, %v3594
  %v3596 = vpop.f32.mrb[0].mxu0
  %3597 = vmatprep.mubr.bf16.mxu0 0
  %3598 = vmatmul.mubr.bf16.gmra.mrb[0].mxu0 %v1411
  %v3599 = vpop.f32.mrb[0].mxu0
  %v3600 = vadd.f32 %v3311, %v3599
  %v3601 = vpop.f32.mrb[0].mxu0
  %v3602 = vpop.f32.mrb[0].mxu0
  %v3603 = vadd.f32 %v3314, %v3602
  %v3604 = vpop.f32.mrb[0].mxu0
  %3605 = vmatprep.mubr.bf16.mxu0 0
  %3606 = vmatmul.mubr.bf16.gmra.mrb[0].mxu0 %v1420
  %v3607 = vpop.f32.mrb[0].mxu0
  %v3608 = vadd.f32 %v3319, %v3607
  %v3609 = vpop.f32.mrb[0].mxu0
  %v3610 = vpop.f32.mrb[0].mxu0
  %v3611 = vadd.f32 %v3322, %v3610
  %v3612 = vpop.f32.mrb[0].mxu0
  %3613 = vmatprep.mubr.bf16.mxu0 0
  %3614 = vmatmul.mubr.bf16.gmra.mrb[0].mxu0 %v1429
  %v3615 = vpop.f32.mrb[0].mxu0
  %v3616 = vadd.f32 %v3327, %v3615
  %v3617 = vpop.f32.mrb[0].mxu0
  %v3618 = vpop.f32.mrb[0].mxu0
  %v3619 = vadd.f32 %v3330, %v3618
  %v3620 = vpop.f32.mrb[0].mxu0
  %3621 = vmatprep.mubr.bf16.mxu0 0
  %3622 = vmatmul.mubr.bf16.gmra.mrb[0].mxu0 %v1438
  %v3623 = vpop.f32.mrb[0].mxu0
  %v3624 = vadd.f32 %v3335, %v3623
  %v3625 = vpop.f32.mrb[0].mxu0
  %v3626 = vpop.f32.mrb[0].mxu0
  %v3627 = vadd.f32 %v3338, %v3626
  %v3628 = vpop.f32.mrb[0].mxu0
  %3629 = vmatprep.mubr.bf16.mxu0 0
  %3630 = vmatmul.mubr.bf16.gmra.mrb[0].mxu0 %v1447
  %v3631 = vpop.f32.mrb[0].mxu0
  %v3632 = vadd.f32 %v3343, %v3631
  %v3633 = vpop.f32.mrb[0].mxu0
  %v3634 = vpop.f32.mrb[0].mxu0
  %v3635 = vadd.f32 %v3346, %v3634
  %v3636 = vpop.f32.mrb[0].mxu0
  %3637 = vmatprep.mubr.bf16.mxu0 0
  %3638 = vmatmul.mubr.bf16.gmra.mrb[0].mxu0 %v1456
  %v3639 = vpop.f32.mrb[0].mxu0
  %v3640 = vadd.f32 %v3351, %v3639
  %v3641 = vpop.f32.mrb[0].mxu0
  %v3642 = vpop.f32.mrb[0].mxu0
  %v3643 = vadd.f32 %v3354, %v3642
  %v3644 = vpop.f32.mrb[0].mxu0
  %3645 = vmatprep.mubr.bf16.mxu0 0
  %3646 = vmatmul.mubr.bf16.gmra.mrb[0].mxu0 %v1465
  %v3647 = vpop.f32.mrb[0].mxu0
  %v3648 = vadd.f32 %v3359, %v3647
  %v3649 = vpop.f32.mrb[0].mxu0
  %v3650 = vpop.f32.mrb[0].mxu0
  %v3651 = vadd.f32 %v3362, %v3650
  %v3652 = vpop.f32.mrb[0].mxu0
  %3653 = vmatprep.mubr.bf16.mxu0 0
  %3654 = vmatmul.mubr.bf16.gmra.mrb[0].mxu0 %v1474
  %v3655 = vpop.f32.mrb[0].mxu0
  %v3656 = vadd.f32 %v3367, %v3655
  %v3657 = vpop.f32.mrb[0].mxu0
  %v3658 = vpop.f32.mrb[0].mxu0
  %v3659 = vadd.f32 %v3370, %v3658
  %v3660 = vpop.f32.mrb[0].mxu0
  %3661 = vmatprep.mubr.bf16.mxu0 0
  %3662 = vmatmul.mubr.bf16.gmra.mrb[0].mxu0 %v1483
  %v3663 = vpop.f32.mrb[0].mxu0
  %v3664 = vadd.f32 %v3375, %v3663
  %v3665 = vpop.f32.mrb[0].mxu0
  %v3666 = vpop.f32.mrb[0].mxu0
  %v3667 = vadd.f32 %v3378, %v3666
  %v3668 = vpop.f32.mrb[0].mxu0
  %3669 = vmatprep.mubr.bf16.mxu0 0
  %3670 = vmatmul.mubr.bf16.gmra.mrb[0].mxu0 %v1492
  %v3671 = vpop.f32.mrb[0].mxu0
  %v3672 = vadd.f32 %v3383, %v3671
  %v3673 = vpop.f32.mrb[0].mxu0
  %v3674 = vpop.f32.mrb[0].mxu0
  %v3675 = vadd.f32 %v3386, %v3674
  %v3676 = vpop.f32.mrb[0].mxu0
  %3677 = vmatprep.mubr.bf16.mxu0 0
  %3678 = vmatmul.mubr.bf16.gmra.mrb[0].mxu0 %v1501
  %v3679 = vpop.f32.mrb[0].mxu0
  %v3680 = vadd.f32 %v3391, %v3679
  %v3681 = vpop.f32.mrb[0].mxu0
  %v3682 = vpop.f32.mrb[0].mxu0
  %v3683 = vadd.f32 %v3394, %v3682
  %v3684 = vpop.f32.mrb[0].mxu0
  %3685 = vmatprep.mubr.bf16.mxu0 0
  %3686 = vmatmul.mubr.bf16.gmra.mrb[0].mxu0 %v1510
  %v3687 = vpop.f32.mrb[0].mxu0
  %v3688 = vadd.f32 %v3399, %v3687
  %v3689 = vpop.f32.mrb[0].mxu0
  %v3690 = vpop.f32.mrb[0].mxu0
  %v3691 = vadd.f32 %v3402, %v3690
  %v3692 = vpop.f32.mrb[0].mxu0
  %3693 = vmatprep.mubr.bf16.mxu0 0
  %3694 = vmatmul.mubr.bf16.gmra.mrb[0].mxu0 %v1519
  %v3695 = vpop.f32.mrb[0].mxu0
  %v3696 = vadd.f32 %v3407, %v3695
  %v3697 = vpop.f32.mrb[0].mxu0
  %v3698 = vpop.f32.mrb[0].mxu0
  %v3699 = vadd.f32 %v3410, %v3698
  %v3700 = vpop.f32.mrb[0].mxu0
  %3701 = vmatprep.mubr.bf16.mxu0 0
  %3702 = vmatmul.mubr.bf16.gmra.mrb[0].mxu0 %v1528
  %v3703 = vpop.f32.mrb[0].mxu0
  %v3704 = vadd.f32 %v3415, %v3703
  %v3705 = vpop.f32.mrb[0].mxu0
  %v3706 = vpop.f32.mrb[0].mxu0
  %v3707 = vadd.f32 %v3418, %v3706
  %v3708 = vpop.f32.mrb[0].mxu0
  %3709 = vmatprep.mubr.bf16.mxu0 0
  %3710 = vmatmul.mubr.bf16.gmra.mrb[0].mxu0 %v1537
  %v3711 = vpop.f32.mrb[0].mxu0
  %v3712 = vadd.f32 %v3423, %v3711
  %v3713 = vpop.f32.mrb[0].mxu0
  %v3714 = vpop.f32.mrb[0].mxu0
  %v3715 = vadd.f32 %v3426, %v3714
  %v3716 = vpop.f32.mrb[0].mxu0
  %3717 = vmatprep.mubr.bf16.mxu0 0
  %3718 = vmatmul.mubr.bf16.gmra.mrb[0].mxu0 %v1546
  %v3719 = vpop.f32.mrb[0].mxu0
  %v3720 = vadd.f32 %v3431, %v3719
  %v3721 = vpop.f32.mrb[0].mxu0
  %v3722 = vpop.f32.mrb[0].mxu0
  %v3723 = vadd.f32 %v3434, %v3722
  %v3724 = vpop.f32.mrb[0].mxu0
  %3725 = vmatprep.mubr.bf16.mxu0 0
  %3726 = vmatmul.mubr.bf16.gmra.mrb[0].mxu0 %v1555
  %v3727 = vpop.f32.mrb[0].mxu0
  %v3728 = vadd.f32 %v3439, %v3727
  %v3729 = vpop.f32.mrb[0].mxu0
  %v3730 = vpop.f32.mrb[0].mxu0
  %v3731 = vadd.f32 %v3442, %v3730
  %v3732 = vpop.f32.mrb[0].mxu0
  %3733 = vmatprep.mubr.bf16.mxu0 0
  %3734 = vmatmul.mubr.bf16.gmra.mrb[0].mxu0 %v1564
  %v3735 = vpop.f32.mrb[0].mxu0
  %v3736 = vadd.f32 %v3447, %v3735
  %v3737 = vpop.f32.mrb[0].mxu0
  %v3738 = vpop.f32.mrb[0].mxu0
  %v3739 = vadd.f32 %v3450, %v3738
  %v3740 = vpop.f32.mrb[0].mxu0
  %3741 = vmatprep.mubr.bf16.mxu0 0
  %3742 = vmatmul.mubr.bf16.gmra.mrb[0].mxu0 %v1573
  %v3743 = vpop.f32.mrb[0].mxu0
  %v3744 = vadd.f32 %v3455, %v3743
  %v3745 = vpop.f32.mrb[0].mxu0
  %v3746 = vpop.f32.mrb[0].mxu0
  %v3747 = vadd.f32 %v3458, %v3746
  %v3748 = vpop.f32.mrb[0].mxu0
  %3749 = vmatprep.mubr.bf16.mxu0 0
  %3750 = vmatmul.mubr.bf16.gmra.mrb[0].mxu0 %v1582
  %v3751 = vpop.f32.mrb[0].mxu0
  %v3752 = vadd.f32 %v3463, %v3751
  %v3753 = vpop.f32.mrb[0].mxu0
  %v3754 = vpop.f32.mrb[0].mxu0
  %v3755 = vadd.f32 %v3466, %v3754
  %v3756 = vpop.f32.mrb[0].mxu0
  %3757 = vmatprep.mubr.bf16.mxu0 0
  %3758 = vmatmul.mubr.bf16.gmra.mrb[0].mxu0 %v1591
  %v3759 = vpop.f32.mrb[0].mxu0
  %v3760 = vadd.f32 %v3471, %v3759
  %v3761 = vpop.f32.mrb[0].mxu0
  %v3762 = vpop.f32.mrb[0].mxu0
  %v3763 = vadd.f32 %v3474, %v3762
  %v3764 = vpop.f32.mrb[0].mxu0
  %3765 = vmatprep.mubr.bf16.mxu0 0
  %3766 = vmatmul.mubr.bf16.gmra.mrb[0].mxu0 %v1600
  %v3767 = vpop.f32.mrb[0].mxu0
  %v3768 = vadd.f32 %v3479, %v3767
  %v3769 = vpop.f32.mrb[0].mxu0
  %v3770 = vpop.f32.mrb[0].mxu0
  %v3771 = vadd.f32 %v3482, %v3770
  %v3772 = vpop.f32.mrb[0].mxu0
  %3773 = vmatprep.mubr.bf16.mxu0 0
  %3774 = vmatmul.mubr.bf16.gmra.mrb[0].mxu0 %v1609
  %v3775 = vpop.f32.mrb[0].mxu0
  %v3776 = vadd.f32 %v3487, %v3775
  %v3777 = vpop.f32.mrb[0].mxu0
  %v3778 = vpop.f32.mrb[0].mxu0
  %v3779 = vadd.f32 %v3490, %v3778
  %v3780 = vpop.f32.mrb[0].mxu0
  %3781 = vmatprep.mubr.bf16.mxu0 0
  %3782 = vmatmul.mubr.bf16.gmra.mrb[0].mxu0 %v1618
  %v3783 = vpop.f32.mrb[0].mxu0
  %v3784 = vadd.f32 %v3495, %v3783
  %v3785 = vpop.f32.mrb[0].mxu0
  %v3786 = vpop.f32.mrb[0].mxu0
  %v3787 = vadd.f32 %v3498, %v3786
  %v3788 = vpop.f32.mrb[0].mxu0
  %3789 = vmatprep.mubr.bf16.mxu0 0
  %3790 = vmatmul.mubr.bf16.gmra.mrb[0].mxu0 %v1627
  %v3791 = vpop.f32.mrb[0].mxu0
  %v3792 = vadd.f32 %v3503, %v3791
  %v3793 = vpop.f32.mrb[0].mxu0
  %v3794 = vpop.f32.mrb[0].mxu0
  %v3795 = vadd.f32 %v3506, %v3794
  %v3796 = vpop.f32.mrb[0].mxu0
  %3797 = vmatprep.mubr.bf16.mxu0 0
  %3798 = vmatmul.mubr.bf16.gmra.mrb[0].mxu0 %v1636
  %v3799 = vpop.f32.mrb[0].mxu0
  %v3800 = vadd.f32 %v3511, %v3799
  %v3801 = vpop.f32.mrb[0].mxu0
  %v3802 = vpop.f32.mrb[0].mxu0
  %v3803 = vadd.f32 %v3514, %v3802
  %v3804 = vpop.f32.mrb[0].mxu0
  %3805 = vmatprep.mubr.bf16.mxu0 0
  %3806 = vmatmul.mubr.bf16.gmra.mrb[0].mxu0 %v1645
  %v3807 = vpop.f32.mrb[0].mxu0
  %v3808 = vadd.f32 %v3519, %v3807
  %v3809 = vpop.f32.mrb[0].mxu0
  %v3810 = vpop.f32.mrb[0].mxu0
  %v3811 = vadd.f32 %v3522, %v3810
  %v3812 = vpop.f32.mrb[0].mxu0
  %3813 = vmatprep.mubr.bf16.mxu0 0
  %3814 = vmatmul.mubr.bf16.gmra.mrb[0].mxu0 %v1654
  %v3815 = vpop.f32.mrb[0].mxu0
  %v3816 = vadd.f32 %v3527, %v3815
  %v3817 = vpop.f32.mrb[0].mxu0
  %v3818 = vpop.f32.mrb[0].mxu0
  %v3819 = vadd.f32 %v3530, %v3818
  %v3820 = vpop.f32.mrb[0].mxu0
  %3821 = vmatprep.mubr.bf16.mxu0 0
  %3822 = vmatmul.mubr.bf16.gmra.mrb[0].mxu0 %v1663
  %v3823 = vpop.f32.mrb[0].mxu0
  %v3824 = vadd.f32 %v3535, %v3823
  %v3825 = vpop.f32.mrb[0].mxu0
  %v3826 = vpop.f32.mrb[0].mxu0
  %v3827 = vadd.f32 %v3538, %v3826
  %v3828 = vpop.f32.mrb[0].mxu0
  %3829 = vmatprep.mubr.bf16.mxu0 0
  %3830 = vmatmul.mubr.bf16.gmra.mrb[0].mxu0 %v1672
  %v3831 = vpop.f32.mrb[0].mxu0
  %v3832 = vadd.f32 %v3543, %v3831
  %v3833 = vpop.f32.mrb[0].mxu0
  %v3834 = vpop.f32.mrb[0].mxu0
  %v3835 = vadd.f32 %v3546, %v3834
  %v3836 = vpop.f32.mrb[0].mxu0
  %3837 = vdwg.mxu0
  %v3838 = vxor.u32 %v3584, 2147483648
  %v3839 = vxor.u32 %v3587, 2147483648
  %v3840 = vxor.u32 %v3592, 2147483648
  %v3841 = vxor.u32 %v3595, 2147483648
  %v3842 = vxor.u32 %v3600, 2147483648
  %v3843 = vxor.u32 %v3603, 2147483648
  %v3844 = vxor.u32 %v3608, 2147483648
  %v3845 = vxor.u32 %v3611, 2147483648
  %v3846 = vxor.u32 %v3616, 2147483648
  %v3847 = vxor.u32 %v3619, 2147483648
  %v3848 = vxor.u32 %v3624, 2147483648
  %v3849 = vxor.u32 %v3627, 2147483648
  %v3850 = vxor.u32 %v3632, 2147483648
  %v3851 = vxor.u32 %v3635, 2147483648
  %v3852 = vxor.u32 %v3640, 2147483648
  %v3853 = vxor.u32 %v3643, 2147483648
  %v3854 = vxor.u32 %v3648, 2147483648
  %v3855 = vxor.u32 %v3651, 2147483648
  %v3856 = vxor.u32 %v3656, 2147483648
  %v3857 = vxor.u32 %v3659, 2147483648
  %v3858 = vxor.u32 %v3664, 2147483648
  %v3859 = vxor.u32 %v3667, 2147483648
  %v3860 = vxor.u32 %v3672, 2147483648
  %v3861 = vxor.u32 %v3675, 2147483648
  %v3862 = vxor.u32 %v3680, 2147483648
  %v3863 = vxor.u32 %v3683, 2147483648
  %v3864 = vxor.u32 %v3688, 2147483648
  %v3865 = vxor.u32 %v3691, 2147483648
  %v3866 = vxor.u32 %v3696, 2147483648
  %v3867 = vxor.u32 %v3699, 2147483648
  %v3868 = vxor.u32 %v3704, 2147483648
  %v3869 = vxor.u32 %v3707, 2147483648
  %v3870 = vxor.u32 %v3712, 2147483648
  %v3871 = vxor.u32 %v3715, 2147483648
  %v3872 = vxor.u32 %v3720, 2147483648
  %v3873 = vxor.u32 %v3723, 2147483648
  %v3874 = vxor.u32 %v3728, 2147483648
  %v3875 = vxor.u32 %v3731, 2147483648
  %v3876 = vxor.u32 %v3736, 2147483648
  %v3877 = vxor.u32 %v3739, 2147483648
  %v3878 = vxor.u32 %v3744, 2147483648
  %v3879 = vxor.u32 %v3747, 2147483648
  %v3880 = vxor.u32 %v3752, 2147483648
  %v3881 = vxor.u32 %v3755, 2147483648
  %v3882 = vxor.u32 %v3760, 2147483648
  %v3883 = vxor.u32 %v3763, 2147483648
  %v3884 = vxor.u32 %v3768, 2147483648
  %v3885 = vxor.u32 %v3771, 2147483648
  %v3886 = vxor.u32 %v3776, 2147483648
  %v3887 = vxor.u32 %v3779, 2147483648
  %v3888 = vxor.u32 %v3784, 2147483648
  %v3889 = vxor.u32 %v3787, 2147483648
  %v3890 = vxor.u32 %v3792, 2147483648
  %v3891 = vxor.u32 %v3795, 2147483648
  %v3892 = vxor.u32 %v3800, 2147483648
  %v3893 = vxor.u32 %v3803, 2147483648
  %v3894 = vxor.u32 %v3808, 2147483648
  %v3895 = vxor.u32 %v3811, 2147483648
  %v3896 = vxor.u32 %v3816, 2147483648
  %v3897 = vxor.u32 %v3819, 2147483648
  %v3898 = vxor.u32 %v3824, 2147483648
  %v3899 = vxor.u32 %v3827, 2147483648
  %v3900 = vxor.u32 %v3832, 2147483648
  %v3901 = vxor.u32 %v3835, 2147483648
  %v3902 = vmul.f32 %v3838, 1.442695
  %v3903 = vpow.pop %v3902
  %v3904 = vmul.f32 %v3839, 1.442695
  %v3905 = vpow.pop %v3904
  %v3906 = vmul.f32 %v3840, 1.442695
  %v3907 = vpow.pop %v3906
  %v3908 = vmul.f32 %v3841, 1.442695
  %v3909 = vpow.pop %v3908
  %v3910 = vmul.f32 %v3842, 1.442695
  %v3911 = vpow.pop %v3910
  %v3912 = vmul.f32 %v3843, 1.442695
  %v3913 = vpow.pop %v3912
  %v3914 = vmul.f32 %v3844, 1.442695
  %v3915 = vpow.pop %v3914
  %v3916 = vmul.f32 %v3845, 1.442695
  %v3917 = vpow.pop %v3916
  %v3918 = vmul.f32 %v3846, 1.442695
  %v3919 = vpow.pop %v3918
  %v3920 = vmul.f32 %v3847, 1.442695
  %v3921 = vpow.pop %v3920
  %v3922 = vmul.f32 %v3848, 1.442695
  %v3923 = vpow.pop %v3922
  %v3924 = vmul.f32 %v3849, 1.442695
  %v3925 = vpow.pop %v3924
  %v3926 = vmul.f32 %v3850, 1.442695
  %v3927 = vpow.pop %v3926
  %v3928 = vmul.f32 %v3851, 1.442695
  %v3929 = vpow.pop %v3928
  %v3930 = vmul.f32 %v3852, 1.442695
  %v3931 = vpow.pop %v3930
  %v3932 = vmul.f32 %v3853, 1.442695
  %v3933 = vpow.pop %v3932
  %v3934 = vmul.f32 %v3854, 1.442695
  %v3935 = vpow.pop %v3934
  %v3936 = vmul.f32 %v3855, 1.442695
  %v3937 = vpow.pop %v3936
  %v3938 = vmul.f32 %v3856, 1.442695
  %v3939 = vpow.pop %v3938
  %v3940 = vmul.f32 %v3857, 1.442695
  %v3941 = vpow.pop %v3940
  %v3942 = vmul.f32 %v3858, 1.442695
  %v3943 = vpow.pop %v3942
  %v3944 = vmul.f32 %v3859, 1.442695
  %v3945 = vpow.pop %v3944
  %v3946 = vmul.f32 %v3860, 1.442695
  %v3947 = vpow.pop %v3946
  %v3948 = vmul.f32 %v3861, 1.442695
  %v3949 = vpow.pop %v3948
  %v3950 = vmul.f32 %v3862, 1.442695
  %v3951 = vpow.pop %v3950
  %v3952 = vmul.f32 %v3863, 1.442695
  %v3953 = vpow.pop %v3952
  %v3954 = vmul.f32 %v3864, 1.442695
  %v3955 = vpow.pop %v3954
  %v3956 = vmul.f32 %v3865, 1.442695
  %v3957 = vpow.pop %v3956
  %v3958 = vmul.f32 %v3866, 1.442695
  %v3959 = vpow.pop %v3958
  %v3960 = vmul.f32 %v3867, 1.442695
  %v3961 = vpow.pop %v3960
  %v3962 = vmul.f32 %v3868, 1.442695
  %v3963 = vpow.pop %v3962
  %v3964 = vmul.f32 %v3869, 1.442695
  %v3965 = vpow.pop %v3964
  %v3966 = vmul.f32 %v3870, 1.442695
  %v3967 = vpow.pop %v3966
  %v3968 = vmul.f32 %v3871, 1.442695
  %v3969 = vpow.pop %v3968
  %v3970 = vmul.f32 %v3872, 1.442695
  %v3971 = vpow.pop %v3970
  %v3972 = vmul.f32 %v3873, 1.442695
  %v3973 = vpow.pop %v3972
  %v3974 = vmul.f32 %v3874, 1.442695
  %v3975 = vpow.pop %v3974
  %v3976 = vmul.f32 %v3875, 1.442695
  %v3977 = vpow.pop %v3976
  %v3978 = vmul.f32 %v3876, 1.442695
  %v3979 = vpow.pop %v3978
  %v3980 = vmul.f32 %v3877, 1.442695
  %v3981 = vpow.pop %v3980
  %v3982 = vmul.f32 %v3878, 1.442695
  %v3983 = vpow.pop %v3982
  %v3984 = vmul.f32 %v3879, 1.442695
  %v3985 = vpow.pop %v3984
  %v3986 = vmul.f32 %v3880, 1.442695
  %v3987 = vpow.pop %v3986
  %v3988 = vmul.f32 %v3881, 1.442695
  %v3989 = vpow.pop %v3988
  %v3990 = vmul.f32 %v3882, 1.442695
  %v3991 = vpow.pop %v3990
  %v3992 = vmul.f32 %v3883, 1.442695
  %v3993 = vpow.pop %v3992
  %v3994 = vmul.f32 %v3884, 1.442695
  %v3995 = vpow.pop %v3994
  %v3996 = vmul.f32 %v3885, 1.442695
  %v3997 = vpow.pop %v3996
  %v3998 = vmul.f32 %v3886, 1.442695
  %v3999 = vpow.pop %v3998
  %v4000 = vmul.f32 %v3887, 1.442695
  %v4001 = vpow.pop %v4000
  %v4002 = vmul.f32 %v3888, 1.442695
  %v4003 = vpow.pop %v4002
  %v4004 = vmul.f32 %v3889, 1.442695
  %v4005 = vpow.pop %v4004
  %v4006 = vmul.f32 %v3890, 1.442695
  %v4007 = vpow.pop %v4006
  %v4008 = vmul.f32 %v3891, 1.442695
  %v4009 = vpow.pop %v4008
  %v4010 = vmul.f32 %v3892, 1.442695
  %v4011 = vpow.pop %v4010
  %v4012 = vmul.f32 %v3893, 1.442695
  %v4013 = vpow.pop %v4012
  %v4014 = vmul.f32 %v3894, 1.442695
  %v4015 = vpow.pop %v4014
  %v4016 = vmul.f32 %v3895, 1.442695
  %v4017 = vpow.pop %v4016
  %v4018 = vmul.f32 %v3896, 1.442695
  %v4019 = vpow.pop %v4018
  %v4020 = vmul.f32 %v3897, 1.442695
  %v4021 = vpow.pop %v4020
  %v4022 = vmul.f32 %v3898, 1.442695
  %v4023 = vpow.pop %v4022
  %v4024 = vmul.f32 %v3899, 1.442695
  %v4025 = vpow.pop %v4024
  %v4026 = vmul.f32 %v3900, 1.442695
  %v4027 = vpow.pop %v4026
  %v4028 = vmul.f32 %v3901, 1.442695
  %v4029 = vpow.pop %v4028
  %v4030 = vadd.f32 %v3903, 1.0
  %v4031 = vadd.f32 %v3905, 1.0
  %v4032 = vadd.f32 %v3907, 1.0
  %v4033 = vadd.f32 %v3909, 1.0
  %v4034 = vadd.f32 %v3911, 1.0
  %v4035 = vadd.f32 %v3913, 1.0
  %v4036 = vadd.f32 %v3915, 1.0
  %v4037 = vadd.f32 %v3917, 1.0
  %v4038 = vadd.f32 %v3919, 1.0
  %v4039 = vadd.f32 %v3921, 1.0
  %v4040 = vadd.f32 %v3923, 1.0
  %v4041 = vadd.f32 %v3925, 1.0
  %v4042 = vadd.f32 %v3927, 1.0
  %v4043 = vadd.f32 %v3929, 1.0
  %v4044 = vadd.f32 %v3931, 1.0
  %v4045 = vadd.f32 %v3933, 1.0
  %v4046 = vadd.f32 %v3935, 1.0
  %v4047 = vadd.f32 %v3937, 1.0
  %v4048 = vadd.f32 %v3939, 1.0
  %v4049 = vadd.f32 %v3941, 1.0
  %v4050 = vadd.f32 %v3943, 1.0
  %v4051 = vadd.f32 %v3945, 1.0
  %v4052 = vadd.f32 %v3947, 1.0
  %v4053 = vadd.f32 %v3949, 1.0
  %v4054 = vadd.f32 %v3951, 1.0
  %v4055 = vadd.f32 %v3953, 1.0
  %v4056 = vadd.f32 %v3955, 1.0
  %v4057 = vadd.f32 %v3957, 1.0
  %v4058 = vadd.f32 %v3959, 1.0
  %v4059 = vadd.f32 %v3961, 1.0
  %v4060 = vadd.f32 %v3963, 1.0
  %v4061 = vadd.f32 %v3965, 1.0
  %v4062 = vadd.f32 %v3967, 1.0
  %v4063 = vadd.f32 %v3969, 1.0
  %v4064 = vadd.f32 %v3971, 1.0
  %v4065 = vadd.f32 %v3973, 1.0
  %v4066 = vadd.f32 %v3975, 1.0
  %v4067 = vadd.f32 %v3977, 1.0
  %v4068 = vadd.f32 %v3979, 1.0
  %v4069 = vadd.f32 %v3981, 1.0
  %v4070 = vadd.f32 %v3983, 1.0
  %v4071 = vadd.f32 %v3985, 1.0
  %v4072 = vadd.f32 %v3987, 1.0
  %v4073 = vadd.f32 %v3989, 1.0
  %v4074 = vadd.f32 %v3991, 1.0
  %v4075 = vadd.f32 %v3993, 1.0
  %v4076 = vadd.f32 %v3995, 1.0
  %v4077 = vadd.f32 %v3997, 1.0
  %v4078 = vadd.f32 %v3999, 1.0
  %v4079 = vadd.f32 %v4001, 1.0
  %v4080 = vadd.f32 %v4003, 1.0
  %v4081 = vadd.f32 %v4005, 1.0
  %v4082 = vadd.f32 %v4007, 1.0
  %v4083 = vadd.f32 %v4009, 1.0
  %v4084 = vadd.f32 %v4011, 1.0
  %v4085 = vadd.f32 %v4013, 1.0
  %v4086 = vadd.f32 %v4015, 1.0
  %v4087 = vadd.f32 %v4017, 1.0
  %v4088 = vadd.f32 %v4019, 1.0
  %v4089 = vadd.f32 %v4021, 1.0
  %v4090 = vadd.f32 %v4023, 1.0
  %v4091 = vadd.f32 %v4025, 1.0
  %v4092 = vadd.f32 %v4027, 1.0
  %v4093 = vadd.f32 %v4029, 1.0
  %v4094 = vrcp.pop %v4030
  %v4095 = vmul.f32 1.0, %v4094
  %v4096 = vrcp.pop %v4031
  %v4097 = vmul.f32 1.0, %v4096
  %v4098 = vrcp.pop %v4032
  %v4099 = vmul.f32 1.0, %v4098
  %v4100 = vrcp.pop %v4033
  %v4101 = vmul.f32 1.0, %v4100
  %v4102 = vrcp.pop %v4034
  %v4103 = vmul.f32 1.0, %v4102
  %v4104 = vrcp.pop %v4035
  %v4105 = vmul.f32 1.0, %v4104
  %v4106 = vrcp.pop %v4036
  %v4107 = vmul.f32 1.0, %v4106
  %v4108 = vrcp.pop %v4037
  %v4109 = vmul.f32 1.0, %v4108
  %v4110 = vrcp.pop %v4038
  %v4111 = vmul.f32 1.0, %v4110
  %v4112 = vrcp.pop %v4039
  %v4113 = vmul.f32 1.0, %v4112
  %v4114 = vrcp.pop %v4040
  %v4115 = vmul.f32 1.0, %v4114
  %v4116 = vrcp.pop %v4041
  %v4117 = vmul.f32 1.0, %v4116
  %v4118 = vrcp.pop %v4042
  %v4119 = vmul.f32 1.0, %v4118
  %v4120 = vrcp.pop %v4043
  %v4121 = vmul.f32 1.0, %v4120
  %v4122 = vrcp.pop %v4044
  %v4123 = vmul.f32 1.0, %v4122
  %v4124 = vrcp.pop %v4045
  %v4125 = vmul.f32 1.0, %v4124
  %v4126 = vrcp.pop %v4046
  %v4127 = vmul.f32 1.0, %v4126
  %v4128 = vrcp.pop %v4047
  %v4129 = vmul.f32 1.0, %v4128
  %v4130 = vrcp.pop %v4048
  %v4131 = vmul.f32 1.0, %v4130
  %v4132 = vrcp.pop %v4049
  %v4133 = vmul.f32 1.0, %v4132
  %v4134 = vrcp.pop %v4050
  %v4135 = vmul.f32 1.0, %v4134
  %v4136 = vrcp.pop %v4051
  %v4137 = vmul.f32 1.0, %v4136
  %v4138 = vrcp.pop %v4052
  %v4139 = vmul.f32 1.0, %v4138
  %v4140 = vrcp.pop %v4053
  %v4141 = vmul.f32 1.0, %v4140
  %v4142 = vrcp.pop %v4054
  %v4143 = vmul.f32 1.0, %v4142
  %v4144 = vrcp.pop %v4055
  %v4145 = vmul.f32 1.0, %v4144
  %v4146 = vrcp.pop %v4056
  %v4147 = vmul.f32 1.0, %v4146
  %v4148 = vrcp.pop %v4057
  %v4149 = vmul.f32 1.0, %v4148
  %v4150 = vrcp.pop %v4058
  %v4151 = vmul.f32 1.0, %v4150
  %v4152 = vrcp.pop %v4059
  %v4153 = vmul.f32 1.0, %v4152
  %v4154 = vrcp.pop %v4060
  %v4155 = vmul.f32 1.0, %v4154
  %v4156 = vrcp.pop %v4061
  %v4157 = vmul.f32 1.0, %v4156
  %v4158 = vrcp.pop %v4062
  %v4159 = vmul.f32 1.0, %v4158
  %v4160 = vrcp.pop %v4063
  %v4161 = vmul.f32 1.0, %v4160
  %v4162 = vrcp.pop %v4064
  %v4163 = vmul.f32 1.0, %v4162
  %v4164 = vrcp.pop %v4065
  %v4165 = vmul.f32 1.0, %v4164
  %v4166 = vrcp.pop %v4066
  %v4167 = vmul.f32 1.0, %v4166
  %v4168 = vrcp.pop %v4067
  %v4169 = vmul.f32 1.0, %v4168
  %v4170 = vrcp.pop %v4068
  %v4171 = vmul.f32 1.0, %v4170
  %v4172 = vrcp.pop %v4069
  %v4173 = vmul.f32 1.0, %v4172
  %v4174 = vrcp.pop %v4070
  %v4175 = vmul.f32 1.0, %v4174
  %v4176 = vrcp.pop %v4071
  %v4177 = vmul.f32 1.0, %v4176
  %v4178 = vrcp.pop %v4072
  %v4179 = vmul.f32 1.0, %v4178
  %v4180 = vrcp.pop %v4073
  %v4181 = vmul.f32 1.0, %v4180
  %v4182 = vrcp.pop %v4074
  %v4183 = vmul.f32 1.0, %v4182
  %v4184 = vrcp.pop %v4075
  %v4185 = vmul.f32 1.0, %v4184
  %v4186 = vrcp.pop %v4076
  %v4187 = vmul.f32 1.0, %v4186
  %v4188 = vrcp.pop %v4077
  %v4189 = vmul.f32 1.0, %v4188
  %v4190 = vrcp.pop %v4078
  %v4191 = vmul.f32 1.0, %v4190
  %v4192 = vrcp.pop %v4079
  %v4193 = vmul.f32 1.0, %v4192
  %v4194 = vrcp.pop %v4080
  %v4195 = vmul.f32 1.0, %v4194
  %v4196 = vrcp.pop %v4081
  %v4197 = vmul.f32 1.0, %v4196
  %v4198 = vrcp.pop %v4082
  %v4199 = vmul.f32 1.0, %v4198
  %v4200 = vrcp.pop %v4083
  %v4201 = vmul.f32 1.0, %v4200
  %v4202 = vrcp.pop %v4084
  %v4203 = vmul.f32 1.0, %v4202
  %v4204 = vrcp.pop %v4085
  %v4205 = vmul.f32 1.0, %v4204
  %v4206 = vrcp.pop %v4086
  %v4207 = vmul.f32 1.0, %v4206
  %v4208 = vrcp.pop %v4087
  %v4209 = vmul.f32 1.0, %v4208
  %v4210 = vrcp.pop %v4088
  %v4211 = vmul.f32 1.0, %v4210
  %v4212 = vrcp.pop %v4089
  %v4213 = vmul.f32 1.0, %v4212
  %v4214 = vrcp.pop %v4090
  %v4215 = vmul.f32 1.0, %v4214
  %v4216 = vrcp.pop %v4091
  %v4217 = vmul.f32 1.0, %v4216
  %v4218 = vrcp.pop %v4092
  %v4219 = vmul.f32 1.0, %v4218
  %v4220 = vrcp.pop %v4093
  %v4221 = vmul.f32 1.0, %v4220
  %v4222 = vmul.f32 %v3584, %v4095
  %v4223 = vmul.f32 %v3587, %v4097
  %v4224 = vmul.f32 %v3592, %v4099
  %v4225 = vmul.f32 %v3595, %v4101
  %v4226 = vmul.f32 %v3600, %v4103
  %v4227 = vmul.f32 %v3603, %v4105
  %v4228 = vmul.f32 %v3608, %v4107
  %v4229 = vmul.f32 %v3611, %v4109
  %v4230 = vmul.f32 %v3616, %v4111
  %v4231 = vmul.f32 %v3619, %v4113
  %v4232 = vmul.f32 %v3624, %v4115
  %v4233 = vmul.f32 %v3627, %v4117
  %v4234 = vmul.f32 %v3632, %v4119
  %v4235 = vmul.f32 %v3635, %v4121
  %v4236 = vmul.f32 %v3640, %v4123
  %v4237 = vmul.f32 %v3643, %v4125
  %v4238 = vmul.f32 %v3648, %v4127
  %v4239 = vmul.f32 %v3651, %v4129
  %v4240 = vmul.f32 %v3656, %v4131
  %v4241 = vmul.f32 %v3659, %v4133
  %v4242 = vmul.f32 %v3664, %v4135
  %v4243 = vmul.f32 %v3667, %v4137
  %v4244 = vmul.f32 %v3672, %v4139
  %v4245 = vmul.f32 %v3675, %v4141
  %v4246 = vmul.f32 %v3680, %v4143
  %v4247 = vmul.f32 %v3683, %v4145
  %v4248 = vmul.f32 %v3688, %v4147
  %v4249 = vmul.f32 %v3691, %v4149
  %v4250 = vmul.f32 %v3696, %v4151
  %v4251 = vmul.f32 %v3699, %v4153
  %v4252 = vmul.f32 %v3704, %v4155
  %v4253 = vmul.f32 %v3707, %v4157
  %v4254 = vmul.f32 %v3712, %v4159
  %v4255 = vmul.f32 %v3715, %v4161
  %v4256 = vmul.f32 %v3720, %v4163
  %v4257 = vmul.f32 %v3723, %v4165
  %v4258 = vmul.f32 %v3728, %v4167
  %v4259 = vmul.f32 %v3731, %v4169
  %v4260 = vmul.f32 %v3736, %v4171
  %v4261 = vmul.f32 %v3739, %v4173
  %v4262 = vmul.f32 %v3744, %v4175
  %v4263 = vmul.f32 %v3747, %v4177
  %v4264 = vmul.f32 %v3752, %v4179
  %v4265 = vmul.f32 %v3755, %v4181
  %v4266 = vmul.f32 %v3760, %v4183
  %v4267 = vmul.f32 %v3763, %v4185
  %v4268 = vmul.f32 %v3768, %v4187
  %v4269 = vmul.f32 %v3771, %v4189
  %v4270 = vmul.f32 %v3776, %v4191
  %v4271 = vmul.f32 %v3779, %v4193
  %v4272 = vmul.f32 %v3784, %v4195
  %v4273 = vmul.f32 %v3787, %v4197
  %v4274 = vmul.f32 %v3792, %v4199
  %v4275 = vmul.f32 %v3795, %v4201
  %v4276 = vmul.f32 %v3800, %v4203
  %v4277 = vmul.f32 %v3803, %v4205
  %v4278 = vmul.f32 %v3808, %v4207
  %v4279 = vmul.f32 %v3811, %v4209
  %v4280 = vmul.f32 %v3816, %v4211
  %v4281 = vmul.f32 %v3819, %v4213
  %v4282 = vmul.f32 %v3824, %v4215
  %v4283 = vmul.f32 %v3827, %v4217
  %v4284 = vmul.f32 %v3832, %v4219
  %v4285 = vmul.f32 %v3835, %v4221
  %v4286 = vld [vmem:[%s3] sm:$0xf]
  %v4287 = vld [vmem:[%s3 + $0x4] sm:$0xf]
  %v4288 = vld [vmem:[%s3 + $0x8] sm:$0xf]
  %v4289 = vld [vmem:[%s3 + $0xc] sm:$0xf]
  %v4290 = vld [vmem:[%s3 + $0x10] sm:$0xf]
  %v4291 = vld [vmem:[%s3 + $0x14] sm:$0xf]
  %v4292 = vld [vmem:[%s3 + $0x18] sm:$0xf]
  %v4293 = vld [vmem:[%s3 + $0x1c] sm:$0xf]
  %v4294 = vld [vmem:[%s3 + $0x20] sm:$0xf]
  %v4295 = vld [vmem:[%s3 + $0x24] sm:$0xf]
  %v4296 = vld [vmem:[%s3 + $0x28] sm:$0xf]
  %v4297 = vld [vmem:[%s3 + $0x2c] sm:$0xf]
  %v4298 = vld [vmem:[%s3 + $0x30] sm:$0xf]
  %v4299 = vld [vmem:[%s3 + $0x34] sm:$0xf]
  %v4300 = vld [vmem:[%s3 + $0x38] sm:$0xf]
  %v4301 = vld [vmem:[%s3 + $0x3c] sm:$0xf]
  %v4302 = vld [vmem:[%s3 + $0x40] sm:$0xf]
  %v4303 = vld [vmem:[%s3 + $0x44] sm:$0xf]
  %v4304 = vld [vmem:[%s3 + $0x48] sm:$0xf]
  %v4305 = vld [vmem:[%s3 + $0x4c] sm:$0xf]
  %v4306 = vld [vmem:[%s3 + $0x50] sm:$0xf]
  %v4307 = vld [vmem:[%s3 + $0x54] sm:$0xf]
  %v4308 = vld [vmem:[%s3 + $0x58] sm:$0xf]
  %v4309 = vld [vmem:[%s3 + $0x5c] sm:$0xf]
  %v4310 = vld [vmem:[%s3 + $0x60] sm:$0xf]
  %v4311 = vld [vmem:[%s3 + $0x64] sm:$0xf]
  %v4312 = vld [vmem:[%s3 + $0x68] sm:$0xf]
  %v4313 = vld [vmem:[%s3 + $0x6c] sm:$0xf]
  %v4314 = vld [vmem:[%s3 + $0x70] sm:$0xf]
  %v4315 = vld [vmem:[%s3 + $0x74] sm:$0xf]
  %v4316 = vld [vmem:[%s3 + $0x78] sm:$0xf]
  %v4317 = vld [vmem:[%s3 + $0x7c] sm:$0xf]
  %v4318 = vld [vmem:[%s3 + $0x80] sm:$0xf]
  %v4319 = vld [vmem:[%s3 + $0x84] sm:$0xf]
  %v4320 = vld [vmem:[%s3 + $0x88] sm:$0xf]
  %v4321 = vld [vmem:[%s3 + $0x8c] sm:$0xf]
  %v4322 = vld [vmem:[%s3 + $0x90] sm:$0xf]
  %v4323 = vld [vmem:[%s3 + $0x94] sm:$0xf]
  %v4324 = vld [vmem:[%s3 + $0x98] sm:$0xf]
  %v4325 = vld [vmem:[%s3 + $0x9c] sm:$0xf]
  %v4326 = vld [vmem:[%s3 + $0xa0] sm:$0xf]
  %v4327 = vld [vmem:[%s3 + $0xa4] sm:$0xf]
  %v4328 = vld [vmem:[%s3 + $0xa8] sm:$0xf]
  %v4329 = vld [vmem:[%s3 + $0xac] sm:$0xf]
  %v4330 = vld [vmem:[%s3 + $0xb0] sm:$0xf]
  %v4331 = vld [vmem:[%s3 + $0xb4] sm:$0xf]
  %v4332 = vld [vmem:[%s3 + $0xb8] sm:$0xf]
  %v4333 = vld [vmem:[%s3 + $0xbc] sm:$0xf]
  %v4334 = vld [vmem:[%s3 + $0xc0] sm:$0xf]
  %v4335 = vld [vmem:[%s3 + $0xc4] sm:$0xf]
  %v4336 = vld [vmem:[%s3 + $0xc8] sm:$0xf]
  %v4337 = vld [vmem:[%s3 + $0xcc] sm:$0xf]
  %v4338 = vld [vmem:[%s3 + $0xd0] sm:$0xf]
  %v4339 = vld [vmem:[%s3 + $0xd4] sm:$0xf]
  %v4340 = vld [vmem:[%s3 + $0xd8] sm:$0xf]
  %v4341 = vld [vmem:[%s3 + $0xdc] sm:$0xf]
  %v4342 = vld [vmem:[%s3 + $0xe0] sm:$0xf]
  %v4343 = vld [vmem:[%s3 + $0xe4] sm:$0xf]
  %v4344 = vld [vmem:[%s3 + $0xe8] sm:$0xf]
  %v4345 = vld [vmem:[%s3 + $0xec] sm:$0xf]
  %v4346 = vld [vmem:[%s3 + $0xf0] sm:$0xf]
  %v4347 = vld [vmem:[%s3 + $0xf4] sm:$0xf]
  %v4348 = vld [vmem:[%s3 + $0xf8] sm:$0xf]
  %v4349 = vld [vmem:[%s3 + $0xfc] sm:$0xf]
  %v4350 = vunpack.c.l.bf16 %v4286
  %v4351 = vunpack.c.l.bf16 %v4287
  %v4352 = vunpack.c.l.bf16 %v4288
  %v4353 = vunpack.c.l.bf16 %v4289
  %v4354 = vunpack.c.l.bf16 %v4290
  %v4355 = vunpack.c.l.bf16 %v4291
  %v4356 = vunpack.c.l.bf16 %v4292
  %v4357 = vunpack.c.l.bf16 %v4293
  %v4358 = vunpack.c.l.bf16 %v4294
  %v4359 = vunpack.c.l.bf16 %v4295
  %v4360 = vunpack.c.l.bf16 %v4296
  %v4361 = vunpack.c.l.bf16 %v4297
  %v4362 = vunpack.c.l.bf16 %v4298
  %v4363 = vunpack.c.l.bf16 %v4299
  %v4364 = vunpack.c.l.bf16 %v4300
  %v4365 = vunpack.c.l.bf16 %v4301
  %v4366 = vunpack.c.l.bf16 %v4302
  %v4367 = vunpack.c.l.bf16 %v4303
  %v4368 = vunpack.c.l.bf16 %v4304
  %v4369 = vunpack.c.l.bf16 %v4305
  %v4370 = vunpack.c.l.bf16 %v4306
  %v4371 = vunpack.c.l.bf16 %v4307
  %v4372 = vunpack.c.l.bf16 %v4308
  %v4373 = vunpack.c.l.bf16 %v4309
  %v4374 = vunpack.c.l.bf16 %v4310
  %v4375 = vunpack.c.l.bf16 %v4311
  %v4376 = vunpack.c.l.bf16 %v4312
  %v4377 = vunpack.c.l.bf16 %v4313
  %v4378 = vunpack.c.l.bf16 %v4314
  %v4379 = vunpack.c.l.bf16 %v4315
  %v4380 = vunpack.c.l.bf16 %v4316
  %v4381 = vunpack.c.l.bf16 %v4317
  %v4382 = vunpack.c.l.bf16 %v4318
  %v4383 = vunpack.c.l.bf16 %v4319
  %v4384 = vunpack.c.l.bf16 %v4320
  %v4385 = vunpack.c.l.bf16 %v4321
  %v4386 = vunpack.c.l.bf16 %v4322
  %v4387 = vunpack.c.l.bf16 %v4323
  %v4388 = vunpack.c.l.bf16 %v4324
  %v4389 = vunpack.c.l.bf16 %v4325
  %v4390 = vunpack.c.l.bf16 %v4326
  %v4391 = vunpack.c.l.bf16 %v4327
  %v4392 = vunpack.c.l.bf16 %v4328
  %v4393 = vunpack.c.l.bf16 %v4329
  %v4394 = vunpack.c.l.bf16 %v4330
  %v4395 = vunpack.c.l.bf16 %v4331
  %v4396 = vunpack.c.l.bf16 %v4332
  %v4397 = vunpack.c.l.bf16 %v4333
  %v4398 = vunpack.c.l.bf16 %v4334
  %v4399 = vunpack.c.l.bf16 %v4335
  %v4400 = vunpack.c.l.bf16 %v4336
  %v4401 = vunpack.c.l.bf16 %v4337
  %v4402 = vunpack.c.l.bf16 %v4338
  %v4403 = vunpack.c.l.bf16 %v4339
  %v4404 = vunpack.c.l.bf16 %v4340
  %v4405 = vunpack.c.l.bf16 %v4341
  %v4406 = vunpack.c.l.bf16 %v4342
  %v4407 = vunpack.c.l.bf16 %v4343
  %v4408 = vunpack.c.l.bf16 %v4344
  %v4409 = vunpack.c.l.bf16 %v4345
  %v4410 = vunpack.c.l.bf16 %v4346
  %v4411 = vunpack.c.l.bf16 %v4347
  %v4412 = vunpack.c.l.bf16 %v4348
  %v4413 = vunpack.c.l.bf16 %v4349
  %v4414 = vadd.f32 %v4222, %v4350
  %v4415 = vadd.f32 %v4223, %v4351
  %v4416 = vadd.f32 %v4224, %v4352
  %v4417 = vadd.f32 %v4225, %v4353
  %v4418 = vadd.f32 %v4226, %v4354
  %v4419 = vadd.f32 %v4227, %v4355
  %v4420 = vadd.f32 %v4228, %v4356
  %v4421 = vadd.f32 %v4229, %v4357
  %v4422 = vadd.f32 %v4230, %v4358
  %v4423 = vadd.f32 %v4231, %v4359
  %v4424 = vadd.f32 %v4232, %v4360
  %v4425 = vadd.f32 %v4233, %v4361
  %v4426 = vadd.f32 %v4234, %v4362
  %v4427 = vadd.f32 %v4235, %v4363
  %v4428 = vadd.f32 %v4236, %v4364
  %v4429 = vadd.f32 %v4237, %v4365
  %v4430 = vadd.f32 %v4238, %v4366
  %v4431 = vadd.f32 %v4239, %v4367
  %v4432 = vadd.f32 %v4240, %v4368
  %v4433 = vadd.f32 %v4241, %v4369
  %v4434 = vadd.f32 %v4242, %v4370
  %v4435 = vadd.f32 %v4243, %v4371
  %v4436 = vadd.f32 %v4244, %v4372
  %v4437 = vadd.f32 %v4245, %v4373
  %v4438 = vadd.f32 %v4246, %v4374
  %v4439 = vadd.f32 %v4247, %v4375
  %v4440 = vadd.f32 %v4248, %v4376
  %v4441 = vadd.f32 %v4249, %v4377
  %v4442 = vadd.f32 %v4250, %v4378
  %v4443 = vadd.f32 %v4251, %v4379
  %v4444 = vadd.f32 %v4252, %v4380
  %v4445 = vadd.f32 %v4253, %v4381
  %v4446 = vadd.f32 %v4254, %v4382
  %v4447 = vadd.f32 %v4255, %v4383
  %v4448 = vadd.f32 %v4256, %v4384
  %v4449 = vadd.f32 %v4257, %v4385
  %v4450 = vadd.f32 %v4258, %v4386
  %v4451 = vadd.f32 %v4259, %v4387
  %v4452 = vadd.f32 %v4260, %v4388
  %v4453 = vadd.f32 %v4261, %v4389
  %v4454 = vadd.f32 %v4262, %v4390
  %v4455 = vadd.f32 %v4263, %v4391
  %v4456 = vadd.f32 %v4264, %v4392
  %v4457 = vadd.f32 %v4265, %v4393
  %v4458 = vadd.f32 %v4266, %v4394
  %v4459 = vadd.f32 %v4267, %v4395
  %v4460 = vadd.f32 %v4268, %v4396
  %v4461 = vadd.f32 %v4269, %v4397
  %v4462 = vadd.f32 %v4270, %v4398
  %v4463 = vadd.f32 %v4271, %v4399
  %v4464 = vadd.f32 %v4272, %v4400
  %v4465 = vadd.f32 %v4273, %v4401
  %v4466 = vadd.f32 %v4274, %v4402
  %v4467 = vadd.f32 %v4275, %v4403
  %v4468 = vadd.f32 %v4276, %v4404
  %v4469 = vadd.f32 %v4277, %v4405
  %v4470 = vadd.f32 %v4278, %v4406
  %v4471 = vadd.f32 %v4279, %v4407
  %v4472 = vadd.f32 %v4280, %v4408
  %v4473 = vadd.f32 %v4281, %v4409
  %v4474 = vadd.f32 %v4282, %v4410
  %v4475 = vadd.f32 %v4283, %v4411
  %v4476 = vadd.f32 %v4284, %v4412
  %v4477 = vadd.f32 %v4285, %v4413
  %v4478 = vpack.c.bf16 %v4415, %v4414
  %v4479 = vpack.c.bf16 %v4417, %v4416
  %v4480 = vpack.c.bf16 %v4419, %v4418
  %v4481 = vpack.c.bf16 %v4421, %v4420
  %v4482 = vpack.c.bf16 %v4423, %v4422
  %v4483 = vpack.c.bf16 %v4425, %v4424
  %v4484 = vpack.c.bf16 %v4427, %v4426
  %v4485 = vpack.c.bf16 %v4429, %v4428
  %v4486 = vpack.c.bf16 %v4431, %v4430
  %v4487 = vpack.c.bf16 %v4433, %v4432
  %v4488 = vpack.c.bf16 %v4435, %v4434
  %v4489 = vpack.c.bf16 %v4437, %v4436
  %v4490 = vpack.c.bf16 %v4439, %v4438
  %v4491 = vpack.c.bf16 %v4441, %v4440
  %v4492 = vpack.c.bf16 %v4443, %v4442
  %v4493 = vpack.c.bf16 %v4445, %v4444
  %v4494 = vpack.c.bf16 %v4447, %v4446
  %v4495 = vpack.c.bf16 %v4449, %v4448
  %v4496 = vpack.c.bf16 %v4451, %v4450
  %v4497 = vpack.c.bf16 %v4453, %v4452
  %v4498 = vpack.c.bf16 %v4455, %v4454
  %v4499 = vpack.c.bf16 %v4457, %v4456
  %v4500 = vpack.c.bf16 %v4459, %v4458
  %v4501 = vpack.c.bf16 %v4461, %v4460
  %v4502 = vpack.c.bf16 %v4463, %v4462
  %v4503 = vpack.c.bf16 %v4465, %v4464
  %v4504 = vpack.c.bf16 %v4467, %v4466
  %v4505 = vpack.c.bf16 %v4469, %v4468
  %v4506 = vpack.c.bf16 %v4471, %v4470
  %v4507 = vpack.c.bf16 %v4473, %v4472
  %v4508 = vpack.c.bf16 %v4475, %v4474
  %v4509 = vpack.c.bf16 %v4477, %v4476
  %v4542 = vunpack.c.l.b16 %v4478
  %v4543 = vunpack.c.h.b16 %v4478
  %v4544 = vunpack.c.l.b16 %v4479
  %v4545 = vunpack.c.h.b16 %v4479
  %v4546 = vunpack.c.l.b16 %v4480
  %v4547 = vunpack.c.h.b16 %v4480
  %v4548 = vunpack.c.l.b16 %v4481
  %v4549 = vunpack.c.h.b16 %v4481
  %v4550 = vunpack.c.l.b16 %v4482
  %v4551 = vunpack.c.h.b16 %v4482
  %v4552 = vunpack.c.l.b16 %v4483
  %v4553 = vunpack.c.h.b16 %v4483
  %v4554 = vunpack.c.l.b16 %v4484
  %v4555 = vunpack.c.h.b16 %v4484
  %v4556 = vunpack.c.l.b16 %v4485
  %v4557 = vunpack.c.h.b16 %v4485
  %v4558 = vunpack.c.l.b16 %v4486
  %v4559 = vunpack.c.h.b16 %v4486
  %v4560 = vunpack.c.l.b16 %v4487
  %v4561 = vunpack.c.h.b16 %v4487
  %v4562 = vunpack.c.l.b16 %v4488
  %v4563 = vunpack.c.h.b16 %v4488
  %v4564 = vunpack.c.l.b16 %v4489
  %v4565 = vunpack.c.h.b16 %v4489
  %v4566 = vunpack.c.l.b16 %v4490
  %v4567 = vunpack.c.h.b16 %v4490
  %v4568 = vunpack.c.l.b16 %v4491
  %v4569 = vunpack.c.h.b16 %v4491
  %v4570 = vunpack.c.l.b16 %v4492
  %v4571 = vunpack.c.h.b16 %v4492
  %v4572 = vunpack.c.l.b16 %v4493
  %v4573 = vunpack.c.h.b16 %v4493
  %v4574 = vunpack.c.l.b16 %v4494
  %v4575 = vunpack.c.h.b16 %v4494
  %v4576 = vunpack.c.l.b16 %v4495
  %v4577 = vunpack.c.h.b16 %v4495
  %v4578 = vunpack.c.l.b16 %v4496
  %v4579 = vunpack.c.h.b16 %v4496
  %v4580 = vunpack.c.l.b16 %v4497
  %v4581 = vunpack.c.h.b16 %v4497
  %v4582 = vunpack.c.l.b16 %v4498
  %v4583 = vunpack.c.h.b16 %v4498
  %v4584 = vunpack.c.l.b16 %v4499
  %v4585 = vunpack.c.h.b16 %v4499
  %v4586 = vunpack.c.l.b16 %v4500
  %v4587 = vunpack.c.h.b16 %v4500
  %v4588 = vunpack.c.l.b16 %v4501
  %v4589 = vunpack.c.h.b16 %v4501
  %v4590 = vunpack.c.l.b16 %v4502
  %v4591 = vunpack.c.h.b16 %v4502
  %v4592 = vunpack.c.l.b16 %v4503
  %v4593 = vunpack.c.h.b16 %v4503
  %v4594 = vunpack.c.l.b16 %v4504
  %v4595 = vunpack.c.h.b16 %v4504
  %v4596 = vunpack.c.l.b16 %v4505
  %v4597 = vunpack.c.h.b16 %v4505
  %v4598 = vunpack.c.l.b16 %v4506
  %v4599 = vunpack.c.h.b16 %v4506
  %v4600 = vunpack.c.l.b16 %v4507
  %v4601 = vunpack.c.h.b16 %v4507
  %v4602 = vunpack.c.l.b16 %v4508
  %v4603 = vunpack.c.h.b16 %v4508
  %v4604 = vunpack.c.l.b16 %v4509
  %v4605 = vunpack.c.h.b16 %v4509
  %v4606 = vpack.c.b16 %v4542, %v4542
  %v4607 = vpack.c.b16 %v4543, %v4543
  %v4608 = vpack.c.b16 %v4544, %v4544
  %v4609 = vpack.c.b16 %v4545, %v4545
  %v4610 = vpack.c.b16 %v4546, %v4546
  %v4611 = vpack.c.b16 %v4547, %v4547
  %v4612 = vpack.c.b16 %v4548, %v4548
  %v4613 = vpack.c.b16 %v4549, %v4549
  %v4614 = vpack.c.b16 %v4550, %v4550
  %v4615 = vpack.c.b16 %v4551, %v4551
  %v4616 = vpack.c.b16 %v4552, %v4552
  %v4617 = vpack.c.b16 %v4553, %v4553
  %v4618 = vpack.c.b16 %v4554, %v4554
  %v4619 = vpack.c.b16 %v4555, %v4555
  %v4620 = vpack.c.b16 %v4556, %v4556
  %v4621 = vpack.c.b16 %v4557, %v4557
  %v4622 = vpack.c.b16 %v4558, %v4558
  %v4623 = vpack.c.b16 %v4559, %v4559
  %v4624 = vpack.c.b16 %v4560, %v4560
  %v4625 = vpack.c.b16 %v4561, %v4561
  %v4626 = vpack.c.b16 %v4562, %v4562
  %v4627 = vpack.c.b16 %v4563, %v4563
  %v4628 = vpack.c.b16 %v4564, %v4564
  %v4629 = vpack.c.b16 %v4565, %v4565
  %v4630 = vpack.c.b16 %v4566, %v4566
  %v4631 = vpack.c.b16 %v4567, %v4567
  %v4632 = vpack.c.b16 %v4568, %v4568
  %v4633 = vpack.c.b16 %v4569, %v4569
  %v4634 = vpack.c.b16 %v4570, %v4570
  %v4635 = vpack.c.b16 %v4571, %v4571
  %v4636 = vpack.c.b16 %v4572, %v4572
  %v4637 = vpack.c.b16 %v4573, %v4573
  %v4638 = vpack.c.b16 %v4574, %v4574
  %v4639 = vpack.c.b16 %v4575, %v4575
  %v4640 = vpack.c.b16 %v4576, %v4576
  %v4641 = vpack.c.b16 %v4577, %v4577
  %v4642 = vpack.c.b16 %v4578, %v4578
  %v4643 = vpack.c.b16 %v4579, %v4579
  %v4644 = vpack.c.b16 %v4580, %v4580
  %v4645 = vpack.c.b16 %v4581, %v4581
  %v4646 = vpack.c.b16 %v4582, %v4582
  %v4647 = vpack.c.b16 %v4583, %v4583
  %v4648 = vpack.c.b16 %v4584, %v4584
  %v4649 = vpack.c.b16 %v4585, %v4585
  %v4650 = vpack.c.b16 %v4586, %v4586
  %v4651 = vpack.c.b16 %v4587, %v4587
  %v4652 = vpack.c.b16 %v4588, %v4588
  %v4653 = vpack.c.b16 %v4589, %v4589
  %v4654 = vpack.c.b16 %v4590, %v4590
  %v4655 = vpack.c.b16 %v4591, %v4591
  %v4656 = vpack.c.b16 %v4592, %v4592
  %v4657 = vpack.c.b16 %v4593, %v4593
  %v4658 = vpack.c.b16 %v4594, %v4594
  %v4659 = vpack.c.b16 %v4595, %v4595
  %v4660 = vpack.c.b16 %v4596, %v4596
  %v4661 = vpack.c.b16 %v4597, %v4597
  %v4662 = vpack.c.b16 %v4598, %v4598
  %v4663 = vpack.c.b16 %v4599, %v4599
  %v4664 = vpack.c.b16 %v4600, %v4600
  %v4665 = vpack.c.b16 %v4601, %v4601
  %v4666 = vpack.c.b16 %v4602, %v4602
  %v4667 = vpack.c.b16 %v4603, %v4603
  %v4668 = vpack.c.b16 %v4604, %v4604
  %v4669 = vpack.c.b16 %v4605, %v4605
  %4734 = vst [vmem:[%s4] sm:$0xf] %v4606
  %4735 = vst [vmem:[%s4 + $0x4] sm:$0xf] %v4607
  %4736 = vst [vmem:[%s4 + $0x8] sm:$0xf] %v4608
  %4737 = vst [vmem:[%s4 + $0xc] sm:$0xf] %v4609
  %4738 = vst [vmem:[%s4 + $0x10] sm:$0xf] %v4610
  %4739 = vst [vmem:[%s4 + $0x14] sm:$0xf] %v4611
  %4740 = vst [vmem:[%s4 + $0x18] sm:$0xf] %v4612
  %4741 = vst [vmem:[%s4 + $0x1c] sm:$0xf] %v4613
  %4742 = vst [vmem:[%s4 + $0x20] sm:$0xf] %v4614
  %4743 = vst [vmem:[%s4 + $0x24] sm:$0xf] %v4615
  %4744 = vst [vmem:[%s4 + $0x28] sm:$0xf] %v4616
  %4745 = vst [vmem:[%s4 + $0x2c] sm:$0xf] %v4617
  %4746 = vst [vmem:[%s4 + $0x30] sm:$0xf] %v4618
  %4747 = vst [vmem:[%s4 + $0x34] sm:$0xf] %v4619
  %4748 = vst [vmem:[%s4 + $0x38] sm:$0xf] %v4620
  %4749 = vst [vmem:[%s4 + $0x3c] sm:$0xf] %v4621
  %4750 = vst [vmem:[%s4 + $0x40] sm:$0xf] %v4622
  %4751 = vst [vmem:[%s4 + $0x44] sm:$0xf] %v4623
  %4752 = vst [vmem:[%s4 + $0x48] sm:$0xf] %v4624
  %4753 = vst [vmem:[%s4 + $0x4c] sm:$0xf] %v4625
  %4754 = vst [vmem:[%s4 + $0x50] sm:$0xf] %v4626
  %4755 = vst [vmem:[%s4 + $0x54] sm:$0xf] %v4627
  %4756 = vst [vmem:[%s4 + $0x58] sm:$0xf] %v4628
  %4757 = vst [vmem:[%s4 + $0x5c] sm:$0xf] %v4629
  %4758 = vst [vmem:[%s4 + $0x60] sm:$0xf] %v4630
  %4759 = vst [vmem:[%s4 + $0x64] sm:$0xf] %v4631
  %4760 = vst [vmem:[%s4 + $0x68] sm:$0xf] %v4632
  %4761 = vst [vmem:[%s4 + $0x6c] sm:$0xf] %v4633
  %4762 = vst [vmem:[%s4 + $0x70] sm:$0xf] %v4634
  %4763 = vst [vmem:[%s4 + $0x74] sm:$0xf] %v4635
  %4764 = vst [vmem:[%s4 + $0x78] sm:$0xf] %v4636
  %4765 = vst [vmem:[%s4 + $0x7c] sm:$0xf] %v4637
  %4766 = vst [vmem:[%s4 + $0x80] sm:$0xf] %v4638
  %4767 = vst [vmem:[%s4 + $0x84] sm:$0xf] %v4639
  %4768 = vst [vmem:[%s4 + $0x88] sm:$0xf] %v4640
  %4769 = vst [vmem:[%s4 + $0x8c] sm:$0xf] %v4641
  %4770 = vst [vmem:[%s4 + $0x90] sm:$0xf] %v4642
  %4771 = vst [vmem:[%s4 + $0x94] sm:$0xf] %v4643
  %4772 = vst [vmem:[%s4 + $0x98] sm:$0xf] %v4644
  %4773 = vst [vmem:[%s4 + $0x9c] sm:$0xf] %v4645
  %4774 = vst [vmem:[%s4 + $0xa0] sm:$0xf] %v4646
  %4775 = vst [vmem:[%s4 + $0xa4] sm:$0xf] %v4647
  %4776 = vst [vmem:[%s4 + $0xa8] sm:$0xf] %v4648
  %4777 = vst [vmem:[%s4 + $0xac] sm:$0xf] %v4649
  %4778 = vst [vmem:[%s4 + $0xb0] sm:$0xf] %v4650
  %4779 = vst [vmem:[%s4 + $0xb4] sm:$0xf] %v4651
  %4780 = vst [vmem:[%s4 + $0xb8] sm:$0xf] %v4652
  %4781 = vst [vmem:[%s4 + $0xbc] sm:$0xf] %v4653
  %4782 = vst [vmem:[%s4 + $0xc0] sm:$0xf] %v4654
  %4783 = vst [vmem:[%s4 + $0xc4] sm:$0xf] %v4655
  %4784 = vst [vmem:[%s4 + $0xc8] sm:$0xf] %v4656
  %4785 = vst [vmem:[%s4 + $0xcc] sm:$0xf] %v4657
  %4786 = vst [vmem:[%s4 + $0xd0] sm:$0xf] %v4658
  %4787 = vst [vmem:[%s4 + $0xd4] sm:$0xf] %v4659
  %4788 = vst [vmem:[%s4 + $0xd8] sm:$0xf] %v4660
  %4789 = vst [vmem:[%s4 + $0xdc] sm:$0xf] %v4661
  %4790 = vst [vmem:[%s4 + $0xe0] sm:$0xf] %v4662
  %4791 = vst [vmem:[%s4 + $0xe4] sm:$0xf] %v4663
  %4792 = vst [vmem:[%s4 + $0xe8] sm:$0xf] %v4664
  %4793 = vst [vmem:[%s4 + $0xec] sm:$0xf] %v4665
  %4794 = vst [vmem:[%s4 + $0xf0] sm:$0xf] %v4666
  %4795 = vst [vmem:[%s4 + $0xf4] sm:$0xf] %v4667
  %4796 = vst [vmem:[%s4 + $0xf8] sm:$0xf] %v4668
  %4797 = vst [vmem:[%s4 + $0xfc] sm:$0xf] %v4669
  // Predicated region
  $region18: #{efficientnetv2l_forward.11} parent=0 // pred_check
    _
  $region19: #{efficientnetv2l_forward.11} parent=0 // pred_check_branch
    %4799 = sbr.rel (0) target = $region21
  $region20: #{efficientnetv2l_forward.11} parent=0 // pred_region
    _
  $region21: #{efficientnetv2l_forward.11} parent=0 // pred_fallthru
    _
  // Predicated region
  $region22: #{efficientnetv2l_forward.11} parent=0 // pred_check
    _
  $region23: #{efficientnetv2l_forward.11} parent=0 // pred_check_branch
    %4801 = sbr.rel (0) target = $region25
  $region24: #{efficientnetv2l_forward.11} parent=0 // pred_region
    _
  $region25: #{efficientnetv2l_forward.11} parent=0 // pred_fallthru
    _

// kernel: efficientnetv2l_forward.13
$region0: #{efficientnetv2l_forward.13}
  #allocation0 [shape = 'u32[]', space=smem, size = 0x4, offset = 0x4, fixed_abs, tag = 'smem constant byte address 0x4 - core index']
  #allocation1 [shape = 'u32[144,128]{1,0:T(1,128)}', space=vmem, size = 0x12000, scoped, tag = 'internal scratch']
  %s0 = inlined_call_operand.vmem [shape: bf16[128,128], index: 0, kind: input, shape index: {}]
  %s1 = inlined_call_operand.vmem [shape: bf16[128,128], index: 1, kind: input, shape index: {}]
  %s2 = inlined_call_operand.vmem [shape: f32[1,128], index: 2, kind: input, shape index: {}]
  %s3 = inlined_call_operand.vmem [shape: bf16[128,128], index: 3, kind: output, shape index: {}]
  %s4 = sld [smem:[#allocation0]]
  $region22: #{efficientnetv2l_forward.13} parent=0
    _
  %s6 = ssub.s32 1, %s4
  %s7 = scalar_select 0, %s6, %s4
  // Predicated region
  $region2: #{efficientnetv2l_forward.13} parent=0 // pred_check
    _
  $region3: #{efficientnetv2l_forward.13} parent=0 // pred_check_branch
    %9 = sbr.rel (0) target = $region5
  $region4: #{efficientnetv2l_forward.13} parent=0 // pred_region
    _
  $region5: #{efficientnetv2l_forward.13} parent=0 // pred_fallthru
    _
  // Predicated region
  $region6: #{efficientnetv2l_forward.13} parent=0 // pred_check
    _
  $region7: #{efficientnetv2l_forward.13} parent=0 // pred_check_branch
    %11 = sbr.rel (0) target = $region9
  $region8: #{efficientnetv2l_forward.13} parent=0 // pred_region
    _
  $region9: #{efficientnetv2l_forward.13} parent=0 // pred_fallthru
    _
  // Predicated region
  $region10: #{efficientnetv2l_forward.13} parent=0 // pred_check
    _
  $region11: #{efficientnetv2l_forward.13} parent=0 // pred_check_branch
    %13 = sbr.rel (0) target = $region13
  $region12: #{efficientnetv2l_forward.13} parent=0 // pred_region
    _
  $region13: #{efficientnetv2l_forward.13} parent=0 // pred_fallthru
    _
  %v15 = vld [vmem:[%s0] sm:$0xf]
  %v16 = vld [vmem:[%s0 + $0x4] sm:$0xf]
  %v17 = vld [vmem:[%s0 + $0x8] sm:$0xf]
  %v18 = vld [vmem:[%s0 + $0xc] sm:$0xf]
  %v19 = vld [vmem:[%s0 + $0x10] sm:$0xf]
  %v20 = vld [vmem:[%s0 + $0x14] sm:$0xf]
  %v21 = vld [vmem:[%s0 + $0x18] sm:$0xf]
  %v22 = vld [vmem:[%s0 + $0x1c] sm:$0xf]
  %v23 = vld [vmem:[%s0 + $0x20] sm:$0xf]
  %v24 = vld [vmem:[%s0 + $0x24] sm:$0xf]
  %v25 = vld [vmem:[%s0 + $0x28] sm:$0xf]
  %v26 = vld [vmem:[%s0 + $0x2c] sm:$0xf]
  %v27 = vld [vmem:[%s0 + $0x30] sm:$0xf]
  %v28 = vld [vmem:[%s0 + $0x34] sm:$0xf]
  %v29 = vld [vmem:[%s0 + $0x38] sm:$0xf]
  %v30 = vld [vmem:[%s0 + $0x3c] sm:$0xf]
  %v31 = vld [vmem:[%s1] sm:$0xf]
  %v32 = vld [vmem:[%s1 + $0x4] sm:$0xf]
  %v33 = vld [vmem:[%s1 + $0x8] sm:$0xf]
  %v34 = vld [vmem:[%s1 + $0xc] sm:$0xf]
  %v35 = vld [vmem:[%s1 + $0x10] sm:$0xf]
  %v36 = vld [vmem:[%s1 + $0x14] sm:$0xf]
  %v37 = vld [vmem:[%s1 + $0x18] sm:$0xf]
  %v38 = vld [vmem:[%s1 + $0x1c] sm:$0xf]
  %v39 = vld [vmem:[%s1 + $0x20] sm:$0xf]
  %v40 = vld [vmem:[%s1 + $0x24] sm:$0xf]
  %v41 = vld [vmem:[%s1 + $0x28] sm:$0xf]
  %v42 = vld [vmem:[%s1 + $0x2c] sm:$0xf]
  %v43 = vld [vmem:[%s1 + $0x30] sm:$0xf]
  %v44 = vld [vmem:[%s1 + $0x34] sm:$0xf]
  %v45 = vld [vmem:[%s1 + $0x38] sm:$0xf]
  %v46 = vld [vmem:[%s1 + $0x3c] sm:$0xf]
  %v47 = vld [vmem:[%s2] sm:$0x1]
  %v49 = vlaneseq
  %v50 = vshrl.u32 %v49, 7
  %v51 = vsub.s32 0, %v50
  %v52 = vrot.slane %v47, %v51
  %v70 = vunpack.c.l.b16 %v15
  %v71 = vunpack.c.l.b16 %v16
  %v72 = vunpack.c.l.b16 %v17
  %v73 = vunpack.c.l.b16 %v18
  %v74 = vunpack.c.l.b16 %v19
  %v75 = vunpack.c.l.b16 %v20
  %v76 = vunpack.c.l.b16 %v21
  %v77 = vunpack.c.l.b16 %v22
  %v78 = vunpack.c.l.b16 %v23
  %v79 = vunpack.c.l.b16 %v24
  %v80 = vunpack.c.l.b16 %v25
  %v81 = vunpack.c.l.b16 %v26
  %v82 = vunpack.c.l.b16 %v27
  %v83 = vunpack.c.l.b16 %v28
  %v84 = vunpack.c.l.b16 %v29
  %v85 = vunpack.c.l.b16 %v30
  %v86 = vpack.c.b16 %v71, %v70
  %v87 = vpack.c.b16 %v73, %v72
  %v88 = vpack.c.b16 %v75, %v74
  %v89 = vpack.c.b16 %v77, %v76
  %v90 = vpack.c.b16 %v79, %v78
  %v91 = vpack.c.b16 %v81, %v80
  %v92 = vpack.c.b16 %v83, %v82
  %v93 = vpack.c.b16 %v85, %v84
  %v118 = vunpack.c.l.b16 %v31
  %v119 = vunpack.c.l.b16 %v32
  %v120 = vunpack.c.l.b16 %v33
  %v121 = vunpack.c.l.b16 %v34
  %v122 = vunpack.c.l.b16 %v35
  %v123 = vunpack.c.l.b16 %v36
  %v124 = vunpack.c.l.b16 %v37
  %v125 = vunpack.c.l.b16 %v38
  %v126 = vunpack.c.l.b16 %v39
  %v127 = vunpack.c.l.b16 %v40
  %v128 = vunpack.c.l.b16 %v41
  %v129 = vunpack.c.l.b16 %v42
  %v130 = vunpack.c.l.b16 %v43
  %v131 = vunpack.c.l.b16 %v44
  %v132 = vunpack.c.l.b16 %v45
  %v133 = vunpack.c.l.b16 %v46
  %v134 = vpack.c.b16 %v119, %v118
  %v135 = vpack.c.b16 %v121, %v120
  %v136 = vpack.c.b16 %v123, %v122
  %v137 = vpack.c.b16 %v125, %v124
  %v138 = vpack.c.b16 %v127, %v126
  %v139 = vpack.c.b16 %v129, %v128
  %v140 = vpack.c.b16 %v131, %v130
  %v141 = vpack.c.b16 %v133, %v132
  %150 = vmatprep.subr.bf16.mxu0 0
  %151 = vmatpush1.bf16.msra.mxu0 %v134
  %152 = vmatprep.subr.bf16.mxu0 0
  %153 = vmatpush1.bf16.msra.mxu0 %v135
  %154 = vmatprep.subr.bf16.mxu0 0
  %155 = vmatpush1.bf16.msra.mxu0 %v136
  %156 = vmatprep.subr.bf16.mxu0 0
  %157 = vmatpush1.bf16.msra.mxu0 %v137
  %158 = vmatprep.subr.bf16.mxu0 0
  %159 = vmatpush1.bf16.msra.mxu0 %v138
  %160 = vmatprep.subr.bf16.mxu0 0
  %161 = vmatpush1.bf16.msra.mxu0 %v139
  %162 = vmatprep.subr.bf16.mxu0 0
  %163 = vmatpush1.bf16.msra.mxu0 %v140
  %164 = vmatprep.subr.bf16.mxu0 0
  %165 = vmatpush1.bf16.msra.mxu0 %v141
  %166 = vmatprep.subr.bf16.mxu0 0
  %167 = vmatpush1.bf16.msra.mxu0 0
  %168 = vmatprep.subr.bf16.mxu0 0
  %169 = vmatpush1.bf16.msra.mxu0 0
  %170 = vmatprep.subr.bf16.mxu0 0
  %171 = vmatpush1.bf16.msra.mxu0 0
  %172 = vmatprep.subr.bf16.mxu0 0
  %173 = vmatpush1.bf16.msra.mxu0 0
  %174 = vmatprep.subr.bf16.mxu0 0
  %175 = vmatpush1.bf16.msra.mxu0 0
  %176 = vmatprep.subr.bf16.mxu0 0
  %177 = vmatpush1.bf16.msra.mxu0 0
  %178 = vmatprep.subr.bf16.mxu0 0
  %179 = vmatpush1.bf16.msra.mxu0 0
  %180 = vmatprep.subr.bf16.mxu0 0
  %181 = vmatpush1.bf16.msra.mxu0 0
  %182 = vmatprep.mubr.bf16.mxu0 0
  %183 = vmatmul.mubr.bf16.gmra.mrb[0].mxu0 %v86
  %v184 = vpop.f32.mrb[0].mxu0
  %v185 = vadd.f32 %v52, %v184
  %v186 = vpop.f32.mrb[0].mxu0
  %v187 = vpop.f32.mrb[0].mxu0
  %v188 = vadd.f32 %v52, %v187
  %v189 = vpop.f32.mrb[0].mxu0
  %190 = vmatprep.mubr.bf16.mxu0 0
  %191 = vmatmul.mubr.bf16.gmra.mrb[0].mxu0 %v87
  %v192 = vpop.f32.mrb[0].mxu0
  %v193 = vadd.f32 %v52, %v192
  %v194 = vpop.f32.mrb[0].mxu0
  %v195 = vpop.f32.mrb[0].mxu0
  %v196 = vadd.f32 %v52, %v195
  %v197 = vpop.f32.mrb[0].mxu0
  %198 = vmatprep.mubr.bf16.mxu0 0
  %199 = vmatmul.mubr.bf16.gmra.mrb[0].mxu0 %v88
  %v200 = vpop.f32.mrb[0].mxu0
  %v201 = vadd.f32 %v52, %v200
  %v202 = vpop.f32.mrb[0].mxu0
  %v203 = vpop.f32.mrb[0].mxu0
  %v204 = vadd.f32 %v52, %v203
  %v205 = vpop.f32.mrb[0].mxu0
  %206 = vmatprep.mubr.bf16.mxu0 0
  %207 = vmatmul.mubr.bf16.gmra.mrb[0].mxu0 %v89
  %v208 = vpop.f32.mrb[0].mxu0
  %v209 = vadd.f32 %v52, %v208
  %v210 = vpop.f32.mrb[0].mxu0
  %v211 = vpop.f32.mrb[0].mxu0
  %v212 = vadd.f32 %v52, %v211
  %v213 = vpop.f32.mrb[0].mxu0
  %214 = vmatprep.mubr.bf16.mxu0 0
  %215 = vmatmul.mubr.bf16.gmra.mrb[0].mxu0 %v90
  %v216 = vpop.f32.mrb[0].mxu0
  %v217 = vadd.f32 %v52, %v216
  %v218 = vpop.f32.mrb[0].mxu0
  %v219 = vpop.f32.mrb[0].mxu0
  %v220 = vadd.f32 %v52, %v219
  %v221 = vpop.f32.mrb[0].mxu0
  %222 = vmatprep.mubr.bf16.mxu0 0
  %223 = vmatmul.mubr.bf16.gmra.mrb[0].mxu0 %v91
  %v224 = vpop.f32.mrb[0].mxu0
  %v225 = vadd.f32 %v52, %v224
  %v226 = vpop.f32.mrb[0].mxu0
  %v227 = vpop.f32.mrb[0].mxu0
  %v228 = vadd.f32 %v52, %v227
  %v229 = vpop.f32.mrb[0].mxu0
  %230 = vmatprep.mubr.bf16.mxu0 0
  %231 = vmatmul.mubr.bf16.gmra.mrb[0].mxu0 %v92
  %v232 = vpop.f32.mrb[0].mxu0
  %v233 = vadd.f32 %v52, %v232
  %v234 = vpop.f32.mrb[0].mxu0
  %v235 = vpop.f32.mrb[0].mxu0
  %v236 = vadd.f32 %v52, %v235
  %v237 = vpop.f32.mrb[0].mxu0
  %238 = vmatprep.mubr.bf16.mxu0 0
  %239 = vmatmul.mubr.bf16.gmra.mrb[0].mxu0 %v93
  %v240 = vpop.f32.mrb[0].mxu0
  %v241 = vadd.f32 %v52, %v240
  %v242 = vpop.f32.mrb[0].mxu0
  %v243 = vpop.f32.mrb[0].mxu0
  %v244 = vadd.f32 %v52, %v243
  %v245 = vpop.f32.mrb[0].mxu0
  %246 = vdwg.mxu0
  %v247 = vpack.c.bf16 %v188, %v185
  %v248 = vpack.c.bf16 %v196, %v193
  %v249 = vpack.c.bf16 %v204, %v201
  %v250 = vpack.c.bf16 %v212, %v209
  %v251 = vpack.c.bf16 %v220, %v217
  %v252 = vpack.c.bf16 %v228, %v225
  %v253 = vpack.c.bf16 %v236, %v233
  %v254 = vpack.c.bf16 %v244, %v241
  %v263 = vunpack.c.l.b16 %v247
  %v264 = vunpack.c.h.b16 %v247
  %v265 = vunpack.c.l.b16 %v248
  %v266 = vunpack.c.h.b16 %v248
  %v267 = vunpack.c.l.b16 %v249
  %v268 = vunpack.c.h.b16 %v249
  %v269 = vunpack.c.l.b16 %v250
  %v270 = vunpack.c.h.b16 %v250
  %v271 = vunpack.c.l.b16 %v251
  %v272 = vunpack.c.h.b16 %v251
  %v273 = vunpack.c.l.b16 %v252
  %v274 = vunpack.c.h.b16 %v252
  %v275 = vunpack.c.l.b16 %v253
  %v276 = vunpack.c.h.b16 %v253
  %v277 = vunpack.c.l.b16 %v254
  %v278 = vunpack.c.h.b16 %v254
  %v279 = vpack.c.b16 %v263, %v263
  %v280 = vpack.c.b16 %v264, %v264
  %v281 = vpack.c.b16 %v265, %v265
  %v282 = vpack.c.b16 %v266, %v266
  %v283 = vpack.c.b16 %v267, %v267
  %v284 = vpack.c.b16 %v268, %v268
  %v285 = vpack.c.b16 %v269, %v269
  %v286 = vpack.c.b16 %v270, %v270
  %v287 = vpack.c.b16 %v271, %v271
  %v288 = vpack.c.b16 %v272, %v272
  %v289 = vpack.c.b16 %v273, %v273
  %v290 = vpack.c.b16 %v274, %v274
  %v291 = vpack.c.b16 %v275, %v275
  %v292 = vpack.c.b16 %v276, %v276
  %v293 = vpack.c.b16 %v277, %v277
  %v294 = vpack.c.b16 %v278, %v278
  %311 = vst [vmem:[%s3] sm:$0xf] %v279
  %312 = vst [vmem:[%s3 + $0x4] sm:$0xf] %v280
  %313 = vst [vmem:[%s3 + $0x8] sm:$0xf] %v281
  %314 = vst [vmem:[%s3 + $0xc] sm:$0xf] %v282
  %315 = vst [vmem:[%s3 + $0x10] sm:$0xf] %v283
  %316 = vst [vmem:[%s3 + $0x14] sm:$0xf] %v284
  %317 = vst [vmem:[%s3 + $0x18] sm:$0xf] %v285
  %318 = vst [vmem:[%s3 + $0x1c] sm:$0xf] %v286
  %319 = vst [vmem:[%s3 + $0x20] sm:$0xf] %v287
  %320 = vst [vmem:[%s3 + $0x24] sm:$0xf] %v288
  %321 = vst [vmem:[%s3 + $0x28] sm:$0xf] %v289
  %322 = vst [vmem:[%s3 + $0x2c] sm:$0xf] %v290
  %323 = vst [vmem:[%s3 + $0x30] sm:$0xf] %v291
  %324 = vst [vmem:[%s3 + $0x34] sm:$0xf] %v292
  %325 = vst [vmem:[%s3 + $0x38] sm:$0xf] %v293
  %326 = vst [vmem:[%s3 + $0x3c] sm:$0xf] %v294
  // Predicated region
  $region14: #{efficientnetv2l_forward.13} parent=0 // pred_check
    _
  $region15: #{efficientnetv2l_forward.13} parent=0 // pred_check_branch
    %328 = sbr.rel (0) target = $region17
  $region16: #{efficientnetv2l_forward.13} parent=0 // pred_region
    _
  $region17: #{efficientnetv2l_forward.13} parent=0 // pred_fallthru
    _
  // Predicated region
  $region18: #{efficientnetv2l_forward.13} parent=0 // pred_check
    _
  $region19: #{efficientnetv2l_forward.13} parent=0 // pred_check_branch
    %330 = sbr.rel (0) target = $region21
  $region20: #{efficientnetv2l_forward.13} parent=0 // pred_region
    _
  $region21: #{efficientnetv2l_forward.13} parent=0 // pred_fallthru
    _

// kernel: efficientnetv2l_forward.12
$region0: #{efficientnetv2l_forward.12}
  #allocation0 [shape = 'u32[]', space=smem, size = 0x4, offset = 0x4, fixed_abs, tag = 'smem constant byte address 0x4 - core index']
  #allocation1 [shape = 'u32[144,128]{1,0:T(1,128)}', space=vmem, size = 0x12000, scoped, tag = 'internal scratch']
  %s0 = inlined_call_operand.vmem [shape: bf16[128,1152], index: 0, kind: input, shape index: {}]
  %s1 = inlined_call_operand.vmem [shape: bf16[1152,128], index: 1, kind: input, shape index: {}]
  %s2 = inlined_call_operand.vmem [shape: f32[1,128], index: 2, kind: input, shape index: {}]
  %s3 = inlined_call_operand.vmem [shape: bf16[128,128], index: 3, kind: output, shape index: {}]
  %s4 = sld [smem:[#allocation0]]
  $region22: #{efficientnetv2l_forward.12} parent=0
    _
  %s6 = ssub.s32 1, %s4
  %s7 = scalar_select 0, %s6, %s4
  // Predicated region
  $region2: #{efficientnetv2l_forward.12} parent=0 // pred_check
    _
  $region3: #{efficientnetv2l_forward.12} parent=0 // pred_check_branch
    %9 = sbr.rel (0) target = $region5
  $region4: #{efficientnetv2l_forward.12} parent=0 // pred_region
    _
  $region5: #{efficientnetv2l_forward.12} parent=0 // pred_fallthru
    _
  // Predicated region
  $region6: #{efficientnetv2l_forward.12} parent=0 // pred_check
    _
  $region7: #{efficientnetv2l_forward.12} parent=0 // pred_check_branch
    %11 = sbr.rel (0) target = $region9
  $region8: #{efficientnetv2l_forward.12} parent=0 // pred_region
    _
  $region9: #{efficientnetv2l_forward.12} parent=0 // pred_fallthru
    _
  // Predicated region
  $region10: #{efficientnetv2l_forward.12} parent=0 // pred_check
    _
  $region11: #{efficientnetv2l_forward.12} parent=0 // pred_check_branch
    %13 = sbr.rel (0) target = $region13
  $region12: #{efficientnetv2l_forward.12} parent=0 // pred_region
    _
  $region13: #{efficientnetv2l_forward.12} parent=0 // pred_fallthru
    _
  %v15 = vld [vmem:[%s0] sm:$0xff]
  %v16 = vld [vmem:[%s0 + $0x8] sm:$0xff]
  %v17 = vld [vmem:[%s0 + $0x10] sm:$0xff]
  %v18 = vld [vmem:[%s0 + $0x18] sm:$0xff]
  %v19 = vld [vmem:[%s0 + $0x20] sm:$0xf]
  %v20 = vld [vmem:[%s0 + $0x24] sm:$0xff]
  %v21 = vld [vmem:[%s0 + $0x2c] sm:$0xff]
  %v22 = vld [vmem:[%s0 + $0x34] sm:$0xff]
  %v23 = vld [vmem:[%s0 + $0x3c] sm:$0xff]
  %v24 = vld [vmem:[%s0 + $0x44] sm:$0xf]
  %v25 = vld [vmem:[%s0 + $0x48] sm:$0xff]
  %v26 = vld [vmem:[%s0 + $0x50] sm:$0xff]
  %v27 = vld [vmem:[%s0 + $0x58] sm:$0xff]
  %v28 = vld [vmem:[%s0 + $0x60] sm:$0xff]
  %v29 = vld [vmem:[%s0 + $0x68] sm:$0xf]
  %v30 = vld [vmem:[%s0 + $0x6c] sm:$0xff]
  %v31 = vld [vmem:[%s0 + $0x74] sm:$0xff]
  %v32 = vld [vmem:[%s0 + $0x7c] sm:$0xff]
  %v33 = vld [vmem:[%s0 + $0x84] sm:$0xff]
  %v34 = vld [vmem:[%s0 + $0x8c] sm:$0xf]
  %v35 = vld [vmem:[%s0 + $0x90] sm:$0xff]
  %v36 = vld [vmem:[%s0 + $0x98] sm:$0xff]
  %v37 = vld [vmem:[%s0 + $0xa0] sm:$0xff]
  %v38 = vld [vmem:[%s0 + $0xa8] sm:$0xff]
  %v39 = vld [vmem:[%s0 + $0xb0] sm:$0xf]
  %v40 = vld [vmem:[%s0 + $0xb4] sm:$0xff]
  %v41 = vld [vmem:[%s0 + $0xbc] sm:$0xff]
  %v42 = vld [vmem:[%s0 + $0xc4] sm:$0xff]
  %v43 = vld [vmem:[%s0 + $0xcc] sm:$0xff]
  %v44 = vld [vmem:[%s0 + $0xd4] sm:$0xf]
  %v45 = vld [vmem:[%s0 + $0xd8] sm:$0xff]
  %v46 = vld [vmem:[%s0 + $0xe0] sm:$0xff]
  %v47 = vld [vmem:[%s0 + $0xe8] sm:$0xff]
  %v48 = vld [vmem:[%s0 + $0xf0] sm:$0xff]
  %v49 = vld [vmem:[%s0 + $0xf8] sm:$0xf]
  %v50 = vld [vmem:[%s0 + $0xfc] sm:$0xff]
  %v51 = vld [vmem:[%s0 + $0x104] sm:$0xff]
  %v52 = vld [vmem:[%s0 + $0x10c] sm:$0xff]
  %v53 = vld [vmem:[%s0 + $0x114] sm:$0xff]
  %v54 = vld [vmem:[%s0 + $0x11c] sm:$0xf]
  %v55 = vld [vmem:[%s0 + $0x120] sm:$0xff]
  %v56 = vld [vmem:[%s0 + $0x128] sm:$0xff]
  %v57 = vld [vmem:[%s0 + $0x130] sm:$0xff]
  %v58 = vld [vmem:[%s0 + $0x138] sm:$0xff]
  %v59 = vld [vmem:[%s0 + $0x140] sm:$0xf]
  %v60 = vld [vmem:[%s0 + $0x144] sm:$0xff]
  %v61 = vld [vmem:[%s0 + $0x14c] sm:$0xff]
  %v62 = vld [vmem:[%s0 + $0x154] sm:$0xff]
  %v63 = vld [vmem:[%s0 + $0x15c] sm:$0xff]
  %v64 = vld [vmem:[%s0 + $0x164] sm:$0xf]
  %v65 = vld [vmem:[%s0 + $0x168] sm:$0xff]
  %v66 = vld [vmem:[%s0 + $0x170] sm:$0xff]
  %v67 = vld [vmem:[%s0 + $0x178] sm:$0xff]
  %v68 = vld [vmem:[%s0 + $0x180] sm:$0xff]
  %v69 = vld [vmem:[%s0 + $0x188] sm:$0xf]
  %v70 = vld [vmem:[%s0 + $0x18c] sm:$0xff]
  %v71 = vld [vmem:[%s0 + $0x194] sm:$0xff]
  %v72 = vld [vmem:[%s0 + $0x19c] sm:$0xff]
  %v73 = vld [vmem:[%s0 + $0x1a4] sm:$0xff]
  %v74 = vld [vmem:[%s0 + $0x1ac] sm:$0xf]
  %v75 = vld [vmem:[%s0 + $0x1b0] sm:$0xff]
  %v76 = vld [vmem:[%s0 + $0x1b8] sm:$0xff]
  %v77 = vld [vmem:[%s0 + $0x1c0] sm:$0xff]
  %v78 = vld [vmem:[%s0 + $0x1c8] sm:$0xff]
  %v79 = vld [vmem:[%s0 + $0x1d0] sm:$0xf]
  %v80 = vld [vmem:[%s0 + $0x1d4] sm:$0xff]
  %v81 = vld [vmem:[%s0 + $0x1dc] sm:$0xff]
  %v82 = vld [vmem:[%s0 + $0x1e4] sm:$0xff]
  %v83 = vld [vmem:[%s0 + $0x1ec] sm:$0xff]
  %v84 = vld [vmem:[%s0 + $0x1f4] sm:$0xf]
  %v85 = vld [vmem:[%s0 + $0x1f8] sm:$0xff]
  %v86 = vld [vmem:[%s0 + $0x200] sm:$0xff]
  %v87 = vld [vmem:[%s0 + $0x208] sm:$0xff]
  %v88 = vld [vmem:[%s0 + $0x210] sm:$0xff]
  %v89 = vld [vmem:[%s0 + $0x218] sm:$0xf]
  %v90 = vld [vmem:[%s0 + $0x21c] sm:$0xff]
  %v91 = vld [vmem:[%s0 + $0x224] sm:$0xff]
  %v92 = vld [vmem:[%s0 + $0x22c] sm:$0xff]
  %v93 = vld [vmem:[%s0 + $0x234] sm:$0xff]
  %v94 = vld [vmem:[%s0 + $0x23c] sm:$0xf]
  %v95 = vld [vmem:[%s1] sm:$0xf]
  %v96 = vld [vmem:[%s1 + $0x4] sm:$0xf]
  %v97 = vld [vmem:[%s1 + $0x8] sm:$0xf]
  %v98 = vld [vmem:[%s1 + $0xc] sm:$0xf]
  %v99 = vld [vmem:[%s1 + $0x10] sm:$0xf]
  %v100 = vld [vmem:[%s1 + $0x14] sm:$0xf]
  %v101 = vld [vmem:[%s1 + $0x18] sm:$0xf]
  %v102 = vld [vmem:[%s1 + $0x1c] sm:$0xf]
  %v103 = vld [vmem:[%s1 + $0x20] sm:$0xf]
  %v104 = vld [vmem:[%s1 + $0x24] sm:$0xf]
  %v105 = vld [vmem:[%s1 + $0x28] sm:$0xf]
  %v106 = vld [vmem:[%s1 + $0x2c] sm:$0xf]
  %v107 = vld [vmem:[%s1 + $0x30] sm:$0xf]
  %v108 = vld [vmem:[%s1 + $0x34] sm:$0xf]
  %v109 = vld [vmem:[%s1 + $0x38] sm:$0xf]
  %v110 = vld [vmem:[%s1 + $0x3c] sm:$0xf]
  %v111 = vld [vmem:[%s1 + $0x40] sm:$0xf]
  %v112 = vld [vmem:[%s1 + $0x44] sm:$0xf]
  %v113 = vld [vmem:[%s1 + $0x48] sm:$0xf]
  %v114 = vld [vmem:[%s1 + $0x4c] sm:$0xf]
  %v115 = vld [vmem:[%s1 + $0x50] sm:$0xf]
  %v116 = vld [vmem:[%s1 + $0x54] sm:$0xf]
  %v117 = vld [vmem:[%s1 + $0x58] sm:$0xf]
  %v118 = vld [vmem:[%s1 + $0x5c] sm:$0xf]
  %v119 = vld [vmem:[%s1 + $0x60] sm:$0xf]
  %v120 = vld [vmem:[%s1 + $0x64] sm:$0xf]
  %v121 = vld [vmem:[%s1 + $0x68] sm:$0xf]
  %v122 = vld [vmem:[%s1 + $0x6c] sm:$0xf]
  %v123 = vld [vmem:[%s1 + $0x70] sm:$0xf]
  %v124 = vld [vmem:[%s1 + $0x74] sm:$0xf]
  %v125 = vld [vmem:[%s1 + $0x78] sm:$0xf]
  %v126 = vld [vmem:[%s1 + $0x7c] sm:$0xf]
  %v127 = vld [vmem:[%s1 + $0x80] sm:$0xf]
  %v128 = vld [vmem:[%s1 + $0x84] sm:$0xf]
  %v129 = vld [vmem:[%s1 + $0x88] sm:$0xf]
  %v130 = vld [vmem:[%s1 + $0x8c] sm:$0xf]
  %v131 = vld [vmem:[%s1 + $0x90] sm:$0xf]
  %v132 = vld [vmem:[%s1 + $0x94] sm:$0xf]
  %v133 = vld [vmem:[%s1 + $0x98] sm:$0xf]
  %v134 = vld [vmem:[%s1 + $0x9c] sm:$0xf]
  %v135 = vld [vmem:[%s1 + $0xa0] sm:$0xf]
  %v136 = vld [vmem:[%s1 + $0xa4] sm:$0xf]
  %v137 = vld [vmem:[%s1 + $0xa8] sm:$0xf]
  %v138 = vld [vmem:[%s1 + $0xac] sm:$0xf]
  %v139 = vld [vmem:[%s1 + $0xb0] sm:$0xf]
  %v140 = vld [vmem:[%s1 + $0xb4] sm:$0xf]
  %v141 = vld [vmem:[%s1 + $0xb8] sm:$0xf]
  %v142 = vld [vmem:[%s1 + $0xbc] sm:$0xf]
  %v143 = vld [vmem:[%s1 + $0xc0] sm:$0xf]
  %v144 = vld [vmem:[%s1 + $0xc4] sm:$0xf]
  %v145 = vld [vmem:[%s1 + $0xc8] sm:$0xf]
  %v146 = vld [vmem:[%s1 + $0xcc] sm:$0xf]
  %v147 = vld [vmem:[%s1 + $0xd0] sm:$0xf]
  %v148 = vld [vmem:[%s1 + $0xd4] sm:$0xf]
  %v149 = vld [vmem:[%s1 + $0xd8] sm:$0xf]
  %v150 = vld [vmem:[%s1 + $0xdc] sm:$0xf]
  %v151 = vld [vmem:[%s1 + $0xe0] sm:$0xf]
  %v152 = vld [vmem:[%s1 + $0xe4] sm:$0xf]
  %v153 = vld [vmem:[%s1 + $0xe8] sm:$0xf]
  %v154 = vld [vmem:[%s1 + $0xec] sm:$0xf]
  %v155 = vld [vmem:[%s1 + $0xf0] sm:$0xf]
  %v156 = vld [vmem:[%s1 + $0xf4] sm:$0xf]
  %v157 = vld [vmem:[%s1 + $0xf8] sm:$0xf]
  %v158 = vld [vmem:[%s1 + $0xfc] sm:$0xf]
  %v159 = vld [vmem:[%s1 + $0x100] sm:$0xf]
  %v160 = vld [vmem:[%s1 + $0x104] sm:$0xf]
  %v161 = vld [vmem:[%s1 + $0x108] sm:$0xf]
  %v162 = vld [vmem:[%s1 + $0x10c] sm:$0xf]
  %v163 = vld [vmem:[%s1 + $0x110] sm:$0xf]
  %v164 = vld [vmem:[%s1 + $0x114] sm:$0xf]
  %v165 = vld [vmem:[%s1 + $0x118] sm:$0xf]
  %v166 = vld [vmem:[%s1 + $0x11c] sm:$0xf]
  %v167 = vld [vmem:[%s1 + $0x120] sm:$0xf]
  %v168 = vld [vmem:[%s1 + $0x124] sm:$0xf]
  %v169 = vld [vmem:[%s1 + $0x128] sm:$0xf]
  %v170 = vld [vmem:[%s1 + $0x12c] sm:$0xf]
  %v171 = vld [vmem:[%s1 + $0x130] sm:$0xf]
  %v172 = vld [vmem:[%s1 + $0x134] sm:$0xf]
  %v173 = vld [vmem:[%s1 + $0x138] sm:$0xf]
  %v174 = vld [vmem:[%s1 + $0x13c] sm:$0xf]
  %v175 = vld [vmem:[%s1 + $0x140] sm:$0xf]
  %v176 = vld [vmem:[%s1 + $0x144] sm:$0xf]
  %v177 = vld [vmem:[%s1 + $0x148] sm:$0xf]
  %v178 = vld [vmem:[%s1 + $0x14c] sm:$0xf]
  %v179 = vld [vmem:[%s1 + $0x150] sm:$0xf]
  %v180 = vld [vmem:[%s1 + $0x154] sm:$0xf]
  %v181 = vld [vmem:[%s1 + $0x158] sm:$0xf]
  %v182 = vld [vmem:[%s1 + $0x15c] sm:$0xf]
  %v183 = vld [vmem:[%s1 + $0x160] sm:$0xf]
  %v184 = vld [vmem:[%s1 + $0x164] sm:$0xf]
  %v185 = vld [vmem:[%s1 + $0x168] sm:$0xf]
  %v186 = vld [vmem:[%s1 + $0x16c] sm:$0xf]
  %v187 = vld [vmem:[%s1 + $0x170] sm:$0xf]
  %v188 = vld [vmem:[%s1 + $0x174] sm:$0xf]
  %v189 = vld [vmem:[%s1 + $0x178] sm:$0xf]
  %v190 = vld [vmem:[%s1 + $0x17c] sm:$0xf]
  %v191 = vld [vmem:[%s1 + $0x180] sm:$0xf]
  %v192 = vld [vmem:[%s1 + $0x184] sm:$0xf]
  %v193 = vld [vmem:[%s1 + $0x188] sm:$0xf]
  %v194 = vld [vmem:[%s1 + $0x18c] sm:$0xf]
  %v195 = vld [vmem:[%s1 + $0x190] sm:$0xf]
  %v196 = vld [vmem:[%s1 + $0x194] sm:$0xf]
  %v197 = vld [vmem:[%s1 + $0x198] sm:$0xf]
  %v198 = vld [vmem:[%s1 + $0x19c] sm:$0xf]
  %v199 = vld [vmem:[%s1 + $0x1a0] sm:$0xf]
  %v200 = vld [vmem:[%s1 + $0x1a4] sm:$0xf]
  %v201 = vld [vmem:[%s1 + $0x1a8] sm:$0xf]
  %v202 = vld [vmem:[%s1 + $0x1ac] sm:$0xf]
  %v203 = vld [vmem:[%s1 + $0x1b0] sm:$0xf]
  %v204 = vld [vmem:[%s1 + $0x1b4] sm:$0xf]
  %v205 = vld [vmem:[%s1 + $0x1b8] sm:$0xf]
  %v206 = vld [vmem:[%s1 + $0x1bc] sm:$0xf]
  %v207 = vld [vmem:[%s1 + $0x1c0] sm:$0xf]
  %v208 = vld [vmem:[%s1 + $0x1c4] sm:$0xf]
  %v209 = vld [vmem:[%s1 + $0x1c8] sm:$0xf]
  %v210 = vld [vmem:[%s1 + $0x1cc] sm:$0xf]
  %v211 = vld [vmem:[%s1 + $0x1d0] sm:$0xf]
  %v212 = vld [vmem:[%s1 + $0x1d4] sm:$0xf]
  %v213 = vld [vmem:[%s1 + $0x1d8] sm:$0xf]
  %v214 = vld [vmem:[%s1 + $0x1dc] sm:$0xf]
  %v215 = vld [vmem:[%s1 + $0x1e0] sm:$0xf]
  %v216 = vld [vmem:[%s1 + $0x1e4] sm:$0xf]
  %v217 = vld [vmem:[%s1 + $0x1e8] sm:$0xf]
  %v218 = vld [vmem:[%s1 + $0x1ec] sm:$0xf]
  %v219 = vld [vmem:[%s1 + $0x1f0] sm:$0xf]
  %v220 = vld [vmem:[%s1 + $0x1f4] sm:$0xf]
  %v221 = vld [vmem:[%s1 + $0x1f8] sm:$0xf]
  %v222 = vld [vmem:[%s1 + $0x1fc] sm:$0xf]
  %v223 = vld [vmem:[%s1 + $0x200] sm:$0xf]
  %v224 = vld [vmem:[%s1 + $0x204] sm:$0xf]
  %v225 = vld [vmem:[%s1 + $0x208] sm:$0xf]
  %v226 = vld [vmem:[%s1 + $0x20c] sm:$0xf]
  %v227 = vld [vmem:[%s1 + $0x210] sm:$0xf]
  %v228 = vld [vmem:[%s1 + $0x214] sm:$0xf]
  %v229 = vld [vmem:[%s1 + $0x218] sm:$0xf]
  %v230 = vld [vmem:[%s1 + $0x21c] sm:$0xf]
  %v231 = vld [vmem:[%s1 + $0x220] sm:$0xf]
  %v232 = vld [vmem:[%s1 + $0x224] sm:$0xf]
  %v233 = vld [vmem:[%s1 + $0x228] sm:$0xf]
  %v234 = vld [vmem:[%s1 + $0x22c] sm:$0xf]
  %v235 = vld [vmem:[%s1 + $0x230] sm:$0xf]
  %v236 = vld [vmem:[%s1 + $0x234] sm:$0xf]
  %v237 = vld [vmem:[%s1 + $0x238] sm:$0xf]
  %v238 = vld [vmem:[%s1 + $0x23c] sm:$0xf]
  %v239 = vld [vmem:[%s2] sm:$0x1]
  %v241 = vlaneseq
  %v242 = vshrl.u32 %v241, 7
  %v243 = vsub.s32 0, %v242
  %v244 = vrot.slane %v239, %v243
  %v326 = vunpack.c.l.b16 %v15
  %v327 = vunpack.c.h.b16 %v15
  %v328 = vunpack.c.l.b16 %v16
  %v329 = vunpack.c.h.b16 %v16
  %v330 = vunpack.c.l.b16 %v17
  %v331 = vunpack.c.h.b16 %v17
  %v332 = vunpack.c.l.b16 %v18
  %v333 = vunpack.c.h.b16 %v18
  %v334 = vunpack.c.l.b16 %v19
  %v335 = vunpack.c.l.b16 %v20
  %v336 = vunpack.c.h.b16 %v20
  %v337 = vunpack.c.l.b16 %v21
  %v338 = vunpack.c.h.b16 %v21
  %v339 = vunpack.c.l.b16 %v22
  %v340 = vunpack.c.h.b16 %v22
  %v341 = vunpack.c.l.b16 %v23
  %v342 = vunpack.c.h.b16 %v23
  %v343 = vunpack.c.l.b16 %v24
  %v344 = vunpack.c.l.b16 %v25
  %v345 = vunpack.c.h.b16 %v25
  %v346 = vunpack.c.l.b16 %v26
  %v347 = vunpack.c.h.b16 %v26
  %v348 = vunpack.c.l.b16 %v27
  %v349 = vunpack.c.h.b16 %v27
  %v350 = vunpack.c.l.b16 %v28
  %v351 = vunpack.c.h.b16 %v28
  %v352 = vunpack.c.l.b16 %v29
  %v353 = vunpack.c.l.b16 %v30
  %v354 = vunpack.c.h.b16 %v30
  %v355 = vunpack.c.l.b16 %v31
  %v356 = vunpack.c.h.b16 %v31
  %v357 = vunpack.c.l.b16 %v32
  %v358 = vunpack.c.h.b16 %v32
  %v359 = vunpack.c.l.b16 %v33
  %v360 = vunpack.c.h.b16 %v33
  %v361 = vunpack.c.l.b16 %v34
  %v362 = vunpack.c.l.b16 %v35
  %v363 = vunpack.c.h.b16 %v35
  %v364 = vunpack.c.l.b16 %v36
  %v365 = vunpack.c.h.b16 %v36
  %v366 = vunpack.c.l.b16 %v37
  %v367 = vunpack.c.h.b16 %v37
  %v368 = vunpack.c.l.b16 %v38
  %v369 = vunpack.c.h.b16 %v38
  %v370 = vunpack.c.l.b16 %v39
  %v371 = vunpack.c.l.b16 %v40
  %v372 = vunpack.c.h.b16 %v40
  %v373 = vunpack.c.l.b16 %v41
  %v374 = vunpack.c.h.b16 %v41
  %v375 = vunpack.c.l.b16 %v42
  %v376 = vunpack.c.h.b16 %v42
  %v377 = vunpack.c.l.b16 %v43
  %v378 = vunpack.c.h.b16 %v43
  %v379 = vunpack.c.l.b16 %v44
  %v380 = vunpack.c.l.b16 %v45
  %v381 = vunpack.c.h.b16 %v45
  %v382 = vunpack.c.l.b16 %v46
  %v383 = vunpack.c.h.b16 %v46
  %v384 = vunpack.c.l.b16 %v47
  %v385 = vunpack.c.h.b16 %v47
  %v386 = vunpack.c.l.b16 %v48
  %v387 = vunpack.c.h.b16 %v48
  %v388 = vunpack.c.l.b16 %v49
  %v389 = vunpack.c.l.b16 %v50
  %v390 = vunpack.c.h.b16 %v50
  %v391 = vunpack.c.l.b16 %v51
  %v392 = vunpack.c.h.b16 %v51
  %v393 = vunpack.c.l.b16 %v52
  %v394 = vunpack.c.h.b16 %v52
  %v395 = vunpack.c.l.b16 %v53
  %v396 = vunpack.c.h.b16 %v53
  %v397 = vunpack.c.l.b16 %v54
  %v398 = vunpack.c.l.b16 %v55
  %v399 = vunpack.c.h.b16 %v55
  %v400 = vunpack.c.l.b16 %v56
  %v401 = vunpack.c.h.b16 %v56
  %v402 = vunpack.c.l.b16 %v57
  %v403 = vunpack.c.h.b16 %v57
  %v404 = vunpack.c.l.b16 %v58
  %v405 = vunpack.c.h.b16 %v58
  %v406 = vunpack.c.l.b16 %v59
  %v407 = vunpack.c.l.b16 %v60
  %v408 = vunpack.c.h.b16 %v60
  %v409 = vunpack.c.l.b16 %v61
  %v410 = vunpack.c.h.b16 %v61
  %v411 = vunpack.c.l.b16 %v62
  %v412 = vunpack.c.h.b16 %v62
  %v413 = vunpack.c.l.b16 %v63
  %v414 = vunpack.c.h.b16 %v63
  %v415 = vunpack.c.l.b16 %v64
  %v416 = vunpack.c.l.b16 %v65
  %v417 = vunpack.c.h.b16 %v65
  %v418 = vunpack.c.l.b16 %v66
  %v419 = vunpack.c.h.b16 %v66
  %v420 = vunpack.c.l.b16 %v67
  %v421 = vunpack.c.h.b16 %v67
  %v422 = vunpack.c.l.b16 %v68
  %v423 = vunpack.c.h.b16 %v68
  %v424 = vunpack.c.l.b16 %v69
  %v425 = vunpack.c.l.b16 %v70
  %v426 = vunpack.c.h.b16 %v70
  %v427 = vunpack.c.l.b16 %v71
  %v428 = vunpack.c.h.b16 %v71
  %v429 = vunpack.c.l.b16 %v72
  %v430 = vunpack.c.h.b16 %v72
  %v431 = vunpack.c.l.b16 %v73
  %v432 = vunpack.c.h.b16 %v73
  %v433 = vunpack.c.l.b16 %v74
  %v434 = vunpack.c.l.b16 %v75
  %v435 = vunpack.c.h.b16 %v75
  %v436 = vunpack.c.l.b16 %v76
  %v437 = vunpack.c.h.b16 %v76
  %v438 = vunpack.c.l.b16 %v77
  %v439 = vunpack.c.h.b16 %v77
  %v440 = vunpack.c.l.b16 %v78
  %v441 = vunpack.c.h.b16 %v78
  %v442 = vunpack.c.l.b16 %v79
  %v443 = vunpack.c.l.b16 %v80
  %v444 = vunpack.c.h.b16 %v80
  %v445 = vunpack.c.l.b16 %v81
  %v446 = vunpack.c.h.b16 %v81
  %v447 = vunpack.c.l.b16 %v82
  %v448 = vunpack.c.h.b16 %v82
  %v449 = vunpack.c.l.b16 %v83
  %v450 = vunpack.c.h.b16 %v83
  %v451 = vunpack.c.l.b16 %v84
  %v452 = vunpack.c.l.b16 %v85
  %v453 = vunpack.c.h.b16 %v85
  %v454 = vunpack.c.l.b16 %v86
  %v455 = vunpack.c.h.b16 %v86
  %v456 = vunpack.c.l.b16 %v87
  %v457 = vunpack.c.h.b16 %v87
  %v458 = vunpack.c.l.b16 %v88
  %v459 = vunpack.c.h.b16 %v88
  %v460 = vunpack.c.l.b16 %v89
  %v461 = vunpack.c.l.b16 %v90
  %v462 = vunpack.c.h.b16 %v90
  %v463 = vunpack.c.l.b16 %v91
  %v464 = vunpack.c.h.b16 %v91
  %v465 = vunpack.c.l.b16 %v92
  %v466 = vunpack.c.h.b16 %v92
  %v467 = vunpack.c.l.b16 %v93
  %v468 = vunpack.c.h.b16 %v93
  %v469 = vunpack.c.l.b16 %v94
  %v470 = vpack.c.b16 %v335, %v326
  %v471 = vpack.c.b16 %v336, %v327
  %v472 = vpack.c.b16 %v337, %v328
  %v473 = vpack.c.b16 %v338, %v329
  %v474 = vpack.c.b16 %v339, %v330
  %v475 = vpack.c.b16 %v340, %v331
  %v476 = vpack.c.b16 %v341, %v332
  %v477 = vpack.c.b16 %v342, %v333
  %v478 = vpack.c.b16 %v343, %v334
  %v479 = vpack.c.b16 %v353, %v344
  %v480 = vpack.c.b16 %v354, %v345
  %v481 = vpack.c.b16 %v355, %v346
  %v482 = vpack.c.b16 %v356, %v347
  %v483 = vpack.c.b16 %v357, %v348
  %v484 = vpack.c.b16 %v358, %v349
  %v485 = vpack.c.b16 %v359, %v350
  %v486 = vpack.c.b16 %v360, %v351
  %v487 = vpack.c.b16 %v361, %v352
  %v488 = vpack.c.b16 %v371, %v362
  %v489 = vpack.c.b16 %v372, %v363
  %v490 = vpack.c.b16 %v373, %v364
  %v491 = vpack.c.b16 %v374, %v365
  %v492 = vpack.c.b16 %v375, %v366
  %v493 = vpack.c.b16 %v376, %v367
  %v494 = vpack.c.b16 %v377, %v368
  %v495 = vpack.c.b16 %v378, %v369
  %v496 = vpack.c.b16 %v379, %v370
  %v497 = vpack.c.b16 %v389, %v380
  %v498 = vpack.c.b16 %v390, %v381
  %v499 = vpack.c.b16 %v391, %v382
  %v500 = vpack.c.b16 %v392, %v383
  %v501 = vpack.c.b16 %v393, %v384
  %v502 = vpack.c.b16 %v394, %v385
  %v503 = vpack.c.b16 %v395, %v386
  %v504 = vpack.c.b16 %v396, %v387
  %v505 = vpack.c.b16 %v397, %v388
  %v506 = vpack.c.b16 %v407, %v398
  %v507 = vpack.c.b16 %v408, %v399
  %v508 = vpack.c.b16 %v409, %v400
  %v509 = vpack.c.b16 %v410, %v401
  %v510 = vpack.c.b16 %v411, %v402
  %v511 = vpack.c.b16 %v412, %v403
  %v512 = vpack.c.b16 %v413, %v404
  %v513 = vpack.c.b16 %v414, %v405
  %v514 = vpack.c.b16 %v415, %v406
  %v515 = vpack.c.b16 %v425, %v416
  %v516 = vpack.c.b16 %v426, %v417
  %v517 = vpack.c.b16 %v427, %v418
  %v518 = vpack.c.b16 %v428, %v419
  %v519 = vpack.c.b16 %v429, %v420
  %v520 = vpack.c.b16 %v430, %v421
  %v521 = vpack.c.b16 %v431, %v422
  %v522 = vpack.c.b16 %v432, %v423
  %v523 = vpack.c.b16 %v433, %v424
  %v524 = vpack.c.b16 %v443, %v434
  %v525 = vpack.c.b16 %v444, %v435
  %v526 = vpack.c.b16 %v445, %v436
  %v527 = vpack.c.b16 %v446, %v437
  %v528 = vpack.c.b16 %v447, %v438
  %v529 = vpack.c.b16 %v448, %v439
  %v530 = vpack.c.b16 %v449, %v440
  %v531 = vpack.c.b16 %v450, %v441
  %v532 = vpack.c.b16 %v451, %v442
  %v533 = vpack.c.b16 %v461, %v452
  %v534 = vpack.c.b16 %v462, %v453
  %v535 = vpack.c.b16 %v463, %v454
  %v536 = vpack.c.b16 %v464, %v455
  %v537 = vpack.c.b16 %v465, %v456
  %v538 = vpack.c.b16 %v466, %v457
  %v539 = vpack.c.b16 %v467, %v458
  %v540 = vpack.c.b16 %v468, %v459
  %v541 = vpack.c.b16 %v469, %v460
  %v758 = vunpack.c.l.b16 %v95
  %v759 = vunpack.c.l.b16 %v96
  %v760 = vunpack.c.l.b16 %v97
  %v761 = vunpack.c.l.b16 %v98
  %v762 = vunpack.c.l.b16 %v99
  %v763 = vunpack.c.l.b16 %v100
  %v764 = vunpack.c.l.b16 %v101
  %v765 = vunpack.c.l.b16 %v102
  %v766 = vunpack.c.l.b16 %v103
  %v767 = vunpack.c.l.b16 %v104
  %v768 = vunpack.c.l.b16 %v105
  %v769 = vunpack.c.l.b16 %v106
  %v770 = vunpack.c.l.b16 %v107
  %v771 = vunpack.c.l.b16 %v108
  %v772 = vunpack.c.l.b16 %v109
  %v773 = vunpack.c.l.b16 %v110
  %v774 = vunpack.c.l.b16 %v111
  %v775 = vunpack.c.l.b16 %v112
  %v776 = vunpack.c.l.b16 %v113
  %v777 = vunpack.c.l.b16 %v114
  %v778 = vunpack.c.l.b16 %v115
  %v779 = vunpack.c.l.b16 %v116
  %v780 = vunpack.c.l.b16 %v117
  %v781 = vunpack.c.l.b16 %v118
  %v782 = vunpack.c.l.b16 %v119
  %v783 = vunpack.c.l.b16 %v120
  %v784 = vunpack.c.l.b16 %v121
  %v785 = vunpack.c.l.b16 %v122
  %v786 = vunpack.c.l.b16 %v123
  %v787 = vunpack.c.l.b16 %v124
  %v788 = vunpack.c.l.b16 %v125
  %v789 = vunpack.c.l.b16 %v126
  %v790 = vunpack.c.l.b16 %v127
  %v791 = vunpack.c.l.b16 %v128
  %v792 = vunpack.c.l.b16 %v129
  %v793 = vunpack.c.l.b16 %v130
  %v794 = vunpack.c.l.b16 %v131
  %v795 = vunpack.c.l.b16 %v132
  %v796 = vunpack.c.l.b16 %v133
  %v797 = vunpack.c.l.b16 %v134
  %v798 = vunpack.c.l.b16 %v135
  %v799 = vunpack.c.l.b16 %v136
  %v800 = vunpack.c.l.b16 %v137
  %v801 = vunpack.c.l.b16 %v138
  %v802 = vunpack.c.l.b16 %v139
  %v803 = vunpack.c.l.b16 %v140
  %v804 = vunpack.c.l.b16 %v141
  %v805 = vunpack.c.l.b16 %v142
  %v806 = vunpack.c.l.b16 %v143
  %v807 = vunpack.c.l.b16 %v144
  %v808 = vunpack.c.l.b16 %v145
  %v809 = vunpack.c.l.b16 %v146
  %v810 = vunpack.c.l.b16 %v147
  %v811 = vunpack.c.l.b16 %v148
  %v812 = vunpack.c.l.b16 %v149
  %v813 = vunpack.c.l.b16 %v150
  %v814 = vunpack.c.l.b16 %v151
  %v815 = vunpack.c.l.b16 %v152
  %v816 = vunpack.c.l.b16 %v153
  %v817 = vunpack.c.l.b16 %v154
  %v818 = vunpack.c.l.b16 %v155
  %v819 = vunpack.c.l.b16 %v156
  %v820 = vunpack.c.l.b16 %v157
  %v821 = vunpack.c.l.b16 %v158
  %v822 = vunpack.c.l.b16 %v159
  %v823 = vunpack.c.l.b16 %v160
  %v824 = vunpack.c.l.b16 %v161
  %v825 = vunpack.c.l.b16 %v162
  %v826 = vunpack.c.l.b16 %v163
  %v827 = vunpack.c.l.b16 %v164
  %v828 = vunpack.c.l.b16 %v165
  %v829 = vunpack.c.l.b16 %v166
  %v830 = vunpack.c.l.b16 %v167
  %v831 = vunpack.c.l.b16 %v168
  %v832 = vunpack.c.l.b16 %v169
  %v833 = vunpack.c.l.b16 %v170
  %v834 = vunpack.c.l.b16 %v171
  %v835 = vunpack.c.l.b16 %v172
  %v836 = vunpack.c.l.b16 %v173
  %v837 = vunpack.c.l.b16 %v174
  %v838 = vunpack.c.l.b16 %v175
  %v839 = vunpack.c.l.b16 %v176
  %v840 = vunpack.c.l.b16 %v177
  %v841 = vunpack.c.l.b16 %v178
  %v842 = vunpack.c.l.b16 %v179
  %v843 = vunpack.c.l.b16 %v180
  %v844 = vunpack.c.l.b16 %v181
  %v845 = vunpack.c.l.b16 %v182
  %v846 = vunpack.c.l.b16 %v183
  %v847 = vunpack.c.l.b16 %v184
  %v848 = vunpack.c.l.b16 %v185
  %v849 = vunpack.c.l.b16 %v186
  %v850 = vunpack.c.l.b16 %v187
  %v851 = vunpack.c.l.b16 %v188
  %v852 = vunpack.c.l.b16 %v189
  %v853 = vunpack.c.l.b16 %v190
  %v854 = vunpack.c.l.b16 %v191
  %v855 = vunpack.c.l.b16 %v192
  %v856 = vunpack.c.l.b16 %v193
  %v857 = vunpack.c.l.b16 %v194
  %v858 = vunpack.c.l.b16 %v195
  %v859 = vunpack.c.l.b16 %v196
  %v860 = vunpack.c.l.b16 %v197
  %v861 = vunpack.c.l.b16 %v198
  %v862 = vunpack.c.l.b16 %v199
  %v863 = vunpack.c.l.b16 %v200
  %v864 = vunpack.c.l.b16 %v201
  %v865 = vunpack.c.l.b16 %v202
  %v866 = vunpack.c.l.b16 %v203
  %v867 = vunpack.c.l.b16 %v204
  %v868 = vunpack.c.l.b16 %v205
  %v869 = vunpack.c.l.b16 %v206
  %v870 = vunpack.c.l.b16 %v207
  %v871 = vunpack.c.l.b16 %v208
  %v872 = vunpack.c.l.b16 %v209
  %v873 = vunpack.c.l.b16 %v210
  %v874 = vunpack.c.l.b16 %v211
  %v875 = vunpack.c.l.b16 %v212
  %v876 = vunpack.c.l.b16 %v213
  %v877 = vunpack.c.l.b16 %v214
  %v878 = vunpack.c.l.b16 %v215
  %v879 = vunpack.c.l.b16 %v216
  %v880 = vunpack.c.l.b16 %v217
  %v881 = vunpack.c.l.b16 %v218
  %v882 = vunpack.c.l.b16 %v219
  %v883 = vunpack.c.l.b16 %v220
  %v884 = vunpack.c.l.b16 %v221
  %v885 = vunpack.c.l.b16 %v222
  %v886 = vunpack.c.l.b16 %v223
  %v887 = vunpack.c.l.b16 %v224
  %v888 = vunpack.c.l.b16 %v225
  %v889 = vunpack.c.l.b16 %v226
  %v890 = vunpack.c.l.b16 %v227
  %v891 = vunpack.c.l.b16 %v228
  %v892 = vunpack.c.l.b16 %v229
  %v893 = vunpack.c.l.b16 %v230
  %v894 = vunpack.c.l.b16 %v231
  %v895 = vunpack.c.l.b16 %v232
  %v896 = vunpack.c.l.b16 %v233
  %v897 = vunpack.c.l.b16 %v234
  %v898 = vunpack.c.l.b16 %v235
  %v899 = vunpack.c.l.b16 %v236
  %v900 = vunpack.c.l.b16 %v237
  %v901 = vunpack.c.l.b16 %v238
  %v902 = vpack.c.b16 %v759, %v758
  %v903 = vpack.c.b16 %v761, %v760
  %v904 = vpack.c.b16 %v763, %v762
  %v905 = vpack.c.b16 %v765, %v764
  %v906 = vpack.c.b16 %v767, %v766
  %v907 = vpack.c.b16 %v769, %v768
  %v908 = vpack.c.b16 %v771, %v770
  %v909 = vpack.c.b16 %v773, %v772
  %v910 = vpack.c.b16 %v775, %v774
  %v911 = vpack.c.b16 %v777, %v776
  %v912 = vpack.c.b16 %v779, %v778
  %v913 = vpack.c.b16 %v781, %v780
  %v914 = vpack.c.b16 %v783, %v782
  %v915 = vpack.c.b16 %v785, %v784
  %v916 = vpack.c.b16 %v787, %v786
  %v917 = vpack.c.b16 %v789, %v788
  %v918 = vpack.c.b16 %v791, %v790
  %v919 = vpack.c.b16 %v793, %v792
  %v920 = vpack.c.b16 %v795, %v794
  %v921 = vpack.c.b16 %v797, %v796
  %v922 = vpack.c.b16 %v799, %v798
  %v923 = vpack.c.b16 %v801, %v800
  %v924 = vpack.c.b16 %v803, %v802
  %v925 = vpack.c.b16 %v805, %v804
  %v926 = vpack.c.b16 %v807, %v806
  %v927 = vpack.c.b16 %v809, %v808
  %v928 = vpack.c.b16 %v811, %v810
  %v929 = vpack.c.b16 %v813, %v812
  %v930 = vpack.c.b16 %v815, %v814
  %v931 = vpack.c.b16 %v817, %v816
  %v932 = vpack.c.b16 %v819, %v818
  %v933 = vpack.c.b16 %v821, %v820
  %v934 = vpack.c.b16 %v823, %v822
  %v935 = vpack.c.b16 %v825, %v824
  %v936 = vpack.c.b16 %v827, %v826
  %v937 = vpack.c.b16 %v829, %v828
  %v938 = vpack.c.b16 %v831, %v830
  %v939 = vpack.c.b16 %v833, %v832
  %v940 = vpack.c.b16 %v835, %v834
  %v941 = vpack.c.b16 %v837, %v836
  %v942 = vpack.c.b16 %v839, %v838
  %v943 = vpack.c.b16 %v841, %v840
  %v944 = vpack.c.b16 %v843, %v842
  %v945 = vpack.c.b16 %v845, %v844
  %v946 = vpack.c.b16 %v847, %v846
  %v947 = vpack.c.b16 %v849, %v848
  %v948 = vpack.c.b16 %v851, %v850
  %v949 = vpack.c.b16 %v853, %v852
  %v950 = vpack.c.b16 %v855, %v854
  %v951 = vpack.c.b16 %v857, %v856
  %v952 = vpack.c.b16 %v859, %v858
  %v953 = vpack.c.b16 %v861, %v860
  %v954 = vpack.c.b16 %v863, %v862
  %v955 = vpack.c.b16 %v865, %v864
  %v956 = vpack.c.b16 %v867, %v866
  %v957 = vpack.c.b16 %v869, %v868
  %v958 = vpack.c.b16 %v871, %v870
  %v959 = vpack.c.b16 %v873, %v872
  %v960 = vpack.c.b16 %v875, %v874
  %v961 = vpack.c.b16 %v877, %v876
  %v962 = vpack.c.b16 %v879, %v878
  %v963 = vpack.c.b16 %v881, %v880
  %v964 = vpack.c.b16 %v883, %v882
  %v965 = vpack.c.b16 %v885, %v884
  %v966 = vpack.c.b16 %v887, %v886
  %v967 = vpack.c.b16 %v889, %v888
  %v968 = vpack.c.b16 %v891, %v890
  %v969 = vpack.c.b16 %v893, %v892
  %v970 = vpack.c.b16 %v895, %v894
  %v971 = vpack.c.b16 %v897, %v896
  %v972 = vpack.c.b16 %v899, %v898
  %v973 = vpack.c.b16 %v901, %v900
  %1046 = vmatprep.subr.bf16.mxu0 0
  %1047 = vmatpush1.bf16.msra.mxu0 %v902
  %1048 = vmatprep.subr.bf16.mxu0 0
  %1049 = vmatpush1.bf16.msra.mxu0 %v903
  %1050 = vmatprep.subr.bf16.mxu0 0
  %1051 = vmatpush1.bf16.msra.mxu0 %v904
  %1052 = vmatprep.subr.bf16.mxu0 0
  %1053 = vmatpush1.bf16.msra.mxu0 %v905
  %1054 = vmatprep.subr.bf16.mxu0 0
  %1055 = vmatpush1.bf16.msra.mxu0 %v906
  %1056 = vmatprep.subr.bf16.mxu0 0
  %1057 = vmatpush1.bf16.msra.mxu0 %v907
  %1058 = vmatprep.subr.bf16.mxu0 0
  %1059 = vmatpush1.bf16.msra.mxu0 %v908
  %1060 = vmatprep.subr.bf16.mxu0 0
  %1061 = vmatpush1.bf16.msra.mxu0 %v909
  %1062 = vmatprep.subr.bf16.mxu0 0
  %1063 = vmatpush1.bf16.msra.mxu0 %v910
  %1064 = vmatprep.subr.bf16.mxu0 0
  %1065 = vmatpush1.bf16.msra.mxu0 %v911
  %1066 = vmatprep.subr.bf16.mxu0 0
  %1067 = vmatpush1.bf16.msra.mxu0 %v912
  %1068 = vmatprep.subr.bf16.mxu0 0
  %1069 = vmatpush1.bf16.msra.mxu0 %v913
  %1070 = vmatprep.subr.bf16.mxu0 0
  %1071 = vmatpush1.bf16.msra.mxu0 %v914
  %1072 = vmatprep.subr.bf16.mxu0 0
  %1073 = vmatpush1.bf16.msra.mxu0 %v915
  %1074 = vmatprep.subr.bf16.mxu0 0
  %1075 = vmatpush1.bf16.msra.mxu0 %v916
  %1076 = vmatprep.subr.bf16.mxu0 0
  %1077 = vmatpush1.bf16.msra.mxu0 %v917
  %1078 = vmatprep.mubr.bf16.mxu0 %v471
  %1079 = vmatmul.mubr.bf16.gmra.mrb[0].mxu0 %v470
  %v1080 = vpop.f32.mrb[0].mxu0
  %v1081 = vadd.f32 %v244, %v1080
  %v1082 = vpop.f32.mrb[0].mxu0
  %v1083 = vpop.f32.mrb[0].mxu0
  %v1084 = vadd.f32 %v244, %v1083
  %v1085 = vpop.f32.mrb[0].mxu0
  %1086 = vmatprep.mubr.bf16.mxu0 %v480
  %1087 = vmatmul.mubr.bf16.gmra.mrb[0].mxu0 %v479
  %v1088 = vpop.f32.mrb[0].mxu0
  %v1089 = vadd.f32 %v244, %v1088
  %v1090 = vpop.f32.mrb[0].mxu0
  %v1091 = vpop.f32.mrb[0].mxu0
  %v1092 = vadd.f32 %v244, %v1091
  %v1093 = vpop.f32.mrb[0].mxu0
  %1094 = vmatprep.mubr.bf16.mxu0 %v489
  %1095 = vmatmul.mubr.bf16.gmra.mrb[0].mxu0 %v488
  %v1096 = vpop.f32.mrb[0].mxu0
  %v1097 = vadd.f32 %v244, %v1096
  %v1098 = vpop.f32.mrb[0].mxu0
  %v1099 = vpop.f32.mrb[0].mxu0
  %v1100 = vadd.f32 %v244, %v1099
  %v1101 = vpop.f32.mrb[0].mxu0
  %1102 = vmatprep.mubr.bf16.mxu0 %v498
  %1103 = vmatmul.mubr.bf16.gmra.mrb[0].mxu0 %v497
  %v1104 = vpop.f32.mrb[0].mxu0
  %v1105 = vadd.f32 %v244, %v1104
  %v1106 = vpop.f32.mrb[0].mxu0
  %v1107 = vpop.f32.mrb[0].mxu0
  %v1108 = vadd.f32 %v244, %v1107
  %v1109 = vpop.f32.mrb[0].mxu0
  %1110 = vmatprep.mubr.bf16.mxu0 %v507
  %1111 = vmatmul.mubr.bf16.gmra.mrb[0].mxu0 %v506
  %v1112 = vpop.f32.mrb[0].mxu0
  %v1113 = vadd.f32 %v244, %v1112
  %v1114 = vpop.f32.mrb[0].mxu0
  %v1115 = vpop.f32.mrb[0].mxu0
  %v1116 = vadd.f32 %v244, %v1115
  %v1117 = vpop.f32.mrb[0].mxu0
  %1118 = vmatprep.mubr.bf16.mxu0 %v516
  %1119 = vmatmul.mubr.bf16.gmra.mrb[0].mxu0 %v515
  %v1120 = vpop.f32.mrb[0].mxu0
  %v1121 = vadd.f32 %v244, %v1120
  %v1122 = vpop.f32.mrb[0].mxu0
  %v1123 = vpop.f32.mrb[0].mxu0
  %v1124 = vadd.f32 %v244, %v1123
  %v1125 = vpop.f32.mrb[0].mxu0
  %1126 = vmatprep.mubr.bf16.mxu0 %v525
  %1127 = vmatmul.mubr.bf16.gmra.mrb[0].mxu0 %v524
  %v1128 = vpop.f32.mrb[0].mxu0
  %v1129 = vadd.f32 %v244, %v1128
  %v1130 = vpop.f32.mrb[0].mxu0
  %v1131 = vpop.f32.mrb[0].mxu0
  %v1132 = vadd.f32 %v244, %v1131
  %v1133 = vpop.f32.mrb[0].mxu0
  %1134 = vmatprep.mubr.bf16.mxu0 %v534
  %1135 = vmatmul.mubr.bf16.gmra.mrb[0].mxu0 %v533
  %v1136 = vpop.f32.mrb[0].mxu0
  %v1137 = vadd.f32 %v244, %v1136
  %v1138 = vpop.f32.mrb[0].mxu0
  %v1139 = vpop.f32.mrb[0].mxu0
  %v1140 = vadd.f32 %v244, %v1139
  %v1141 = vpop.f32.mrb[0].mxu0
  %1142 = vdwg.mxu0
  %1143 = vmatprep.subr.bf16.mxu0 0
  %1144 = vmatpush1.bf16.msra.mxu0 %v918
  %1145 = vmatprep.subr.bf16.mxu0 0
  %1146 = vmatpush1.bf16.msra.mxu0 %v919
  %1147 = vmatprep.subr.bf16.mxu0 0
  %1148 = vmatpush1.bf16.msra.mxu0 %v920
  %1149 = vmatprep.subr.bf16.mxu0 0
  %1150 = vmatpush1.bf16.msra.mxu0 %v921
  %1151 = vmatprep.subr.bf16.mxu0 0
  %1152 = vmatpush1.bf16.msra.mxu0 %v922
  %1153 = vmatprep.subr.bf16.mxu0 0
  %1154 = vmatpush1.bf16.msra.mxu0 %v923
  %1155 = vmatprep.subr.bf16.mxu0 0
  %1156 = vmatpush1.bf16.msra.mxu0 %v924
  %1157 = vmatprep.subr.bf16.mxu0 0
  %1158 = vmatpush1.bf16.msra.mxu0 %v925
  %1159 = vmatprep.subr.bf16.mxu0 0
  %1160 = vmatpush1.bf16.msra.mxu0 %v926
  %1161 = vmatprep.subr.bf16.mxu0 0
  %1162 = vmatpush1.bf16.msra.mxu0 %v927
  %1163 = vmatprep.subr.bf16.mxu0 0
  %1164 = vmatpush1.bf16.msra.mxu0 %v928
  %1165 = vmatprep.subr.bf16.mxu0 0
  %1166 = vmatpush1.bf16.msra.mxu0 %v929
  %1167 = vmatprep.subr.bf16.mxu0 0
  %1168 = vmatpush1.bf16.msra.mxu0 %v930
  %1169 = vmatprep.subr.bf16.mxu0 0
  %1170 = vmatpush1.bf16.msra.mxu0 %v931
  %1171 = vmatprep.subr.bf16.mxu0 0
  %1172 = vmatpush1.bf16.msra.mxu0 %v932
  %1173 = vmatprep.subr.bf16.mxu0 0
  %1174 = vmatpush1.bf16.msra.mxu0 %v933
  %1175 = vmatprep.mubr.bf16.mxu0 %v473
  %1176 = vmatmul.mubr.bf16.gmra.mrb[0].mxu0 %v472
  %v1177 = vpop.f32.mrb[0].mxu0
  %v1178 = vadd.f32 %v1081, %v1177
  %v1179 = vpop.f32.mrb[0].mxu0
  %v1180 = vpop.f32.mrb[0].mxu0
  %v1181 = vadd.f32 %v1084, %v1180
  %v1182 = vpop.f32.mrb[0].mxu0
  %1183 = vmatprep.mubr.bf16.mxu0 %v482
  %1184 = vmatmul.mubr.bf16.gmra.mrb[0].mxu0 %v481
  %v1185 = vpop.f32.mrb[0].mxu0
  %v1186 = vadd.f32 %v1089, %v1185
  %v1187 = vpop.f32.mrb[0].mxu0
  %v1188 = vpop.f32.mrb[0].mxu0
  %v1189 = vadd.f32 %v1092, %v1188
  %v1190 = vpop.f32.mrb[0].mxu0
  %1191 = vmatprep.mubr.bf16.mxu0 %v491
  %1192 = vmatmul.mubr.bf16.gmra.mrb[0].mxu0 %v490
  %v1193 = vpop.f32.mrb[0].mxu0
  %v1194 = vadd.f32 %v1097, %v1193
  %v1195 = vpop.f32.mrb[0].mxu0
  %v1196 = vpop.f32.mrb[0].mxu0
  %v1197 = vadd.f32 %v1100, %v1196
  %v1198 = vpop.f32.mrb[0].mxu0
  %1199 = vmatprep.mubr.bf16.mxu0 %v500
  %1200 = vmatmul.mubr.bf16.gmra.mrb[0].mxu0 %v499
  %v1201 = vpop.f32.mrb[0].mxu0
  %v1202 = vadd.f32 %v1105, %v1201
  %v1203 = vpop.f32.mrb[0].mxu0
  %v1204 = vpop.f32.mrb[0].mxu0
  %v1205 = vadd.f32 %v1108, %v1204
  %v1206 = vpop.f32.mrb[0].mxu0
  %1207 = vmatprep.mubr.bf16.mxu0 %v509
  %1208 = vmatmul.mubr.bf16.gmra.mrb[0].mxu0 %v508
  %v1209 = vpop.f32.mrb[0].mxu0
  %v1210 = vadd.f32 %v1113, %v1209
  %v1211 = vpop.f32.mrb[0].mxu0
  %v1212 = vpop.f32.mrb[0].mxu0
  %v1213 = vadd.f32 %v1116, %v1212
  %v1214 = vpop.f32.mrb[0].mxu0
  %1215 = vmatprep.mubr.bf16.mxu0 %v518
  %1216 = vmatmul.mubr.bf16.gmra.mrb[0].mxu0 %v517
  %v1217 = vpop.f32.mrb[0].mxu0
  %v1218 = vadd.f32 %v1121, %v1217
  %v1219 = vpop.f32.mrb[0].mxu0
  %v1220 = vpop.f32.mrb[0].mxu0
  %v1221 = vadd.f32 %v1124, %v1220
  %v1222 = vpop.f32.mrb[0].mxu0
  %1223 = vmatprep.mubr.bf16.mxu0 %v527
  %1224 = vmatmul.mubr.bf16.gmra.mrb[0].mxu0 %v526
  %v1225 = vpop.f32.mrb[0].mxu0
  %v1226 = vadd.f32 %v1129, %v1225
  %v1227 = vpop.f32.mrb[0].mxu0
  %v1228 = vpop.f32.mrb[0].mxu0
  %v1229 = vadd.f32 %v1132, %v1228
  %v1230 = vpop.f32.mrb[0].mxu0
  %1231 = vmatprep.mubr.bf16.mxu0 %v536
  %1232 = vmatmul.mubr.bf16.gmra.mrb[0].mxu0 %v535
  %v1233 = vpop.f32.mrb[0].mxu0
  %v1234 = vadd.f32 %v1137, %v1233
  %v1235 = vpop.f32.mrb[0].mxu0
  %v1236 = vpop.f32.mrb[0].mxu0
  %v1237 = vadd.f32 %v1140, %v1236
  %v1238 = vpop.f32.mrb[0].mxu0
  %1239 = vdwg.mxu0
  %1240 = vmatprep.subr.bf16.mxu0 0
  %1241 = vmatpush1.bf16.msra.mxu0 %v934
  %1242 = vmatprep.subr.bf16.mxu0 0
  %1243 = vmatpush1.bf16.msra.mxu0 %v935
  %1244 = vmatprep.subr.bf16.mxu0 0
  %1245 = vmatpush1.bf16.msra.mxu0 %v936
  %1246 = vmatprep.subr.bf16.mxu0 0
  %1247 = vmatpush1.bf16.msra.mxu0 %v937
  %1248 = vmatprep.subr.bf16.mxu0 0
  %1249 = vmatpush1.bf16.msra.mxu0 %v938
  %1250 = vmatprep.subr.bf16.mxu0 0
  %1251 = vmatpush1.bf16.msra.mxu0 %v939
  %1252 = vmatprep.subr.bf16.mxu0 0
  %1253 = vmatpush1.bf16.msra.mxu0 %v940
  %1254 = vmatprep.subr.bf16.mxu0 0
  %1255 = vmatpush1.bf16.msra.mxu0 %v941
  %1256 = vmatprep.subr.bf16.mxu0 0
  %1257 = vmatpush1.bf16.msra.mxu0 %v942
  %1258 = vmatprep.subr.bf16.mxu0 0
  %1259 = vmatpush1.bf16.msra.mxu0 %v943
  %1260 = vmatprep.subr.bf16.mxu0 0
  %1261 = vmatpush1.bf16.msra.mxu0 %v944
  %1262 = vmatprep.subr.bf16.mxu0 0
  %1263 = vmatpush1.bf16.msra.mxu0 %v945
  %1264 = vmatprep.subr.bf16.mxu0 0
  %1265 = vmatpush1.bf16.msra.mxu0 %v946
  %1266 = vmatprep.subr.bf16.mxu0 0
  %1267 = vmatpush1.bf16.msra.mxu0 %v947
  %1268 = vmatprep.subr.bf16.mxu0 0
  %1269 = vmatpush1.bf16.msra.mxu0 %v948
  %1270 = vmatprep.subr.bf16.mxu0 0
  %1271 = vmatpush1.bf16.msra.mxu0 %v949
  %1272 = vmatprep.mubr.bf16.mxu0 %v475
  %1273 = vmatmul.mubr.bf16.gmra.mrb[0].mxu0 %v474
  %v1274 = vpop.f32.mrb[0].mxu0
  %v1275 = vadd.f32 %v1178, %v1274
  %v1276 = vpop.f32.mrb[0].mxu0
  %v1277 = vpop.f32.mrb[0].mxu0
  %v1278 = vadd.f32 %v1181, %v1277
  %v1279 = vpop.f32.mrb[0].mxu0
  %1280 = vmatprep.mubr.bf16.mxu0 %v484
  %1281 = vmatmul.mubr.bf16.gmra.mrb[0].mxu0 %v483
  %v1282 = vpop.f32.mrb[0].mxu0
  %v1283 = vadd.f32 %v1186, %v1282
  %v1284 = vpop.f32.mrb[0].mxu0
  %v1285 = vpop.f32.mrb[0].mxu0
  %v1286 = vadd.f32 %v1189, %v1285
  %v1287 = vpop.f32.mrb[0].mxu0
  %1288 = vmatprep.mubr.bf16.mxu0 %v493
  %1289 = vmatmul.mubr.bf16.gmra.mrb[0].mxu0 %v492
  %v1290 = vpop.f32.mrb[0].mxu0
  %v1291 = vadd.f32 %v1194, %v1290
  %v1292 = vpop.f32.mrb[0].mxu0
  %v1293 = vpop.f32.mrb[0].mxu0
  %v1294 = vadd.f32 %v1197, %v1293
  %v1295 = vpop.f32.mrb[0].mxu0
  %1296 = vmatprep.mubr.bf16.mxu0 %v502
  %1297 = vmatmul.mubr.bf16.gmra.mrb[0].mxu0 %v501
  %v1298 = vpop.f32.mrb[0].mxu0
  %v1299 = vadd.f32 %v1202, %v1298
  %v1300 = vpop.f32.mrb[0].mxu0
  %v1301 = vpop.f32.mrb[0].mxu0
  %v1302 = vadd.f32 %v1205, %v1301
  %v1303 = vpop.f32.mrb[0].mxu0
  %1304 = vmatprep.mubr.bf16.mxu0 %v511
  %1305 = vmatmul.mubr.bf16.gmra.mrb[0].mxu0 %v510
  %v1306 = vpop.f32.mrb[0].mxu0
  %v1307 = vadd.f32 %v1210, %v1306
  %v1308 = vpop.f32.mrb[0].mxu0
  %v1309 = vpop.f32.mrb[0].mxu0
  %v1310 = vadd.f32 %v1213, %v1309
  %v1311 = vpop.f32.mrb[0].mxu0
  %1312 = vmatprep.mubr.bf16.mxu0 %v520
  %1313 = vmatmul.mubr.bf16.gmra.mrb[0].mxu0 %v519
  %v1314 = vpop.f32.mrb[0].mxu0
  %v1315 = vadd.f32 %v1218, %v1314
  %v1316 = vpop.f32.mrb[0].mxu0
  %v1317 = vpop.f32.mrb[0].mxu0
  %v1318 = vadd.f32 %v1221, %v1317
  %v1319 = vpop.f32.mrb[0].mxu0
  %1320 = vmatprep.mubr.bf16.mxu0 %v529
  %1321 = vmatmul.mubr.bf16.gmra.mrb[0].mxu0 %v528
  %v1322 = vpop.f32.mrb[0].mxu0
  %v1323 = vadd.f32 %v1226, %v1322
  %v1324 = vpop.f32.mrb[0].mxu0
  %v1325 = vpop.f32.mrb[0].mxu0
  %v1326 = vadd.f32 %v1229, %v1325
  %v1327 = vpop.f32.mrb[0].mxu0
  %1328 = vmatprep.mubr.bf16.mxu0 %v538
  %1329 = vmatmul.mubr.bf16.gmra.mrb[0].mxu0 %v537
  %v1330 = vpop.f32.mrb[0].mxu0
  %v1331 = vadd.f32 %v1234, %v1330
  %v1332 = vpop.f32.mrb[0].mxu0
  %v1333 = vpop.f32.mrb[0].mxu0
  %v1334 = vadd.f32 %v1237, %v1333
  %v1335 = vpop.f32.mrb[0].mxu0
  %1336 = vdwg.mxu0
  %1337 = vmatprep.subr.bf16.mxu0 0
  %1338 = vmatpush1.bf16.msra.mxu0 %v950
  %1339 = vmatprep.subr.bf16.mxu0 0
  %1340 = vmatpush1.bf16.msra.mxu0 %v951
  %1341 = vmatprep.subr.bf16.mxu0 0
  %1342 = vmatpush1.bf16.msra.mxu0 %v952
  %1343 = vmatprep.subr.bf16.mxu0 0
  %1344 = vmatpush1.bf16.msra.mxu0 %v953
  %1345 = vmatprep.subr.bf16.mxu0 0
  %1346 = vmatpush1.bf16.msra.mxu0 %v954
  %1347 = vmatprep.subr.bf16.mxu0 0
  %1348 = vmatpush1.bf16.msra.mxu0 %v955
  %1349 = vmatprep.subr.bf16.mxu0 0
  %1350 = vmatpush1.bf16.msra.mxu0 %v956
  %1351 = vmatprep.subr.bf16.mxu0 0
  %1352 = vmatpush1.bf16.msra.mxu0 %v957
  %1353 = vmatprep.subr.bf16.mxu0 0
  %1354 = vmatpush1.bf16.msra.mxu0 %v958
  %1355 = vmatprep.subr.bf16.mxu0 0
  %1356 = vmatpush1.bf16.msra.mxu0 %v959
  %1357 = vmatprep.subr.bf16.mxu0 0
  %1358 = vmatpush1.bf16.msra.mxu0 %v960
  %1359 = vmatprep.subr.bf16.mxu0 0
  %1360 = vmatpush1.bf16.msra.mxu0 %v961
  %1361 = vmatprep.subr.bf16.mxu0 0
  %1362 = vmatpush1.bf16.msra.mxu0 %v962
  %1363 = vmatprep.subr.bf16.mxu0 0
  %1364 = vmatpush1.bf16.msra.mxu0 %v963
  %1365 = vmatprep.subr.bf16.mxu0 0
  %1366 = vmatpush1.bf16.msra.mxu0 %v964
  %1367 = vmatprep.subr.bf16.mxu0 0
  %1368 = vmatpush1.bf16.msra.mxu0 %v965
  %1369 = vmatprep.mubr.bf16.mxu0 %v477
  %1370 = vmatmul.mubr.bf16.gmra.mrb[0].mxu0 %v476
  %v1371 = vpop.f32.mrb[0].mxu0
  %v1372 = vadd.f32 %v1275, %v1371
  %v1373 = vpop.f32.mrb[0].mxu0
  %v1374 = vpop.f32.mrb[0].mxu0
  %v1375 = vadd.f32 %v1278, %v1374
  %v1376 = vpop.f32.mrb[0].mxu0
  %1377 = vmatprep.mubr.bf16.mxu0 %v486
  %1378 = vmatmul.mubr.bf16.gmra.mrb[0].mxu0 %v485
  %v1379 = vpop.f32.mrb[0].mxu0
  %v1380 = vadd.f32 %v1283, %v1379
  %v1381 = vpop.f32.mrb[0].mxu0
  %v1382 = vpop.f32.mrb[0].mxu0
  %v1383 = vadd.f32 %v1286, %v1382
  %v1384 = vpop.f32.mrb[0].mxu0
  %1385 = vmatprep.mubr.bf16.mxu0 %v495
  %1386 = vmatmul.mubr.bf16.gmra.mrb[0].mxu0 %v494
  %v1387 = vpop.f32.mrb[0].mxu0
  %v1388 = vadd.f32 %v1291, %v1387
  %v1389 = vpop.f32.mrb[0].mxu0
  %v1390 = vpop.f32.mrb[0].mxu0
  %v1391 = vadd.f32 %v1294, %v1390
  %v1392 = vpop.f32.mrb[0].mxu0
  %1393 = vmatprep.mubr.bf16.mxu0 %v504
  %1394 = vmatmul.mubr.bf16.gmra.mrb[0].mxu0 %v503
  %v1395 = vpop.f32.mrb[0].mxu0
  %v1396 = vadd.f32 %v1299, %v1395
  %v1397 = vpop.f32.mrb[0].mxu0
  %v1398 = vpop.f32.mrb[0].mxu0
  %v1399 = vadd.f32 %v1302, %v1398
  %v1400 = vpop.f32.mrb[0].mxu0
  %1401 = vmatprep.mubr.bf16.mxu0 %v513
  %1402 = vmatmul.mubr.bf16.gmra.mrb[0].mxu0 %v512
  %v1403 = vpop.f32.mrb[0].mxu0
  %v1404 = vadd.f32 %v1307, %v1403
  %v1405 = vpop.f32.mrb[0].mxu0
  %v1406 = vpop.f32.mrb[0].mxu0
  %v1407 = vadd.f32 %v1310, %v1406
  %v1408 = vpop.f32.mrb[0].mxu0
  %1409 = vmatprep.mubr.bf16.mxu0 %v522
  %1410 = vmatmul.mubr.bf16.gmra.mrb[0].mxu0 %v521
  %v1411 = vpop.f32.mrb[0].mxu0
  %v1412 = vadd.f32 %v1315, %v1411
  %v1413 = vpop.f32.mrb[0].mxu0
  %v1414 = vpop.f32.mrb[0].mxu0
  %v1415 = vadd.f32 %v1318, %v1414
  %v1416 = vpop.f32.mrb[0].mxu0
  %1417 = vmatprep.mubr.bf16.mxu0 %v531
  %1418 = vmatmul.mubr.bf16.gmra.mrb[0].mxu0 %v530
  %v1419 = vpop.f32.mrb[0].mxu0
  %v1420 = vadd.f32 %v1323, %v1419
  %v1421 = vpop.f32.mrb[0].mxu0
  %v1422 = vpop.f32.mrb[0].mxu0
  %v1423 = vadd.f32 %v1326, %v1422
  %v1424 = vpop.f32.mrb[0].mxu0
  %1425 = vmatprep.mubr.bf16.mxu0 %v540
  %1426 = vmatmul.mubr.bf16.gmra.mrb[0].mxu0 %v539
  %v1427 = vpop.f32.mrb[0].mxu0
  %v1428 = vadd.f32 %v1331, %v1427
  %v1429 = vpop.f32.mrb[0].mxu0
  %v1430 = vpop.f32.mrb[0].mxu0
  %v1431 = vadd.f32 %v1334, %v1430
  %v1432 = vpop.f32.mrb[0].mxu0
  %1433 = vdwg.mxu0
  %1434 = vmatprep.subr.bf16.mxu0 0
  %1435 = vmatpush1.bf16.msra.mxu0 %v966
  %1436 = vmatprep.subr.bf16.mxu0 0
  %1437 = vmatpush1.bf16.msra.mxu0 %v967
  %1438 = vmatprep.subr.bf16.mxu0 0
  %1439 = vmatpush1.bf16.msra.mxu0 %v968
  %1440 = vmatprep.subr.bf16.mxu0 0
  %1441 = vmatpush1.bf16.msra.mxu0 %v969
  %1442 = vmatprep.subr.bf16.mxu0 0
  %1443 = vmatpush1.bf16.msra.mxu0 %v970
  %1444 = vmatprep.subr.bf16.mxu0 0
  %1445 = vmatpush1.bf16.msra.mxu0 %v971
  %1446 = vmatprep.subr.bf16.mxu0 0
  %1447 = vmatpush1.bf16.msra.mxu0 %v972
  %1448 = vmatprep.subr.bf16.mxu0 0
  %1449 = vmatpush1.bf16.msra.mxu0 %v973
  %1450 = vmatprep.subr.bf16.mxu0 0
  %1451 = vmatpush1.bf16.msra.mxu0 0
  %1452 = vmatprep.subr.bf16.mxu0 0
  %1453 = vmatpush1.bf16.msra.mxu0 0
  %1454 = vmatprep.subr.bf16.mxu0 0
  %1455 = vmatpush1.bf16.msra.mxu0 0
  %1456 = vmatprep.subr.bf16.mxu0 0
  %1457 = vmatpush1.bf16.msra.mxu0 0
  %1458 = vmatprep.subr.bf16.mxu0 0
  %1459 = vmatpush1.bf16.msra.mxu0 0
  %1460 = vmatprep.subr.bf16.mxu0 0
  %1461 = vmatpush1.bf16.msra.mxu0 0
  %1462 = vmatprep.subr.bf16.mxu0 0
  %1463 = vmatpush1.bf16.msra.mxu0 0
  %1464 = vmatprep.subr.bf16.mxu0 0
  %1465 = vmatpush1.bf16.msra.mxu0 0
  %1466 = vmatprep.mubr.bf16.mxu0 0
  %1467 = vmatmul.mubr.bf16.gmra.mrb[0].mxu0 %v478
  %v1468 = vpop.f32.mrb[0].mxu0
  %v1469 = vadd.f32 %v1372, %v1468
  %v1470 = vpop.f32.mrb[0].mxu0
  %v1471 = vpop.f32.mrb[0].mxu0
  %v1472 = vadd.f32 %v1375, %v1471
  %v1473 = vpop.f32.mrb[0].mxu0
  %1474 = vmatprep.mubr.bf16.mxu0 0
  %1475 = vmatmul.mubr.bf16.gmra.mrb[0].mxu0 %v487
  %v1476 = vpop.f32.mrb[0].mxu0
  %v1477 = vadd.f32 %v1380, %v1476
  %v1478 = vpop.f32.mrb[0].mxu0
  %v1479 = vpop.f32.mrb[0].mxu0
  %v1480 = vadd.f32 %v1383, %v1479
  %v1481 = vpop.f32.mrb[0].mxu0
  %1482 = vmatprep.mubr.bf16.mxu0 0
  %1483 = vmatmul.mubr.bf16.gmra.mrb[0].mxu0 %v496
  %v1484 = vpop.f32.mrb[0].mxu0
  %v1485 = vadd.f32 %v1388, %v1484
  %v1486 = vpop.f32.mrb[0].mxu0
  %v1487 = vpop.f32.mrb[0].mxu0
  %v1488 = vadd.f32 %v1391, %v1487
  %v1489 = vpop.f32.mrb[0].mxu0
  %1490 = vmatprep.mubr.bf16.mxu0 0
  %1491 = vmatmul.mubr.bf16.gmra.mrb[0].mxu0 %v505
  %v1492 = vpop.f32.mrb[0].mxu0
  %v1493 = vadd.f32 %v1396, %v1492
  %v1494 = vpop.f32.mrb[0].mxu0
  %v1495 = vpop.f32.mrb[0].mxu0
  %v1496 = vadd.f32 %v1399, %v1495
  %v1497 = vpop.f32.mrb[0].mxu0
  %1498 = vmatprep.mubr.bf16.mxu0 0
  %1499 = vmatmul.mubr.bf16.gmra.mrb[0].mxu0 %v514
  %v1500 = vpop.f32.mrb[0].mxu0
  %v1501 = vadd.f32 %v1404, %v1500
  %v1502 = vpop.f32.mrb[0].mxu0
  %v1503 = vpop.f32.mrb[0].mxu0
  %v1504 = vadd.f32 %v1407, %v1503
  %v1505 = vpop.f32.mrb[0].mxu0
  %1506 = vmatprep.mubr.bf16.mxu0 0
  %1507 = vmatmul.mubr.bf16.gmra.mrb[0].mxu0 %v523
  %v1508 = vpop.f32.mrb[0].mxu0
  %v1509 = vadd.f32 %v1412, %v1508
  %v1510 = vpop.f32.mrb[0].mxu0
  %v1511 = vpop.f32.mrb[0].mxu0
  %v1512 = vadd.f32 %v1415, %v1511
  %v1513 = vpop.f32.mrb[0].mxu0
  %1514 = vmatprep.mubr.bf16.mxu0 0
  %1515 = vmatmul.mubr.bf16.gmra.mrb[0].mxu0 %v532
  %v1516 = vpop.f32.mrb[0].mxu0
  %v1517 = vadd.f32 %v1420, %v1516
  %v1518 = vpop.f32.mrb[0].mxu0
  %v1519 = vpop.f32.mrb[0].mxu0
  %v1520 = vadd.f32 %v1423, %v1519
  %v1521 = vpop.f32.mrb[0].mxu0
  %1522 = vmatprep.mubr.bf16.mxu0 0
  %1523 = vmatmul.mubr.bf16.gmra.mrb[0].mxu0 %v541
  %v1524 = vpop.f32.mrb[0].mxu0
  %v1525 = vadd.f32 %v1428, %v1524
  %v1526 = vpop.f32.mrb[0].mxu0
  %v1527 = vpop.f32.mrb[0].mxu0
  %v1528 = vadd.f32 %v1431, %v1527
  %v1529 = vpop.f32.mrb[0].mxu0
  %1530 = vdwg.mxu0
  %v1531 = vxor.u32 %v1469, 2147483648
  %v1532 = vxor.u32 %v1472, 2147483648
  %v1533 = vxor.u32 %v1477, 2147483648
  %v1534 = vxor.u32 %v1480, 2147483648
  %v1535 = vxor.u32 %v1485, 2147483648
  %v1536 = vxor.u32 %v1488, 2147483648
  %v1537 = vxor.u32 %v1493, 2147483648
  %v1538 = vxor.u32 %v1496, 2147483648
  %v1539 = vxor.u32 %v1501, 2147483648
  %v1540 = vxor.u32 %v1504, 2147483648
  %v1541 = vxor.u32 %v1509, 2147483648
  %v1542 = vxor.u32 %v1512, 2147483648
  %v1543 = vxor.u32 %v1517, 2147483648
  %v1544 = vxor.u32 %v1520, 2147483648
  %v1545 = vxor.u32 %v1525, 2147483648
  %v1546 = vxor.u32 %v1528, 2147483648
  %v1547 = vmul.f32 %v1531, 1.442695
  %v1548 = vpow.pop %v1547
  %v1549 = vmul.f32 %v1532, 1.442695
  %v1550 = vpow.pop %v1549
  %v1551 = vmul.f32 %v1533, 1.442695
  %v1552 = vpow.pop %v1551
  %v1553 = vmul.f32 %v1534, 1.442695
  %v1554 = vpow.pop %v1553
  %v1555 = vmul.f32 %v1535, 1.442695
  %v1556 = vpow.pop %v1555
  %v1557 = vmul.f32 %v1536, 1.442695
  %v1558 = vpow.pop %v1557
  %v1559 = vmul.f32 %v1537, 1.442695
  %v1560 = vpow.pop %v1559
  %v1561 = vmul.f32 %v1538, 1.442695
  %v1562 = vpow.pop %v1561
  %v1563 = vmul.f32 %v1539, 1.442695
  %v1564 = vpow.pop %v1563
  %v1565 = vmul.f32 %v1540, 1.442695
  %v1566 = vpow.pop %v1565
  %v1567 = vmul.f32 %v1541, 1.442695
  %v1568 = vpow.pop %v1567
  %v1569 = vmul.f32 %v1542, 1.442695
  %v1570 = vpow.pop %v1569
  %v1571 = vmul.f32 %v1543, 1.442695
  %v1572 = vpow.pop %v1571
  %v1573 = vmul.f32 %v1544, 1.442695
  %v1574 = vpow.pop %v1573
  %v1575 = vmul.f32 %v1545, 1.442695
  %v1576 = vpow.pop %v1575
  %v1577 = vmul.f32 %v1546, 1.442695
  %v1578 = vpow.pop %v1577
  %v1579 = vadd.f32 %v1548, 1.0
  %v1580 = vadd.f32 %v1550, 1.0
  %v1581 = vadd.f32 %v1552, 1.0
  %v1582 = vadd.f32 %v1554, 1.0
  %v1583 = vadd.f32 %v1556, 1.0
  %v1584 = vadd.f32 %v1558, 1.0
  %v1585 = vadd.f32 %v1560, 1.0
  %v1586 = vadd.f32 %v1562, 1.0
  %v1587 = vadd.f32 %v1564, 1.0
  %v1588 = vadd.f32 %v1566, 1.0
  %v1589 = vadd.f32 %v1568, 1.0
  %v1590 = vadd.f32 %v1570, 1.0
  %v1591 = vadd.f32 %v1572, 1.0
  %v1592 = vadd.f32 %v1574, 1.0
  %v1593 = vadd.f32 %v1576, 1.0
  %v1594 = vadd.f32 %v1578, 1.0
  %v1595 = vrcp.pop %v1579
  %v1596 = vmul.f32 1.0, %v1595
  %v1597 = vrcp.pop %v1580
  %v1598 = vmul.f32 1.0, %v1597
  %v1599 = vrcp.pop %v1581
  %v1600 = vmul.f32 1.0, %v1599
  %v1601 = vrcp.pop %v1582
  %v1602 = vmul.f32 1.0, %v1601
  %v1603 = vrcp.pop %v1583
  %v1604 = vmul.f32 1.0, %v1603
  %v1605 = vrcp.pop %v1584
  %v1606 = vmul.f32 1.0, %v1605
  %v1607 = vrcp.pop %v1585
  %v1608 = vmul.f32 1.0, %v1607
  %v1609 = vrcp.pop %v1586
  %v1610 = vmul.f32 1.0, %v1609
  %v1611 = vrcp.pop %v1587
  %v1612 = vmul.f32 1.0, %v1611
  %v1613 = vrcp.pop %v1588
  %v1614 = vmul.f32 1.0, %v1613
  %v1615 = vrcp.pop %v1589
  %v1616 = vmul.f32 1.0, %v1615
  %v1617 = vrcp.pop %v1590
  %v1618 = vmul.f32 1.0, %v1617
  %v1619 = vrcp.pop %v1591
  %v1620 = vmul.f32 1.0, %v1619
  %v1621 = vrcp.pop %v1592
  %v1622 = vmul.f32 1.0, %v1621
  %v1623 = vrcp.pop %v1593
  %v1624 = vmul.f32 1.0, %v1623
  %v1625 = vrcp.pop %v1594
  %v1626 = vmul.f32 1.0, %v1625
  %v1627 = vmul.f32 %v1469, %v1596
  %v1628 = vmul.f32 %v1472, %v1598
  %v1629 = vmul.f32 %v1477, %v1600
  %v1630 = vmul.f32 %v1480, %v1602
  %v1631 = vmul.f32 %v1485, %v1604
  %v1632 = vmul.f32 %v1488, %v1606
  %v1633 = vmul.f32 %v1493, %v1608
  %v1634 = vmul.f32 %v1496, %v1610
  %v1635 = vmul.f32 %v1501, %v1612
  %v1636 = vmul.f32 %v1504, %v1614
  %v1637 = vmul.f32 %v1509, %v1616
  %v1638 = vmul.f32 %v1512, %v1618
  %v1639 = vmul.f32 %v1517, %v1620
  %v1640 = vmul.f32 %v1520, %v1622
  %v1641 = vmul.f32 %v1525, %v1624
  %v1642 = vmul.f32 %v1528, %v1626
  %v1643 = vpack.c.bf16 %v1628, %v1627
  %v1644 = vpack.c.bf16 %v1630, %v1629
  %v1645 = vpack.c.bf16 %v1632, %v1631
  %v1646 = vpack.c.bf16 %v1634, %v1633
  %v1647 = vpack.c.bf16 %v1636, %v1635
  %v1648 = vpack.c.bf16 %v1638, %v1637
  %v1649 = vpack.c.bf16 %v1640, %v1639
  %v1650 = vpack.c.bf16 %v1642, %v1641
  %v1659 = vunpack.c.l.b16 %v1643
  %v1660 = vunpack.c.h.b16 %v1643
  %v1661 = vunpack.c.l.b16 %v1644
  %v1662 = vunpack.c.h.b16 %v1644
  %v1663 = vunpack.c.l.b16 %v1645
  %v1664 = vunpack.c.h.b16 %v1645
  %v1665 = vunpack.c.l.b16 %v1646
  %v1666 = vunpack.c.h.b16 %v1646
  %v1667 = vunpack.c.l.b16 %v1647
  %v1668 = vunpack.c.h.b16 %v1647
  %v1669 = vunpack.c.l.b16 %v1648
  %v1670 = vunpack.c.h.b16 %v1648
  %v1671 = vunpack.c.l.b16 %v1649
  %v1672 = vunpack.c.h.b16 %v1649
  %v1673 = vunpack.c.l.b16 %v1650
  %v1674 = vunpack.c.h.b16 %v1650
  %v1675 = vpack.c.b16 %v1659, %v1659
  %v1676 = vpack.c.b16 %v1660, %v1660
  %v1677 = vpack.c.b16 %v1661, %v1661
  %v1678 = vpack.c.b16 %v1662, %v1662
  %v1679 = vpack.c.b16 %v1663, %v1663
  %v1680 = vpack.c.b16 %v1664, %v1664
  %v1681 = vpack.c.b16 %v1665, %v1665
  %v1682 = vpack.c.b16 %v1666, %v1666
  %v1683 = vpack.c.b16 %v1667, %v1667
  %v1684 = vpack.c.b16 %v1668, %v1668
  %v1685 = vpack.c.b16 %v1669, %v1669
  %v1686 = vpack.c.b16 %v1670, %v1670
  %v1687 = vpack.c.b16 %v1671, %v1671
  %v1688 = vpack.c.b16 %v1672, %v1672
  %v1689 = vpack.c.b16 %v1673, %v1673
  %v1690 = vpack.c.b16 %v1674, %v1674
  %1707 = vst [vmem:[%s3] sm:$0xf] %v1675
  %1708 = vst [vmem:[%s3 + $0x4] sm:$0xf] %v1676
  %1709 = vst [vmem:[%s3 + $0x8] sm:$0xf] %v1677
  %1710 = vst [vmem:[%s3 + $0xc] sm:$0xf] %v1678
  %1711 = vst [vmem:[%s3 + $0x10] sm:$0xf] %v1679
  %1712 = vst [vmem:[%s3 + $0x14] sm:$0xf] %v1680
  %1713 = vst [vmem:[%s3 + $0x18] sm:$0xf] %v1681
  %1714 = vst [vmem:[%s3 + $0x1c] sm:$0xf] %v1682
  %1715 = vst [vmem:[%s3 + $0x20] sm:$0xf] %v1683
  %1716 = vst [vmem:[%s3 + $0x24] sm:$0xf] %v1684
  %1717 = vst [vmem:[%s3 + $0x28] sm:$0xf] %v1685
  %1718 = vst [vmem:[%s3 + $0x2c] sm:$0xf] %v1686
  %1719 = vst [vmem:[%s3 + $0x30] sm:$0xf] %v1687
  %1720 = vst [vmem:[%s3 + $0x34] sm:$0xf] %v1688
  %1721 = vst [vmem:[%s3 + $0x38] sm:$0xf] %v1689
  %1722 = vst [vmem:[%s3 + $0x3c] sm:$0xf] %v1690
  // Predicated region
  $region14: #{efficientnetv2l_forward.12} parent=0 // pred_check
    _
  $region15: #{efficientnetv2l_forward.12} parent=0 // pred_check_branch
    %1724 = sbr.rel (0) target = $region17
  $region16: #{efficientnetv2l_forward.12} parent=0 // pred_region
    _
  $region17: #{efficientnetv2l_forward.12} parent=0 // pred_fallthru
    _
  // Predicated region
  $region18: #{efficientnetv2l_forward.12} parent=0 // pred_check
    _
  $region19: #{efficientnetv2l_forward.12} parent=0 // pred_check_branch
    %1726 = sbr.rel (0) target = $region21
  $region20: #{efficientnetv2l_forward.12} parent=0 // pred_region
    _
  $region21: #{efficientnetv2l_forward.12} parent=0 // pred_fallthru
    _

// kernel: efficientnetv2l_forward.14
$region0: #{efficientnetv2l_forward.14}
  #allocation0 [shape = 'u32[]', space=smem, size = 0x4, offset = 0x4, fixed_abs, tag = 'smem constant byte address 0x4 - core index']
  #allocation1 [shape = 'u32[144,128]{1,0:T(1,128)}', space=vmem, size = 0x12000, scoped, tag = 'internal scratch']
  %s0 = inlined_call_operand.vmem [shape: bf16[128,128], index: 0, kind: input, shape index: {}]
  %s1 = inlined_call_operand.vmem [shape: bf16[128,128], index: 1, kind: input, shape index: {}]
  %s2 = inlined_call_operand.vmem [shape: f32[1,128], index: 2, kind: input, shape index: {}]
  %s3 = inlined_call_operand.vmem [shape: bf16[128,128], index: 3, kind: output, shape index: {}]
  %s4 = sld [smem:[#allocation0]]
  $region22: #{efficientnetv2l_forward.14} parent=0
    _
  %s6 = ssub.s32 1, %s4
  %s7 = scalar_select 0, %s6, %s4
  // Predicated region
  $region2: #{efficientnetv2l_forward.14} parent=0 // pred_check
    _
  $region3: #{efficientnetv2l_forward.14} parent=0 // pred_check_branch
    %9 = sbr.rel (0) target = $region5
  $region4: #{efficientnetv2l_forward.14} parent=0 // pred_region
    _
  $region5: #{efficientnetv2l_forward.14} parent=0 // pred_fallthru
    _
  // Predicated region
  $region6: #{efficientnetv2l_forward.14} parent=0 // pred_check
    _
  $region7: #{efficientnetv2l_forward.14} parent=0 // pred_check_branch
    %11 = sbr.rel (0) target = $region9
  $region8: #{efficientnetv2l_forward.14} parent=0 // pred_region
    _
  $region9: #{efficientnetv2l_forward.14} parent=0 // pred_fallthru
    _
  // Predicated region
  $region10: #{efficientnetv2l_forward.14} parent=0 // pred_check
    _
  $region11: #{efficientnetv2l_forward.14} parent=0 // pred_check_branch
    %13 = sbr.rel (0) target = $region13
  $region12: #{efficientnetv2l_forward.14} parent=0 // pred_region
    _
  $region13: #{efficientnetv2l_forward.14} parent=0 // pred_fallthru
    _
  %v15 = vld [vmem:[%s0] sm:$0xf]
  %v16 = vld [vmem:[%s0 + $0x4] sm:$0xf]
  %v17 = vld [vmem:[%s0 + $0x8] sm:$0xf]
  %v18 = vld [vmem:[%s0 + $0xc] sm:$0xf]
  %v19 = vld [vmem:[%s0 + $0x10] sm:$0xf]
  %v20 = vld [vmem:[%s0 + $0x14] sm:$0xf]
  %v21 = vld [vmem:[%s0 + $0x18] sm:$0xf]
  %v22 = vld [vmem:[%s0 + $0x1c] sm:$0xf]
  %v23 = vld [vmem:[%s0 + $0x20] sm:$0xf]
  %v24 = vld [vmem:[%s0 + $0x24] sm:$0xf]
  %v25 = vld [vmem:[%s0 + $0x28] sm:$0xf]
  %v26 = vld [vmem:[%s0 + $0x2c] sm:$0xf]
  %v27 = vld [vmem:[%s0 + $0x30] sm:$0xf]
  %v28 = vld [vmem:[%s0 + $0x34] sm:$0xf]
  %v29 = vld [vmem:[%s0 + $0x38] sm:$0xf]
  %v30 = vld [vmem:[%s0 + $0x3c] sm:$0xf]
  %v31 = vld [vmem:[%s1] sm:$0xf]
  %v32 = vld [vmem:[%s1 + $0x4] sm:$0xf]
  %v33 = vld [vmem:[%s1 + $0x8] sm:$0xf]
  %v34 = vld [vmem:[%s1 + $0xc] sm:$0xf]
  %v35 = vld [vmem:[%s1 + $0x10] sm:$0xf]
  %v36 = vld [vmem:[%s1 + $0x14] sm:$0xf]
  %v37 = vld [vmem:[%s1 + $0x18] sm:$0xf]
  %v38 = vld [vmem:[%s1 + $0x1c] sm:$0xf]
  %v39 = vld [vmem:[%s1 + $0x20] sm:$0xf]
  %v40 = vld [vmem:[%s1 + $0x24] sm:$0xf]
  %v41 = vld [vmem:[%s1 + $0x28] sm:$0xf]
  %v42 = vld [vmem:[%s1 + $0x2c] sm:$0xf]
  %v43 = vld [vmem:[%s1 + $0x30] sm:$0xf]
  %v44 = vld [vmem:[%s1 + $0x34] sm:$0xf]
  %v45 = vld [vmem:[%s1 + $0x38] sm:$0xf]
  %v46 = vld [vmem:[%s1 + $0x3c] sm:$0xf]
  %v47 = vld [vmem:[%s2] sm:$0x1]
  %v49 = vlaneseq
  %v50 = vshrl.u32 %v49, 7
  %v51 = vsub.s32 0, %v50
  %v52 = vrot.slane %v47, %v51
  %v70 = vunpack.c.l.b16 %v15
  %v71 = vunpack.c.l.b16 %v16
  %v72 = vunpack.c.l.b16 %v17
  %v73 = vunpack.c.l.b16 %v18
  %v74 = vunpack.c.l.b16 %v19
  %v75 = vunpack.c.l.b16 %v20
  %v76 = vunpack.c.l.b16 %v21
  %v77 = vunpack.c.l.b16 %v22
  %v78 = vunpack.c.l.b16 %v23
  %v79 = vunpack.c.l.b16 %v24
  %v80 = vunpack.c.l.b16 %v25
  %v81 = vunpack.c.l.b16 %v26
  %v82 = vunpack.c.l.b16 %v27
  %v83 = vunpack.c.l.b16 %v28
  %v84 = vunpack.c.l.b16 %v29
  %v85 = vunpack.c.l.b16 %v30
  %v86 = vpack.c.b16 %v71, %v70
  %v87 = vpack.c.b16 %v73, %v72
  %v88 = vpack.c.b16 %v75, %v74
  %v89 = vpack.c.b16 %v77, %v76
  %v90 = vpack.c.b16 %v79, %v78
  %v91 = vpack.c.b16 %v81, %v80
  %v92 = vpack.c.b16 %v83, %v82
  %v93 = vpack.c.b16 %v85, %v84
  %v118 = vunpack.c.l.b16 %v31
  %v119 = vunpack.c.l.b16 %v32
  %v120 = vunpack.c.l.b16 %v33
  %v121 = vunpack.c.l.b16 %v34
  %v122 = vunpack.c.l.b16 %v35
  %v123 = vunpack.c.l.b16 %v36
  %v124 = vunpack.c.l.b16 %v37
  %v125 = vunpack.c.l.b16 %v38
  %v126 = vunpack.c.l.b16 %v39
  %v127 = vunpack.c.l.b16 %v40
  %v128 = vunpack.c.l.b16 %v41
  %v129 = vunpack.c.l.b16 %v42
  %v130 = vunpack.c.l.b16 %v43
  %v131 = vunpack.c.l.b16 %v44
  %v132 = vunpack.c.l.b16 %v45
  %v133 = vunpack.c.l.b16 %v46
  %v134 = vpack.c.b16 %v119, %v118
  %v135 = vpack.c.b16 %v121, %v120
  %v136 = vpack.c.b16 %v123, %v122
  %v137 = vpack.c.b16 %v125, %v124
  %v138 = vpack.c.b16 %v127, %v126
  %v139 = vpack.c.b16 %v129, %v128
  %v140 = vpack.c.b16 %v131, %v130
  %v141 = vpack.c.b16 %v133, %v132
  %150 = vmatprep.subr.bf16.mxu0 0
  %151 = vmatpush1.bf16.msra.mxu0 %v134
  %152 = vmatprep.subr.bf16.mxu0 0
  %153 = vmatpush1.bf16.msra.mxu0 %v135
  %154 = vmatprep.subr.bf16.mxu0 0
  %155 = vmatpush1.bf16.msra.mxu0 %v136
  %156 = vmatprep.subr.bf16.mxu0 0
  %157 = vmatpush1.bf16.msra.mxu0 %v137
  %158 = vmatprep.subr.bf16.mxu0 0
  %159 = vmatpush1.bf16.msra.mxu0 %v138
  %160 = vmatprep.subr.bf16.mxu0 0
  %161 = vmatpush1.bf16.msra.mxu0 %v139
  %162 = vmatprep.subr.bf16.mxu0 0
  %163 = vmatpush1.bf16.msra.mxu0 %v140
  %164 = vmatprep.subr.bf16.mxu0 0
  %165 = vmatpush1.bf16.msra.mxu0 %v141
  %166 = vmatprep.subr.bf16.mxu0 0
  %167 = vmatpush1.bf16.msra.mxu0 0
  %168 = vmatprep.subr.bf16.mxu0 0
  %169 = vmatpush1.bf16.msra.mxu0 0
  %170 = vmatprep.subr.bf16.mxu0 0
  %171 = vmatpush1.bf16.msra.mxu0 0
  %172 = vmatprep.subr.bf16.mxu0 0
  %173 = vmatpush1.bf16.msra.mxu0 0
  %174 = vmatprep.subr.bf16.mxu0 0
  %175 = vmatpush1.bf16.msra.mxu0 0
  %176 = vmatprep.subr.bf16.mxu0 0
  %177 = vmatpush1.bf16.msra.mxu0 0
  %178 = vmatprep.subr.bf16.mxu0 0
  %179 = vmatpush1.bf16.msra.mxu0 0
  %180 = vmatprep.subr.bf16.mxu0 0
  %181 = vmatpush1.bf16.msra.mxu0 0
  %182 = vmatprep.mubr.bf16.mxu0 0
  %183 = vmatmul.mubr.bf16.gmra.mrb[0].mxu0 %v86
  %v184 = vpop.f32.mrb[0].mxu0
  %v185 = vadd.f32 %v52, %v184
  %v186 = vpop.f32.mrb[0].mxu0
  %v187 = vpop.f32.mrb[0].mxu0
  %v188 = vadd.f32 %v52, %v187
  %v189 = vpop.f32.mrb[0].mxu0
  %190 = vmatprep.mubr.bf16.mxu0 0
  %191 = vmatmul.mubr.bf16.gmra.mrb[0].mxu0 %v87
  %v192 = vpop.f32.mrb[0].mxu0
  %v193 = vadd.f32 %v52, %v192
  %v194 = vpop.f32.mrb[0].mxu0
  %v195 = vpop.f32.mrb[0].mxu0
  %v196 = vadd.f32 %v52, %v195
  %v197 = vpop.f32.mrb[0].mxu0
  %198 = vmatprep.mubr.bf16.mxu0 0
  %199 = vmatmul.mubr.bf16.gmra.mrb[0].mxu0 %v88
  %v200 = vpop.f32.mrb[0].mxu0
  %v201 = vadd.f32 %v52, %v200
  %v202 = vpop.f32.mrb[0].mxu0
  %v203 = vpop.f32.mrb[0].mxu0
  %v204 = vadd.f32 %v52, %v203
  %v205 = vpop.f32.mrb[0].mxu0
  %206 = vmatprep.mubr.bf16.mxu0 0
  %207 = vmatmul.mubr.bf16.gmra.mrb[0].mxu0 %v89
  %v208 = vpop.f32.mrb[0].mxu0
  %v209 = vadd.f32 %v52, %v208
  %v210 = vpop.f32.mrb[0].mxu0
  %v211 = vpop.f32.mrb[0].mxu0
  %v212 = vadd.f32 %v52, %v211
  %v213 = vpop.f32.mrb[0].mxu0
  %214 = vmatprep.mubr.bf16.mxu0 0
  %215 = vmatmul.mubr.bf16.gmra.mrb[0].mxu0 %v90
  %v216 = vpop.f32.mrb[0].mxu0
  %v217 = vadd.f32 %v52, %v216
  %v218 = vpop.f32.mrb[0].mxu0
  %v219 = vpop.f32.mrb[0].mxu0
  %v220 = vadd.f32 %v52, %v219
  %v221 = vpop.f32.mrb[0].mxu0
  %222 = vmatprep.mubr.bf16.mxu0 0
  %223 = vmatmul.mubr.bf16.gmra.mrb[0].mxu0 %v91
  %v224 = vpop.f32.mrb[0].mxu0
  %v225 = vadd.f32 %v52, %v224
  %v226 = vpop.f32.mrb[0].mxu0
  %v227 = vpop.f32.mrb[0].mxu0
  %v228 = vadd.f32 %v52, %v227
  %v229 = vpop.f32.mrb[0].mxu0
  %230 = vmatprep.mubr.bf16.mxu0 0
  %231 = vmatmul.mubr.bf16.gmra.mrb[0].mxu0 %v92
  %v232 = vpop.f32.mrb[0].mxu0
  %v233 = vadd.f32 %v52, %v232
  %v234 = vpop.f32.mrb[0].mxu0
  %v235 = vpop.f32.mrb[0].mxu0
  %v236 = vadd.f32 %v52, %v235
  %v237 = vpop.f32.mrb[0].mxu0
  %238 = vmatprep.mubr.bf16.mxu0 0
  %239 = vmatmul.mubr.bf16.gmra.mrb[0].mxu0 %v93
  %v240 = vpop.f32.mrb[0].mxu0
  %v241 = vadd.f32 %v52, %v240
  %v242 = vpop.f32.mrb[0].mxu0
  %v243 = vpop.f32.mrb[0].mxu0
  %v244 = vadd.f32 %v52, %v243
  %v245 = vpop.f32.mrb[0].mxu0
  %246 = vdwg.mxu0
  %v247 = vxor.u32 %v185, 2147483648
  %v248 = vxor.u32 %v188, 2147483648
  %v249 = vxor.u32 %v193, 2147483648
  %v250 = vxor.u32 %v196, 2147483648
  %v251 = vxor.u32 %v201, 2147483648
  %v252 = vxor.u32 %v204, 2147483648
  %v253 = vxor.u32 %v209, 2147483648
  %v254 = vxor.u32 %v212, 2147483648
  %v255 = vxor.u32 %v217, 2147483648
  %v256 = vxor.u32 %v220, 2147483648
  %v257 = vxor.u32 %v225, 2147483648
  %v258 = vxor.u32 %v228, 2147483648
  %v259 = vxor.u32 %v233, 2147483648
  %v260 = vxor.u32 %v236, 2147483648
  %v261 = vxor.u32 %v241, 2147483648
  %v262 = vxor.u32 %v244, 2147483648
  %v263 = vmul.f32 %v247, 1.442695
  %v264 = vpow.pop %v263
  %v265 = vmul.f32 %v248, 1.442695
  %v266 = vpow.pop %v265
  %v267 = vmul.f32 %v249, 1.442695
  %v268 = vpow.pop %v267
  %v269 = vmul.f32 %v250, 1.442695
  %v270 = vpow.pop %v269
  %v271 = vmul.f32 %v251, 1.442695
  %v272 = vpow.pop %v271
  %v273 = vmul.f32 %v252, 1.442695
  %v274 = vpow.pop %v273
  %v275 = vmul.f32 %v253, 1.442695
  %v276 = vpow.pop %v275
  %v277 = vmul.f32 %v254, 1.442695
  %v278 = vpow.pop %v277
  %v279 = vmul.f32 %v255, 1.442695
  %v280 = vpow.pop %v279
  %v281 = vmul.f32 %v256, 1.442695
  %v282 = vpow.pop %v281
  %v283 = vmul.f32 %v257, 1.442695
  %v284 = vpow.pop %v283
  %v285 = vmul.f32 %v258, 1.442695
  %v286 = vpow.pop %v285
  %v287 = vmul.f32 %v259, 1.442695
  %v288 = vpow.pop %v287
  %v289 = vmul.f32 %v260, 1.442695
  %v290 = vpow.pop %v289
  %v291 = vmul.f32 %v261, 1.442695
  %v292 = vpow.pop %v291
  %v293 = vmul.f32 %v262, 1.442695
  %v294 = vpow.pop %v293
  %v295 = vadd.f32 %v264, 1.0
  %v296 = vadd.f32 %v266, 1.0
  %v297 = vadd.f32 %v268, 1.0
  %v298 = vadd.f32 %v270, 1.0
  %v299 = vadd.f32 %v272, 1.0
  %v300 = vadd.f32 %v274, 1.0
  %v301 = vadd.f32 %v276, 1.0
  %v302 = vadd.f32 %v278, 1.0
  %v303 = vadd.f32 %v280, 1.0
  %v304 = vadd.f32 %v282, 1.0
  %v305 = vadd.f32 %v284, 1.0
  %v306 = vadd.f32 %v286, 1.0
  %v307 = vadd.f32 %v288, 1.0
  %v308 = vadd.f32 %v290, 1.0
  %v309 = vadd.f32 %v292, 1.0
  %v310 = vadd.f32 %v294, 1.0
  %v311 = vrcp.pop %v295
  %v312 = vmul.f32 1.0, %v311
  %v313 = vrcp.pop %v296
  %v314 = vmul.f32 1.0, %v313
  %v315 = vrcp.pop %v297
  %v316 = vmul.f32 1.0, %v315
  %v317 = vrcp.pop %v298
  %v318 = vmul.f32 1.0, %v317
  %v319 = vrcp.pop %v299
  %v320 = vmul.f32 1.0, %v319
  %v321 = vrcp.pop %v300
  %v322 = vmul.f32 1.0, %v321
  %v323 = vrcp.pop %v301
  %v324 = vmul.f32 1.0, %v323
  %v325 = vrcp.pop %v302
  %v326 = vmul.f32 1.0, %v325
  %v327 = vrcp.pop %v303
  %v328 = vmul.f32 1.0, %v327
  %v329 = vrcp.pop %v304
  %v330 = vmul.f32 1.0, %v329
  %v331 = vrcp.pop %v305
  %v332 = vmul.f32 1.0, %v331
  %v333 = vrcp.pop %v306
  %v334 = vmul.f32 1.0, %v333
  %v335 = vrcp.pop %v307
  %v336 = vmul.f32 1.0, %v335
  %v337 = vrcp.pop %v308
  %v338 = vmul.f32 1.0, %v337
  %v339 = vrcp.pop %v309
  %v340 = vmul.f32 1.0, %v339
  %v341 = vrcp.pop %v310
  %v342 = vmul.f32 1.0, %v341
  %v343 = vmul.f32 %v185, %v312
  %v344 = vmul.f32 %v188, %v314
  %v345 = vmul.f32 %v193, %v316
  %v346 = vmul.f32 %v196, %v318
  %v347 = vmul.f32 %v201, %v320
  %v348 = vmul.f32 %v204, %v322
  %v349 = vmul.f32 %v209, %v324
  %v350 = vmul.f32 %v212, %v326
  %v351 = vmul.f32 %v217, %v328
  %v352 = vmul.f32 %v220, %v330
  %v353 = vmul.f32 %v225, %v332
  %v354 = vmul.f32 %v228, %v334
  %v355 = vmul.f32 %v233, %v336
  %v356 = vmul.f32 %v236, %v338
  %v357 = vmul.f32 %v241, %v340
  %v358 = vmul.f32 %v244, %v342
  %v359 = vpack.c.bf16 %v344, %v343
  %v360 = vpack.c.bf16 %v346, %v345
  %v361 = vpack.c.bf16 %v348, %v347
  %v362 = vpack.c.bf16 %v350, %v349
  %v363 = vpack.c.bf16 %v352, %v351
  %v364 = vpack.c.bf16 %v354, %v353
  %v365 = vpack.c.bf16 %v356, %v355
  %v366 = vpack.c.bf16 %v358, %v357
  %v375 = vunpack.c.l.b16 %v359
  %v376 = vunpack.c.h.b16 %v359
  %v377 = vunpack.c.l.b16 %v360
  %v378 = vunpack.c.h.b16 %v360
  %v379 = vunpack.c.l.b16 %v361
  %v380 = vunpack.c.h.b16 %v361
  %v381 = vunpack.c.l.b16 %v362
  %v382 = vunpack.c.h.b16 %v362
  %v383 = vunpack.c.l.b16 %v363
  %v384 = vunpack.c.h.b16 %v363
  %v385 = vunpack.c.l.b16 %v364
  %v386 = vunpack.c.h.b16 %v364
  %v387 = vunpack.c.l.b16 %v365
  %v388 = vunpack.c.h.b16 %v365
  %v389 = vunpack.c.l.b16 %v366
  %v390 = vunpack.c.h.b16 %v366
  %v391 = vpack.c.b16 %v375, %v375
  %v392 = vpack.c.b16 %v376, %v376
  %v393 = vpack.c.b16 %v377, %v377
  %v394 = vpack.c.b16 %v378, %v378
  %v395 = vpack.c.b16 %v379, %v379
  %v396 = vpack.c.b16 %v380, %v380
  %v397 = vpack.c.b16 %v381, %v381
  %v398 = vpack.c.b16 %v382, %v382
  %v399 = vpack.c.b16 %v383, %v383
  %v400 = vpack.c.b16 %v384, %v384
  %v401 = vpack.c.b16 %v385, %v385
  %v402 = vpack.c.b16 %v386, %v386
  %v403 = vpack.c.b16 %v387, %v387
  %v404 = vpack.c.b16 %v388, %v388
  %v405 = vpack.c.b16 %v389, %v389
  %v406 = vpack.c.b16 %v390, %v390
  %423 = vst [vmem:[%s3] sm:$0xf] %v391
  %424 = vst [vmem:[%s3 + $0x4] sm:$0xf] %v392
  %425 = vst [vmem:[%s3 + $0x8] sm:$0xf] %v393
  %426 = vst [vmem:[%s3 + $0xc] sm:$0xf] %v394
  %427 = vst [vmem:[%s3 + $0x10] sm:$0xf] %v395
  %428 = vst [vmem:[%s3 + $0x14] sm:$0xf] %v396
  %429 = vst [vmem:[%s3 + $0x18] sm:$0xf] %v397
  %430 = vst [vmem:[%s3 + $0x1c] sm:$0xf] %v398
  %431 = vst [vmem:[%s3 + $0x20] sm:$0xf] %v399
  %432 = vst [vmem:[%s3 + $0x24] sm:$0xf] %v400
  %433 = vst [vmem:[%s3 + $0x28] sm:$0xf] %v401
  %434 = vst [vmem:[%s3 + $0x2c] sm:$0xf] %v402
  %435 = vst [vmem:[%s3 + $0x30] sm:$0xf] %v403
  %436 = vst [vmem:[%s3 + $0x34] sm:$0xf] %v404
  %437 = vst [vmem:[%s3 + $0x38] sm:$0xf] %v405
  %438 = vst [vmem:[%s3 + $0x3c] sm:$0xf] %v406
  // Predicated region
  $region14: #{efficientnetv2l_forward.14} parent=0 // pred_check
    _
  $region15: #{efficientnetv2l_forward.14} parent=0 // pred_check_branch
    %440 = sbr.rel (0) target = $region17
  $region16: #{efficientnetv2l_forward.14} parent=0 // pred_region
    _
  $region17: #{efficientnetv2l_forward.14} parent=0 // pred_fallthru
    _
  // Predicated region
  $region18: #{efficientnetv2l_forward.14} parent=0 // pred_check
    _
  $region19: #{efficientnetv2l_forward.14} parent=0 // pred_check_branch
    %442 = sbr.rel (0) target = $region21
  $region20: #{efficientnetv2l_forward.14} parent=0 // pred_region
    _
  $region21: #{efficientnetv2l_forward.14} parent=0 // pred_fallthru
    _

// kernel: efficientnetv2l_forward.15
$region0: #{efficientnetv2l_forward.15}
  #allocation0 [shape = 'u32[]', space=smem, size = 0x4, offset = 0x4, fixed_abs, tag = 'smem constant byte address 0x4 - core index']
  #allocation1 [shape = 'u32[144,128]{1,0:T(1,128)}', space=vmem, size = 0x12000, scoped, tag = 'internal scratch']
  %s0 = inlined_call_operand.vmem [shape: bf16[9,32,128], index: 0, kind: input, shape index: {}]
  %s1 = inlined_call_operand.vmem [shape: f32[9,128], index: 1, kind: input, shape index: {}]
  %s2 = inlined_call_operand.vmem [shape: f32[1,128], index: 2, kind: input, shape index: {}]
  %s3 = inlined_call_operand.vmem [shape: bf16[32,128], index: 3, kind: output, shape index: {}]
  %s4 = sld [smem:[#allocation0]]
  $region22: #{efficientnetv2l_forward.15} parent=0
    _
  %s6 = ssub.s32 1, %s4
  %s7 = scalar_select 0, %s6, %s4
  // Predicated region
  $region2: #{efficientnetv2l_forward.15} parent=0 // pred_check
    _
  $region3: #{efficientnetv2l_forward.15} parent=0 // pred_check_branch
    %9 = sbr.rel (0) target = $region5
  $region4: #{efficientnetv2l_forward.15} parent=0 // pred_region
    _
  $region5: #{efficientnetv2l_forward.15} parent=0 // pred_fallthru
    _
  // Predicated region
  $region6: #{efficientnetv2l_forward.15} parent=0 // pred_check
    _
  $region7: #{efficientnetv2l_forward.15} parent=0 // pred_check_branch
    %11 = sbr.rel (0) target = $region9
  $region8: #{efficientnetv2l_forward.15} parent=0 // pred_region
    _
  $region9: #{efficientnetv2l_forward.15} parent=0 // pred_fallthru
    _
  // Predicated region
  $region10: #{efficientnetv2l_forward.15} parent=0 // pred_check
    _
  $region11: #{efficientnetv2l_forward.15} parent=0 // pred_check_branch
    %13 = sbr.rel (0) target = $region13
  $region12: #{efficientnetv2l_forward.15} parent=0 // pred_region
    _
  $region13: #{efficientnetv2l_forward.15} parent=0 // pred_fallthru
    _
  %v14 = vld [vmem:[%s0] sm:$0xf]
  %v15 = vld [vmem:[%s0 + $0x4] sm:$0xf]
  %v16 = vld [vmem:[%s0 + $0x8] sm:$0xf]
  %v17 = vld [vmem:[%s0 + $0xc] sm:$0xf]
  %v18 = vunpack.c.l.bf16 %v14
  %v19 = vunpack.c.l.bf16 %v15
  %v20 = vunpack.c.l.bf16 %v16
  %v21 = vunpack.c.l.bf16 %v17
  %v22 = vld [vmem:[%s1] sm:$0x1]
  %v23 = vlaneseq
  %v24 = vshrl.u32 %v23, 7
  %v25 = vsub.s32 0, %v24
  %v26 = vrot.slane %v22, %v25
  %v27 = vmul.f32 %v18, %v26
  %v28 = vmul.f32 %v19, %v26
  %v29 = vmul.f32 %v20, %v26
  %v30 = vmul.f32 %v21, %v26
  %v31 = vadd.f32 %v27, 0.0
  %v32 = vadd.f32 %v28, 0.0
  %v33 = vadd.f32 %v29, 0.0
  %v34 = vadd.f32 %v30, 0.0
  %s35 = scalar_lea.vmem %s0, 16
  %v36 = vld [vmem:[%s35] sm:$0xf]
  %v37 = vld [vmem:[%s35 + $0x4] sm:$0xf]
  %v38 = vld [vmem:[%s35 + $0x8] sm:$0xf]
  %v39 = vld [vmem:[%s35 + $0xc] sm:$0xf]
  %v40 = vunpack.c.l.bf16 %v36
  %v41 = vunpack.c.l.bf16 %v37
  %v42 = vunpack.c.l.bf16 %v38
  %v43 = vunpack.c.l.bf16 %v39
  %v44 = vld [vmem:[%s1 + $0x1] sm:$0x1]
  %v45 = vlaneseq
  %v46 = vshrl.u32 %v45, 7
  %v47 = vsub.s32 0, %v46
  %v48 = vrot.slane %v44, %v47
  %v49 = vmul.f32 %v40, %v48
  %v50 = vmul.f32 %v41, %v48
  %v51 = vmul.f32 %v42, %v48
  %v52 = vmul.f32 %v43, %v48
  %v53 = vadd.f32 %v31, %v49
  %v54 = vadd.f32 %v32, %v50
  %v55 = vadd.f32 %v33, %v51
  %v56 = vadd.f32 %v34, %v52
  %s57 = scalar_lea.vmem %s0, 32
  %v58 = vld [vmem:[%s57] sm:$0xf]
  %v59 = vld [vmem:[%s57 + $0x4] sm:$0xf]
  %v60 = vld [vmem:[%s57 + $0x8] sm:$0xf]
  %v61 = vld [vmem:[%s57 + $0xc] sm:$0xf]
  %v62 = vunpack.c.l.bf16 %v58
  %v63 = vunpack.c.l.bf16 %v59
  %v64 = vunpack.c.l.bf16 %v60
  %v65 = vunpack.c.l.bf16 %v61
  %v66 = vld [vmem:[%s1 + $0x2] sm:$0x1]
  %v67 = vlaneseq
  %v68 = vshrl.u32 %v67, 7
  %v69 = vsub.s32 0, %v68
  %v70 = vrot.slane %v66, %v69
  %v71 = vmul.f32 %v62, %v70
  %v72 = vmul.f32 %v63, %v70
  %v73 = vmul.f32 %v64, %v70
  %v74 = vmul.f32 %v65, %v70
  %v75 = vadd.f32 %v53, %v71
  %v76 = vadd.f32 %v54, %v72
  %v77 = vadd.f32 %v55, %v73
  %v78 = vadd.f32 %v56, %v74
  %s79 = scalar_lea.vmem %s0, 48
  %v80 = vld [vmem:[%s79] sm:$0xf]
  %v81 = vld [vmem:[%s79 + $0x4] sm:$0xf]
  %v82 = vld [vmem:[%s79 + $0x8] sm:$0xf]
  %v83 = vld [vmem:[%s79 + $0xc] sm:$0xf]
  %v84 = vunpack.c.l.bf16 %v80
  %v85 = vunpack.c.l.bf16 %v81
  %v86 = vunpack.c.l.bf16 %v82
  %v87 = vunpack.c.l.bf16 %v83
  %v88 = vld [vmem:[%s1 + $0x3] sm:$0x1]
  %v89 = vlaneseq
  %v90 = vshrl.u32 %v89, 7
  %v91 = vsub.s32 0, %v90
  %v92 = vrot.slane %v88, %v91
  %v93 = vmul.f32 %v84, %v92
  %v94 = vmul.f32 %v85, %v92
  %v95 = vmul.f32 %v86, %v92
  %v96 = vmul.f32 %v87, %v92
  %v97 = vadd.f32 %v75, %v93
  %v98 = vadd.f32 %v76, %v94
  %v99 = vadd.f32 %v77, %v95
  %v100 = vadd.f32 %v78, %v96
  %s101 = scalar_lea.vmem %s0, 64
  %v102 = vld [vmem:[%s101] sm:$0xf]
  %v103 = vld [vmem:[%s101 + $0x4] sm:$0xf]
  %v104 = vld [vmem:[%s101 + $0x8] sm:$0xf]
  %v105 = vld [vmem:[%s101 + $0xc] sm:$0xf]
  %v106 = vunpack.c.l.bf16 %v102
  %v107 = vunpack.c.l.bf16 %v103
  %v108 = vunpack.c.l.bf16 %v104
  %v109 = vunpack.c.l.bf16 %v105
  %v110 = vld [vmem:[%s1 + $0x4] sm:$0x1]
  %v111 = vlaneseq
  %v112 = vshrl.u32 %v111, 7
  %v113 = vsub.s32 0, %v112
  %v114 = vrot.slane %v110, %v113
  %v115 = vmul.f32 %v106, %v114
  %v116 = vmul.f32 %v107, %v114
  %v117 = vmul.f32 %v108, %v114
  %v118 = vmul.f32 %v109, %v114
  %v119 = vadd.f32 %v97, %v115
  %v120 = vadd.f32 %v98, %v116
  %v121 = vadd.f32 %v99, %v117
  %v122 = vadd.f32 %v100, %v118
  %s123 = scalar_lea.vmem %s0, 80
  %v124 = vld [vmem:[%s123] sm:$0xf]
  %v125 = vld [vmem:[%s123 + $0x4] sm:$0xf]
  %v126 = vld [vmem:[%s123 + $0x8] sm:$0xf]
  %v127 = vld [vmem:[%s123 + $0xc] sm:$0xf]
  %v128 = vunpack.c.l.bf16 %v124
  %v129 = vunpack.c.l.bf16 %v125
  %v130 = vunpack.c.l.bf16 %v126
  %v131 = vunpack.c.l.bf16 %v127
  %v132 = vld [vmem:[%s1 + $0x5] sm:$0x1]
  %v133 = vlaneseq
  %v134 = vshrl.u32 %v133, 7
  %v135 = vsub.s32 0, %v134
  %v136 = vrot.slane %v132, %v135
  %v137 = vmul.f32 %v128, %v136
  %v138 = vmul.f32 %v129, %v136
  %v139 = vmul.f32 %v130, %v136
  %v140 = vmul.f32 %v131, %v136
  %v141 = vadd.f32 %v119, %v137
  %v142 = vadd.f32 %v120, %v138
  %v143 = vadd.f32 %v121, %v139
  %v144 = vadd.f32 %v122, %v140
  %s145 = scalar_lea.vmem %s0, 96
  %v146 = vld [vmem:[%s145] sm:$0xf]
  %v147 = vld [vmem:[%s145 + $0x4] sm:$0xf]
  %v148 = vld [vmem:[%s145 + $0x8] sm:$0xf]
  %v149 = vld [vmem:[%s145 + $0xc] sm:$0xf]
  %v150 = vunpack.c.l.bf16 %v146
  %v151 = vunpack.c.l.bf16 %v147
  %v152 = vunpack.c.l.bf16 %v148
  %v153 = vunpack.c.l.bf16 %v149
  %v154 = vld [vmem:[%s1 + $0x6] sm:$0x1]
  %v155 = vlaneseq
  %v156 = vshrl.u32 %v155, 7
  %v157 = vsub.s32 0, %v156
  %v158 = vrot.slane %v154, %v157
  %v159 = vmul.f32 %v150, %v158
  %v160 = vmul.f32 %v151, %v158
  %v161 = vmul.f32 %v152, %v158
  %v162 = vmul.f32 %v153, %v158
  %v163 = vadd.f32 %v141, %v159
  %v164 = vadd.f32 %v142, %v160
  %v165 = vadd.f32 %v143, %v161
  %v166 = vadd.f32 %v144, %v162
  %s167 = scalar_lea.vmem %s0, 112
  %v168 = vld [vmem:[%s167] sm:$0xf]
  %v169 = vld [vmem:[%s167 + $0x4] sm:$0xf]
  %v170 = vld [vmem:[%s167 + $0x8] sm:$0xf]
  %v171 = vld [vmem:[%s167 + $0xc] sm:$0xf]
  %v172 = vunpack.c.l.bf16 %v168
  %v173 = vunpack.c.l.bf16 %v169
  %v174 = vunpack.c.l.bf16 %v170
  %v175 = vunpack.c.l.bf16 %v171
  %v176 = vld [vmem:[%s1 + $0x7] sm:$0x1]
  %v177 = vlaneseq
  %v178 = vshrl.u32 %v177, 7
  %v179 = vsub.s32 0, %v178
  %v180 = vrot.slane %v176, %v179
  %v181 = vmul.f32 %v172, %v180
  %v182 = vmul.f32 %v173, %v180
  %v183 = vmul.f32 %v174, %v180
  %v184 = vmul.f32 %v175, %v180
  %v185 = vadd.f32 %v163, %v181
  %v186 = vadd.f32 %v164, %v182
  %v187 = vadd.f32 %v165, %v183
  %v188 = vadd.f32 %v166, %v184
  %s189 = scalar_lea.vmem %s0, 128
  %v190 = vld [vmem:[%s189] sm:$0xf]
  %v191 = vld [vmem:[%s189 + $0x4] sm:$0xf]
  %v192 = vld [vmem:[%s189 + $0x8] sm:$0xf]
  %v193 = vld [vmem:[%s189 + $0xc] sm:$0xf]
  %v194 = vunpack.c.l.bf16 %v190
  %v195 = vunpack.c.l.bf16 %v191
  %v196 = vunpack.c.l.bf16 %v192
  %v197 = vunpack.c.l.bf16 %v193
  %v198 = vld [vmem:[%s1 + $0x8] sm:$0x1]
  %v199 = vlaneseq
  %v200 = vshrl.u32 %v199, 7
  %v201 = vsub.s32 0, %v200
  %v202 = vrot.slane %v198, %v201
  %v203 = vmul.f32 %v194, %v202
  %v204 = vmul.f32 %v195, %v202
  %v205 = vmul.f32 %v196, %v202
  %v206 = vmul.f32 %v197, %v202
  %v207 = vadd.f32 %v185, %v203
  %v208 = vadd.f32 %v186, %v204
  %v209 = vadd.f32 %v187, %v205
  %v210 = vadd.f32 %v188, %v206
  %v211 = vld [vmem:[%s2] sm:$0x1]
  %v213 = vlaneseq
  %v214 = vshrl.u32 %v213, 7
  %v215 = vsub.s32 0, %v214
  %v216 = vrot.slane %v211, %v215
  %v218 = vadd.f32 %v207, %v216
  %v219 = vadd.f32 %v208, %v216
  %v220 = vadd.f32 %v209, %v216
  %v221 = vadd.f32 %v210, %v216
  %v222 = vxor.u32 %v218, 2147483648
  %v223 = vxor.u32 %v219, 2147483648
  %v224 = vxor.u32 %v220, 2147483648
  %v225 = vxor.u32 %v221, 2147483648
  %v226 = vmul.f32 %v222, 1.442695
  %v227 = vpow.pop %v226
  %v228 = vmul.f32 %v223, 1.442695
  %v229 = vpow.pop %v228
  %v230 = vmul.f32 %v224, 1.442695
  %v231 = vpow.pop %v230
  %v232 = vmul.f32 %v225, 1.442695
  %v233 = vpow.pop %v232
  %v234 = vadd.f32 %v227, 1.0
  %v235 = vadd.f32 %v229, 1.0
  %v236 = vadd.f32 %v231, 1.0
  %v237 = vadd.f32 %v233, 1.0
  %v238 = vrcp.pop %v234
  %v239 = vmul.f32 1.0, %v238
  %v240 = vrcp.pop %v235
  %v241 = vmul.f32 1.0, %v240
  %v242 = vrcp.pop %v236
  %v243 = vmul.f32 1.0, %v242
  %v244 = vrcp.pop %v237
  %v245 = vmul.f32 1.0, %v244
  %v246 = vmul.f32 %v218, %v239
  %v247 = vmul.f32 %v219, %v241
  %v248 = vmul.f32 %v220, %v243
  %v249 = vmul.f32 %v221, %v245
  %v250 = vpack.c.bf16 %v247, %v246
  %v251 = vpack.c.bf16 %v249, %v248
  %v254 = vunpack.c.l.b16 %v250
  %v255 = vunpack.c.h.b16 %v250
  %v256 = vunpack.c.l.b16 %v251
  %v257 = vunpack.c.h.b16 %v251
  %v258 = vpack.c.b16 %v254, %v254
  %v259 = vpack.c.b16 %v255, %v255
  %v260 = vpack.c.b16 %v256, %v256
  %v261 = vpack.c.b16 %v257, %v257
  %266 = vst [vmem:[%s3] sm:$0xf] %v258
  %267 = vst [vmem:[%s3 + $0x4] sm:$0xf] %v259
  %268 = vst [vmem:[%s3 + $0x8] sm:$0xf] %v260
  %269 = vst [vmem:[%s3 + $0xc] sm:$0xf] %v261
  // Predicated region
  $region14: #{efficientnetv2l_forward.15} parent=0 // pred_check
    _
  $region15: #{efficientnetv2l_forward.15} parent=0 // pred_check_branch
    %271 = sbr.rel (0) target = $region17
  $region16: #{efficientnetv2l_forward.15} parent=0 // pred_region
    _
  $region17: #{efficientnetv2l_forward.15} parent=0 // pred_fallthru
    _
  // Predicated region
  $region18: #{efficientnetv2l_forward.15} parent=0 // pred_check
    _
  $region19: #{efficientnetv2l_forward.15} parent=0 // pred_check_branch
    %273 = sbr.rel (0) target = $region21
  $region20: #{efficientnetv2l_forward.15} parent=0 // pred_region
    _
  $region21: #{efficientnetv2l_forward.15} parent=0 // pred_fallthru
    _

// kernel: efficientnetv2l_forward.16
$region0: #{efficientnetv2l_forward.16}
  #allocation0 [shape = 'u32[]', space=smem, size = 0x4, offset = 0x4, fixed_abs, tag = 'smem constant byte address 0x4 - core index']
  #allocation1 [shape = 'u32[144,128]{1,0:T(1,128)}', space=vmem, size = 0x12000, scoped, tag = 'internal scratch']
  %s0 = inlined_call_operand.vmem [shape: bf16[2,16,128], index: 0, kind: input, shape index: {}]
  %s1 = inlined_call_operand.vmem [shape: bf16[128,128], index: 1, kind: input, shape index: {}]
  %s2 = inlined_call_operand.vmem [shape: f32[1,128], index: 2, kind: input, shape index: {}]
  %s3 = inlined_call_operand.vmem [shape: bf16[128,128], index: 3, kind: input, shape index: {}]
  %s4 = inlined_call_operand.vmem [shape: f32[1,128], index: 4, kind: input, shape index: {}]
  %s5 = inlined_call_operand.vmem [shape: bf16[2,128], index: 5, kind: output, shape index: {}]
  %s6 = sld [smem:[#allocation0]]
  $region30: #{efficientnetv2l_forward.16} parent=0
    _
  %s8 = ssub.s32 1, %s6
  %s9 = scalar_select 0, %s8, %s6
  // Predicated region
  $region2: #{efficientnetv2l_forward.16} parent=0 // pred_check
    _
  $region3: #{efficientnetv2l_forward.16} parent=0 // pred_check_branch
    %11 = sbr.rel (0) target = $region5
  $region4: #{efficientnetv2l_forward.16} parent=0 // pred_region
    _
  $region5: #{efficientnetv2l_forward.16} parent=0 // pred_fallthru
    _
  // Predicated region
  $region6: #{efficientnetv2l_forward.16} parent=0 // pred_check
    _
  $region7: #{efficientnetv2l_forward.16} parent=0 // pred_check_branch
    %13 = sbr.rel (0) target = $region9
  $region8: #{efficientnetv2l_forward.16} parent=0 // pred_region
    _
  $region9: #{efficientnetv2l_forward.16} parent=0 // pred_fallthru
    _
  // Predicated region
  $region10: #{efficientnetv2l_forward.16} parent=0 // pred_check
    _
  $region11: #{efficientnetv2l_forward.16} parent=0 // pred_check_branch
    %15 = sbr.rel (0) target = $region13
  $region12: #{efficientnetv2l_forward.16} parent=0 // pred_region
    _
  $region13: #{efficientnetv2l_forward.16} parent=0 // pred_fallthru
    _
  // Predicated region
  $region14: #{efficientnetv2l_forward.16} parent=0 // pred_check
    _
  $region15: #{efficientnetv2l_forward.16} parent=0 // pred_check_branch
    %17 = sbr.rel (0) target = $region17
  $region16: #{efficientnetv2l_forward.16} parent=0 // pred_region
    _
  $region17: #{efficientnetv2l_forward.16} parent=0 // pred_fallthru
    _
  // Predicated region
  $region18: #{efficientnetv2l_forward.16} parent=0 // pred_check
    _
  $region19: #{efficientnetv2l_forward.16} parent=0 // pred_check_branch
    %19 = sbr.rel (0) target = $region21
  $region20: #{efficientnetv2l_forward.16} parent=0 // pred_region
    _
  $region21: #{efficientnetv2l_forward.16} parent=0 // pred_fallthru
    _
  %v21 = vld [vmem:[%s0] sm:$0xf]
  %v22 = vld [vmem:[%s0 + $0x4] sm:$0xf]
  %v23 = vld [vmem:[%s0 + $0x8] sm:$0xf]
  %v24 = vld [vmem:[%s0 + $0xc] sm:$0xf]
  %v25 = vunpack.c.l.bf16 %v21
  %v26 = vunpack.c.l.bf16 %v22
  %v27 = vunpack.c.l.bf16 %v23
  %v28 = vunpack.c.l.bf16 %v24
  %v29 = vadd.f32 %v25, %v26
  %v30 = vrot.slane %v29, 4
  %v31 = vadd.f32 %v29, %v30
  %v32 = vrot.slane %v31, 2
  %v33 = vadd.f32 %v31, %v32
  %v34 = vrot.slane %v33, 1
  %v35 = vadd.f32 %v33, %v34
  %v36 = vadd.f32 %v27, %v28
  %v37 = vrot.slane %v36, 4
  %v38 = vadd.f32 %v36, %v37
  %v39 = vrot.slane %v38, 2
  %v40 = vadd.f32 %v38, %v39
  %v41 = vrot.slane %v40, 1
  %v42 = vadd.f32 %v40, %v41
  %v43 = vmul.f32 %v35, 0.0625
  %v44 = vmul.f32 %v42, 0.0625
  %v45 = vpack.c.bf16 %v43, %v43
  %v46 = vpack.c.bf16 %v44, %v44
  %v47 = vld [vmem:[%s1] sm:$0xf]
  %v48 = vld [vmem:[%s1 + $0x4] sm:$0xf]
  %v49 = vld [vmem:[%s1 + $0x8] sm:$0xf]
  %v50 = vld [vmem:[%s1 + $0xc] sm:$0xf]
  %v51 = vld [vmem:[%s1 + $0x10] sm:$0xf]
  %v52 = vld [vmem:[%s1 + $0x14] sm:$0xf]
  %v53 = vld [vmem:[%s1 + $0x18] sm:$0xf]
  %v54 = vld [vmem:[%s1 + $0x1c] sm:$0xf]
  %v55 = vld [vmem:[%s1 + $0x20] sm:$0xf]
  %v56 = vld [vmem:[%s1 + $0x24] sm:$0xf]
  %v57 = vld [vmem:[%s1 + $0x28] sm:$0xf]
  %v58 = vld [vmem:[%s1 + $0x2c] sm:$0xf]
  %v59 = vld [vmem:[%s1 + $0x30] sm:$0xf]
  %v60 = vld [vmem:[%s1 + $0x34] sm:$0xf]
  %v61 = vld [vmem:[%s1 + $0x38] sm:$0xf]
  %v62 = vld [vmem:[%s1 + $0x3c] sm:$0xf]
  %v63 = vld [vmem:[%s2] sm:$0x1]
  %v65 = vlaneseq
  %v66 = vshrl.u32 %v65, 7
  %v67 = vsub.s32 0, %v66
  %v68 = vrot.slane %v63, %v67
  %v72 = vunpack.c.l.b16 %v45
  %v73 = vunpack.c.l.b16 %v46
  %vm74 = vcmask 1041409
  %v75 = vsel %vm74, %v73, %v72
  %v76 = vpack.c.b16 %v75, %v75
  %v94 = vunpack.c.l.b16 %v47
  %v95 = vunpack.c.l.b16 %v48
  %v96 = vunpack.c.l.b16 %v49
  %v97 = vunpack.c.l.b16 %v50
  %v98 = vunpack.c.l.b16 %v51
  %v99 = vunpack.c.l.b16 %v52
  %v100 = vunpack.c.l.b16 %v53
  %v101 = vunpack.c.l.b16 %v54
  %v102 = vunpack.c.l.b16 %v55
  %v103 = vunpack.c.l.b16 %v56
  %v104 = vunpack.c.l.b16 %v57
  %v105 = vunpack.c.l.b16 %v58
  %v106 = vunpack.c.l.b16 %v59
  %v107 = vunpack.c.l.b16 %v60
  %v108 = vunpack.c.l.b16 %v61
  %v109 = vunpack.c.l.b16 %v62
  %v110 = vpack.c.b16 %v95, %v94
  %v111 = vpack.c.b16 %v97, %v96
  %v112 = vpack.c.b16 %v99, %v98
  %v113 = vpack.c.b16 %v101, %v100
  %v114 = vpack.c.b16 %v103, %v102
  %v115 = vpack.c.b16 %v105, %v104
  %v116 = vpack.c.b16 %v107, %v106
  %v117 = vpack.c.b16 %v109, %v108
  %126 = vmatprep.subr.bf16.mxu0 0
  %127 = vmatpush1.bf16.msra.mxu0 %v110
  %128 = vmatprep.subr.bf16.mxu0 0
  %129 = vmatpush1.bf16.msra.mxu0 %v111
  %130 = vmatprep.subr.bf16.mxu0 0
  %131 = vmatpush1.bf16.msra.mxu0 %v112
  %132 = vmatprep.subr.bf16.mxu0 0
  %133 = vmatpush1.bf16.msra.mxu0 %v113
  %134 = vmatprep.subr.bf16.mxu0 0
  %135 = vmatpush1.bf16.msra.mxu0 %v114
  %136 = vmatprep.subr.bf16.mxu0 0
  %137 = vmatpush1.bf16.msra.mxu0 %v115
  %138 = vmatprep.subr.bf16.mxu0 0
  %139 = vmatpush1.bf16.msra.mxu0 %v116
  %140 = vmatprep.subr.bf16.mxu0 0
  %141 = vmatpush1.bf16.msra.mxu0 %v117
  %142 = vmatprep.subr.bf16.mxu0 0
  %143 = vmatpush1.bf16.msra.mxu0 0
  %144 = vmatprep.subr.bf16.mxu0 0
  %145 = vmatpush1.bf16.msra.mxu0 0
  %146 = vmatprep.subr.bf16.mxu0 0
  %147 = vmatpush1.bf16.msra.mxu0 0
  %148 = vmatprep.subr.bf16.mxu0 0
  %149 = vmatpush1.bf16.msra.mxu0 0
  %150 = vmatprep.subr.bf16.mxu0 0
  %151 = vmatpush1.bf16.msra.mxu0 0
  %152 = vmatprep.subr.bf16.mxu0 0
  %153 = vmatpush1.bf16.msra.mxu0 0
  %154 = vmatprep.subr.bf16.mxu0 0
  %155 = vmatpush1.bf16.msra.mxu0 0
  %156 = vmatprep.subr.bf16.mxu0 0
  %157 = vmatpush1.bf16.msra.mxu0 0
  %158 = vmatprep.mubr.bf16.mxu0 0
  %159 = vmatmul.mubr.bf16.gmra.mrb[0].mxu0 %v76
  %v160 = vpop.f32.mrb[0].mxu0
  %v161 = vadd.f32 %v68, %v160
  %v162 = vpop.f32.mrb[0].mxu0
  %v163 = vpop.f32.mrb[0].mxu0
  %v164 = vpop.f32.mrb[0].mxu0
  %165 = vdwg.mxu0
  %v166 = vxor.u32 %v161, 2147483648
  %v167 = vmul.f32 %v166, 1.442695
  %v168 = vpow.pop %v167
  %v169 = vadd.f32 %v168, 1.0
  %v170 = vrcp.pop %v169
  %v171 = vmul.f32 1.0, %v170
  %v172 = vmul.f32 %v161, %v171
  %v173 = vpack.c.bf16 %v172, %v172
  %v174 = vld [vmem:[%s3] sm:$0xf]
  %v175 = vld [vmem:[%s3 + $0x4] sm:$0xf]
  %v176 = vld [vmem:[%s3 + $0x8] sm:$0xf]
  %v177 = vld [vmem:[%s3 + $0xc] sm:$0xf]
  %v178 = vld [vmem:[%s3 + $0x10] sm:$0xf]
  %v179 = vld [vmem:[%s3 + $0x14] sm:$0xf]
  %v180 = vld [vmem:[%s3 + $0x18] sm:$0xf]
  %v181 = vld [vmem:[%s3 + $0x1c] sm:$0xf]
  %v182 = vld [vmem:[%s3 + $0x20] sm:$0xf]
  %v183 = vld [vmem:[%s3 + $0x24] sm:$0xf]
  %v184 = vld [vmem:[%s3 + $0x28] sm:$0xf]
  %v185 = vld [vmem:[%s3 + $0x2c] sm:$0xf]
  %v186 = vld [vmem:[%s3 + $0x30] sm:$0xf]
  %v187 = vld [vmem:[%s3 + $0x34] sm:$0xf]
  %v188 = vld [vmem:[%s3 + $0x38] sm:$0xf]
  %v189 = vld [vmem:[%s3 + $0x3c] sm:$0xf]
  %v190 = vld [vmem:[%s4] sm:$0x1]
  %v192 = vlaneseq
  %v193 = vshrl.u32 %v192, 7
  %v194 = vsub.s32 0, %v193
  %v195 = vrot.slane %v190, %v194
  %v213 = vunpack.c.l.b16 %v174
  %v214 = vunpack.c.l.b16 %v175
  %v215 = vunpack.c.l.b16 %v176
  %v216 = vunpack.c.l.b16 %v177
  %v217 = vunpack.c.l.b16 %v178
  %v218 = vunpack.c.l.b16 %v179
  %v219 = vunpack.c.l.b16 %v180
  %v220 = vunpack.c.l.b16 %v181
  %v221 = vunpack.c.l.b16 %v182
  %v222 = vunpack.c.l.b16 %v183
  %v223 = vunpack.c.l.b16 %v184
  %v224 = vunpack.c.l.b16 %v185
  %v225 = vunpack.c.l.b16 %v186
  %v226 = vunpack.c.l.b16 %v187
  %v227 = vunpack.c.l.b16 %v188
  %v228 = vunpack.c.l.b16 %v189
  %v229 = vpack.c.b16 %v214, %v213
  %v230 = vpack.c.b16 %v216, %v215
  %v231 = vpack.c.b16 %v218, %v217
  %v232 = vpack.c.b16 %v220, %v219
  %v233 = vpack.c.b16 %v222, %v221
  %v234 = vpack.c.b16 %v224, %v223
  %v235 = vpack.c.b16 %v226, %v225
  %v236 = vpack.c.b16 %v228, %v227
  %245 = vmatprep.subr.bf16.mxu0 0
  %246 = vmatpush1.bf16.msra.mxu0 %v229
  %247 = vmatprep.subr.bf16.mxu0 0
  %248 = vmatpush1.bf16.msra.mxu0 %v230
  %249 = vmatprep.subr.bf16.mxu0 0
  %250 = vmatpush1.bf16.msra.mxu0 %v231
  %251 = vmatprep.subr.bf16.mxu0 0
  %252 = vmatpush1.bf16.msra.mxu0 %v232
  %253 = vmatprep.subr.bf16.mxu0 0
  %254 = vmatpush1.bf16.msra.mxu0 %v233
  %255 = vmatprep.subr.bf16.mxu0 0
  %256 = vmatpush1.bf16.msra.mxu0 %v234
  %257 = vmatprep.subr.bf16.mxu0 0
  %258 = vmatpush1.bf16.msra.mxu0 %v235
  %259 = vmatprep.subr.bf16.mxu0 0
  %260 = vmatpush1.bf16.msra.mxu0 %v236
  %261 = vmatprep.subr.bf16.mxu0 0
  %262 = vmatpush1.bf16.msra.mxu0 0
  %263 = vmatprep.subr.bf16.mxu0 0
  %264 = vmatpush1.bf16.msra.mxu0 0
  %265 = vmatprep.subr.bf16.mxu0 0
  %266 = vmatpush1.bf16.msra.mxu0 0
  %267 = vmatprep.subr.bf16.mxu0 0
  %268 = vmatpush1.bf16.msra.mxu0 0
  %269 = vmatprep.subr.bf16.mxu0 0
  %270 = vmatpush1.bf16.msra.mxu0 0
  %271 = vmatprep.subr.bf16.mxu0 0
  %272 = vmatpush1.bf16.msra.mxu0 0
  %273 = vmatprep.subr.bf16.mxu0 0
  %274 = vmatpush1.bf16.msra.mxu0 0
  %275 = vmatprep.subr.bf16.mxu0 0
  %276 = vmatpush1.bf16.msra.mxu0 0
  %277 = vmatprep.mubr.bf16.mxu0 0
  %278 = vmatmul.mubr.bf16.gmra.mrb[0].mxu0 %v173
  %v279 = vpop.f32.mrb[0].mxu0
  %v280 = vadd.f32 %v195, %v279
  %v281 = vpop.f32.mrb[0].mxu0
  %v282 = vpop.f32.mrb[0].mxu0
  %v283 = vpop.f32.mrb[0].mxu0
  %284 = vdwg.mxu0
  %v285 = vxor.u32 %v280, 2147483648
  %v286 = vmul.f32 %v285, 1.442695
  %v287 = vpow.pop %v286
  %v288 = vadd.f32 %v287, 1.0
  %v289 = vrcp.pop %v288
  %v290 = vmul.f32 1.0, %v289
  %v291 = vpack.c.bf16 %v290, %v290
  %292 = vst [vmem:[%s5] sm:$0x1] %v291
  // Predicated region
  $region22: #{efficientnetv2l_forward.16} parent=0 // pred_check
    _
  $region23: #{efficientnetv2l_forward.16} parent=0 // pred_check_branch
    %294 = sbr.rel (0) target = $region25
  $region24: #{efficientnetv2l_forward.16} parent=0 // pred_region
    _
  $region25: #{efficientnetv2l_forward.16} parent=0 // pred_fallthru
    _
  // Predicated region
  $region26: #{efficientnetv2l_forward.16} parent=0 // pred_check
    _
  $region27: #{efficientnetv2l_forward.16} parent=0 // pred_check_branch
    %296 = sbr.rel (0) target = $region29
  $region28: #{efficientnetv2l_forward.16} parent=0 // pred_region
    _
  $region29: #{efficientnetv2l_forward.16} parent=0 // pred_fallthru
    _

// kernel: efficientnetv2l_forward.17
$region0: #{efficientnetv2l_forward.17}
  #allocation0 [shape = 'u32[]', space=smem, size = 0x4, offset = 0x4, fixed_abs, tag = 'smem constant byte address 0x4 - core index']
  #allocation1 [shape = 'u32[144,128]{1,0:T(1,128)}', space=vmem, size = 0x12000, scoped, tag = 'internal scratch']
  %s0 = inlined_call_operand.vmem [shape: bf16[2,16,128], index: 0, kind: input, shape index: {}]
  %s1 = inlined_call_operand.vmem [shape: bf16[2,1,128], index: 1, kind: input, shape index: {}]
  %s2 = inlined_call_operand.vmem [shape: bf16[128,128], index: 2, kind: input, shape index: {}]
  %s3 = inlined_call_operand.vmem [shape: f32[1,128], index: 3, kind: input, shape index: {}]
  %s4 = inlined_call_operand.vmem [shape: bf16[2,16,128], index: 4, kind: output, shape index: {}]
  %s5 = sld [smem:[#allocation0]]
  $region49: #{efficientnetv2l_forward.17} parent=0
    _
  %s7 = ssub.s32 1, %s5
  %s8 = scalar_select 0, %s7, %s5
  loop: start=0, step=1, limit=4
  $region2: #{efficientnetv2l_forward.17} parent=0 // loop_pre_header
    _
  $region3: #{efficientnetv2l_forward.17} parent=0 // loop_header
    %s10 = sphi 0, %s14
    %p11 = scmp.ge.s32.totalorder %s10, 4
    %s17 = sphi 0, %s29
    %s18 = sphi 0, %s25
    %s19 = sphi 0, %s17
    %s20 = sphi 0, %s18
    %s21 = sphi 0, %s19
    %s22 = sphi 0, %s20
    %s34 = sphi 0, %s36
    %s37 = sphi 0, %s34
    %s38 = sphi 0, %s37
    %s54 = sphi 0, %s38
    %s60 = sphi 0, %s62
    %s63 = sphi 0, %s60
    %s64 = sphi 0, %s63
    %s80 = sphi 0, %s64
    %s84 = sphi 0, %s84
    %s86 = sphi 0, %s84
    %s87 = sphi 0, %s86
    %s101 = sphi 0, %s87
    %s105 = sphi 0, %s105
    %s107 = sphi 0, %s105
    %s108 = sphi 0, %s107
    %s122 = sphi 0, %s108
    %s130 = sphi 0, %s132
    %s133 = sphi 0, %s130
    %s134 = sphi 0, %s133
    %s150 = sphi 0, %s134
  $region4: #{efficientnetv2l_forward.17} parent=0 // loop_header_branch
    %13 = sbr.rel (%p11) target = $region8
  $region5: #{efficientnetv2l_forward.17} parent=0 // loop_body
    %s15 = ssub.s32 %s10, 1
    %s16 = ssub.s32 %s10, 2
    %s23 = sadd.s32 1, %s18
    %p24 = scmp.ge.s32.totalorder %s23, 1
    %s25 = scalar_select %p24, 0, %s23
    %s26 = sadd.s32 1, %s17
    %s27 = scalar_select %p24, %s26, %s17
    %p28 = scmp.ge.s32.totalorder %s27, 2
    %s29 = scalar_select %p28, 0, %s27
    %s30 = ssub.s32 %s17, %s29
    %s31 = ssub.s32 %s18, %s25
    %s32 = sor.u32 %s30, %s31
    %p33 = scmp.eq.s32.totalorder %s32, 0
    %s35 = sadd.s32 %s34, 1
    %s36 = scalar_select %p33, %s34, %s35
    %p39 = pneg %p33
    %p40 = scmp.eq.s32.totalorder %s10, 1
    %p41 = por %p39, %p40
    %p42 = scmp.ne.s32.totalorder %s34, %s37
    %p43 = scmp.eq.s32.totalorder %s10, 0
    %p44 = por %p42, %p43
    %p45 = scmp.ne.s32.totalorder %s34, %s37
    %p46 = scmp.eq.s32.totalorder %s15, 1
    %p47 = por %p45, %p46
    %p48 = scmp.ne.s32.totalorder %s37, %s38
    %p49 = scmp.eq.s32.totalorder %s15, 0
    %p50 = por %p48, %p49
    %p51 = scmp.ne.s32.totalorder %s37, %s38
    %p52 = scmp.eq.s32.totalorder %s16, 1
    %p53 = por %p51, %p52
    %p55 = scmp.ne.s32.totalorder %s38, %s54
    %p56 = scmp.eq.s32.totalorder %s16, 0
    %p57 = por %p55, %p56
    %s58 = ssub.s32 %s17, %s29
    %p59 = scmp.eq.s32.totalorder %s58, 0
    %s61 = sadd.s32 %s60, 1
    %s62 = scalar_select %p59, %s60, %s61
    %p65 = pneg %p59
    %p66 = scmp.eq.s32.totalorder %s10, 1
    %p67 = por %p65, %p66
    %p68 = scmp.ne.s32.totalorder %s60, %s63
    %p69 = scmp.eq.s32.totalorder %s10, 0
    %p70 = por %p68, %p69
    %p71 = scmp.ne.s32.totalorder %s60, %s63
    %p72 = scmp.eq.s32.totalorder %s15, 1
    %p73 = por %p71, %p72
    %p74 = scmp.ne.s32.totalorder %s63, %s64
    %p75 = scmp.eq.s32.totalorder %s15, 0
    %p76 = por %p74, %p75
    %p77 = scmp.ne.s32.totalorder %s63, %s64
    %p78 = scmp.eq.s32.totalorder %s16, 1
    %p79 = por %p77, %p78
    %p81 = scmp.ne.s32.totalorder %s64, %s80
    %p82 = scmp.eq.s32.totalorder %s16, 0
    %p83 = por %p81, %p82
    %s85 = sadd.s32 %s84, 1
    %p88 = scmp.eq.s32.totalorder %s10, 1
    %p89 = scmp.ne.s32.totalorder %s84, %s86
    %p90 = scmp.eq.s32.totalorder %s10, 0
    %p91 = por %p89, %p90
    %p92 = scmp.ne.s32.totalorder %s84, %s86
    %p93 = scmp.eq.s32.totalorder %s15, 1
    %p94 = por %p92, %p93
    %p95 = scmp.ne.s32.totalorder %s86, %s87
    %p96 = scmp.eq.s32.totalorder %s15, 0
    %p97 = por %p95, %p96
    %p98 = scmp.ne.s32.totalorder %s86, %s87
    %p99 = scmp.eq.s32.totalorder %s16, 1
    %p100 = por %p98, %p99
    %p102 = scmp.ne.s32.totalorder %s87, %s101
    %p103 = scmp.eq.s32.totalorder %s16, 0
    %p104 = por %p102, %p103
    %s106 = sadd.s32 %s105, 1
    %p109 = scmp.eq.s32.totalorder %s10, 1
    %p110 = scmp.ne.s32.totalorder %s105, %s107
    %p111 = scmp.eq.s32.totalorder %s10, 0
    %p112 = por %p110, %p111
    %p113 = scmp.ne.s32.totalorder %s105, %s107
    %p114 = scmp.eq.s32.totalorder %s15, 1
    %p115 = por %p113, %p114
    %p116 = scmp.ne.s32.totalorder %s107, %s108
    %p117 = scmp.eq.s32.totalorder %s15, 0
    %p118 = por %p116, %p117
    %p119 = scmp.ne.s32.totalorder %s107, %s108
    %p120 = scmp.eq.s32.totalorder %s16, 1
    %p121 = por %p119, %p120
    %p123 = scmp.ne.s32.totalorder %s108, %s122
    %p124 = scmp.eq.s32.totalorder %s16, 0
    %p125 = por %p123, %p124
    %s126 = ssub.s32 %s17, %s29
    %s127 = ssub.s32 %s18, %s25
    %s128 = sor.u32 %s126, %s127
    %p129 = scmp.eq.s32.totalorder %s128, 0
    %s131 = sadd.s32 %s130, 1
    %s132 = scalar_select %p129, %s130, %s131
    %p135 = pneg %p129
    %p136 = scmp.eq.s32.totalorder %s10, 1
    %p137 = por %p135, %p136
    %p138 = scmp.ne.s32.totalorder %s130, %s133
    %p139 = scmp.eq.s32.totalorder %s10, 0
    %p140 = por %p138, %p139
    %p141 = scmp.ne.s32.totalorder %s130, %s133
    %p142 = scmp.eq.s32.totalorder %s15, 1
    %p143 = por %p141, %p142
    %p144 = scmp.ne.s32.totalorder %s133, %s134
    %p145 = scmp.eq.s32.totalorder %s15, 0
    %p146 = por %p144, %p145
    %p147 = scmp.ne.s32.totalorder %s133, %s134
    %p148 = scmp.eq.s32.totalorder %s16, 1
    %p149 = por %p147, %p148
    %p151 = scmp.ne.s32.totalorder %s134, %s150
    %p152 = scmp.eq.s32.totalorder %s16, 0
    %p153 = por %p151, %p152
    %p154 = scmp.le.s32.totalorder 1, %s10
    %p155 = scmp.lt.s32.totalorder %s10, 3
    %p156 = pnand %p154, %p155
    %p157 = pneg %p156
    // Predicated region
    $region9: #{efficientnetv2l_forward.17} parent=5 // pred_check
      _
    $region10: #{efficientnetv2l_forward.17} parent=5 // pred_check_branch
      %159 = sbr.rel (%p156) target = $region12
    $region11: #{efficientnetv2l_forward.17} parent=5 // pred_region
      %s160 = ssub.s32 %s10, 1
      // Predicated region
      $region13: #{efficientnetv2l_forward.17} parent=11 // pred_check
        %p161 = pneg %p97
      $region14: #{efficientnetv2l_forward.17} parent=11 // pred_check_branch
        %163 = sbr.rel (%p161) target = $region16
      $region15: #{efficientnetv2l_forward.17} parent=11 // pred_region
        _
      $region16: #{efficientnetv2l_forward.17} parent=11 // pred_fallthru
        _
      // Predicated region
      $region17: #{efficientnetv2l_forward.17} parent=11 // pred_check
        %p164 = pneg %p118
      $region18: #{efficientnetv2l_forward.17} parent=11 // pred_check_branch
        %166 = sbr.rel (%p164) target = $region20
      $region19: #{efficientnetv2l_forward.17} parent=11 // pred_region
        _
      $region20: #{efficientnetv2l_forward.17} parent=11 // pred_fallthru
        _
    $region12: #{efficientnetv2l_forward.17} parent=5 // pred_fallthru
      _
    %p167 = scmp.lt.s32.totalorder %s10, 2
    // Predicated region
    $region21: #{efficientnetv2l_forward.17} parent=5 // pred_check
      %p168 = pneg %p167
    $region22: #{efficientnetv2l_forward.17} parent=5 // pred_check_branch
      %170 = sbr.rel (%p168) target = $region24
    $region23: #{efficientnetv2l_forward.17} parent=5 // pred_region
      // Predicated region
      $region25: #{efficientnetv2l_forward.17} parent=23 // pred_check
        %p171 = pneg %p44
      $region26: #{efficientnetv2l_forward.17} parent=23 // pred_check_branch
        %173 = sbr.rel (%p171) target = $region28
      $region27: #{efficientnetv2l_forward.17} parent=23 // pred_region
        %s174 = smul.u32 2, %s18
        %p175 = scmp.lt.s32.totalorder %s17, 1
        %s176 = scalar_select %p175, %s17, 1
        %p177 = scmp.lt.s32.totalorder %s174, 1
        %s178 = scalar_select %p177, %s174, 1
        %s179 = smul.addr %s176, 2
        %s180 = sadd.s32 %s178, %s179
        %s181 = smul.addr %s180, 4
        %s182 = scalar_lea.vmem %s0, %s181
        %s183 = smul.u32 2, %s18
      $region28: #{efficientnetv2l_forward.17} parent=23 // pred_fallthru
        _
      // Predicated region
      $region29: #{efficientnetv2l_forward.17} parent=23 // pred_check
        %p184 = pneg %p70
      $region30: #{efficientnetv2l_forward.17} parent=23 // pred_check_branch
        %186 = sbr.rel (%p184) target = $region32
      $region31: #{efficientnetv2l_forward.17} parent=23 // pred_region
        %p187 = scmp.lt.s32.totalorder %s17, 1
        %s188 = scalar_select %p187, %s17, 1
        %s189 = scalar_lea.vmem %s1, %s188
      $region32: #{efficientnetv2l_forward.17} parent=23 // pred_fallthru
        _
    $region24: #{efficientnetv2l_forward.17} parent=5 // pred_fallthru
      _
    %p190 = scmp.le.s32.totalorder 1, %s10
    %p191 = scmp.lt.s32.totalorder %s10, 3
    %p192 = pnand %p190, %p191
    %p193 = pneg %p192
    // Predicated region
    $region33: #{efficientnetv2l_forward.17} parent=5 // pred_check
      _
    $region34: #{efficientnetv2l_forward.17} parent=5 // pred_check_branch
      %195 = sbr.rel (%p192) target = $region36
    $region35: #{efficientnetv2l_forward.17} parent=5 // pred_region
      %s196 = ssub.s32 %s10, 1
      %s197 = smul.u32 2, %s20
      %p198 = scmp.lt.s32.totalorder %s19, 1
      %s199 = scalar_select %p198, %s19, 1
      %p200 = scmp.lt.s32.totalorder %s197, 1
      %s201 = scalar_select %p200, %s197, 1
      %s202 = smul.addr %s199, 2
      %s203 = sadd.s32 %s201, %s202
      %s204 = smul.addr %s203, 4
      %s205 = scalar_lea.vmem %s0, %s204
      %p206 = pneg %p50
      %p207 = pneg %p47
      %p208 = scmp.lt.s32.totalorder %s19, 1
      %s209 = scalar_select %p208, %s19, 1
      %s210 = scalar_lea.vmem %s1, %s209
      %p211 = pneg %p76
      %p212 = pneg %p73
      %p213 = pneg %p97
      %p214 = pneg %p94
      %p215 = pneg %p118
      %p216 = pneg %p115
      %p217 = pneg %p146
      %p218 = pneg %p143
      %s219 = smul.u32 2, %s20
      %p220 = scmp.lt.s32.totalorder %s19, 1
      %s221 = scalar_select %p220, %s19, 1
      %p222 = scmp.lt.s32.totalorder %s219, 1
      %s223 = scalar_select %p222, %s219, 1
      %s224 = smul.addr %s221, 2
      %s225 = sadd.s32 %s223, %s224
      %s226 = smul.addr %s225, 4
      %s227 = scalar_lea.vmem %s4, %s226
      %s228 = smul.u32 2, %s20
      %p229 = scmp.lt.s32.totalorder %s19, 1
      %s230 = scalar_select %p229, %s19, 1
      %p231 = scmp.lt.s32.totalorder %s228, 1
      %s232 = scalar_select %p231, %s228, 1
      %s233 = smul.addr %s230, 2
      %s234 = sadd.s32 %s232, %s233
      %s235 = smul.addr %s234, 4
      %s236 = scalar_lea.vmem %s0, %s235
      %s237 = smul.u32 2, %s20
      %p238 = scmp.lt.s32.totalorder %s19, 1
      %s239 = scalar_select %p238, %s19, 1
      %s240 = scalar_lea.vmem %s1, %s239
      %s241 = smul.u32 2, %s20
      %p242 = scmp.lt.s32.totalorder %s19, 1
      %s243 = scalar_select %p242, %s19, 1
      %p244 = scmp.lt.s32.totalorder %s241, 1
      %s245 = scalar_select %p244, %s241, 1
      %s246 = smul.addr %s243, 2
      %s247 = sadd.s32 %s245, %s246
      %s248 = smul.addr %s247, 4
      %s249 = scalar_lea.vmem %s4, %s248
      %s250 = smul.u32 2, %s20
      %v252 = vld [vmem:[%s236] sm:$0xf]
      %v253 = vld [vmem:[%s236 + $0x4] sm:$0xf]
      %v254 = vunpack.c.l.bf16 %v252
      %v255 = vunpack.c.l.bf16 %v253
      %v256 = vld [vmem:[%s240] sm:$0x1]
      %v257 = vunpack.c.l.bf16 %v256
      %v258 = vlaneseq
      %v259 = vshrl.u32 %v258, 7
      %v260 = vsub.s32 0, %v259
      %v261 = vrot.slane %v257, %v260
      %v262 = vmul.f32 %v254, %v261
      %v263 = vmul.f32 %v255, %v261
      %v264 = vpack.c.bf16 %v263, %v262
      %v265 = vld [vmem:[%s2] sm:$0xf]
      %v266 = vld [vmem:[%s2 + $0x4] sm:$0xf]
      %v267 = vld [vmem:[%s2 + $0x8] sm:$0xf]
      %v268 = vld [vmem:[%s2 + $0xc] sm:$0xf]
      %v269 = vld [vmem:[%s2 + $0x10] sm:$0xf]
      %v270 = vld [vmem:[%s2 + $0x14] sm:$0xf]
      %v271 = vld [vmem:[%s2 + $0x18] sm:$0xf]
      %v272 = vld [vmem:[%s2 + $0x1c] sm:$0xf]
      %v273 = vld [vmem:[%s2 + $0x20] sm:$0xf]
      %v274 = vld [vmem:[%s2 + $0x24] sm:$0xf]
      %v275 = vld [vmem:[%s2 + $0x28] sm:$0xf]
      %v276 = vld [vmem:[%s2 + $0x2c] sm:$0xf]
      %v277 = vld [vmem:[%s2 + $0x30] sm:$0xf]
      %v278 = vld [vmem:[%s2 + $0x34] sm:$0xf]
      %v279 = vld [vmem:[%s2 + $0x38] sm:$0xf]
      %v280 = vld [vmem:[%s2 + $0x3c] sm:$0xf]
      %v281 = vld [vmem:[%s3] sm:$0x1]
      %v283 = vlaneseq
      %v284 = vshrl.u32 %v283, 7
      %v285 = vsub.s32 0, %v284
      %v286 = vrot.slane %v281, %v285
      %v304 = vunpack.c.l.b16 %v265
      %v305 = vunpack.c.l.b16 %v266
      %v306 = vunpack.c.l.b16 %v267
      %v307 = vunpack.c.l.b16 %v268
      %v308 = vunpack.c.l.b16 %v269
      %v309 = vunpack.c.l.b16 %v270
      %v310 = vunpack.c.l.b16 %v271
      %v311 = vunpack.c.l.b16 %v272
      %v312 = vunpack.c.l.b16 %v273
      %v313 = vunpack.c.l.b16 %v274
      %v314 = vunpack.c.l.b16 %v275
      %v315 = vunpack.c.l.b16 %v276
      %v316 = vunpack.c.l.b16 %v277
      %v317 = vunpack.c.l.b16 %v278
      %v318 = vunpack.c.l.b16 %v279
      %v319 = vunpack.c.l.b16 %v280
      %v320 = vpack.c.b16 %v305, %v304
      %v321 = vpack.c.b16 %v307, %v306
      %v322 = vpack.c.b16 %v309, %v308
      %v323 = vpack.c.b16 %v311, %v310
      %v324 = vpack.c.b16 %v313, %v312
      %v325 = vpack.c.b16 %v315, %v314
      %v326 = vpack.c.b16 %v317, %v316
      %v327 = vpack.c.b16 %v319, %v318
      %336 = vmatprep.subr.bf16.mxu0 0
      %337 = vmatpush1.bf16.msra.mxu0 %v320
      %338 = vmatprep.subr.bf16.mxu0 0
      %339 = vmatpush1.bf16.msra.mxu0 %v321
      %340 = vmatprep.subr.bf16.mxu0 0
      %341 = vmatpush1.bf16.msra.mxu0 %v322
      %342 = vmatprep.subr.bf16.mxu0 0
      %343 = vmatpush1.bf16.msra.mxu0 %v323
      %344 = vmatprep.subr.bf16.mxu0 0
      %345 = vmatpush1.bf16.msra.mxu0 %v324
      %346 = vmatprep.subr.bf16.mxu0 0
      %347 = vmatpush1.bf16.msra.mxu0 %v325
      %348 = vmatprep.subr.bf16.mxu0 0
      %349 = vmatpush1.bf16.msra.mxu0 %v326
      %350 = vmatprep.subr.bf16.mxu0 0
      %351 = vmatpush1.bf16.msra.mxu0 %v327
      %352 = vmatprep.subr.bf16.mxu0 0
      %353 = vmatpush1.bf16.msra.mxu0 0
      %354 = vmatprep.subr.bf16.mxu0 0
      %355 = vmatpush1.bf16.msra.mxu0 0
      %356 = vmatprep.subr.bf16.mxu0 0
      %357 = vmatpush1.bf16.msra.mxu0 0
      %358 = vmatprep.subr.bf16.mxu0 0
      %359 = vmatpush1.bf16.msra.mxu0 0
      %360 = vmatprep.subr.bf16.mxu0 0
      %361 = vmatpush1.bf16.msra.mxu0 0
      %362 = vmatprep.subr.bf16.mxu0 0
      %363 = vmatpush1.bf16.msra.mxu0 0
      %364 = vmatprep.subr.bf16.mxu0 0
      %365 = vmatpush1.bf16.msra.mxu0 0
      %366 = vmatprep.subr.bf16.mxu0 0
      %367 = vmatpush1.bf16.msra.mxu0 0
      %368 = vmatprep.mubr.bf16.mxu0 0
      %369 = vmatmul.mubr.bf16.gmra.mrb[0].mxu0 %v264
      %v370 = vpop.f32.mrb[0].mxu0
      %v371 = vadd.f32 %v286, %v370
      %v372 = vpop.f32.mrb[0].mxu0
      %v373 = vpop.f32.mrb[0].mxu0
      %v374 = vadd.f32 %v286, %v373
      %v375 = vpop.f32.mrb[0].mxu0
      %376 = vdwg.mxu0
      %v377 = vpack.c.bf16 %v374, %v371
      %v379 = vunpack.c.l.b16 %v377
      %v380 = vunpack.c.h.b16 %v377
      %v381 = vpack.c.b16 %v379, %v379
      %v382 = vpack.c.b16 %v380, %v380
      %385 = vst [vmem:[%s249] sm:$0xf] %v381
      %386 = vst [vmem:[%s249 + $0x4] sm:$0xf] %v382
      %s387 = smul.u32 2, %s20
      %p388 = scmp.lt.s32.totalorder %s19, 1
      %s389 = scalar_select %p388, %s19, 1
      %p390 = scmp.lt.s32.totalorder %s387, 1
      %s391 = scalar_select %p390, %s387, 1
      %s392 = smul.addr %s389, 2
      %s393 = sadd.s32 %s391, %s392
      %s394 = smul.addr %s393, 4
      %s395 = scalar_lea.vmem %s4, %s394
      // Predicated region
      $region37: #{efficientnetv2l_forward.17} parent=35 // pred_check
        %p396 = pneg %p143
      $region38: #{efficientnetv2l_forward.17} parent=35 // pred_check_branch
        %398 = sbr.rel (%p396) target = $region40
      $region39: #{efficientnetv2l_forward.17} parent=35 // pred_region
        %s399 = smul.u32 2, %s20
      $region40: #{efficientnetv2l_forward.17} parent=35 // pred_fallthru
        _
    $region36: #{efficientnetv2l_forward.17} parent=5 // pred_fallthru
      _
    %p400 = scmp.le.s32.totalorder 2, %s10
    // Predicated region
    $region41: #{efficientnetv2l_forward.17} parent=5 // pred_check
      %p401 = pneg %p400
    $region42: #{efficientnetv2l_forward.17} parent=5 // pred_check_branch
      %403 = sbr.rel (%p401) target = $region44
    $region43: #{efficientnetv2l_forward.17} parent=5 // pred_region
      %s404 = ssub.s32 %s10, 2
      // Predicated region
      $region45: #{efficientnetv2l_forward.17} parent=43 // pred_check
        %p405 = pneg %p149
      $region46: #{efficientnetv2l_forward.17} parent=43 // pred_check_branch
        %407 = sbr.rel (%p405) target = $region48
      $region47: #{efficientnetv2l_forward.17} parent=43 // pred_region
        %s408 = smul.u32 2, %s22
        %p409 = scmp.lt.s32.totalorder %s21, 1
        %s410 = scalar_select %p409, %s21, 1
        %p411 = scmp.lt.s32.totalorder %s408, 1
        %s412 = scalar_select %p411, %s408, 1
        %s413 = smul.addr %s410, 2
        %s414 = sadd.s32 %s412, %s413
        %s415 = smul.addr %s414, 4
        %s416 = scalar_lea.vmem %s4, %s415
      $region48: #{efficientnetv2l_forward.17} parent=43 // pred_fallthru
        _
    $region44: #{efficientnetv2l_forward.17} parent=5 // pred_fallthru
      _
  $region6: #{efficientnetv2l_forward.17} parent=0 // loop_footer
    %s14 = sadd.s32 1, %s10
  $region7: #{efficientnetv2l_forward.17} parent=0 // loop_footer_branch
    %9 = sbr.rel target = $region3
  $region8: #{efficientnetv2l_forward.17} parent=0 // loop_exit
    _

// kernel: efficientnetv2l_forward.18
$region0: #{efficientnetv2l_forward.18}
  #allocation0 [shape = 'u32[]', space=smem, size = 0x4, offset = 0x4, fixed_abs, tag = 'smem constant byte address 0x4 - core index']
  #allocation1 [shape = 'u32[144,128]{1,0:T(1,128)}', space=vmem, size = 0x12000, scoped, tag = 'internal scratch']
  %s0 = inlined_call_operand.vmem [shape: bf16[32,128], index: 0, kind: input, shape index: {}]
  %s1 = inlined_call_operand.vmem [shape: bf16[128,128], index: 1, kind: input, shape index: {}]
  %s2 = inlined_call_operand.vmem [shape: f32[1,128], index: 2, kind: input, shape index: {}]
  %s3 = inlined_call_operand.vmem [shape: bf16[32,128], index: 3, kind: output, shape index: {}]
  %s4 = sld [smem:[#allocation0]]
  $region22: #{efficientnetv2l_forward.18} parent=0
    _
  %s6 = ssub.s32 1, %s4
  %s7 = scalar_select 0, %s6, %s4
  // Predicated region
  $region2: #{efficientnetv2l_forward.18} parent=0 // pred_check
    _
  $region3: #{efficientnetv2l_forward.18} parent=0 // pred_check_branch
    %9 = sbr.rel (0) target = $region5
  $region4: #{efficientnetv2l_forward.18} parent=0 // pred_region
    _
  $region5: #{efficientnetv2l_forward.18} parent=0 // pred_fallthru
    _
  // Predicated region
  $region6: #{efficientnetv2l_forward.18} parent=0 // pred_check
    _
  $region7: #{efficientnetv2l_forward.18} parent=0 // pred_check_branch
    %11 = sbr.rel (0) target = $region9
  $region8: #{efficientnetv2l_forward.18} parent=0 // pred_region
    _
  $region9: #{efficientnetv2l_forward.18} parent=0 // pred_fallthru
    _
  // Predicated region
  $region10: #{efficientnetv2l_forward.18} parent=0 // pred_check
    _
  $region11: #{efficientnetv2l_forward.18} parent=0 // pred_check_branch
    %13 = sbr.rel (0) target = $region13
  $region12: #{efficientnetv2l_forward.18} parent=0 // pred_region
    _
  $region13: #{efficientnetv2l_forward.18} parent=0 // pred_fallthru
    _
  %v15 = vld [vmem:[%s0] sm:$0xf]
  %v16 = vld [vmem:[%s0 + $0x4] sm:$0xf]
  %v17 = vld [vmem:[%s0 + $0x8] sm:$0xf]
  %v18 = vld [vmem:[%s0 + $0xc] sm:$0xf]
  %v19 = vld [vmem:[%s1] sm:$0xf]
  %v20 = vld [vmem:[%s1 + $0x4] sm:$0xf]
  %v21 = vld [vmem:[%s1 + $0x8] sm:$0xf]
  %v22 = vld [vmem:[%s1 + $0xc] sm:$0xf]
  %v23 = vld [vmem:[%s1 + $0x10] sm:$0xf]
  %v24 = vld [vmem:[%s1 + $0x14] sm:$0xf]
  %v25 = vld [vmem:[%s1 + $0x18] sm:$0xf]
  %v26 = vld [vmem:[%s1 + $0x1c] sm:$0xf]
  %v27 = vld [vmem:[%s1 + $0x20] sm:$0xf]
  %v28 = vld [vmem:[%s1 + $0x24] sm:$0xf]
  %v29 = vld [vmem:[%s1 + $0x28] sm:$0xf]
  %v30 = vld [vmem:[%s1 + $0x2c] sm:$0xf]
  %v31 = vld [vmem:[%s1 + $0x30] sm:$0xf]
  %v32 = vld [vmem:[%s1 + $0x34] sm:$0xf]
  %v33 = vld [vmem:[%s1 + $0x38] sm:$0xf]
  %v34 = vld [vmem:[%s1 + $0x3c] sm:$0xf]
  %v35 = vld [vmem:[%s2] sm:$0x1]
  %v37 = vlaneseq
  %v38 = vshrl.u32 %v37, 7
  %v39 = vsub.s32 0, %v38
  %v40 = vrot.slane %v35, %v39
  %v46 = vunpack.c.l.b16 %v15
  %v47 = vunpack.c.l.b16 %v16
  %v48 = vunpack.c.l.b16 %v17
  %v49 = vunpack.c.l.b16 %v18
  %v50 = vpack.c.b16 %v47, %v46
  %v51 = vpack.c.b16 %v49, %v48
  %v70 = vunpack.c.l.b16 %v19
  %v71 = vunpack.c.l.b16 %v20
  %v72 = vunpack.c.l.b16 %v21
  %v73 = vunpack.c.l.b16 %v22
  %v74 = vunpack.c.l.b16 %v23
  %v75 = vunpack.c.l.b16 %v24
  %v76 = vunpack.c.l.b16 %v25
  %v77 = vunpack.c.l.b16 %v26
  %v78 = vunpack.c.l.b16 %v27
  %v79 = vunpack.c.l.b16 %v28
  %v80 = vunpack.c.l.b16 %v29
  %v81 = vunpack.c.l.b16 %v30
  %v82 = vunpack.c.l.b16 %v31
  %v83 = vunpack.c.l.b16 %v32
  %v84 = vunpack.c.l.b16 %v33
  %v85 = vunpack.c.l.b16 %v34
  %v86 = vpack.c.b16 %v71, %v70
  %v87 = vpack.c.b16 %v73, %v72
  %v88 = vpack.c.b16 %v75, %v74
  %v89 = vpack.c.b16 %v77, %v76
  %v90 = vpack.c.b16 %v79, %v78
  %v91 = vpack.c.b16 %v81, %v80
  %v92 = vpack.c.b16 %v83, %v82
  %v93 = vpack.c.b16 %v85, %v84
  %102 = vmatprep.subr.bf16.mxu0 0
  %103 = vmatpush1.bf16.msra.mxu0 %v86
  %104 = vmatprep.subr.bf16.mxu0 0
  %105 = vmatpush1.bf16.msra.mxu0 %v87
  %106 = vmatprep.subr.bf16.mxu0 0
  %107 = vmatpush1.bf16.msra.mxu0 %v88
  %108 = vmatprep.subr.bf16.mxu0 0
  %109 = vmatpush1.bf16.msra.mxu0 %v89
  %110 = vmatprep.subr.bf16.mxu0 0
  %111 = vmatpush1.bf16.msra.mxu0 %v90
  %112 = vmatprep.subr.bf16.mxu0 0
  %113 = vmatpush1.bf16.msra.mxu0 %v91
  %114 = vmatprep.subr.bf16.mxu0 0
  %115 = vmatpush1.bf16.msra.mxu0 %v92
  %116 = vmatprep.subr.bf16.mxu0 0
  %117 = vmatpush1.bf16.msra.mxu0 %v93
  %118 = vmatprep.subr.bf16.mxu0 0
  %119 = vmatpush1.bf16.msra.mxu0 0
  %120 = vmatprep.subr.bf16.mxu0 0
  %121 = vmatpush1.bf16.msra.mxu0 0
  %122 = vmatprep.subr.bf16.mxu0 0
  %123 = vmatpush1.bf16.msra.mxu0 0
  %124 = vmatprep.subr.bf16.mxu0 0
  %125 = vmatpush1.bf16.msra.mxu0 0
  %126 = vmatprep.subr.bf16.mxu0 0
  %127 = vmatpush1.bf16.msra.mxu0 0
  %128 = vmatprep.subr.bf16.mxu0 0
  %129 = vmatpush1.bf16.msra.mxu0 0
  %130 = vmatprep.subr.bf16.mxu0 0
  %131 = vmatpush1.bf16.msra.mxu0 0
  %132 = vmatprep.subr.bf16.mxu0 0
  %133 = vmatpush1.bf16.msra.mxu0 0
  %134 = vmatprep.mubr.bf16.mxu0 0
  %135 = vmatmul.mubr.bf16.gmra.mrb[0].mxu0 %v50
  %v136 = vpop.f32.mrb[0].mxu0
  %v137 = vadd.f32 %v40, %v136
  %v138 = vpop.f32.mrb[0].mxu0
  %v139 = vpop.f32.mrb[0].mxu0
  %v140 = vadd.f32 %v40, %v139
  %v141 = vpop.f32.mrb[0].mxu0
  %142 = vmatprep.mubr.bf16.mxu0 0
  %143 = vmatmul.mubr.bf16.gmra.mrb[0].mxu0 %v51
  %v144 = vpop.f32.mrb[0].mxu0
  %v145 = vadd.f32 %v40, %v144
  %v146 = vpop.f32.mrb[0].mxu0
  %v147 = vpop.f32.mrb[0].mxu0
  %v148 = vadd.f32 %v40, %v147
  %v149 = vpop.f32.mrb[0].mxu0
  %150 = vdwg.mxu0
  %v151 = vxor.u32 %v137, 2147483648
  %v152 = vxor.u32 %v140, 2147483648
  %v153 = vxor.u32 %v145, 2147483648
  %v154 = vxor.u32 %v148, 2147483648
  %v155 = vmul.f32 %v151, 1.442695
  %v156 = vpow.pop %v155
  %v157 = vmul.f32 %v152, 1.442695
  %v158 = vpow.pop %v157
  %v159 = vmul.f32 %v153, 1.442695
  %v160 = vpow.pop %v159
  %v161 = vmul.f32 %v154, 1.442695
  %v162 = vpow.pop %v161
  %v163 = vadd.f32 %v156, 1.0
  %v164 = vadd.f32 %v158, 1.0
  %v165 = vadd.f32 %v160, 1.0
  %v166 = vadd.f32 %v162, 1.0
  %v167 = vrcp.pop %v163
  %v168 = vmul.f32 1.0, %v167
  %v169 = vrcp.pop %v164
  %v170 = vmul.f32 1.0, %v169
  %v171 = vrcp.pop %v165
  %v172 = vmul.f32 1.0, %v171
  %v173 = vrcp.pop %v166
  %v174 = vmul.f32 1.0, %v173
  %v175 = vmul.f32 %v137, %v168
  %v176 = vmul.f32 %v140, %v170
  %v177 = vmul.f32 %v145, %v172
  %v178 = vmul.f32 %v148, %v174
  %v179 = vpack.c.bf16 %v176, %v175
  %v180 = vpack.c.bf16 %v178, %v177
  %v183 = vunpack.c.l.b16 %v179
  %v184 = vunpack.c.h.b16 %v179
  %v185 = vunpack.c.l.b16 %v180
  %v186 = vunpack.c.h.b16 %v180
  %v187 = vpack.c.b16 %v183, %v183
  %v188 = vpack.c.b16 %v184, %v184
  %v189 = vpack.c.b16 %v185, %v185
  %v190 = vpack.c.b16 %v186, %v186
  %195 = vst [vmem:[%s3] sm:$0xf] %v187
  %196 = vst [vmem:[%s3 + $0x4] sm:$0xf] %v188
  %197 = vst [vmem:[%s3 + $0x8] sm:$0xf] %v189
  %198 = vst [vmem:[%s3 + $0xc] sm:$0xf] %v190
  // Predicated region
  $region14: #{efficientnetv2l_forward.18} parent=0 // pred_check
    _
  $region15: #{efficientnetv2l_forward.18} parent=0 // pred_check_branch
    %200 = sbr.rel (0) target = $region17
  $region16: #{efficientnetv2l_forward.18} parent=0 // pred_region
    _
  $region17: #{efficientnetv2l_forward.18} parent=0 // pred_fallthru
    _
  // Predicated region
  $region18: #{efficientnetv2l_forward.18} parent=0 // pred_check
    _
  $region19: #{efficientnetv2l_forward.18} parent=0 // pred_check_branch
    %202 = sbr.rel (0) target = $region21
  $region20: #{efficientnetv2l_forward.18} parent=0 // pred_region
    _
  $region21: #{efficientnetv2l_forward.18} parent=0 // pred_fallthru
    _

// kernel: efficientnetv2l_forward.19
$region0: #{efficientnetv2l_forward.19}
  #allocation0 [shape = 'u32[]', space=smem, size = 0x4, offset = 0x4, fixed_abs, tag = 'smem constant byte address 0x4 - core index']
  #allocation1 [shape = 'u32[144,128]{1,0:T(1,128)}', space=vmem, size = 0x12000, scoped, tag = 'internal scratch']
  %s0 = inlined_call_operand.vmem [shape: bf16[2,16,128], index: 0, kind: input, shape index: {}]
  %s1 = inlined_call_operand.vmem [shape: bf16[128,128], index: 1, kind: input, shape index: {}]
  %s2 = inlined_call_operand.vmem [shape: f32[1,128], index: 2, kind: input, shape index: {}]
  %s3 = inlined_call_operand.vmem [shape: f32[2,128], index: 3, kind: output, shape index: {}]
  %s4 = sld [smem:[#allocation0]]
  $region22: #{efficientnetv2l_forward.19} parent=0
    _
  %s6 = ssub.s32 1, %s4
  %s7 = scalar_select 0, %s6, %s4
  // Predicated region
  $region2: #{efficientnetv2l_forward.19} parent=0 // pred_check
    _
  $region3: #{efficientnetv2l_forward.19} parent=0 // pred_check_branch
    %9 = sbr.rel (0) target = $region5
  $region4: #{efficientnetv2l_forward.19} parent=0 // pred_region
    _
  $region5: #{efficientnetv2l_forward.19} parent=0 // pred_fallthru
    _
  // Predicated region
  $region6: #{efficientnetv2l_forward.19} parent=0 // pred_check
    _
  $region7: #{efficientnetv2l_forward.19} parent=0 // pred_check_branch
    %11 = sbr.rel (0) target = $region9
  $region8: #{efficientnetv2l_forward.19} parent=0 // pred_region
    _
  $region9: #{efficientnetv2l_forward.19} parent=0 // pred_fallthru
    _
  // Predicated region
  $region10: #{efficientnetv2l_forward.19} parent=0 // pred_check
    _
  $region11: #{efficientnetv2l_forward.19} parent=0 // pred_check_branch
    %13 = sbr.rel (0) target = $region13
  $region12: #{efficientnetv2l_forward.19} parent=0 // pred_region
    _
  $region13: #{efficientnetv2l_forward.19} parent=0 // pred_fallthru
    _
  %v15 = vld [vmem:[%s0] sm:$0xf]
  %v16 = vld [vmem:[%s0 + $0x4] sm:$0xf]
  %v17 = vld [vmem:[%s0 + $0x8] sm:$0xf]
  %v18 = vld [vmem:[%s0 + $0xc] sm:$0xf]
  %v19 = vunpack.c.l.bf16 %v15
  %v20 = vunpack.c.l.bf16 %v16
  %v21 = vunpack.c.l.bf16 %v17
  %v22 = vunpack.c.l.bf16 %v18
  %v23 = vadd.f32 %v19, %v20
  %v24 = vrot.slane %v23, 4
  %v25 = vadd.f32 %v23, %v24
  %v26 = vrot.slane %v25, 2
  %v27 = vadd.f32 %v25, %v26
  %v28 = vrot.slane %v27, 1
  %v29 = vadd.f32 %v27, %v28
  %v30 = vadd.f32 %v21, %v22
  %v31 = vrot.slane %v30, 4
  %v32 = vadd.f32 %v30, %v31
  %v33 = vrot.slane %v32, 2
  %v34 = vadd.f32 %v32, %v33
  %v35 = vrot.slane %v34, 1
  %v36 = vadd.f32 %v34, %v35
  %v37 = vmul.f32 %v29, 0.0625
  %v38 = vmul.f32 %v36, 0.0625
  %v39 = vpack.c.bf16 %v37, %v37
  %v40 = vpack.c.bf16 %v38, %v38
  %v41 = vld [vmem:[%s1] sm:$0xf]
  %v42 = vld [vmem:[%s1 + $0x4] sm:$0xf]
  %v43 = vld [vmem:[%s1 + $0x8] sm:$0xf]
  %v44 = vld [vmem:[%s1 + $0xc] sm:$0xf]
  %v45 = vld [vmem:[%s1 + $0x10] sm:$0xf]
  %v46 = vld [vmem:[%s1 + $0x14] sm:$0xf]
  %v47 = vld [vmem:[%s1 + $0x18] sm:$0xf]
  %v48 = vld [vmem:[%s1 + $0x1c] sm:$0xf]
  %v49 = vld [vmem:[%s1 + $0x20] sm:$0xf]
  %v50 = vld [vmem:[%s1 + $0x24] sm:$0xf]
  %v51 = vld [vmem:[%s1 + $0x28] sm:$0xf]
  %v52 = vld [vmem:[%s1 + $0x2c] sm:$0xf]
  %v53 = vld [vmem:[%s1 + $0x30] sm:$0xf]
  %v54 = vld [vmem:[%s1 + $0x34] sm:$0xf]
  %v55 = vld [vmem:[%s1 + $0x38] sm:$0xf]
  %v56 = vld [vmem:[%s1 + $0x3c] sm:$0xf]
  %v57 = vld [vmem:[%s2] sm:$0x1]
  %v59 = vlaneseq
  %v60 = vshrl.u32 %v59, 7
  %v61 = vsub.s32 0, %v60
  %v62 = vrot.slane %v57, %v61
  %v66 = vunpack.c.l.b16 %v39
  %v67 = vunpack.c.l.b16 %v40
  %vm68 = vcmask 1041409
  %v69 = vsel %vm68, %v67, %v66
  %v70 = vpack.c.b16 %v69, %v69
  %v88 = vunpack.c.l.b16 %v41
  %v89 = vunpack.c.l.b16 %v42
  %v90 = vunpack.c.l.b16 %v43
  %v91 = vunpack.c.l.b16 %v44
  %v92 = vunpack.c.l.b16 %v45
  %v93 = vunpack.c.l.b16 %v46
  %v94 = vunpack.c.l.b16 %v47
  %v95 = vunpack.c.l.b16 %v48
  %v96 = vunpack.c.l.b16 %v49
  %v97 = vunpack.c.l.b16 %v50
  %v98 = vunpack.c.l.b16 %v51
  %v99 = vunpack.c.l.b16 %v52
  %v100 = vunpack.c.l.b16 %v53
  %v101 = vunpack.c.l.b16 %v54
  %v102 = vunpack.c.l.b16 %v55
  %v103 = vunpack.c.l.b16 %v56
  %v104 = vpack.c.b16 %v89, %v88
  %v105 = vpack.c.b16 %v91, %v90
  %v106 = vpack.c.b16 %v93, %v92
  %v107 = vpack.c.b16 %v95, %v94
  %v108 = vpack.c.b16 %v97, %v96
  %v109 = vpack.c.b16 %v99, %v98
  %v110 = vpack.c.b16 %v101, %v100
  %v111 = vpack.c.b16 %v103, %v102
  %120 = vmatprep.subr.bf16.mxu0 0
  %121 = vmatpush1.bf16.msra.mxu0 %v104
  %122 = vmatprep.subr.bf16.mxu0 0
  %123 = vmatpush1.bf16.msra.mxu0 %v105
  %124 = vmatprep.subr.bf16.mxu0 0
  %125 = vmatpush1.bf16.msra.mxu0 %v106
  %126 = vmatprep.subr.bf16.mxu0 0
  %127 = vmatpush1.bf16.msra.mxu0 %v107
  %128 = vmatprep.subr.bf16.mxu0 0
  %129 = vmatpush1.bf16.msra.mxu0 %v108
  %130 = vmatprep.subr.bf16.mxu0 0
  %131 = vmatpush1.bf16.msra.mxu0 %v109
  %132 = vmatprep.subr.bf16.mxu0 0
  %133 = vmatpush1.bf16.msra.mxu0 %v110
  %134 = vmatprep.subr.bf16.mxu0 0
  %135 = vmatpush1.bf16.msra.mxu0 %v111
  %136 = vmatprep.subr.bf16.mxu0 0
  %137 = vmatpush1.bf16.msra.mxu0 0
  %138 = vmatprep.subr.bf16.mxu0 0
  %139 = vmatpush1.bf16.msra.mxu0 0
  %140 = vmatprep.subr.bf16.mxu0 0
  %141 = vmatpush1.bf16.msra.mxu0 0
  %142 = vmatprep.subr.bf16.mxu0 0
  %143 = vmatpush1.bf16.msra.mxu0 0
  %144 = vmatprep.subr.bf16.mxu0 0
  %145 = vmatpush1.bf16.msra.mxu0 0
  %146 = vmatprep.subr.bf16.mxu0 0
  %147 = vmatpush1.bf16.msra.mxu0 0
  %148 = vmatprep.subr.bf16.mxu0 0
  %149 = vmatpush1.bf16.msra.mxu0 0
  %150 = vmatprep.subr.bf16.mxu0 0
  %151 = vmatpush1.bf16.msra.mxu0 0
  %152 = vmatprep.mubr.bf16.mxu0 0
  %153 = vmatmul.mubr.bf16.gmra.mrb[0].mxu0 %v70
  %v154 = vpop.f32.mrb[0].mxu0
  %v155 = vadd.f32 %v62, %v154
  %v156 = vpop.f32.mrb[0].mxu0
  %v157 = vpop.f32.mrb[0].mxu0
  %v158 = vpop.f32.mrb[0].mxu0
  %159 = vdwg.mxu0
  %160 = vst [vmem:[%s3] sm:$0x3] %v155
  // Predicated region
  $region14: #{efficientnetv2l_forward.19} parent=0 // pred_check
    _
  $region15: #{efficientnetv2l_forward.19} parent=0 // pred_check_branch
    %162 = sbr.rel (0) target = $region17
  $region16: #{efficientnetv2l_forward.19} parent=0 // pred_region
    _
  $region17: #{efficientnetv2l_forward.19} parent=0 // pred_fallthru
    _
  // Predicated region
  $region18: #{efficientnetv2l_forward.19} parent=0 // pred_check
    _
  $region19: #{efficientnetv2l_forward.19} parent=0 // pred_check_branch
    %164 = sbr.rel (0) target = $region21
  $region20: #{efficientnetv2l_forward.19} parent=0 // pred_region
    _
  $region21: #{efficientnetv2l_forward.19} parent=0 // pred_fallthru
    _

</llo_original>
